<compile_context>
chip_gen: v6e
topology: v6e:2x2x1
jax: 0.10.0
libtpu: 0.0.40
codegen_flags: <defaults>
</compile_context>

<pallas_src>
import functools
import math

import numpy as np

import jax
import jax.numpy as jnp
from jax.experimental import pallas as pl
from jax.experimental.pallas import tpu as pltpu


ENC_PAD = 128        # encoded emitted as a lane-dense (TB, 128) slab (hidden <= 128)
NUM_CHAIN = 10       # matmul chain length after folding bottleneck+linear_decoder
_ENC_LAYER = 4       # chain position of the fused [encoder | folded-decoder] layer
# per-chain-layer ReLU (the fused affine layer and the final 1x1 conv have none)
_RELU = (True, True, True, True, False, True, True, True, True, False)


def _round_up(x, m):
    return ((x + m - 1) // m) * m


# --------------------------------------------------------------------------
# Fused kernel: noise add + 10 affine layers (ReLU on the conv layers only).
# --------------------------------------------------------------------------

def _dae_fused_kernel(img_ref, noise_ref,
                      w0_ref, w1_ref, w2_ref, w3_ref, wenc45_ref,
                      w6_ref, w7_ref, w8_ref,
                      q9_ref, s9_ref, q10_ref, s10_ref, bias_ref,
                      decoded_ref, encoded_ref,
                      w9_scr, w10_scr, *, noise_scale):
    enc_pad = encoded_ref.shape[1]            # 128, lane-dense encoded slab

    # One-time int8 -> bf16 dequant (per-output-column scales) of the two
    # dominant weights into persistent VMEM scratch.  The batch grid axis is
    # "arbitrary" (sequential on a single TensorCore), so step 0 always runs
    # first and the scratch stays valid for every later grid step.
    @pl.when(pl.program_id(0) == 0)
    def _():
        w9_scr[...] = (q9_ref[...].astype(jnp.float32)
                       * s9_ref[...]).astype(jnp.bfloat16)
        w10_scr[...] = (q10_ref[...].astype(jnp.float32)
                        * s10_ref[...]).astype(jnp.bfloat16)

    # Noise injection (fused; no standalone dispatch / HBM round trip).
    x = img_ref[...] + jnp.float32(noise_scale) * noise_ref[...]   # (TB, 768) f32

    chain = (w0_ref, w1_ref, w2_ref, w3_ref, wenc45_ref,
             w6_ref, w7_ref, w8_ref, w9_scr, w10_scr)

    for li in range(NUM_CHAIN):
        w = chain[li][...]                                  # (K, Nl) bf16
        nl = w.shape[1]
        b = bias_ref[li:li + 1, 0:nl]                       # (1, Nl) f32 (static slice)
        y = jnp.dot(x.astype(jnp.bfloat16), w,
                    preferred_element_type=jnp.float32) + b  # MXU, f32 epilogue
        if _RELU[li]:
            y = jnp.maximum(y, 0.0)
        if li == _ENC_LAYER:
            # Fused layer output = [encoded (128 lanes, padded) | decoder feat].
            encoded_ref[...] = y[:, 0:enc_pad]              # lane-dense store
            y = y[:, enc_pad:]                              # (TB, feat) -> decoder
        x = y

    decoded_ref[...] = x


def dae_forward(image_nchw, noise_nchw, packed, *, noise_scale, hidden,
                block_batch=128):
    """Fused forward. image/noise: (N, C, H, W) f32. packed: pack_params output."""
    N, C, H, W = image_nchw.shape
    f_in = C * H * W
    img = image_nchw.reshape(N, f_in).astype(jnp.float32)
    noise = noise_nchw.reshape(N, f_in).astype(jnp.float32)

    bf16_ws, q9, s9, q10, s10, bias_slab = packed

    # Batch tiling: TB rows per grid step (multiple of 8 for sublane tiling).
    TB = min(block_batch, _round_up(N, 8))
    n_pad = _round_up(N, TB)
    if n_pad != N:
        img = jnp.pad(img, ((0, n_pad - N), (0, 0)))
        noise = jnp.pad(noise, ((0, n_pad - N), (0, 0)))
    n_blocks = n_pad // TB

    def const_spec(a):                 # full-array block, fetched once (index 0,0)
        return pl.BlockSpec(a.shape, lambda i: (0, 0))

    in_specs = ([pl.BlockSpec((TB, f_in), lambda i: (i, 0)),     # image tile
                 pl.BlockSpec((TB, f_in), lambda i: (i, 0))]     # noise tile
                + [const_spec(w) for w in bf16_ws]
                + [const_spec(q9), const_spec(s9),
                   const_spec(q10), const_spec(s10),
                   const_spec(bias_slab)])

    out_specs = [pl.BlockSpec((TB, f_in), lambda i: (i, 0)),      # decoded
                 pl.BlockSpec((TB, ENC_PAD), lambda i: (i, 0))]   # encoded (padded)

    decoded_flat, encoded_pad = pl.pallas_call(
        functools.partial(_dae_fused_kernel, noise_scale=noise_scale),
        out_shape=(jax.ShapeDtypeStruct((n_pad, f_in), jnp.float32),
                   jax.ShapeDtypeStruct((n_pad, ENC_PAD), jnp.float32)),
        grid_spec=pltpu.PrefetchScalarGridSpec(
            num_scalar_prefetch=0,
            grid=(n_blocks,),
            in_specs=in_specs,
            out_specs=out_specs,
            scratch_shapes=[pltpu.VMEM(q9.shape, jnp.bfloat16),
                            pltpu.VMEM(q10.shape, jnp.bfloat16)]),
        # "arbitrary": grid steps are sequential on one TensorCore so the
        # step-0 dequant-into-scratch is guaranteed to run first.  (At very
        # large N on v7x, drop the scratch-dequant and mark this "parallel".)
        compiler_params=pltpu.CompilerParams(
            dimension_semantics=("arbitrary",)),
    )(img, noise, *bf16_ws, q9, s9, q10, s10, bias_slab)

    decoded = decoded_flat[:N].reshape(N, C, H, W)   # (C,H,W)-flatten == NCHW
    encoded = encoded_pad[:N, :hidden]
    return decoded, encoded


# --------------------------------------------------------------------------
# One-time parameter packing (hoisted out of the forward).
# --------------------------------------------------------------------------

def _dense_conv2d(weight, bias, H, W, stride, padding):
    """PyTorch Conv2d(weight (Cout,Cin,kh,kw)) as dense (Cin*H*W, Cout*Ho*Wo)."""
    w = np.asarray(weight, np.float32)
    Cout, Cin, kh, kw = w.shape
    Ho = (H + 2 * padding - kh) // stride + 1
    Wo = (W + 2 * padding - kw) // stride + 1
    D = np.zeros((Cin * H * W, Cout * Ho * Wo), np.float32)
    for co in range(Cout):
        for ci in range(Cin):
            for dh in range(kh):
                for dw in range(kw):
                    wv = w[co, ci, dh, dw]
                    for oh in range(Ho):
                        ih = stride * oh + dh - padding
                        if not (0 <= ih < H):
                            continue
                        for ow in range(Wo):
                            iw = stride * ow + dw - padding
                            if not (0 <= iw < W):
                                continue
                            D[(ci * H + ih) * W + iw,
                              (co * Ho + oh) * Wo + ow] += wv
    b_flat = np.repeat(np.asarray(bias, np.float32), Ho * Wo)
    return D, b_flat, Ho, Wo


def _dense_convT2d(weight, bias, H, W, stride):
    """PyTorch ConvTranspose2d(weight (Cin,Cout,kh,kw), padding=0) as dense."""
    w = np.asarray(weight, np.float32)
    Cin, Cout, kh, kw = w.shape
    Ho = (H - 1) * stride + kh
    Wo = (W - 1) * stride + kw
    D = np.zeros((Cin * H * W, Cout * Ho * Wo), np.float32)
    for ci in range(Cin):
        for co in range(Cout):
            for dh in range(kh):
                for dw in range(kw):
                    wv = w[ci, co, dh, dw]
                    for ih in range(H):
                        oh = stride * ih + dh
                        for iw in range(W):
                            ow = stride * iw + dw
                            D[(ci * H + ih) * W + iw,
                              (co * Ho + oh) * Wo + ow] += wv
    b_flat = np.repeat(np.asarray(bias, np.float32), Ho * Wo)
    return D, b_flat, Ho, Wo


def _quantize_cols_int8(D):
    """Symmetric int8 quantization with per-output-column scales."""
    D = np.asarray(D, np.float32)
    col_max = np.max(np.abs(D), axis=0)
    col_max = np.where(col_max == 0.0, 1.0, col_max)
    scale = (col_max / 127.0).astype(np.float32)
    q = np.clip(np.rint(D / scale), -127, 127).astype(np.int8)
    return q, scale.reshape(1, -1)


def pack_params(params, *, height, width, hidden, compute_dtype=jnp.bfloat16):
    """PyTorch-layout params -> fused-kernel operands (done once, offline)."""
    dense, biases = [], []

    h, w = height, width
    for name in ('conv1', 'conv2', 'conv3', 'conv4'):           # encoder convs
        D, b, h, w = _dense_conv2d(params[f'{name}_w'], params[f'{name}_b'],
                                   h, w, stride=2, padding=1)
        dense.append(D)
        biases.append(b)
    # The module architecture fixes exactly 4 stride-2 encoder convs, so the
    # tracked (h, w) here equals (height//16, width//16) used by the Linear.
    feat = dense[-1].shape[1]
    assert params['bottleneck_w'].shape[1] == feat, (params['bottleneck_w'].shape, feat)
    assert hidden <= ENC_PAD, hidden

    # Fold bottleneck + linear_decoder (both affine, no ReLU between) and fuse
    # the `encoded` output into the same matmul: [W4 (padded to 128) | W4@W5].
    W4 = np.asarray(params['bottleneck_w'], np.float32).T       # (feat, hidden)
    b4 = np.asarray(params['bottleneck_b'], np.float32)         # (hidden,)
    W5 = np.asarray(params['dec_w'], np.float32).T              # (hidden, feat)
    b5 = np.asarray(params['dec_b'], np.float32)                # (feat,)
    W45 = W4 @ W5                                               # (feat, feat)
    b45 = b4 @ W5 + b5                                          # (feat,)
    Wenc = np.zeros((feat, ENC_PAD), np.float32)
    Wenc[:, :hidden] = W4
    benc = np.zeros((ENC_PAD,), np.float32)
    benc[:hidden] = b4
    dense.append(np.concatenate([Wenc, W45], axis=1))           # (feat, 128+feat)
    biases.append(np.concatenate([benc, b45]))

    for name in ('conv5', 'conv6', 'conv7', 'conv8'):           # decoder convT
        D, b, h, w = _dense_convT2d(params[f'{name}_w'], params[f'{name}_b'],
                                    h, w, stride=2)
        dense.append(D)
        biases.append(b)
    D, b, h, w = _dense_conv2d(params['out_w'], params['out_b'],   # 1x1 output
                               h, w, stride=1, padding=0)
    dense.append(D)
    biases.append(b)
    assert len(dense) == NUM_CHAIN

    # The two dominant matrices (convT8: 256x1024, output: 1024x768) are stored
    # int8 with per-column scales (halves the dominant weight DMA bytes).
    q9, s9 = _quantize_cols_int8(dense[8])
    q10, s10 = _quantize_cols_int8(dense[9])
    bf16_ws = tuple(jnp.asarray(d, compute_dtype) for d in dense[:8])

    # Single bias slab (one operand / one DMA instead of 11 tiny padded ones).
    slab_w = _round_up(max(b.size for b in biases), 128)
    bias_slab = np.zeros((NUM_CHAIN, slab_w), np.float32)
    for i, b in enumerate(biases):
        bias_slab[i, :b.size] = b

    return (bf16_ws,
            jnp.asarray(q9), jnp.asarray(s9),
            jnp.asarray(q10), jnp.asarray(s10),
            jnp.asarray(bias_slab))


# --------------------------------------------------------------------------
# Deterministic parameter init (PyTorch parameter layouts)
# --------------------------------------------------------------------------

def init_params(key, *, conv_layers, hidden, height, width, input_channels, k):
    C = conv_layers
    feat = (height // 16) * (width // 16) * 2 * C
    specs = {
        'conv1_w': (C, input_channels, k, k),       'conv1_b': (C,),
        'conv2_w': (C, C, k, k),                    'conv2_b': (C,),
        'conv3_w': (2 * C, C, k, k),                'conv3_b': (2 * C,),
        'conv4_w': (2 * C, 2 * C, k, k),            'conv4_b': (2 * C,),
        'bottleneck_w': (hidden, feat),             'bottleneck_b': (hidden,),
        'dec_w': (feat, hidden),                    'dec_b': (feat,),
        'conv5_w': (2 * C, 2 * C, k - 1, k - 1),    'conv5_b': (2 * C,),
        'conv6_w': (2 * C, 2 * C, k - 1, k - 1),    'conv6_b': (2 * C,),
        'conv7_w': (2 * C, C, k - 1, k - 1),        'conv7_b': (C,),
        'conv8_w': (C, C, k - 1, k - 1),            'conv8_b': (C,),
        'out_w': (input_channels, C, k - 2, k - 2), 'out_b': (input_channels,),
    }
    params = {}
    keys = jax.random.split(key, len(specs))
    for kk, (name, shape) in zip(keys, specs.items()):
        fan_in = math.prod(shape[1:]) if len(shape) > 1 else shape[0]
        params[name] = (jax.random.normal(kk, shape, jnp.float32)
                        * (1.0 / math.sqrt(float(fan_in))))
    return params


# --------------------------------------------------------------------------
# Pure-JAX reference (XLA convs) for a runtime sanity check
# --------------------------------------------------------------------------

def dae_reference(image, noise, params, *, noise_scale, conv_layers, height, width):
    dn = ('NCHW', 'OIHW', 'NCHW')

    def conv(x, w, b, stride, pad):
        y = jax.lax.conv_general_dilated(x, w, (stride, stride),
                                         ((pad, pad), (pad, pad)),
                                         dimension_numbers=dn)
        return y + b[None, :, None, None]

    def convT(x, w, b):                        # PyTorch ConvTranspose2d, pad 0
        k = w.shape[2]
        wt = jnp.transpose(w, (1, 0, 2, 3))[:, :, ::-1, ::-1]
        y = jax.lax.conv_general_dilated(x, wt, (1, 1),
                                         ((k - 1, k - 1), (k - 1, k - 1)),
                                         lhs_dilation=(2, 2),
                                         dimension_numbers=dn)
        return y + b[None, :, None, None]

    r = jax.nn.relu
    x = image + noise_scale * noise
    x = r(conv(x, params['conv1_w'], params['conv1_b'], 2, 1))
    x = r(conv(x, params['conv2_w'], params['conv2_b'], 2, 1))
    x = r(conv(x, params['conv3_w'], params['conv3_b'], 2, 1))
    x = r(conv(x, params['conv4_w'], params['conv4_b'], 2, 1))
    n = x.shape[0]
    encoded = x.reshape(n, -1) @ params['bottleneck_w'].T + params['bottleneck_b']
    d = encoded @ params['dec_w'].T + params['dec_b']
    d = d.reshape(n, 2 * conv_layers, height // 16, width // 16)
    d = r(convT(d, params['conv5_w'], params['conv5_b']))
    d = r(convT(d, params['conv6_w'], params['conv6_b']))
    d = r(convT(d, params['conv7_w'], params['conv7_b']))
    d = r(convT(d, params['conv8_w'], params['conv8_b']))
    decoded = conv(d, params['out_w'], params['out_b'], 1, 0)
    return decoded, encoded


# --------------------------------------------------------------------------

if __name__ == "__main__":
    N, H, W = 2, 16, 16
    INPUT_CHANNELS = 3
    CONV_LAYERS = 4
    HIDDEN = 32
    KSIZE = 3
    NOISE_SCALE = 0.1

    root = jax.random.PRNGKey(0)
    k_params, k_img, k_noise = jax.random.split(root, 3)

    params = init_params(k_params, conv_layers=CONV_LAYERS, hidden=HIDDEN,
                         height=H, width=W, input_channels=INPUT_CHANNELS,
                         k=KSIZE)
    packed = pack_params(params, height=H, width=W, hidden=HIDDEN)

    image = jax.random.normal(k_img, (N, INPUT_CHANNELS, H, W), jnp.float32)
    # TODO(synk): torch.randn noise replaced by jax.random.normal (same
    # distribution, different PRNG stream), added inside the fused kernel.
    noise = jax.random.normal(k_noise, (N, 3, H, W), jnp.float32)

    fwd = jax.jit(functools.partial(dae_forward, noise_scale=NOISE_SCALE,
                                    hidden=HIDDEN))
    decoded, encoded = fwd(image, noise, packed)
    jax.block_until_ready((decoded, encoded))

    assert decoded.shape == (N, INPUT_CHANNELS, H, W), decoded.shape
    assert encoded.shape == (N, HIDDEN), encoded.shape
    assert decoded.dtype == jnp.float32 and encoded.dtype == jnp.float32

    # sanity check vs an XLA-conv reference
    # (loose tolerance: bf16 MXU operands + int8 weights for the last 2 layers)
    ref_dec, ref_enc = dae_reference(image, noise, params,
                                     noise_scale=NOISE_SCALE,
                                     conv_layers=CONV_LAYERS, height=H, width=W)
    for got, ref in ((decoded, ref_dec), (encoded, ref_enc)):
        scale = float(jnp.max(jnp.abs(ref)))
        err = float(jnp.max(jnp.abs(got - ref)))
        assert err <= 0.1 * scale + 1e-3, (err, scale)

    print("KERNEL_OK")
</pallas_src>

<mosaic_0001>
module attributes {stable_mosaic.version = 11 : i64} {
  func.func @_dae_fused_kernel(%arg0: i32, %arg1: memref<8x768xf32, #tpu.memory_space<vmem>>, %arg2: memref<8x768xf32, #tpu.memory_space<vmem>>, %arg3: memref<768x256xbf16, #tpu.memory_space<vmem>>, %arg4: memref<256x64xbf16, #tpu.memory_space<vmem>>, %arg5: memref<64x32xbf16, #tpu.memory_space<vmem>>, %arg6: memref<32x8xbf16, #tpu.memory_space<vmem>>, %arg7: memref<8x136xbf16, #tpu.memory_space<vmem>>, %arg8: memref<8x32xbf16, #tpu.memory_space<vmem>>, %arg9: memref<32x128xbf16, #tpu.memory_space<vmem>>, %arg10: memref<128x256xbf16, #tpu.memory_space<vmem>>, %arg11: memref<256x1024xi8, #tpu.memory_space<vmem>>, %arg12: memref<1x1024xf32, #tpu.memory_space<vmem>>, %arg13: memref<1024x768xi8, #tpu.memory_space<vmem>>, %arg14: memref<1x768xf32, #tpu.memory_space<vmem>>, %arg15: memref<10x1024xf32, #tpu.memory_space<vmem>>, %arg16: memref<8x768xf32, #tpu.memory_space<vmem>>, %arg17: memref<8x128xf32, #tpu.memory_space<vmem>>, %arg18: memref<256x1024xbf16, #tpu.memory_space<vmem>>, %arg19: memref<1024x768xbf16, #tpu.memory_space<vmem>>) attributes {dimension_semantics = [#tpu.dimension_semantics<arbitrary>], iteration_bounds = array<i64: 1>, scalar_prefetch = 0 : i64, scratch_operands = 2 : i64, tpu.core_type = #tpu.core_type<tc>, window_params = [{transform_indices = @transform_0, window_bounds = array<i64: 8, 768>}, {transform_indices = @transform_1, window_bounds = array<i64: 8, 768>}, {pipeline_mode = #tpu.pipeline_mode<synchronous>, transform_indices = @transform_2, window_bounds = array<i64: 768, 256>}, {pipeline_mode = #tpu.pipeline_mode<synchronous>, transform_indices = @transform_3, window_bounds = array<i64: 256, 64>}, {pipeline_mode = #tpu.pipeline_mode<synchronous>, transform_indices = @transform_4, window_bounds = array<i64: 64, 32>}, {pipeline_mode = #tpu.pipeline_mode<synchronous>, transform_indices = @transform_5, window_bounds = array<i64: 32, 8>}, {pipeline_mode = #tpu.pipeline_mode<synchronous>, transform_indices = @transform_6, window_bounds = array<i64: 8, 136>}, {pipeline_mode = #tpu.pipeline_mode<synchronous>, transform_indices = @transform_7, window_bounds = array<i64: 8, 32>}, {pipeline_mode = #tpu.pipeline_mode<synchronous>, transform_indices = @transform_8, window_bounds = array<i64: 32, 128>}, {pipeline_mode = #tpu.pipeline_mode<synchronous>, transform_indices = @transform_9, window_bounds = array<i64: 128, 256>}, {pipeline_mode = #tpu.pipeline_mode<synchronous>, transform_indices = @transform_10, window_bounds = array<i64: 256, 1024>}, {pipeline_mode = #tpu.pipeline_mode<synchronous>, transform_indices = @transform_11, window_bounds = array<i64: 1, 1024>}, {pipeline_mode = #tpu.pipeline_mode<synchronous>, transform_indices = @transform_12, window_bounds = array<i64: 1024, 768>}, {pipeline_mode = #tpu.pipeline_mode<synchronous>, transform_indices = @transform_13, window_bounds = array<i64: 1, 768>}, {pipeline_mode = #tpu.pipeline_mode<synchronous>, transform_indices = @transform_14, window_bounds = array<i64: 10, 1024>}, {transform_indices = @transform_15, window_bounds = array<i64: 8, 768>}, {transform_indices = @transform_16, window_bounds = array<i64: 8, 128>}]} {
    %c0_i32 = arith.constant 0 : i32
    %0 = arith.cmpi eq, %arg0, %c0_i32 : i32
    %1 = arith.extui %0 : i1 to i32
    %c0_i32_0 = arith.constant 0 : i32
    %2 = arith.cmpi ne, %1, %c0_i32_0 : i32
    scf.if %2 {
      %c0_57 = arith.constant 0 : index
      %c0_58 = arith.constant 0 : index
      %88 = vector.load %arg11[%c0_57, %c0_58] : memref<256x1024xi8, #tpu.memory_space<vmem>>, vector<256x1024xi8>
      %89 = arith.sitofp %88 : vector<256x1024xi8> to vector<256x1024xf32>
      %c0_59 = arith.constant 0 : index
      %c0_60 = arith.constant 0 : index
      %90 = vector.load %arg12[%c0_59, %c0_60] : memref<1x1024xf32, #tpu.memory_space<vmem>>, vector<1x1024xf32>
      %91 = vector.broadcast %90 : vector<1x1024xf32> to vector<256x1024xf32>
      %92 = arith.mulf %89, %91 : vector<256x1024xf32>
      %93 = arith.truncf %92 : vector<256x1024xf32> to vector<256x1024xbf16>
      %c0_61 = arith.constant 0 : index
      %c0_62 = arith.constant 0 : index
      %94 = vector.load %arg18[%c0_61, %c0_62] : memref<256x1024xbf16, #tpu.memory_space<vmem>>, vector<256x1024xbf16>
      tpu.vector_store %arg18[%c0_61, %c0_62], %93 {strides = array<i32>} : memref<256x1024xbf16, #tpu.memory_space<vmem>>, vector<256x1024xbf16>,
      %c0_63 = arith.constant 0 : index
      %c0_64 = arith.constant 0 : index
      %95 = vector.load %arg13[%c0_63, %c0_64] : memref<1024x768xi8, #tpu.memory_space<vmem>>, vector<1024x768xi8>
      %96 = arith.sitofp %95 : vector<1024x768xi8> to vector<1024x768xf32>
      %c0_65 = arith.constant 0 : index
      %c0_66 = arith.constant 0 : index
      %97 = vector.load %arg14[%c0_65, %c0_66] : memref<1x768xf32, #tpu.memory_space<vmem>>, vector<1x768xf32>
      %98 = vector.broadcast %97 : vector<1x768xf32> to vector<1024x768xf32>
      %99 = arith.mulf %96, %98 : vector<1024x768xf32>
      %100 = arith.truncf %99 : vector<1024x768xf32> to vector<1024x768xbf16>
      %c0_67 = arith.constant 0 : index
      %c0_68 = arith.constant 0 : index
      %101 = vector.load %arg19[%c0_67, %c0_68] : memref<1024x768xbf16, #tpu.memory_space<vmem>>, vector<1024x768xbf16>
      tpu.vector_store %arg19[%c0_67, %c0_68], %100 {strides = array<i32>} : memref<1024x768xbf16, #tpu.memory_space<vmem>>, vector<1024x768xbf16>,
    } else {
    }
    %c0 = arith.constant 0 : index
    %c0_1 = arith.constant 0 : index
    %3 = vector.load %arg1[%c0, %c0_1] : memref<8x768xf32, #tpu.memory_space<vmem>>, vector<8x768xf32>
    %c0_2 = arith.constant 0 : index
    %c0_3 = arith.constant 0 : index
    %4 = vector.load %arg2[%c0_2, %c0_3] : memref<8x768xf32, #tpu.memory_space<vmem>>, vector<8x768xf32>
    %cst = arith.constant 1.000000e-01 : f32
    %5 = vector.broadcast %cst : f32 to vector<8x768xf32>
    %6 = arith.mulf %5, %4 : vector<8x768xf32>
    %7 = arith.addf %3, %6 : vector<8x768xf32>
    %c0_4 = arith.constant 0 : index
    %c0_5 = arith.constant 0 : index
    %8 = vector.load %arg3[%c0_4, %c0_5] : memref<768x256xbf16, #tpu.memory_space<vmem>>, vector<768x256xbf16>
    %c0_6 = arith.constant 0 : index
    %c0_7 = arith.constant 0 : index
    %9 = vector.load %arg15[%c0_6, %c0_7] : memref<10x1024xf32, #tpu.memory_space<vmem>>, vector<1x256xf32>
    %10 = arith.truncf %7 : vector<8x768xf32> to vector<8x768xbf16>
    %cst_8 = arith.constant dense<0.000000e+00> : vector<8x256xf32>
    %11 = tpu.matmul %10, %8, %cst_8 {dimension_numbers = #tpu.dot_dimension_numbers<[1], [0], [0], [1], [0, 0, 1, 1], [], []>} : vector<8x768xbf16>, vector<768x256xbf16>, vector<8x256xf32> -> vector<8x256xf32>
    %12 = vector.broadcast %9 : vector<1x256xf32> to vector<8x256xf32>
    %13 = arith.addf %11, %12 : vector<8x256xf32>
    %cst_9 = arith.constant 0.000000e+00 : f32
    %14 = vector.broadcast %cst_9 : f32 to vector<8x256xf32>
    %15 = arith.maximumf %13, %14 : vector<8x256xf32>
    %c0_10 = arith.constant 0 : index
    %c0_11 = arith.constant 0 : index
    %16 = vector.load %arg4[%c0_10, %c0_11] : memref<256x64xbf16, #tpu.memory_space<vmem>>, vector<256x64xbf16>
    %c1 = arith.constant 1 : index
    %c0_12 = arith.constant 0 : index
    %17 = vector.load %arg15[%c1, %c0_12] : memref<10x1024xf32, #tpu.memory_space<vmem>>, vector<1x64xf32>
    %18 = arith.truncf %15 : vector<8x256xf32> to vector<8x256xbf16>
    %cst_13 = arith.constant dense<0.000000e+00> : vector<8x64xf32>
    %19 = tpu.matmul %18, %16, %cst_13 {dimension_numbers = #tpu.dot_dimension_numbers<[1], [0], [0], [1], [0, 0, 1, 1], [], []>} : vector<8x256xbf16>, vector<256x64xbf16>, vector<8x64xf32> -> vector<8x64xf32>
    %20 = vector.broadcast %17 : vector<1x64xf32> to vector<8x64xf32>
    %21 = arith.addf %19, %20 : vector<8x64xf32>
    %cst_14 = arith.constant 0.000000e+00 : f32
    %22 = vector.broadcast %cst_14 : f32 to vector<8x64xf32>
    %23 = arith.maximumf %21, %22 : vector<8x64xf32>
    %c0_15 = arith.constant 0 : index
    %c0_16 = arith.constant 0 : index
    %24 = vector.load %arg5[%c0_15, %c0_16] : memref<64x32xbf16, #tpu.memory_space<vmem>>, vector<64x32xbf16>
    %c2 = arith.constant 2 : index
    %c0_17 = arith.constant 0 : index
    %25 = vector.load %arg15[%c2, %c0_17] : memref<10x1024xf32, #tpu.memory_space<vmem>>, vector<1x32xf32>
    %26 = arith.truncf %23 : vector<8x64xf32> to vector<8x64xbf16>
    %cst_18 = arith.constant dense<0.000000e+00> : vector<8x32xf32>
    %27 = tpu.matmul %26, %24, %cst_18 {dimension_numbers = #tpu.dot_dimension_numbers<[1], [0], [0], [1], [0, 0, 1, 1], [], []>} : vector<8x64xbf16>, vector<64x32xbf16>, vector<8x32xf32> -> vector<8x32xf32>
    %28 = vector.broadcast %25 : vector<1x32xf32> to vector<8x32xf32>
    %29 = arith.addf %27, %28 : vector<8x32xf32>
    %cst_19 = arith.constant 0.000000e+00 : f32
    %30 = vector.broadcast %cst_19 : f32 to vector<8x32xf32>
    %31 = arith.maximumf %29, %30 : vector<8x32xf32>
    %c0_20 = arith.constant 0 : index
    %c0_21 = arith.constant 0 : index
    %32 = vector.load %arg6[%c0_20, %c0_21] : memref<32x8xbf16, #tpu.memory_space<vmem>>, vector<32x8xbf16>
    %c3 = arith.constant 3 : index
    %c0_22 = arith.constant 0 : index
    %33 = vector.load %arg15[%c3, %c0_22] : memref<10x1024xf32, #tpu.memory_space<vmem>>, vector<1x8xf32>
    %34 = arith.truncf %31 : vector<8x32xf32> to vector<8x32xbf16>
    %cst_23 = arith.constant dense<0.000000e+00> : vector<8x8xf32>
    %35 = tpu.matmul %34, %32, %cst_23 {dimension_numbers = #tpu.dot_dimension_numbers<[1], [0], [0], [1], [0, 0, 1, 1], [], []>} : vector<8x32xbf16>, vector<32x8xbf16>, vector<8x8xf32> -> vector<8x8xf32>
    %36 = vector.broadcast %33 : vector<1x8xf32> to vector<8x8xf32>
    %37 = arith.addf %35, %36 : vector<8x8xf32>
    %cst_24 = arith.constant 0.000000e+00 : f32
    %38 = vector.broadcast %cst_24 : f32 to vector<8x8xf32>
    %39 = arith.maximumf %37, %38 : vector<8x8xf32>
    %c0_25 = arith.constant 0 : index
    %c0_26 = arith.constant 0 : index
    %40 = vector.load %arg7[%c0_25, %c0_26] : memref<8x136xbf16, #tpu.memory_space<vmem>>, vector<8x136xbf16>
    %c4 = arith.constant 4 : index
    %c0_27 = arith.constant 0 : index
    %41 = vector.load %arg15[%c4, %c0_27] : memref<10x1024xf32, #tpu.memory_space<vmem>>, vector<1x136xf32>
    %42 = arith.truncf %39 : vector<8x8xf32> to vector<8x8xbf16>
    %cst_28 = arith.constant dense<0.000000e+00> : vector<8x136xf32>
    %43 = tpu.matmul %42, %40, %cst_28 {dimension_numbers = #tpu.dot_dimension_numbers<[1], [0], [0], [1], [0, 0, 1, 1], [], []>} : vector<8x8xbf16>, vector<8x136xbf16>, vector<8x136xf32> -> vector<8x136xf32>
    %44 = vector.broadcast %41 : vector<1x136xf32> to vector<8x136xf32>
    %45 = arith.addf %43, %44 : vector<8x136xf32>
    %46 = vector.extract_strided_slice %45 {offsets = [0, 0], sizes = [8, 128], strides = [1, 1]} : vector<8x136xf32> to vector<8x128xf32>
    %c0_29 = arith.constant 0 : index
    %c0_30 = arith.constant 0 : index
    %47 = vector.load %arg17[%c0_29, %c0_30] : memref<8x128xf32, #tpu.memory_space<vmem>>, vector<8x128xf32>
    tpu.vector_store %arg17[%c0_29, %c0_30], %46 {strides = array<i32>} : memref<8x128xf32, #tpu.memory_space<vmem>>, vector<8x128xf32>,
    %48 = vector.extract_strided_slice %45 {offsets = [0, 128], sizes = [8, 8], strides = [1, 1]} : vector<8x136xf32> to vector<8x8xf32>
    %c0_31 = arith.constant 0 : index
    %c0_32 = arith.constant 0 : index
    %49 = vector.load %arg8[%c0_31, %c0_32] : memref<8x32xbf16, #tpu.memory_space<vmem>>, vector<8x32xbf16>
    %c5 = arith.constant 5 : index
    %c0_33 = arith.constant 0 : index
    %50 = vector.load %arg15[%c5, %c0_33] : memref<10x1024xf32, #tpu.memory_space<vmem>>, vector<1x32xf32>
    %51 = arith.truncf %48 : vector<8x8xf32> to vector<8x8xbf16>
    %cst_34 = arith.constant dense<0.000000e+00> : vector<8x32xf32>
    %52 = tpu.matmul %51, %49, %cst_34 {dimension_numbers = #tpu.dot_dimension_numbers<[1], [0], [0], [1], [0, 0, 1, 1], [], []>} : vector<8x8xbf16>, vector<8x32xbf16>, vector<8x32xf32> -> vector<8x32xf32>
    %53 = vector.broadcast %50 : vector<1x32xf32> to vector<8x32xf32>
    %54 = arith.addf %52, %53 : vector<8x32xf32>
    %cst_35 = arith.constant 0.000000e+00 : f32
    %55 = vector.broadcast %cst_35 : f32 to vector<8x32xf32>
    %56 = arith.maximumf %54, %55 : vector<8x32xf32>
    %c0_36 = arith.constant 0 : index
    %c0_37 = arith.constant 0 : index
    %57 = vector.load %arg9[%c0_36, %c0_37] : memref<32x128xbf16, #tpu.memory_space<vmem>>, vector<32x128xbf16>
    %c6 = arith.constant 6 : index
    %c0_38 = arith.constant 0 : index
    %58 = vector.load %arg15[%c6, %c0_38] : memref<10x1024xf32, #tpu.memory_space<vmem>>, vector<1x128xf32>
    %59 = arith.truncf %56 : vector<8x32xf32> to vector<8x32xbf16>
    %cst_39 = arith.constant dense<0.000000e+00> : vector<8x128xf32>
    %60 = tpu.matmul %59, %57, %cst_39 {dimension_numbers = #tpu.dot_dimension_numbers<[1], [0], [0], [1], [0, 0, 1, 1], [], []>} : vector<8x32xbf16>, vector<32x128xbf16>, vector<8x128xf32> -> vector<8x128xf32>
    %61 = vector.broadcast %58 : vector<1x128xf32> to vector<8x128xf32>
    %62 = arith.addf %60, %61 : vector<8x128xf32>
    %cst_40 = arith.constant 0.000000e+00 : f32
    %63 = vector.broadcast %cst_40 : f32 to vector<8x128xf32>
    %64 = arith.maximumf %62, %63 : vector<8x128xf32>
    %c0_41 = arith.constant 0 : index
    %c0_42 = arith.constant 0 : index
    %65 = vector.load %arg10[%c0_41, %c0_42] : memref<128x256xbf16, #tpu.memory_space<vmem>>, vector<128x256xbf16>
    %c7 = arith.constant 7 : index
    %c0_43 = arith.constant 0 : index
    %66 = vector.load %arg15[%c7, %c0_43] : memref<10x1024xf32, #tpu.memory_space<vmem>>, vector<1x256xf32>
    %67 = arith.truncf %64 : vector<8x128xf32> to vector<8x128xbf16>
    %cst_44 = arith.constant dense<0.000000e+00> : vector<8x256xf32>
    %68 = tpu.matmul %67, %65, %cst_44 {dimension_numbers = #tpu.dot_dimension_numbers<[1], [0], [0], [1], [0, 0, 1, 1], [], []>} : vector<8x128xbf16>, vector<128x256xbf16>, vector<8x256xf32> -> vector<8x256xf32>
    %69 = vector.broadcast %66 : vector<1x256xf32> to vector<8x256xf32>
    %70 = arith.addf %68, %69 : vector<8x256xf32>
    %cst_45 = arith.constant 0.000000e+00 : f32
    %71 = vector.broadcast %cst_45 : f32 to vector<8x256xf32>
    %72 = arith.maximumf %70, %71 : vector<8x256xf32>
    %c0_46 = arith.constant 0 : index
    %c0_47 = arith.constant 0 : index
    %73 = vector.load %arg18[%c0_46, %c0_47] : memref<256x1024xbf16, #tpu.memory_space<vmem>>, vector<256x1024xbf16>
    %c8 = arith.constant 8 : index
    %c0_48 = arith.constant 0 : index
    %74 = vector.load %arg15[%c8, %c0_48] : memref<10x1024xf32, #tpu.memory_space<vmem>>, vector<1x1024xf32>
    %75 = arith.truncf %72 : vector<8x256xf32> to vector<8x256xbf16>
    %cst_49 = arith.constant dense<0.000000e+00> : vector<8x1024xf32>
    %76 = tpu.matmul %75, %73, %cst_49 {dimension_numbers = #tpu.dot_dimension_numbers<[1], [0], [0], [1], [0, 0, 1, 1], [], []>} : vector<8x256xbf16>, vector<256x1024xbf16>, vector<8x1024xf32> -> vector<8x1024xf32>
    %77 = vector.broadcast %74 : vector<1x1024xf32> to vector<8x1024xf32>
    %78 = arith.addf %76, %77 : vector<8x1024xf32>
    %cst_50 = arith.constant 0.000000e+00 : f32
    %79 = vector.broadcast %cst_50 : f32 to vector<8x1024xf32>
    %80 = arith.maximumf %78, %79 : vector<8x1024xf32>
    %c0_51 = arith.constant 0 : index
    %c0_52 = arith.constant 0 : index
    %81 = vector.load %arg19[%c0_51, %c0_52] : memref<1024x768xbf16, #tpu.memory_space<vmem>>, vector<1024x768xbf16>
    %c9 = arith.constant 9 : index
    %c0_53 = arith.constant 0 : index
    %82 = vector.load %arg15[%c9, %c0_53] : memref<10x1024xf32, #tpu.memory_space<vmem>>, vector<1x768xf32>
    %83 = arith.truncf %80 : vector<8x1024xf32> to vector<8x1024xbf16>
    %cst_54 = arith.constant dense<0.000000e+00> : vector<8x768xf32>
    %84 = tpu.matmul %83, %81, %cst_54 {dimension_numbers = #tpu.dot_dimension_numbers<[1], [0], [0], [1], [0, 0, 1, 1], [], []>} : vector<8x1024xbf16>, vector<1024x768xbf16>, vector<8x768xf32> -> vector<8x768xf32>
    %85 = vector.broadcast %82 : vector<1x768xf32> to vector<8x768xf32>
    %86 = arith.addf %84, %85 : vector<8x768xf32>
    %c0_55 = arith.constant 0 : index
    %c0_56 = arith.constant 0 : index
    %87 = vector.load %arg16[%c0_55, %c0_56] : memref<8x768xf32, #tpu.memory_space<vmem>>, vector<8x768xf32>
    tpu.vector_store %arg16[%c0_55, %c0_56], %86 {strides = array<i32>} : memref<8x768xf32, #tpu.memory_space<vmem>>, vector<8x768xf32>,
    return
  }
  func.func @transform_0(%arg0: i32) -> (i32, i32) {
    %c0_i32 = arith.constant 0 : i32
    %c0_i32_0 = arith.constant 0 : i32
    return %arg0, %c0_i32 : i32, i32
  }
  func.func @transform_1(%arg0: i32) -> (i32, i32) {
    %c0_i32 = arith.constant 0 : i32
    %c0_i32_0 = arith.constant 0 : i32
    return %arg0, %c0_i32 : i32, i32
  }
  func.func @transform_2(%arg0: i32) -> (i32, i32) {
    %c0_i32 = arith.constant 0 : i32
    %c0_i32_0 = arith.constant 0 : i32
    %c0_i32_1 = arith.constant 0 : i32
    return %c0_i32, %c0_i32_0 : i32, i32
  }
  func.func @transform_3(%arg0: i32) -> (i32, i32) {
    %c0_i32 = arith.constant 0 : i32
    %c0_i32_0 = arith.constant 0 : i32
    %c0_i32_1 = arith.constant 0 : i32
    return %c0_i32, %c0_i32_0 : i32, i32
  }
  func.func @transform_4(%arg0: i32) -> (i32, i32) {
    %c0_i32 = arith.constant 0 : i32
    %c0_i32_0 = arith.constant 0 : i32
    %c0_i32_1 = arith.constant 0 : i32
    return %c0_i32, %c0_i32_0 : i32, i32
  }
  func.func @transform_5(%arg0: i32) -> (i32, i32) {
    %c0_i32 = arith.constant 0 : i32
    %c0_i32_0 = arith.constant 0 : i32
    %c0_i32_1 = arith.constant 0 : i32
    return %c0_i32, %c0_i32_0 : i32, i32
  }
  func.func @transform_6(%arg0: i32) -> (i32, i32) {
    %c0_i32 = arith.constant 0 : i32
    %c0_i32_0 = arith.constant 0 : i32
    %c0_i32_1 = arith.constant 0 : i32
    return %c0_i32, %c0_i32_0 : i32, i32
  }
  func.func @transform_7(%arg0: i32) -> (i32, i32) {
    %c0_i32 = arith.constant 0 : i32
    %c0_i32_0 = arith.constant 0 : i32
    %c0_i32_1 = arith.constant 0 : i32
    return %c0_i32, %c0_i32_0 : i32, i32
  }
  func.func @transform_8(%arg0: i32) -> (i32, i32) {
    %c0_i32 = arith.constant 0 : i32
    %c0_i32_0 = arith.constant 0 : i32
    %c0_i32_1 = arith.constant 0 : i32
    return %c0_i32, %c0_i32_0 : i32, i32
  }
  func.func @transform_9(%arg0: i32) -> (i32, i32) {
    %c0_i32 = arith.constant 0 : i32
    %c0_i32_0 = arith.constant 0 : i32
    %c0_i32_1 = arith.constant 0 : i32
    return %c0_i32, %c0_i32_0 : i32, i32
  }
  func.func @transform_10(%arg0: i32) -> (i32, i32) {
    %c0_i32 = arith.constant 0 : i32
    %c0_i32_0 = arith.constant 0 : i32
    %c0_i32_1 = arith.constant 0 : i32
    return %c0_i32, %c0_i32_0 : i32, i32
  }
  func.func @transform_11(%arg0: i32) -> (i32, i32) {
    %c0_i32 = arith.constant 0 : i32
    %c0_i32_0 = arith.constant 0 : i32
    %c0_i32_1 = arith.constant 0 : i32
    return %c0_i32, %c0_i32_0 : i32, i32
  }
  func.func @transform_12(%arg0: i32) -> (i32, i32) {
    %c0_i32 = arith.constant 0 : i32
    %c0_i32_0 = arith.constant 0 : i32
    %c0_i32_1 = arith.constant 0 : i32
    return %c0_i32, %c0_i32_0 : i32, i32
  }
  func.func @transform_13(%arg0: i32) -> (i32, i32) {
    %c0_i32 = arith.constant 0 : i32
    %c0_i32_0 = arith.constant 0 : i32
    %c0_i32_1 = arith.constant 0 : i32
    return %c0_i32, %c0_i32_0 : i32, i32
  }
  func.func @transform_14(%arg0: i32) -> (i32, i32) {
    %c0_i32 = arith.constant 0 : i32
    %c0_i32_0 = arith.constant 0 : i32
    %c0_i32_1 = arith.constant 0 : i32
    return %c0_i32, %c0_i32_0 : i32, i32
  }
  func.func @transform_15(%arg0: i32) -> (i32, i32) {
    %c0_i32 = arith.constant 0 : i32
    %c0_i32_0 = arith.constant 0 : i32
    return %arg0, %c0_i32 : i32, i32
  }
  func.func @transform_16(%arg0: i32) -> (i32, i32) {
    %c0_i32 = arith.constant 0 : i32
    %c0_i32_0 = arith.constant 0 : i32
    return %arg0, %c0_i32 : i32, i32
  }
}

</mosaic_0001>

<llo_original>
// kernel: dae_forward.1
$region0: #{dae_forward.1}
  #allocation0 [shape = 'u32[]', space=smem, size = 0x4, offset = 0x4, fixed_abs, tag = 'smem constant byte address 0x4 - core index']
  #allocation1 [shape = 'u32[144,128]{1,0:T(1,128)}', space=vmem, size = 0x12000, scoped, tag = 'internal scratch']
  #allocation2 [shape = 'bf16[256,1024]{1,0:T(8,128)(2,1)}', space=vmem, size = 0x80000, scoped, tag = 'scratch operand']
  #allocation3 [shape = 'bf16[1024,768]{1,0:T(8,128)(2,1)}', space=vmem, size = 0x180000, scoped, tag = 'scratch operand']
  %s0 = inlined_call_operand.vmem [shape: f32[8,768], index: 0, kind: input, shape index: {}]
  %s1 = inlined_call_operand.vmem [shape: f32[8,768], index: 1, kind: input, shape index: {}]
  %s2 = inlined_call_operand.hbm [shape: bf16[768,256], index: 2, kind: input, shape index: {}]
  %s3 = inlined_call_operand.vmem [shape: bf16[256,64], index: 3, kind: input, shape index: {}]
  %s4 = inlined_call_operand.vmem [shape: bf16[64,32], index: 4, kind: input, shape index: {}]
  %s5 = inlined_call_operand.vmem [shape: bf16[32,8], index: 5, kind: input, shape index: {}]
  %s6 = inlined_call_operand.vmem [shape: bf16[8,136], index: 6, kind: input, shape index: {}]
  %s7 = inlined_call_operand.vmem [shape: bf16[8,32], index: 7, kind: input, shape index: {}]
  %s8 = inlined_call_operand.vmem [shape: bf16[32,128], index: 8, kind: input, shape index: {}]
  %s9 = inlined_call_operand.hbm [shape: bf16[128,256], index: 9, kind: input, shape index: {}]
  %s10 = inlined_call_operand.vmem [shape: s8[256,1024], index: 10, kind: input, shape index: {}]
  %s11 = inlined_call_operand.vmem [shape: f32[1,1024], index: 11, kind: input, shape index: {}]
  %s12 = inlined_call_operand.hbm [shape: s8[1024,768], index: 12, kind: input, shape index: {}]
  %s13 = inlined_call_operand.vmem [shape: f32[1,768], index: 13, kind: input, shape index: {}]
  %s14 = inlined_call_operand.hbm [shape: f32[10,1024], index: 14, kind: input, shape index: {}]
  %s15 = inlined_call_operand.vmem [shape: f32[8,768], index: 15, kind: output, shape index: {0}]
  %s16 = inlined_call_operand.vmem [shape: f32[8,128], index: 16, kind: output, shape index: {1}]
  %17 = xla_tuple %s15, %s16
  %s18 = sld [smem:[#allocation0]]
  $region98: #{dae_forward.1} parent=0
    _
  %s20 = ssub.s32 1, %s18
  %s21 = scalar_select 0, %s20, %s18
  $region1: #{dae_forward.1} parent=0
    #allocation4 [shape = 'u8[393216]{0}', space=vmem, size = 0x60000, scoped, tag = 'input window, operand 2, single buffered']
    #allocation5 [shape = 's32[1]{0}', space=sflag, size = 0x4, scoped, tag = 'scoped memory for dae_forward.1']
    #allocation6 [shape = 'u8[65536]{0}', space=vmem, size = 0x10000, scoped, tag = 'input window, operand 9, single buffered']
    #allocation7 [shape = 's32[1]{0}', space=sflag, size = 0x4, scoped, tag = 'scoped memory for dae_forward.1']
    #allocation8 [shape = 'u8[786432]{0}', space=vmem, size = 0xc0000, scoped, tag = 'input window, operand 12, single buffered']
    #allocation9 [shape = 'u8[65536]{0}', space=vmem, size = 0x10000, scoped, tag = 'input window, operand 14, single buffered']
    #allocation10 [shape = 's32[1]{0}', space=sflag, size = 0x4, scoped, tag = 'scoped memory for dae_forward.1']
    %22 = vsyncpa [#allocation5], 0
    %23 = vsyncpa [#allocation7], 0
    %24 = vsyncpa [#allocation10], 0
    // Predicated region
    $region2: #{dae_forward.1} parent=1 // pred_check
      _
    $region3: #{dae_forward.1} parent=1 // pred_check_branch
      %26 = sbr.rel (0) target = $region5
    $region4: #{dae_forward.1} parent=1 // pred_region
      _
    $region5: #{dae_forward.1} parent=1 // pred_fallthru
      _
    // Predicated region
    $region6: #{dae_forward.1} parent=1 // pred_check
      _
    $region7: #{dae_forward.1} parent=1 // pred_check_branch
      %28 = sbr.rel (0) target = $region9
    $region8: #{dae_forward.1} parent=1 // pred_region
      _
    $region9: #{dae_forward.1} parent=1 // pred_fallthru
      _
    // Predicated region
    $region10: #{dae_forward.1} parent=1 // pred_check
      _
    $region11: #{dae_forward.1} parent=1 // pred_check_branch
      %30 = sbr.rel (0) target = $region13
    $region12: #{dae_forward.1} parent=1 // pred_region
      %s32 = ssub.s32 12288, 12288
      %33 = vsyncadd [#allocation5], %s32
      %s34 = sshll.u32 [#allocation4], 4
      %s35 = int_to_ptr.vmem [resolvable:$true] %s34
      %40 = dma.hbm_to_vmem [thread:$0]  %s2, 12288, %s35, [#allocation5], 128, 128, 8
    $region13: #{dae_forward.1} parent=1 // pred_fallthru
      _
    // Predicated region
    $region14: #{dae_forward.1} parent=1 // pred_check
      _
    $region15: #{dae_forward.1} parent=1 // pred_check_branch
      %42 = sbr.rel (0) target = $region17
    $region16: #{dae_forward.1} parent=1 // pred_region
      _
    $region17: #{dae_forward.1} parent=1 // pred_fallthru
      _
    // Predicated region
    $region18: #{dae_forward.1} parent=1 // pred_check
      _
    $region19: #{dae_forward.1} parent=1 // pred_check_branch
      %44 = sbr.rel (0) target = $region21
    $region20: #{dae_forward.1} parent=1 // pred_region
      _
    $region21: #{dae_forward.1} parent=1 // pred_fallthru
      _
    // Predicated region
    $region22: #{dae_forward.1} parent=1 // pred_check
      _
    $region23: #{dae_forward.1} parent=1 // pred_check_branch
      %46 = sbr.rel (0) target = $region25
    $region24: #{dae_forward.1} parent=1 // pred_region
      _
    $region25: #{dae_forward.1} parent=1 // pred_fallthru
      _
    // Predicated region
    $region26: #{dae_forward.1} parent=1 // pred_check
      _
    $region27: #{dae_forward.1} parent=1 // pred_check_branch
      %48 = sbr.rel (0) target = $region29
    $region28: #{dae_forward.1} parent=1 // pred_region
      _
    $region29: #{dae_forward.1} parent=1 // pred_fallthru
      _
    // Predicated region
    $region30: #{dae_forward.1} parent=1 // pred_check
      _
    $region31: #{dae_forward.1} parent=1 // pred_check_branch
      %50 = sbr.rel (0) target = $region33
    $region32: #{dae_forward.1} parent=1 // pred_region
      _
    $region33: #{dae_forward.1} parent=1 // pred_fallthru
      _
    // Predicated region
    $region34: #{dae_forward.1} parent=1 // pred_check
      _
    $region35: #{dae_forward.1} parent=1 // pred_check_branch
      %52 = sbr.rel (0) target = $region37
    $region36: #{dae_forward.1} parent=1 // pred_region
      _
    $region37: #{dae_forward.1} parent=1 // pred_fallthru
      _
    // Predicated region
    $region38: #{dae_forward.1} parent=1 // pred_check
      _
    $region39: #{dae_forward.1} parent=1 // pred_check_branch
      %54 = sbr.rel (0) target = $region41
    $region40: #{dae_forward.1} parent=1 // pred_region
      %s56 = ssub.s32 2048, 2048
      %57 = vsyncadd [#allocation7], %s56
      %s58 = sshll.u32 [#allocation6], 4
      %s59 = int_to_ptr.vmem [resolvable:$true] %s58
      %64 = dma.hbm_to_vmem [thread:$0]  %s9, 2048, %s59, [#allocation7], 128, 128, 8
    $region41: #{dae_forward.1} parent=1 // pred_fallthru
      _
    // Predicated region
    $region42: #{dae_forward.1} parent=1 // pred_check
      _
    $region43: #{dae_forward.1} parent=1 // pred_check_branch
      %66 = sbr.rel (0) target = $region45
    $region44: #{dae_forward.1} parent=1 // pred_region
      _
    $region45: #{dae_forward.1} parent=1 // pred_fallthru
      _
    // Predicated region
    $region46: #{dae_forward.1} parent=1 // pred_check
      _
    $region47: #{dae_forward.1} parent=1 // pred_check_branch
      %68 = sbr.rel (0) target = $region49
    $region48: #{dae_forward.1} parent=1 // pred_region
      _
    $region49: #{dae_forward.1} parent=1 // pred_fallthru
      _
    // Predicated region
    $region50: #{dae_forward.1} parent=1 // pred_check
      _
    $region51: #{dae_forward.1} parent=1 // pred_check_branch
      %70 = sbr.rel (0) target = $region53
    $region52: #{dae_forward.1} parent=1 // pred_region
      %s72 = ssub.s32 24576, 24576
      %73 = vsyncadd [#allocation7], %s72
      %s74 = sshll.u32 [#allocation8], 4
      %s75 = int_to_ptr.vmem [resolvable:$true] %s74
      %80 = dma.hbm_to_vmem [thread:$0]  %s12, 24576, %s75, [#allocation7], 768, 768, 48
    $region53: #{dae_forward.1} parent=1 // pred_fallthru
      _
    // Predicated region
    $region54: #{dae_forward.1} parent=1 // pred_check
      _
    $region55: #{dae_forward.1} parent=1 // pred_check_branch
      %82 = sbr.rel (0) target = $region57
    $region56: #{dae_forward.1} parent=1 // pred_region
      _
    $region57: #{dae_forward.1} parent=1 // pred_fallthru
      _
    // Predicated region
    $region58: #{dae_forward.1} parent=1 // pred_check
      _
    $region59: #{dae_forward.1} parent=1 // pred_check_branch
      %84 = sbr.rel (0) target = $region61
    $region60: #{dae_forward.1} parent=1 // pred_region
      %s86 = ssub.s32 2048, 2048
      %87 = vsyncadd [#allocation10], %s86
      %s88 = sshll.u32 [#allocation9], 4
      %s89 = int_to_ptr.vmem [resolvable:$true] %s88
      %94 = dma.hbm_to_vmem [thread:$0]  %s14, 2048, %s89, [#allocation10], 1024, 1024, 64
    $region61: #{dae_forward.1} parent=1 // pred_fallthru
      _
    // Predicated region
    $region62: #{dae_forward.1} parent=1 // pred_check
      _
    $region63: #{dae_forward.1} parent=1 // pred_check_branch
      %96 = sbr.rel (0) target = $region65
    $region64: #{dae_forward.1} parent=1 // pred_region
      %97 = dma.done [#allocation5], 12288
    $region65: #{dae_forward.1} parent=1 // pred_fallthru
      _
    // Predicated region
    $region66: #{dae_forward.1} parent=1 // pred_check
      _
    $region67: #{dae_forward.1} parent=1 // pred_check_branch
      %99 = sbr.rel (0) target = $region69
    $region68: #{dae_forward.1} parent=1 // pred_region
      %100 = dma.done [#allocation7], 2048
    $region69: #{dae_forward.1} parent=1 // pred_fallthru
      _
    // Predicated region
    $region70: #{dae_forward.1} parent=1 // pred_check
      _
    $region71: #{dae_forward.1} parent=1 // pred_check_branch
      %102 = sbr.rel (0) target = $region73
    $region72: #{dae_forward.1} parent=1 // pred_region
      %103 = dma.done [#allocation7], 24576
    $region73: #{dae_forward.1} parent=1 // pred_fallthru
      _
    // Predicated region
    $region74: #{dae_forward.1} parent=1 // pred_check
      _
    $region75: #{dae_forward.1} parent=1 // pred_check_branch
      %105 = sbr.rel (0) target = $region77
    $region76: #{dae_forward.1} parent=1 // pred_region
      %106 = dma.done [#allocation10], 2048
    $region77: #{dae_forward.1} parent=1 // pred_fallthru
      _
    %p108 = scmp.eq.s32.totalorder 0, 0
    // Predicated region
    $region78: #{dae_forward.1} parent=1 // pred_check
      %p109 = pneg %p108
    $region79: #{dae_forward.1} parent=1 // pred_check_branch
      %111 = sbr.rel (%p109) target = $region81
    $region80: #{dae_forward.1} parent=1 // pred_region
      %v112 = vld [vmem:[%s10] sm:$0xff]
      %v113 = vld [vmem:[%s10 + $0x8] sm:$0xff]
      %v114 = vld [vmem:[%s10 + $0x10] sm:$0xff]
      %v115 = vld [vmem:[%s10 + $0x18] sm:$0xff]
      %v116 = vld [vmem:[%s10 + $0x20] sm:$0xff]
      %v117 = vld [vmem:[%s10 + $0x28] sm:$0xff]
      %v118 = vld [vmem:[%s10 + $0x30] sm:$0xff]
      %v119 = vld [vmem:[%s10 + $0x38] sm:$0xff]
      %v120 = vld [vmem:[%s10 + $0x40] sm:$0xff]
      %v121 = vld [vmem:[%s10 + $0x48] sm:$0xff]
      %v122 = vld [vmem:[%s10 + $0x50] sm:$0xff]
      %v123 = vld [vmem:[%s10 + $0x58] sm:$0xff]
      %v124 = vld [vmem:[%s10 + $0x60] sm:$0xff]
      %v125 = vld [vmem:[%s10 + $0x68] sm:$0xff]
      %v126 = vld [vmem:[%s10 + $0x70] sm:$0xff]
      %v127 = vld [vmem:[%s10 + $0x78] sm:$0xff]
      %v128 = vld [vmem:[%s10 + $0x80] sm:$0xff]
      %v129 = vld [vmem:[%s10 + $0x88] sm:$0xff]
      %v130 = vld [vmem:[%s10 + $0x90] sm:$0xff]
      %v131 = vld [vmem:[%s10 + $0x98] sm:$0xff]
      %v132 = vld [vmem:[%s10 + $0xa0] sm:$0xff]
      %v133 = vld [vmem:[%s10 + $0xa8] sm:$0xff]
      %v134 = vld [vmem:[%s10 + $0xb0] sm:$0xff]
      %v135 = vld [vmem:[%s10 + $0xb8] sm:$0xff]
      %v136 = vld [vmem:[%s10 + $0xc0] sm:$0xff]
      %v137 = vld [vmem:[%s10 + $0xc8] sm:$0xff]
      %v138 = vld [vmem:[%s10 + $0xd0] sm:$0xff]
      %v139 = vld [vmem:[%s10 + $0xd8] sm:$0xff]
      %v140 = vld [vmem:[%s10 + $0xe0] sm:$0xff]
      %v141 = vld [vmem:[%s10 + $0xe8] sm:$0xff]
      %v142 = vld [vmem:[%s10 + $0xf0] sm:$0xff]
      %v143 = vld [vmem:[%s10 + $0xf8] sm:$0xff]
      %v144 = vld [vmem:[%s10 + $0x100] sm:$0xff]
      %v145 = vld [vmem:[%s10 + $0x108] sm:$0xff]
      %v146 = vld [vmem:[%s10 + $0x110] sm:$0xff]
      %v147 = vld [vmem:[%s10 + $0x118] sm:$0xff]
      %v148 = vld [vmem:[%s10 + $0x120] sm:$0xff]
      %v149 = vld [vmem:[%s10 + $0x128] sm:$0xff]
      %v150 = vld [vmem:[%s10 + $0x130] sm:$0xff]
      %v151 = vld [vmem:[%s10 + $0x138] sm:$0xff]
      %v152 = vld [vmem:[%s10 + $0x140] sm:$0xff]
      %v153 = vld [vmem:[%s10 + $0x148] sm:$0xff]
      %v154 = vld [vmem:[%s10 + $0x150] sm:$0xff]
      %v155 = vld [vmem:[%s10 + $0x158] sm:$0xff]
      %v156 = vld [vmem:[%s10 + $0x160] sm:$0xff]
      %v157 = vld [vmem:[%s10 + $0x168] sm:$0xff]
      %v158 = vld [vmem:[%s10 + $0x170] sm:$0xff]
      %v159 = vld [vmem:[%s10 + $0x178] sm:$0xff]
      %v160 = vld [vmem:[%s10 + $0x180] sm:$0xff]
      %v161 = vld [vmem:[%s10 + $0x188] sm:$0xff]
      %v162 = vld [vmem:[%s10 + $0x190] sm:$0xff]
      %v163 = vld [vmem:[%s10 + $0x198] sm:$0xff]
      %v164 = vld [vmem:[%s10 + $0x1a0] sm:$0xff]
      %v165 = vld [vmem:[%s10 + $0x1a8] sm:$0xff]
      %v166 = vld [vmem:[%s10 + $0x1b0] sm:$0xff]
      %v167 = vld [vmem:[%s10 + $0x1b8] sm:$0xff]
      %v168 = vld [vmem:[%s10 + $0x1c0] sm:$0xff]
      %v169 = vld [vmem:[%s10 + $0x1c8] sm:$0xff]
      %v170 = vld [vmem:[%s10 + $0x1d0] sm:$0xff]
      %v171 = vld [vmem:[%s10 + $0x1d8] sm:$0xff]
      %v172 = vld [vmem:[%s10 + $0x1e0] sm:$0xff]
      %v173 = vld [vmem:[%s10 + $0x1e8] sm:$0xff]
      %v174 = vld [vmem:[%s10 + $0x1f0] sm:$0xff]
      %v175 = vld [vmem:[%s10 + $0x1f8] sm:$0xff]
      %v176 = vunpack.c.0.s8 %v112
      %v177 = vunpack.c.0.s8 %v113
      %v178 = vunpack.c.0.s8 %v114
      %v179 = vunpack.c.0.s8 %v115
      %v180 = vunpack.c.0.s8 %v116
      %v181 = vunpack.c.0.s8 %v117
      %v182 = vunpack.c.0.s8 %v118
      %v183 = vunpack.c.0.s8 %v119
      %v184 = vunpack.c.1.s8 %v112
      %v185 = vunpack.c.1.s8 %v113
      %v186 = vunpack.c.1.s8 %v114
      %v187 = vunpack.c.1.s8 %v115
      %v188 = vunpack.c.1.s8 %v116
      %v189 = vunpack.c.1.s8 %v117
      %v190 = vunpack.c.1.s8 %v118
      %v191 = vunpack.c.1.s8 %v119
      %v192 = vunpack.c.2.s8 %v112
      %v193 = vunpack.c.2.s8 %v113
      %v194 = vunpack.c.2.s8 %v114
      %v195 = vunpack.c.2.s8 %v115
      %v196 = vunpack.c.2.s8 %v116
      %v197 = vunpack.c.2.s8 %v117
      %v198 = vunpack.c.2.s8 %v118
      %v199 = vunpack.c.2.s8 %v119
      %v200 = vunpack.c.3.s8 %v112
      %v201 = vunpack.c.3.s8 %v113
      %v202 = vunpack.c.3.s8 %v114
      %v203 = vunpack.c.3.s8 %v115
      %v204 = vunpack.c.3.s8 %v116
      %v205 = vunpack.c.3.s8 %v117
      %v206 = vunpack.c.3.s8 %v118
      %v207 = vunpack.c.3.s8 %v119
      %v208 = vunpack.c.0.s8 %v120
      %v209 = vunpack.c.0.s8 %v121
      %v210 = vunpack.c.0.s8 %v122
      %v211 = vunpack.c.0.s8 %v123
      %v212 = vunpack.c.0.s8 %v124
      %v213 = vunpack.c.0.s8 %v125
      %v214 = vunpack.c.0.s8 %v126
      %v215 = vunpack.c.0.s8 %v127
      %v216 = vunpack.c.1.s8 %v120
      %v217 = vunpack.c.1.s8 %v121
      %v218 = vunpack.c.1.s8 %v122
      %v219 = vunpack.c.1.s8 %v123
      %v220 = vunpack.c.1.s8 %v124
      %v221 = vunpack.c.1.s8 %v125
      %v222 = vunpack.c.1.s8 %v126
      %v223 = vunpack.c.1.s8 %v127
      %v224 = vunpack.c.2.s8 %v120
      %v225 = vunpack.c.2.s8 %v121
      %v226 = vunpack.c.2.s8 %v122
      %v227 = vunpack.c.2.s8 %v123
      %v228 = vunpack.c.2.s8 %v124
      %v229 = vunpack.c.2.s8 %v125
      %v230 = vunpack.c.2.s8 %v126
      %v231 = vunpack.c.2.s8 %v127
      %v232 = vunpack.c.3.s8 %v120
      %v233 = vunpack.c.3.s8 %v121
      %v234 = vunpack.c.3.s8 %v122
      %v235 = vunpack.c.3.s8 %v123
      %v236 = vunpack.c.3.s8 %v124
      %v237 = vunpack.c.3.s8 %v125
      %v238 = vunpack.c.3.s8 %v126
      %v239 = vunpack.c.3.s8 %v127
      %v240 = vunpack.c.0.s8 %v128
      %v241 = vunpack.c.0.s8 %v129
      %v242 = vunpack.c.0.s8 %v130
      %v243 = vunpack.c.0.s8 %v131
      %v244 = vunpack.c.0.s8 %v132
      %v245 = vunpack.c.0.s8 %v133
      %v246 = vunpack.c.0.s8 %v134
      %v247 = vunpack.c.0.s8 %v135
      %v248 = vunpack.c.1.s8 %v128
      %v249 = vunpack.c.1.s8 %v129
      %v250 = vunpack.c.1.s8 %v130
      %v251 = vunpack.c.1.s8 %v131
      %v252 = vunpack.c.1.s8 %v132
      %v253 = vunpack.c.1.s8 %v133
      %v254 = vunpack.c.1.s8 %v134
      %v255 = vunpack.c.1.s8 %v135
      %v256 = vunpack.c.2.s8 %v128
      %v257 = vunpack.c.2.s8 %v129
      %v258 = vunpack.c.2.s8 %v130
      %v259 = vunpack.c.2.s8 %v131
      %v260 = vunpack.c.2.s8 %v132
      %v261 = vunpack.c.2.s8 %v133
      %v262 = vunpack.c.2.s8 %v134
      %v263 = vunpack.c.2.s8 %v135
      %v264 = vunpack.c.3.s8 %v128
      %v265 = vunpack.c.3.s8 %v129
      %v266 = vunpack.c.3.s8 %v130
      %v267 = vunpack.c.3.s8 %v131
      %v268 = vunpack.c.3.s8 %v132
      %v269 = vunpack.c.3.s8 %v133
      %v270 = vunpack.c.3.s8 %v134
      %v271 = vunpack.c.3.s8 %v135
      %v272 = vunpack.c.0.s8 %v136
      %v273 = vunpack.c.0.s8 %v137
      %v274 = vunpack.c.0.s8 %v138
      %v275 = vunpack.c.0.s8 %v139
      %v276 = vunpack.c.0.s8 %v140
      %v277 = vunpack.c.0.s8 %v141
      %v278 = vunpack.c.0.s8 %v142
      %v279 = vunpack.c.0.s8 %v143
      %v280 = vunpack.c.1.s8 %v136
      %v281 = vunpack.c.1.s8 %v137
      %v282 = vunpack.c.1.s8 %v138
      %v283 = vunpack.c.1.s8 %v139
      %v284 = vunpack.c.1.s8 %v140
      %v285 = vunpack.c.1.s8 %v141
      %v286 = vunpack.c.1.s8 %v142
      %v287 = vunpack.c.1.s8 %v143
      %v288 = vunpack.c.2.s8 %v136
      %v289 = vunpack.c.2.s8 %v137
      %v290 = vunpack.c.2.s8 %v138
      %v291 = vunpack.c.2.s8 %v139
      %v292 = vunpack.c.2.s8 %v140
      %v293 = vunpack.c.2.s8 %v141
      %v294 = vunpack.c.2.s8 %v142
      %v295 = vunpack.c.2.s8 %v143
      %v296 = vunpack.c.3.s8 %v136
      %v297 = vunpack.c.3.s8 %v137
      %v298 = vunpack.c.3.s8 %v138
      %v299 = vunpack.c.3.s8 %v139
      %v300 = vunpack.c.3.s8 %v140
      %v301 = vunpack.c.3.s8 %v141
      %v302 = vunpack.c.3.s8 %v142
      %v303 = vunpack.c.3.s8 %v143
      %v304 = vunpack.c.0.s8 %v144
      %v305 = vunpack.c.0.s8 %v145
      %v306 = vunpack.c.0.s8 %v146
      %v307 = vunpack.c.0.s8 %v147
      %v308 = vunpack.c.0.s8 %v148
      %v309 = vunpack.c.0.s8 %v149
      %v310 = vunpack.c.0.s8 %v150
      %v311 = vunpack.c.0.s8 %v151
      %v312 = vunpack.c.1.s8 %v144
      %v313 = vunpack.c.1.s8 %v145
      %v314 = vunpack.c.1.s8 %v146
      %v315 = vunpack.c.1.s8 %v147
      %v316 = vunpack.c.1.s8 %v148
      %v317 = vunpack.c.1.s8 %v149
      %v318 = vunpack.c.1.s8 %v150
      %v319 = vunpack.c.1.s8 %v151
      %v320 = vunpack.c.2.s8 %v144
      %v321 = vunpack.c.2.s8 %v145
      %v322 = vunpack.c.2.s8 %v146
      %v323 = vunpack.c.2.s8 %v147
      %v324 = vunpack.c.2.s8 %v148
      %v325 = vunpack.c.2.s8 %v149
      %v326 = vunpack.c.2.s8 %v150
      %v327 = vunpack.c.2.s8 %v151
      %v328 = vunpack.c.3.s8 %v144
      %v329 = vunpack.c.3.s8 %v145
      %v330 = vunpack.c.3.s8 %v146
      %v331 = vunpack.c.3.s8 %v147
      %v332 = vunpack.c.3.s8 %v148
      %v333 = vunpack.c.3.s8 %v149
      %v334 = vunpack.c.3.s8 %v150
      %v335 = vunpack.c.3.s8 %v151
      %v336 = vunpack.c.0.s8 %v152
      %v337 = vunpack.c.0.s8 %v153
      %v338 = vunpack.c.0.s8 %v154
      %v339 = vunpack.c.0.s8 %v155
      %v340 = vunpack.c.0.s8 %v156
      %v341 = vunpack.c.0.s8 %v157
      %v342 = vunpack.c.0.s8 %v158
      %v343 = vunpack.c.0.s8 %v159
      %v344 = vunpack.c.1.s8 %v152
      %v345 = vunpack.c.1.s8 %v153
      %v346 = vunpack.c.1.s8 %v154
      %v347 = vunpack.c.1.s8 %v155
      %v348 = vunpack.c.1.s8 %v156
      %v349 = vunpack.c.1.s8 %v157
      %v350 = vunpack.c.1.s8 %v158
      %v351 = vunpack.c.1.s8 %v159
      %v352 = vunpack.c.2.s8 %v152
      %v353 = vunpack.c.2.s8 %v153
      %v354 = vunpack.c.2.s8 %v154
      %v355 = vunpack.c.2.s8 %v155
      %v356 = vunpack.c.2.s8 %v156
      %v357 = vunpack.c.2.s8 %v157
      %v358 = vunpack.c.2.s8 %v158
      %v359 = vunpack.c.2.s8 %v159
      %v360 = vunpack.c.3.s8 %v152
      %v361 = vunpack.c.3.s8 %v153
      %v362 = vunpack.c.3.s8 %v154
      %v363 = vunpack.c.3.s8 %v155
      %v364 = vunpack.c.3.s8 %v156
      %v365 = vunpack.c.3.s8 %v157
      %v366 = vunpack.c.3.s8 %v158
      %v367 = vunpack.c.3.s8 %v159
      %v368 = vunpack.c.0.s8 %v160
      %v369 = vunpack.c.0.s8 %v161
      %v370 = vunpack.c.0.s8 %v162
      %v371 = vunpack.c.0.s8 %v163
      %v372 = vunpack.c.0.s8 %v164
      %v373 = vunpack.c.0.s8 %v165
      %v374 = vunpack.c.0.s8 %v166
      %v375 = vunpack.c.0.s8 %v167
      %v376 = vunpack.c.1.s8 %v160
      %v377 = vunpack.c.1.s8 %v161
      %v378 = vunpack.c.1.s8 %v162
      %v379 = vunpack.c.1.s8 %v163
      %v380 = vunpack.c.1.s8 %v164
      %v381 = vunpack.c.1.s8 %v165
      %v382 = vunpack.c.1.s8 %v166
      %v383 = vunpack.c.1.s8 %v167
      %v384 = vunpack.c.2.s8 %v160
      %v385 = vunpack.c.2.s8 %v161
      %v386 = vunpack.c.2.s8 %v162
      %v387 = vunpack.c.2.s8 %v163
      %v388 = vunpack.c.2.s8 %v164
      %v389 = vunpack.c.2.s8 %v165
      %v390 = vunpack.c.2.s8 %v166
      %v391 = vunpack.c.2.s8 %v167
      %v392 = vunpack.c.3.s8 %v160
      %v393 = vunpack.c.3.s8 %v161
      %v394 = vunpack.c.3.s8 %v162
      %v395 = vunpack.c.3.s8 %v163
      %v396 = vunpack.c.3.s8 %v164
      %v397 = vunpack.c.3.s8 %v165
      %v398 = vunpack.c.3.s8 %v166
      %v399 = vunpack.c.3.s8 %v167
      %v400 = vunpack.c.0.s8 %v168
      %v401 = vunpack.c.0.s8 %v169
      %v402 = vunpack.c.0.s8 %v170
      %v403 = vunpack.c.0.s8 %v171
      %v404 = vunpack.c.0.s8 %v172
      %v405 = vunpack.c.0.s8 %v173
      %v406 = vunpack.c.0.s8 %v174
      %v407 = vunpack.c.0.s8 %v175
      %v408 = vunpack.c.1.s8 %v168
      %v409 = vunpack.c.1.s8 %v169
      %v410 = vunpack.c.1.s8 %v170
      %v411 = vunpack.c.1.s8 %v171
      %v412 = vunpack.c.1.s8 %v172
      %v413 = vunpack.c.1.s8 %v173
      %v414 = vunpack.c.1.s8 %v174
      %v415 = vunpack.c.1.s8 %v175
      %v416 = vunpack.c.2.s8 %v168
      %v417 = vunpack.c.2.s8 %v169
      %v418 = vunpack.c.2.s8 %v170
      %v419 = vunpack.c.2.s8 %v171
      %v420 = vunpack.c.2.s8 %v172
      %v421 = vunpack.c.2.s8 %v173
      %v422 = vunpack.c.2.s8 %v174
      %v423 = vunpack.c.2.s8 %v175
      %v424 = vunpack.c.3.s8 %v168
      %v425 = vunpack.c.3.s8 %v169
      %v426 = vunpack.c.3.s8 %v170
      %v427 = vunpack.c.3.s8 %v171
      %v428 = vunpack.c.3.s8 %v172
      %v429 = vunpack.c.3.s8 %v173
      %v430 = vunpack.c.3.s8 %v174
      %v431 = vunpack.c.3.s8 %v175
      %v432 = vcvt.s32.f32 %v176
      %v433 = vcvt.s32.f32 %v177
      %v434 = vcvt.s32.f32 %v178
      %v435 = vcvt.s32.f32 %v179
      %v436 = vcvt.s32.f32 %v180
      %v437 = vcvt.s32.f32 %v181
      %v438 = vcvt.s32.f32 %v182
      %v439 = vcvt.s32.f32 %v183
      %v440 = vcvt.s32.f32 %v184
      %v441 = vcvt.s32.f32 %v185
      %v442 = vcvt.s32.f32 %v186
      %v443 = vcvt.s32.f32 %v187
      %v444 = vcvt.s32.f32 %v188
      %v445 = vcvt.s32.f32 %v189
      %v446 = vcvt.s32.f32 %v190
      %v447 = vcvt.s32.f32 %v191
      %v448 = vcvt.s32.f32 %v192
      %v449 = vcvt.s32.f32 %v193
      %v450 = vcvt.s32.f32 %v194
      %v451 = vcvt.s32.f32 %v195
      %v452 = vcvt.s32.f32 %v196
      %v453 = vcvt.s32.f32 %v197
      %v454 = vcvt.s32.f32 %v198
      %v455 = vcvt.s32.f32 %v199
      %v456 = vcvt.s32.f32 %v200
      %v457 = vcvt.s32.f32 %v201
      %v458 = vcvt.s32.f32 %v202
      %v459 = vcvt.s32.f32 %v203
      %v460 = vcvt.s32.f32 %v204
      %v461 = vcvt.s32.f32 %v205
      %v462 = vcvt.s32.f32 %v206
      %v463 = vcvt.s32.f32 %v207
      %v464 = vcvt.s32.f32 %v208
      %v465 = vcvt.s32.f32 %v209
      %v466 = vcvt.s32.f32 %v210
      %v467 = vcvt.s32.f32 %v211
      %v468 = vcvt.s32.f32 %v212
      %v469 = vcvt.s32.f32 %v213
      %v470 = vcvt.s32.f32 %v214
      %v471 = vcvt.s32.f32 %v215
      %v472 = vcvt.s32.f32 %v216
      %v473 = vcvt.s32.f32 %v217
      %v474 = vcvt.s32.f32 %v218
      %v475 = vcvt.s32.f32 %v219
      %v476 = vcvt.s32.f32 %v220
      %v477 = vcvt.s32.f32 %v221
      %v478 = vcvt.s32.f32 %v222
      %v479 = vcvt.s32.f32 %v223
      %v480 = vcvt.s32.f32 %v224
      %v481 = vcvt.s32.f32 %v225
      %v482 = vcvt.s32.f32 %v226
      %v483 = vcvt.s32.f32 %v227
      %v484 = vcvt.s32.f32 %v228
      %v485 = vcvt.s32.f32 %v229
      %v486 = vcvt.s32.f32 %v230
      %v487 = vcvt.s32.f32 %v231
      %v488 = vcvt.s32.f32 %v232
      %v489 = vcvt.s32.f32 %v233
      %v490 = vcvt.s32.f32 %v234
      %v491 = vcvt.s32.f32 %v235
      %v492 = vcvt.s32.f32 %v236
      %v493 = vcvt.s32.f32 %v237
      %v494 = vcvt.s32.f32 %v238
      %v495 = vcvt.s32.f32 %v239
      %v496 = vcvt.s32.f32 %v240
      %v497 = vcvt.s32.f32 %v241
      %v498 = vcvt.s32.f32 %v242
      %v499 = vcvt.s32.f32 %v243
      %v500 = vcvt.s32.f32 %v244
      %v501 = vcvt.s32.f32 %v245
      %v502 = vcvt.s32.f32 %v246
      %v503 = vcvt.s32.f32 %v247
      %v504 = vcvt.s32.f32 %v248
      %v505 = vcvt.s32.f32 %v249
      %v506 = vcvt.s32.f32 %v250
      %v507 = vcvt.s32.f32 %v251
      %v508 = vcvt.s32.f32 %v252
      %v509 = vcvt.s32.f32 %v253
      %v510 = vcvt.s32.f32 %v254
      %v511 = vcvt.s32.f32 %v255
      %v512 = vcvt.s32.f32 %v256
      %v513 = vcvt.s32.f32 %v257
      %v514 = vcvt.s32.f32 %v258
      %v515 = vcvt.s32.f32 %v259
      %v516 = vcvt.s32.f32 %v260
      %v517 = vcvt.s32.f32 %v261
      %v518 = vcvt.s32.f32 %v262
      %v519 = vcvt.s32.f32 %v263
      %v520 = vcvt.s32.f32 %v264
      %v521 = vcvt.s32.f32 %v265
      %v522 = vcvt.s32.f32 %v266
      %v523 = vcvt.s32.f32 %v267
      %v524 = vcvt.s32.f32 %v268
      %v525 = vcvt.s32.f32 %v269
      %v526 = vcvt.s32.f32 %v270
      %v527 = vcvt.s32.f32 %v271
      %v528 = vcvt.s32.f32 %v272
      %v529 = vcvt.s32.f32 %v273
      %v530 = vcvt.s32.f32 %v274
      %v531 = vcvt.s32.f32 %v275
      %v532 = vcvt.s32.f32 %v276
      %v533 = vcvt.s32.f32 %v277
      %v534 = vcvt.s32.f32 %v278
      %v535 = vcvt.s32.f32 %v279
      %v536 = vcvt.s32.f32 %v280
      %v537 = vcvt.s32.f32 %v281
      %v538 = vcvt.s32.f32 %v282
      %v539 = vcvt.s32.f32 %v283
      %v540 = vcvt.s32.f32 %v284
      %v541 = vcvt.s32.f32 %v285
      %v542 = vcvt.s32.f32 %v286
      %v543 = vcvt.s32.f32 %v287
      %v544 = vcvt.s32.f32 %v288
      %v545 = vcvt.s32.f32 %v289
      %v546 = vcvt.s32.f32 %v290
      %v547 = vcvt.s32.f32 %v291
      %v548 = vcvt.s32.f32 %v292
      %v549 = vcvt.s32.f32 %v293
      %v550 = vcvt.s32.f32 %v294
      %v551 = vcvt.s32.f32 %v295
      %v552 = vcvt.s32.f32 %v296
      %v553 = vcvt.s32.f32 %v297
      %v554 = vcvt.s32.f32 %v298
      %v555 = vcvt.s32.f32 %v299
      %v556 = vcvt.s32.f32 %v300
      %v557 = vcvt.s32.f32 %v301
      %v558 = vcvt.s32.f32 %v302
      %v559 = vcvt.s32.f32 %v303
      %v560 = vcvt.s32.f32 %v304
      %v561 = vcvt.s32.f32 %v305
      %v562 = vcvt.s32.f32 %v306
      %v563 = vcvt.s32.f32 %v307
      %v564 = vcvt.s32.f32 %v308
      %v565 = vcvt.s32.f32 %v309
      %v566 = vcvt.s32.f32 %v310
      %v567 = vcvt.s32.f32 %v311
      %v568 = vcvt.s32.f32 %v312
      %v569 = vcvt.s32.f32 %v313
      %v570 = vcvt.s32.f32 %v314
      %v571 = vcvt.s32.f32 %v315
      %v572 = vcvt.s32.f32 %v316
      %v573 = vcvt.s32.f32 %v317
      %v574 = vcvt.s32.f32 %v318
      %v575 = vcvt.s32.f32 %v319
      %v576 = vcvt.s32.f32 %v320
      %v577 = vcvt.s32.f32 %v321
      %v578 = vcvt.s32.f32 %v322
      %v579 = vcvt.s32.f32 %v323
      %v580 = vcvt.s32.f32 %v324
      %v581 = vcvt.s32.f32 %v325
      %v582 = vcvt.s32.f32 %v326
      %v583 = vcvt.s32.f32 %v327
      %v584 = vcvt.s32.f32 %v328
      %v585 = vcvt.s32.f32 %v329
      %v586 = vcvt.s32.f32 %v330
      %v587 = vcvt.s32.f32 %v331
      %v588 = vcvt.s32.f32 %v332
      %v589 = vcvt.s32.f32 %v333
      %v590 = vcvt.s32.f32 %v334
      %v591 = vcvt.s32.f32 %v335
      %v592 = vcvt.s32.f32 %v336
      %v593 = vcvt.s32.f32 %v337
      %v594 = vcvt.s32.f32 %v338
      %v595 = vcvt.s32.f32 %v339
      %v596 = vcvt.s32.f32 %v340
      %v597 = vcvt.s32.f32 %v341
      %v598 = vcvt.s32.f32 %v342
      %v599 = vcvt.s32.f32 %v343
      %v600 = vcvt.s32.f32 %v344
      %v601 = vcvt.s32.f32 %v345
      %v602 = vcvt.s32.f32 %v346
      %v603 = vcvt.s32.f32 %v347
      %v604 = vcvt.s32.f32 %v348
      %v605 = vcvt.s32.f32 %v349
      %v606 = vcvt.s32.f32 %v350
      %v607 = vcvt.s32.f32 %v351
      %v608 = vcvt.s32.f32 %v352
      %v609 = vcvt.s32.f32 %v353
      %v610 = vcvt.s32.f32 %v354
      %v611 = vcvt.s32.f32 %v355
      %v612 = vcvt.s32.f32 %v356
      %v613 = vcvt.s32.f32 %v357
      %v614 = vcvt.s32.f32 %v358
      %v615 = vcvt.s32.f32 %v359
      %v616 = vcvt.s32.f32 %v360
      %v617 = vcvt.s32.f32 %v361
      %v618 = vcvt.s32.f32 %v362
      %v619 = vcvt.s32.f32 %v363
      %v620 = vcvt.s32.f32 %v364
      %v621 = vcvt.s32.f32 %v365
      %v622 = vcvt.s32.f32 %v366
      %v623 = vcvt.s32.f32 %v367
      %v624 = vcvt.s32.f32 %v368
      %v625 = vcvt.s32.f32 %v369
      %v626 = vcvt.s32.f32 %v370
      %v627 = vcvt.s32.f32 %v371
      %v628 = vcvt.s32.f32 %v372
      %v629 = vcvt.s32.f32 %v373
      %v630 = vcvt.s32.f32 %v374
      %v631 = vcvt.s32.f32 %v375
      %v632 = vcvt.s32.f32 %v376
      %v633 = vcvt.s32.f32 %v377
      %v634 = vcvt.s32.f32 %v378
      %v635 = vcvt.s32.f32 %v379
      %v636 = vcvt.s32.f32 %v380
      %v637 = vcvt.s32.f32 %v381
      %v638 = vcvt.s32.f32 %v382
      %v639 = vcvt.s32.f32 %v383
      %v640 = vcvt.s32.f32 %v384
      %v641 = vcvt.s32.f32 %v385
      %v642 = vcvt.s32.f32 %v386
      %v643 = vcvt.s32.f32 %v387
      %v644 = vcvt.s32.f32 %v388
      %v645 = vcvt.s32.f32 %v389
      %v646 = vcvt.s32.f32 %v390
      %v647 = vcvt.s32.f32 %v391
      %v648 = vcvt.s32.f32 %v392
      %v649 = vcvt.s32.f32 %v393
      %v650 = vcvt.s32.f32 %v394
      %v651 = vcvt.s32.f32 %v395
      %v652 = vcvt.s32.f32 %v396
      %v653 = vcvt.s32.f32 %v397
      %v654 = vcvt.s32.f32 %v398
      %v655 = vcvt.s32.f32 %v399
      %v656 = vcvt.s32.f32 %v400
      %v657 = vcvt.s32.f32 %v401
      %v658 = vcvt.s32.f32 %v402
      %v659 = vcvt.s32.f32 %v403
      %v660 = vcvt.s32.f32 %v404
      %v661 = vcvt.s32.f32 %v405
      %v662 = vcvt.s32.f32 %v406
      %v663 = vcvt.s32.f32 %v407
      %v664 = vcvt.s32.f32 %v408
      %v665 = vcvt.s32.f32 %v409
      %v666 = vcvt.s32.f32 %v410
      %v667 = vcvt.s32.f32 %v411
      %v668 = vcvt.s32.f32 %v412
      %v669 = vcvt.s32.f32 %v413
      %v670 = vcvt.s32.f32 %v414
      %v671 = vcvt.s32.f32 %v415
      %v672 = vcvt.s32.f32 %v416
      %v673 = vcvt.s32.f32 %v417
      %v674 = vcvt.s32.f32 %v418
      %v675 = vcvt.s32.f32 %v419
      %v676 = vcvt.s32.f32 %v420
      %v677 = vcvt.s32.f32 %v421
      %v678 = vcvt.s32.f32 %v422
      %v679 = vcvt.s32.f32 %v423
      %v680 = vcvt.s32.f32 %v424
      %v681 = vcvt.s32.f32 %v425
      %v682 = vcvt.s32.f32 %v426
      %v683 = vcvt.s32.f32 %v427
      %v684 = vcvt.s32.f32 %v428
      %v685 = vcvt.s32.f32 %v429
      %v686 = vcvt.s32.f32 %v430
      %v687 = vcvt.s32.f32 %v431
      %v688 = vld [vmem:[%s11] sm:$0xff]
      %v690 = vlaneseq
      %v691 = vshrl.u32 %v690, 7
      %v692 = vsub.s32 0, %v691
      %v693 = vrot.slane %v688, %v692
      %v694 = vlaneseq
      %v695 = vshrl.u32 %v694, 7
      %v696 = vsub.s32 1, %v695
      %v697 = vrot.slane %v688, %v696
      %v698 = vlaneseq
      %v699 = vshrl.u32 %v698, 7
      %v700 = vsub.s32 2, %v699
      %v701 = vrot.slane %v688, %v700
      %v702 = vlaneseq
      %v703 = vshrl.u32 %v702, 7
      %v704 = vsub.s32 3, %v703
      %v705 = vrot.slane %v688, %v704
      %v706 = vlaneseq
      %v707 = vshrl.u32 %v706, 7
      %v708 = vsub.s32 4, %v707
      %v709 = vrot.slane %v688, %v708
      %v710 = vlaneseq
      %v711 = vshrl.u32 %v710, 7
      %v712 = vsub.s32 5, %v711
      %v713 = vrot.slane %v688, %v712
      %v714 = vlaneseq
      %v715 = vshrl.u32 %v714, 7
      %v716 = vsub.s32 6, %v715
      %v717 = vrot.slane %v688, %v716
      %v718 = vlaneseq
      %v719 = vshrl.u32 %v718, 7
      %v720 = vsub.s32 7, %v719
      %v721 = vrot.slane %v688, %v720
      %v730 = vmul.f32 %v432, %v693
      %v731 = vmul.f32 %v433, %v697
      %v732 = vmul.f32 %v434, %v701
      %v733 = vmul.f32 %v435, %v705
      %v734 = vmul.f32 %v436, %v709
      %v735 = vmul.f32 %v437, %v713
      %v736 = vmul.f32 %v438, %v717
      %v737 = vmul.f32 %v439, %v721
      %v738 = vmul.f32 %v440, %v693
      %v739 = vmul.f32 %v441, %v697
      %v740 = vmul.f32 %v442, %v701
      %v741 = vmul.f32 %v443, %v705
      %v742 = vmul.f32 %v444, %v709
      %v743 = vmul.f32 %v445, %v713
      %v744 = vmul.f32 %v446, %v717
      %v745 = vmul.f32 %v447, %v721
      %v746 = vmul.f32 %v448, %v693
      %v747 = vmul.f32 %v449, %v697
      %v748 = vmul.f32 %v450, %v701
      %v749 = vmul.f32 %v451, %v705
      %v750 = vmul.f32 %v452, %v709
      %v751 = vmul.f32 %v453, %v713
      %v752 = vmul.f32 %v454, %v717
      %v753 = vmul.f32 %v455, %v721
      %v754 = vmul.f32 %v456, %v693
      %v755 = vmul.f32 %v457, %v697
      %v756 = vmul.f32 %v458, %v701
      %v757 = vmul.f32 %v459, %v705
      %v758 = vmul.f32 %v460, %v709
      %v759 = vmul.f32 %v461, %v713
      %v760 = vmul.f32 %v462, %v717
      %v761 = vmul.f32 %v463, %v721
      %v762 = vmul.f32 %v464, %v693
      %v763 = vmul.f32 %v465, %v697
      %v764 = vmul.f32 %v466, %v701
      %v765 = vmul.f32 %v467, %v705
      %v766 = vmul.f32 %v468, %v709
      %v767 = vmul.f32 %v469, %v713
      %v768 = vmul.f32 %v470, %v717
      %v769 = vmul.f32 %v471, %v721
      %v770 = vmul.f32 %v472, %v693
      %v771 = vmul.f32 %v473, %v697
      %v772 = vmul.f32 %v474, %v701
      %v773 = vmul.f32 %v475, %v705
      %v774 = vmul.f32 %v476, %v709
      %v775 = vmul.f32 %v477, %v713
      %v776 = vmul.f32 %v478, %v717
      %v777 = vmul.f32 %v479, %v721
      %v778 = vmul.f32 %v480, %v693
      %v779 = vmul.f32 %v481, %v697
      %v780 = vmul.f32 %v482, %v701
      %v781 = vmul.f32 %v483, %v705
      %v782 = vmul.f32 %v484, %v709
      %v783 = vmul.f32 %v485, %v713
      %v784 = vmul.f32 %v486, %v717
      %v785 = vmul.f32 %v487, %v721
      %v786 = vmul.f32 %v488, %v693
      %v787 = vmul.f32 %v489, %v697
      %v788 = vmul.f32 %v490, %v701
      %v789 = vmul.f32 %v491, %v705
      %v790 = vmul.f32 %v492, %v709
      %v791 = vmul.f32 %v493, %v713
      %v792 = vmul.f32 %v494, %v717
      %v793 = vmul.f32 %v495, %v721
      %v794 = vmul.f32 %v496, %v693
      %v795 = vmul.f32 %v497, %v697
      %v796 = vmul.f32 %v498, %v701
      %v797 = vmul.f32 %v499, %v705
      %v798 = vmul.f32 %v500, %v709
      %v799 = vmul.f32 %v501, %v713
      %v800 = vmul.f32 %v502, %v717
      %v801 = vmul.f32 %v503, %v721
      %v802 = vmul.f32 %v504, %v693
      %v803 = vmul.f32 %v505, %v697
      %v804 = vmul.f32 %v506, %v701
      %v805 = vmul.f32 %v507, %v705
      %v806 = vmul.f32 %v508, %v709
      %v807 = vmul.f32 %v509, %v713
      %v808 = vmul.f32 %v510, %v717
      %v809 = vmul.f32 %v511, %v721
      %v810 = vmul.f32 %v512, %v693
      %v811 = vmul.f32 %v513, %v697
      %v812 = vmul.f32 %v514, %v701
      %v813 = vmul.f32 %v515, %v705
      %v814 = vmul.f32 %v516, %v709
      %v815 = vmul.f32 %v517, %v713
      %v816 = vmul.f32 %v518, %v717
      %v817 = vmul.f32 %v519, %v721
      %v818 = vmul.f32 %v520, %v693
      %v819 = vmul.f32 %v521, %v697
      %v820 = vmul.f32 %v522, %v701
      %v821 = vmul.f32 %v523, %v705
      %v822 = vmul.f32 %v524, %v709
      %v823 = vmul.f32 %v525, %v713
      %v824 = vmul.f32 %v526, %v717
      %v825 = vmul.f32 %v527, %v721
      %v826 = vmul.f32 %v528, %v693
      %v827 = vmul.f32 %v529, %v697
      %v828 = vmul.f32 %v530, %v701
      %v829 = vmul.f32 %v531, %v705
      %v830 = vmul.f32 %v532, %v709
      %v831 = vmul.f32 %v533, %v713
      %v832 = vmul.f32 %v534, %v717
      %v833 = vmul.f32 %v535, %v721
      %v834 = vmul.f32 %v536, %v693
      %v835 = vmul.f32 %v537, %v697
      %v836 = vmul.f32 %v538, %v701
      %v837 = vmul.f32 %v539, %v705
      %v838 = vmul.f32 %v540, %v709
      %v839 = vmul.f32 %v541, %v713
      %v840 = vmul.f32 %v542, %v717
      %v841 = vmul.f32 %v543, %v721
      %v842 = vmul.f32 %v544, %v693
      %v843 = vmul.f32 %v545, %v697
      %v844 = vmul.f32 %v546, %v701
      %v845 = vmul.f32 %v547, %v705
      %v846 = vmul.f32 %v548, %v709
      %v847 = vmul.f32 %v549, %v713
      %v848 = vmul.f32 %v550, %v717
      %v849 = vmul.f32 %v551, %v721
      %v850 = vmul.f32 %v552, %v693
      %v851 = vmul.f32 %v553, %v697
      %v852 = vmul.f32 %v554, %v701
      %v853 = vmul.f32 %v555, %v705
      %v854 = vmul.f32 %v556, %v709
      %v855 = vmul.f32 %v557, %v713
      %v856 = vmul.f32 %v558, %v717
      %v857 = vmul.f32 %v559, %v721
      %v858 = vmul.f32 %v560, %v693
      %v859 = vmul.f32 %v561, %v697
      %v860 = vmul.f32 %v562, %v701
      %v861 = vmul.f32 %v563, %v705
      %v862 = vmul.f32 %v564, %v709
      %v863 = vmul.f32 %v565, %v713
      %v864 = vmul.f32 %v566, %v717
      %v865 = vmul.f32 %v567, %v721
      %v866 = vmul.f32 %v568, %v693
      %v867 = vmul.f32 %v569, %v697
      %v868 = vmul.f32 %v570, %v701
      %v869 = vmul.f32 %v571, %v705
      %v870 = vmul.f32 %v572, %v709
      %v871 = vmul.f32 %v573, %v713
      %v872 = vmul.f32 %v574, %v717
      %v873 = vmul.f32 %v575, %v721
      %v874 = vmul.f32 %v576, %v693
      %v875 = vmul.f32 %v577, %v697
      %v876 = vmul.f32 %v578, %v701
      %v877 = vmul.f32 %v579, %v705
      %v878 = vmul.f32 %v580, %v709
      %v879 = vmul.f32 %v581, %v713
      %v880 = vmul.f32 %v582, %v717
      %v881 = vmul.f32 %v583, %v721
      %v882 = vmul.f32 %v584, %v693
      %v883 = vmul.f32 %v585, %v697
      %v884 = vmul.f32 %v586, %v701
      %v885 = vmul.f32 %v587, %v705
      %v886 = vmul.f32 %v588, %v709
      %v887 = vmul.f32 %v589, %v713
      %v888 = vmul.f32 %v590, %v717
      %v889 = vmul.f32 %v591, %v721
      %v890 = vmul.f32 %v592, %v693
      %v891 = vmul.f32 %v593, %v697
      %v892 = vmul.f32 %v594, %v701
      %v893 = vmul.f32 %v595, %v705
      %v894 = vmul.f32 %v596, %v709
      %v895 = vmul.f32 %v597, %v713
      %v896 = vmul.f32 %v598, %v717
      %v897 = vmul.f32 %v599, %v721
      %v898 = vmul.f32 %v600, %v693
      %v899 = vmul.f32 %v601, %v697
      %v900 = vmul.f32 %v602, %v701
      %v901 = vmul.f32 %v603, %v705
      %v902 = vmul.f32 %v604, %v709
      %v903 = vmul.f32 %v605, %v713
      %v904 = vmul.f32 %v606, %v717
      %v905 = vmul.f32 %v607, %v721
      %v906 = vmul.f32 %v608, %v693
      %v907 = vmul.f32 %v609, %v697
      %v908 = vmul.f32 %v610, %v701
      %v909 = vmul.f32 %v611, %v705
      %v910 = vmul.f32 %v612, %v709
      %v911 = vmul.f32 %v613, %v713
      %v912 = vmul.f32 %v614, %v717
      %v913 = vmul.f32 %v615, %v721
      %v914 = vmul.f32 %v616, %v693
      %v915 = vmul.f32 %v617, %v697
      %v916 = vmul.f32 %v618, %v701
      %v917 = vmul.f32 %v619, %v705
      %v918 = vmul.f32 %v620, %v709
      %v919 = vmul.f32 %v621, %v713
      %v920 = vmul.f32 %v622, %v717
      %v921 = vmul.f32 %v623, %v721
      %v922 = vmul.f32 %v624, %v693
      %v923 = vmul.f32 %v625, %v697
      %v924 = vmul.f32 %v626, %v701
      %v925 = vmul.f32 %v627, %v705
      %v926 = vmul.f32 %v628, %v709
      %v927 = vmul.f32 %v629, %v713
      %v928 = vmul.f32 %v630, %v717
      %v929 = vmul.f32 %v631, %v721
      %v930 = vmul.f32 %v632, %v693
      %v931 = vmul.f32 %v633, %v697
      %v932 = vmul.f32 %v634, %v701
      %v933 = vmul.f32 %v635, %v705
      %v934 = vmul.f32 %v636, %v709
      %v935 = vmul.f32 %v637, %v713
      %v936 = vmul.f32 %v638, %v717
      %v937 = vmul.f32 %v639, %v721
      %v938 = vmul.f32 %v640, %v693
      %v939 = vmul.f32 %v641, %v697
      %v940 = vmul.f32 %v642, %v701
      %v941 = vmul.f32 %v643, %v705
      %v942 = vmul.f32 %v644, %v709
      %v943 = vmul.f32 %v645, %v713
      %v944 = vmul.f32 %v646, %v717
      %v945 = vmul.f32 %v647, %v721
      %v946 = vmul.f32 %v648, %v693
      %v947 = vmul.f32 %v649, %v697
      %v948 = vmul.f32 %v650, %v701
      %v949 = vmul.f32 %v651, %v705
      %v950 = vmul.f32 %v652, %v709
      %v951 = vmul.f32 %v653, %v713
      %v952 = vmul.f32 %v654, %v717
      %v953 = vmul.f32 %v655, %v721
      %v954 = vmul.f32 %v656, %v693
      %v955 = vmul.f32 %v657, %v697
      %v956 = vmul.f32 %v658, %v701
      %v957 = vmul.f32 %v659, %v705
      %v958 = vmul.f32 %v660, %v709
      %v959 = vmul.f32 %v661, %v713
      %v960 = vmul.f32 %v662, %v717
      %v961 = vmul.f32 %v663, %v721
      %v962 = vmul.f32 %v664, %v693
      %v963 = vmul.f32 %v665, %v697
      %v964 = vmul.f32 %v666, %v701
      %v965 = vmul.f32 %v667, %v705
      %v966 = vmul.f32 %v668, %v709
      %v967 = vmul.f32 %v669, %v713
      %v968 = vmul.f32 %v670, %v717
      %v969 = vmul.f32 %v671, %v721
      %v970 = vmul.f32 %v672, %v693
      %v971 = vmul.f32 %v673, %v697
      %v972 = vmul.f32 %v674, %v701
      %v973 = vmul.f32 %v675, %v705
      %v974 = vmul.f32 %v676, %v709
      %v975 = vmul.f32 %v677, %v713
      %v976 = vmul.f32 %v678, %v717
      %v977 = vmul.f32 %v679, %v721
      %v978 = vmul.f32 %v680, %v693
      %v979 = vmul.f32 %v681, %v697
      %v980 = vmul.f32 %v682, %v701
      %v981 = vmul.f32 %v683, %v705
      %v982 = vmul.f32 %v684, %v709
      %v983 = vmul.f32 %v685, %v713
      %v984 = vmul.f32 %v686, %v717
      %v985 = vmul.f32 %v687, %v721
      %v986 = vpack.c.bf16 %v738, %v730
      %v987 = vpack.c.bf16 %v739, %v731
      %v988 = vpack.c.bf16 %v740, %v732
      %v989 = vpack.c.bf16 %v741, %v733
      %v990 = vpack.c.bf16 %v742, %v734
      %v991 = vpack.c.bf16 %v743, %v735
      %v992 = vpack.c.bf16 %v744, %v736
      %v993 = vpack.c.bf16 %v745, %v737
      %v994 = vpack.c.bf16 %v754, %v746
      %v995 = vpack.c.bf16 %v755, %v747
      %v996 = vpack.c.bf16 %v756, %v748
      %v997 = vpack.c.bf16 %v757, %v749
      %v998 = vpack.c.bf16 %v758, %v750
      %v999 = vpack.c.bf16 %v759, %v751
      %v1000 = vpack.c.bf16 %v760, %v752
      %v1001 = vpack.c.bf16 %v761, %v753
      %v1002 = vpack.c.bf16 %v770, %v762
      %v1003 = vpack.c.bf16 %v771, %v763
      %v1004 = vpack.c.bf16 %v772, %v764
      %v1005 = vpack.c.bf16 %v773, %v765
      %v1006 = vpack.c.bf16 %v774, %v766
      %v1007 = vpack.c.bf16 %v775, %v767
      %v1008 = vpack.c.bf16 %v776, %v768
      %v1009 = vpack.c.bf16 %v777, %v769
      %v1010 = vpack.c.bf16 %v786, %v778
      %v1011 = vpack.c.bf16 %v787, %v779
      %v1012 = vpack.c.bf16 %v788, %v780
      %v1013 = vpack.c.bf16 %v789, %v781
      %v1014 = vpack.c.bf16 %v790, %v782
      %v1015 = vpack.c.bf16 %v791, %v783
      %v1016 = vpack.c.bf16 %v792, %v784
      %v1017 = vpack.c.bf16 %v793, %v785
      %v1018 = vpack.c.bf16 %v802, %v794
      %v1019 = vpack.c.bf16 %v803, %v795
      %v1020 = vpack.c.bf16 %v804, %v796
      %v1021 = vpack.c.bf16 %v805, %v797
      %v1022 = vpack.c.bf16 %v806, %v798
      %v1023 = vpack.c.bf16 %v807, %v799
      %v1024 = vpack.c.bf16 %v808, %v800
      %v1025 = vpack.c.bf16 %v809, %v801
      %v1026 = vpack.c.bf16 %v818, %v810
      %v1027 = vpack.c.bf16 %v819, %v811
      %v1028 = vpack.c.bf16 %v820, %v812
      %v1029 = vpack.c.bf16 %v821, %v813
      %v1030 = vpack.c.bf16 %v822, %v814
      %v1031 = vpack.c.bf16 %v823, %v815
      %v1032 = vpack.c.bf16 %v824, %v816
      %v1033 = vpack.c.bf16 %v825, %v817
      %v1034 = vpack.c.bf16 %v834, %v826
      %v1035 = vpack.c.bf16 %v835, %v827
      %v1036 = vpack.c.bf16 %v836, %v828
      %v1037 = vpack.c.bf16 %v837, %v829
      %v1038 = vpack.c.bf16 %v838, %v830
      %v1039 = vpack.c.bf16 %v839, %v831
      %v1040 = vpack.c.bf16 %v840, %v832
      %v1041 = vpack.c.bf16 %v841, %v833
      %v1042 = vpack.c.bf16 %v850, %v842
      %v1043 = vpack.c.bf16 %v851, %v843
      %v1044 = vpack.c.bf16 %v852, %v844
      %v1045 = vpack.c.bf16 %v853, %v845
      %v1046 = vpack.c.bf16 %v854, %v846
      %v1047 = vpack.c.bf16 %v855, %v847
      %v1048 = vpack.c.bf16 %v856, %v848
      %v1049 = vpack.c.bf16 %v857, %v849
      %v1050 = vpack.c.bf16 %v866, %v858
      %v1051 = vpack.c.bf16 %v867, %v859
      %v1052 = vpack.c.bf16 %v868, %v860
      %v1053 = vpack.c.bf16 %v869, %v861
      %v1054 = vpack.c.bf16 %v870, %v862
      %v1055 = vpack.c.bf16 %v871, %v863
      %v1056 = vpack.c.bf16 %v872, %v864
      %v1057 = vpack.c.bf16 %v873, %v865
      %v1058 = vpack.c.bf16 %v882, %v874
      %v1059 = vpack.c.bf16 %v883, %v875
      %v1060 = vpack.c.bf16 %v884, %v876
      %v1061 = vpack.c.bf16 %v885, %v877
      %v1062 = vpack.c.bf16 %v886, %v878
      %v1063 = vpack.c.bf16 %v887, %v879
      %v1064 = vpack.c.bf16 %v888, %v880
      %v1065 = vpack.c.bf16 %v889, %v881
      %v1066 = vpack.c.bf16 %v898, %v890
      %v1067 = vpack.c.bf16 %v899, %v891
      %v1068 = vpack.c.bf16 %v900, %v892
      %v1069 = vpack.c.bf16 %v901, %v893
      %v1070 = vpack.c.bf16 %v902, %v894
      %v1071 = vpack.c.bf16 %v903, %v895
      %v1072 = vpack.c.bf16 %v904, %v896
      %v1073 = vpack.c.bf16 %v905, %v897
      %v1074 = vpack.c.bf16 %v914, %v906
      %v1075 = vpack.c.bf16 %v915, %v907
      %v1076 = vpack.c.bf16 %v916, %v908
      %v1077 = vpack.c.bf16 %v917, %v909
      %v1078 = vpack.c.bf16 %v918, %v910
      %v1079 = vpack.c.bf16 %v919, %v911
      %v1080 = vpack.c.bf16 %v920, %v912
      %v1081 = vpack.c.bf16 %v921, %v913
      %v1082 = vpack.c.bf16 %v930, %v922
      %v1083 = vpack.c.bf16 %v931, %v923
      %v1084 = vpack.c.bf16 %v932, %v924
      %v1085 = vpack.c.bf16 %v933, %v925
      %v1086 = vpack.c.bf16 %v934, %v926
      %v1087 = vpack.c.bf16 %v935, %v927
      %v1088 = vpack.c.bf16 %v936, %v928
      %v1089 = vpack.c.bf16 %v937, %v929
      %v1090 = vpack.c.bf16 %v946, %v938
      %v1091 = vpack.c.bf16 %v947, %v939
      %v1092 = vpack.c.bf16 %v948, %v940
      %v1093 = vpack.c.bf16 %v949, %v941
      %v1094 = vpack.c.bf16 %v950, %v942
      %v1095 = vpack.c.bf16 %v951, %v943
      %v1096 = vpack.c.bf16 %v952, %v944
      %v1097 = vpack.c.bf16 %v953, %v945
      %v1098 = vpack.c.bf16 %v962, %v954
      %v1099 = vpack.c.bf16 %v963, %v955
      %v1100 = vpack.c.bf16 %v964, %v956
      %v1101 = vpack.c.bf16 %v965, %v957
      %v1102 = vpack.c.bf16 %v966, %v958
      %v1103 = vpack.c.bf16 %v967, %v959
      %v1104 = vpack.c.bf16 %v968, %v960
      %v1105 = vpack.c.bf16 %v969, %v961
      %v1106 = vpack.c.bf16 %v978, %v970
      %v1107 = vpack.c.bf16 %v979, %v971
      %v1108 = vpack.c.bf16 %v980, %v972
      %v1109 = vpack.c.bf16 %v981, %v973
      %v1110 = vpack.c.bf16 %v982, %v974
      %v1111 = vpack.c.bf16 %v983, %v975
      %v1112 = vpack.c.bf16 %v984, %v976
      %v1113 = vpack.c.bf16 %v985, %v977
      %v1242 = vunpack.c.l.b16 %v986
      %v1243 = vunpack.c.l.b16 %v987
      %v1244 = vunpack.c.l.b16 %v988
      %v1245 = vunpack.c.l.b16 %v989
      %v1246 = vunpack.c.l.b16 %v990
      %v1247 = vunpack.c.l.b16 %v991
      %v1248 = vunpack.c.l.b16 %v992
      %v1249 = vunpack.c.l.b16 %v993
      %v1250 = vunpack.c.h.b16 %v986
      %v1251 = vunpack.c.h.b16 %v987
      %v1252 = vunpack.c.h.b16 %v988
      %v1253 = vunpack.c.h.b16 %v989
      %v1254 = vunpack.c.h.b16 %v990
      %v1255 = vunpack.c.h.b16 %v991
      %v1256 = vunpack.c.h.b16 %v992
      %v1257 = vunpack.c.h.b16 %v993
      %v1258 = vunpack.c.l.b16 %v994
      %v1259 = vunpack.c.l.b16 %v995
      %v1260 = vunpack.c.l.b16 %v996
      %v1261 = vunpack.c.l.b16 %v997
      %v1262 = vunpack.c.l.b16 %v998
      %v1263 = vunpack.c.l.b16 %v999
      %v1264 = vunpack.c.l.b16 %v1000
      %v1265 = vunpack.c.l.b16 %v1001
      %v1266 = vunpack.c.h.b16 %v994
      %v1267 = vunpack.c.h.b16 %v995
      %v1268 = vunpack.c.h.b16 %v996
      %v1269 = vunpack.c.h.b16 %v997
      %v1270 = vunpack.c.h.b16 %v998
      %v1271 = vunpack.c.h.b16 %v999
      %v1272 = vunpack.c.h.b16 %v1000
      %v1273 = vunpack.c.h.b16 %v1001
      %v1274 = vunpack.c.l.b16 %v1002
      %v1275 = vunpack.c.l.b16 %v1003
      %v1276 = vunpack.c.l.b16 %v1004
      %v1277 = vunpack.c.l.b16 %v1005
      %v1278 = vunpack.c.l.b16 %v1006
      %v1279 = vunpack.c.l.b16 %v1007
      %v1280 = vunpack.c.l.b16 %v1008
      %v1281 = vunpack.c.l.b16 %v1009
      %v1282 = vunpack.c.h.b16 %v1002
      %v1283 = vunpack.c.h.b16 %v1003
      %v1284 = vunpack.c.h.b16 %v1004
      %v1285 = vunpack.c.h.b16 %v1005
      %v1286 = vunpack.c.h.b16 %v1006
      %v1287 = vunpack.c.h.b16 %v1007
      %v1288 = vunpack.c.h.b16 %v1008
      %v1289 = vunpack.c.h.b16 %v1009
      %v1290 = vunpack.c.l.b16 %v1010
      %v1291 = vunpack.c.l.b16 %v1011
      %v1292 = vunpack.c.l.b16 %v1012
      %v1293 = vunpack.c.l.b16 %v1013
      %v1294 = vunpack.c.l.b16 %v1014
      %v1295 = vunpack.c.l.b16 %v1015
      %v1296 = vunpack.c.l.b16 %v1016
      %v1297 = vunpack.c.l.b16 %v1017
      %v1298 = vunpack.c.h.b16 %v1010
      %v1299 = vunpack.c.h.b16 %v1011
      %v1300 = vunpack.c.h.b16 %v1012
      %v1301 = vunpack.c.h.b16 %v1013
      %v1302 = vunpack.c.h.b16 %v1014
      %v1303 = vunpack.c.h.b16 %v1015
      %v1304 = vunpack.c.h.b16 %v1016
      %v1305 = vunpack.c.h.b16 %v1017
      %v1306 = vunpack.c.l.b16 %v1018
      %v1307 = vunpack.c.l.b16 %v1019
      %v1308 = vunpack.c.l.b16 %v1020
      %v1309 = vunpack.c.l.b16 %v1021
      %v1310 = vunpack.c.l.b16 %v1022
      %v1311 = vunpack.c.l.b16 %v1023
      %v1312 = vunpack.c.l.b16 %v1024
      %v1313 = vunpack.c.l.b16 %v1025
      %v1314 = vunpack.c.h.b16 %v1018
      %v1315 = vunpack.c.h.b16 %v1019
      %v1316 = vunpack.c.h.b16 %v1020
      %v1317 = vunpack.c.h.b16 %v1021
      %v1318 = vunpack.c.h.b16 %v1022
      %v1319 = vunpack.c.h.b16 %v1023
      %v1320 = vunpack.c.h.b16 %v1024
      %v1321 = vunpack.c.h.b16 %v1025
      %v1322 = vunpack.c.l.b16 %v1026
      %v1323 = vunpack.c.l.b16 %v1027
      %v1324 = vunpack.c.l.b16 %v1028
      %v1325 = vunpack.c.l.b16 %v1029
      %v1326 = vunpack.c.l.b16 %v1030
      %v1327 = vunpack.c.l.b16 %v1031
      %v1328 = vunpack.c.l.b16 %v1032
      %v1329 = vunpack.c.l.b16 %v1033
      %v1330 = vunpack.c.h.b16 %v1026
      %v1331 = vunpack.c.h.b16 %v1027
      %v1332 = vunpack.c.h.b16 %v1028
      %v1333 = vunpack.c.h.b16 %v1029
      %v1334 = vunpack.c.h.b16 %v1030
      %v1335 = vunpack.c.h.b16 %v1031
      %v1336 = vunpack.c.h.b16 %v1032
      %v1337 = vunpack.c.h.b16 %v1033
      %v1338 = vunpack.c.l.b16 %v1034
      %v1339 = vunpack.c.l.b16 %v1035
      %v1340 = vunpack.c.l.b16 %v1036
      %v1341 = vunpack.c.l.b16 %v1037
      %v1342 = vunpack.c.l.b16 %v1038
      %v1343 = vunpack.c.l.b16 %v1039
      %v1344 = vunpack.c.l.b16 %v1040
      %v1345 = vunpack.c.l.b16 %v1041
      %v1346 = vunpack.c.h.b16 %v1034
      %v1347 = vunpack.c.h.b16 %v1035
      %v1348 = vunpack.c.h.b16 %v1036
      %v1349 = vunpack.c.h.b16 %v1037
      %v1350 = vunpack.c.h.b16 %v1038
      %v1351 = vunpack.c.h.b16 %v1039
      %v1352 = vunpack.c.h.b16 %v1040
      %v1353 = vunpack.c.h.b16 %v1041
      %v1354 = vunpack.c.l.b16 %v1042
      %v1355 = vunpack.c.l.b16 %v1043
      %v1356 = vunpack.c.l.b16 %v1044
      %v1357 = vunpack.c.l.b16 %v1045
      %v1358 = vunpack.c.l.b16 %v1046
      %v1359 = vunpack.c.l.b16 %v1047
      %v1360 = vunpack.c.l.b16 %v1048
      %v1361 = vunpack.c.l.b16 %v1049
      %v1362 = vunpack.c.h.b16 %v1042
      %v1363 = vunpack.c.h.b16 %v1043
      %v1364 = vunpack.c.h.b16 %v1044
      %v1365 = vunpack.c.h.b16 %v1045
      %v1366 = vunpack.c.h.b16 %v1046
      %v1367 = vunpack.c.h.b16 %v1047
      %v1368 = vunpack.c.h.b16 %v1048
      %v1369 = vunpack.c.h.b16 %v1049
      %v1370 = vunpack.c.l.b16 %v1050
      %v1371 = vunpack.c.l.b16 %v1051
      %v1372 = vunpack.c.l.b16 %v1052
      %v1373 = vunpack.c.l.b16 %v1053
      %v1374 = vunpack.c.l.b16 %v1054
      %v1375 = vunpack.c.l.b16 %v1055
      %v1376 = vunpack.c.l.b16 %v1056
      %v1377 = vunpack.c.l.b16 %v1057
      %v1378 = vunpack.c.h.b16 %v1050
      %v1379 = vunpack.c.h.b16 %v1051
      %v1380 = vunpack.c.h.b16 %v1052
      %v1381 = vunpack.c.h.b16 %v1053
      %v1382 = vunpack.c.h.b16 %v1054
      %v1383 = vunpack.c.h.b16 %v1055
      %v1384 = vunpack.c.h.b16 %v1056
      %v1385 = vunpack.c.h.b16 %v1057
      %v1386 = vunpack.c.l.b16 %v1058
      %v1387 = vunpack.c.l.b16 %v1059
      %v1388 = vunpack.c.l.b16 %v1060
      %v1389 = vunpack.c.l.b16 %v1061
      %v1390 = vunpack.c.l.b16 %v1062
      %v1391 = vunpack.c.l.b16 %v1063
      %v1392 = vunpack.c.l.b16 %v1064
      %v1393 = vunpack.c.l.b16 %v1065
      %v1394 = vunpack.c.h.b16 %v1058
      %v1395 = vunpack.c.h.b16 %v1059
      %v1396 = vunpack.c.h.b16 %v1060
      %v1397 = vunpack.c.h.b16 %v1061
      %v1398 = vunpack.c.h.b16 %v1062
      %v1399 = vunpack.c.h.b16 %v1063
      %v1400 = vunpack.c.h.b16 %v1064
      %v1401 = vunpack.c.h.b16 %v1065
      %v1402 = vunpack.c.l.b16 %v1066
      %v1403 = vunpack.c.l.b16 %v1067
      %v1404 = vunpack.c.l.b16 %v1068
      %v1405 = vunpack.c.l.b16 %v1069
      %v1406 = vunpack.c.l.b16 %v1070
      %v1407 = vunpack.c.l.b16 %v1071
      %v1408 = vunpack.c.l.b16 %v1072
      %v1409 = vunpack.c.l.b16 %v1073
      %v1410 = vunpack.c.h.b16 %v1066
      %v1411 = vunpack.c.h.b16 %v1067
      %v1412 = vunpack.c.h.b16 %v1068
      %v1413 = vunpack.c.h.b16 %v1069
      %v1414 = vunpack.c.h.b16 %v1070
      %v1415 = vunpack.c.h.b16 %v1071
      %v1416 = vunpack.c.h.b16 %v1072
      %v1417 = vunpack.c.h.b16 %v1073
      %v1418 = vunpack.c.l.b16 %v1074
      %v1419 = vunpack.c.l.b16 %v1075
      %v1420 = vunpack.c.l.b16 %v1076
      %v1421 = vunpack.c.l.b16 %v1077
      %v1422 = vunpack.c.l.b16 %v1078
      %v1423 = vunpack.c.l.b16 %v1079
      %v1424 = vunpack.c.l.b16 %v1080
      %v1425 = vunpack.c.l.b16 %v1081
      %v1426 = vunpack.c.h.b16 %v1074
      %v1427 = vunpack.c.h.b16 %v1075
      %v1428 = vunpack.c.h.b16 %v1076
      %v1429 = vunpack.c.h.b16 %v1077
      %v1430 = vunpack.c.h.b16 %v1078
      %v1431 = vunpack.c.h.b16 %v1079
      %v1432 = vunpack.c.h.b16 %v1080
      %v1433 = vunpack.c.h.b16 %v1081
      %v1434 = vunpack.c.l.b16 %v1082
      %v1435 = vunpack.c.l.b16 %v1083
      %v1436 = vunpack.c.l.b16 %v1084
      %v1437 = vunpack.c.l.b16 %v1085
      %v1438 = vunpack.c.l.b16 %v1086
      %v1439 = vunpack.c.l.b16 %v1087
      %v1440 = vunpack.c.l.b16 %v1088
      %v1441 = vunpack.c.l.b16 %v1089
      %v1442 = vunpack.c.h.b16 %v1082
      %v1443 = vunpack.c.h.b16 %v1083
      %v1444 = vunpack.c.h.b16 %v1084
      %v1445 = vunpack.c.h.b16 %v1085
      %v1446 = vunpack.c.h.b16 %v1086
      %v1447 = vunpack.c.h.b16 %v1087
      %v1448 = vunpack.c.h.b16 %v1088
      %v1449 = vunpack.c.h.b16 %v1089
      %v1450 = vunpack.c.l.b16 %v1090
      %v1451 = vunpack.c.l.b16 %v1091
      %v1452 = vunpack.c.l.b16 %v1092
      %v1453 = vunpack.c.l.b16 %v1093
      %v1454 = vunpack.c.l.b16 %v1094
      %v1455 = vunpack.c.l.b16 %v1095
      %v1456 = vunpack.c.l.b16 %v1096
      %v1457 = vunpack.c.l.b16 %v1097
      %v1458 = vunpack.c.h.b16 %v1090
      %v1459 = vunpack.c.h.b16 %v1091
      %v1460 = vunpack.c.h.b16 %v1092
      %v1461 = vunpack.c.h.b16 %v1093
      %v1462 = vunpack.c.h.b16 %v1094
      %v1463 = vunpack.c.h.b16 %v1095
      %v1464 = vunpack.c.h.b16 %v1096
      %v1465 = vunpack.c.h.b16 %v1097
      %v1466 = vunpack.c.l.b16 %v1098
      %v1467 = vunpack.c.l.b16 %v1099
      %v1468 = vunpack.c.l.b16 %v1100
      %v1469 = vunpack.c.l.b16 %v1101
      %v1470 = vunpack.c.l.b16 %v1102
      %v1471 = vunpack.c.l.b16 %v1103
      %v1472 = vunpack.c.l.b16 %v1104
      %v1473 = vunpack.c.l.b16 %v1105
      %v1474 = vunpack.c.h.b16 %v1098
      %v1475 = vunpack.c.h.b16 %v1099
      %v1476 = vunpack.c.h.b16 %v1100
      %v1477 = vunpack.c.h.b16 %v1101
      %v1478 = vunpack.c.h.b16 %v1102
      %v1479 = vunpack.c.h.b16 %v1103
      %v1480 = vunpack.c.h.b16 %v1104
      %v1481 = vunpack.c.h.b16 %v1105
      %v1482 = vunpack.c.l.b16 %v1106
      %v1483 = vunpack.c.l.b16 %v1107
      %v1484 = vunpack.c.l.b16 %v1108
      %v1485 = vunpack.c.l.b16 %v1109
      %v1486 = vunpack.c.l.b16 %v1110
      %v1487 = vunpack.c.l.b16 %v1111
      %v1488 = vunpack.c.l.b16 %v1112
      %v1489 = vunpack.c.l.b16 %v1113
      %v1490 = vunpack.c.h.b16 %v1106
      %v1491 = vunpack.c.h.b16 %v1107
      %v1492 = vunpack.c.h.b16 %v1108
      %v1493 = vunpack.c.h.b16 %v1109
      %v1494 = vunpack.c.h.b16 %v1110
      %v1495 = vunpack.c.h.b16 %v1111
      %v1496 = vunpack.c.h.b16 %v1112
      %v1497 = vunpack.c.h.b16 %v1113
      %v1498 = vpack.c.b16 %v1243, %v1242
      %v1499 = vpack.c.b16 %v1245, %v1244
      %v1500 = vpack.c.b16 %v1247, %v1246
      %v1501 = vpack.c.b16 %v1249, %v1248
      %v1502 = vpack.c.b16 %v1251, %v1250
      %v1503 = vpack.c.b16 %v1253, %v1252
      %v1504 = vpack.c.b16 %v1255, %v1254
      %v1505 = vpack.c.b16 %v1257, %v1256
      %v1506 = vpack.c.b16 %v1259, %v1258
      %v1507 = vpack.c.b16 %v1261, %v1260
      %v1508 = vpack.c.b16 %v1263, %v1262
      %v1509 = vpack.c.b16 %v1265, %v1264
      %v1510 = vpack.c.b16 %v1267, %v1266
      %v1511 = vpack.c.b16 %v1269, %v1268
      %v1512 = vpack.c.b16 %v1271, %v1270
      %v1513 = vpack.c.b16 %v1273, %v1272
      %v1514 = vpack.c.b16 %v1275, %v1274
      %v1515 = vpack.c.b16 %v1277, %v1276
      %v1516 = vpack.c.b16 %v1279, %v1278
      %v1517 = vpack.c.b16 %v1281, %v1280
      %v1518 = vpack.c.b16 %v1283, %v1282
      %v1519 = vpack.c.b16 %v1285, %v1284
      %v1520 = vpack.c.b16 %v1287, %v1286
      %v1521 = vpack.c.b16 %v1289, %v1288
      %v1522 = vpack.c.b16 %v1291, %v1290
      %v1523 = vpack.c.b16 %v1293, %v1292
      %v1524 = vpack.c.b16 %v1295, %v1294
      %v1525 = vpack.c.b16 %v1297, %v1296
      %v1526 = vpack.c.b16 %v1299, %v1298
      %v1527 = vpack.c.b16 %v1301, %v1300
      %v1528 = vpack.c.b16 %v1303, %v1302
      %v1529 = vpack.c.b16 %v1305, %v1304
      %v1530 = vpack.c.b16 %v1307, %v1306
      %v1531 = vpack.c.b16 %v1309, %v1308
      %v1532 = vpack.c.b16 %v1311, %v1310
      %v1533 = vpack.c.b16 %v1313, %v1312
      %v1534 = vpack.c.b16 %v1315, %v1314
      %v1535 = vpack.c.b16 %v1317, %v1316
      %v1536 = vpack.c.b16 %v1319, %v1318
      %v1537 = vpack.c.b16 %v1321, %v1320
      %v1538 = vpack.c.b16 %v1323, %v1322
      %v1539 = vpack.c.b16 %v1325, %v1324
      %v1540 = vpack.c.b16 %v1327, %v1326
      %v1541 = vpack.c.b16 %v1329, %v1328
      %v1542 = vpack.c.b16 %v1331, %v1330
      %v1543 = vpack.c.b16 %v1333, %v1332
      %v1544 = vpack.c.b16 %v1335, %v1334
      %v1545 = vpack.c.b16 %v1337, %v1336
      %v1546 = vpack.c.b16 %v1339, %v1338
      %v1547 = vpack.c.b16 %v1341, %v1340
      %v1548 = vpack.c.b16 %v1343, %v1342
      %v1549 = vpack.c.b16 %v1345, %v1344
      %v1550 = vpack.c.b16 %v1347, %v1346
      %v1551 = vpack.c.b16 %v1349, %v1348
      %v1552 = vpack.c.b16 %v1351, %v1350
      %v1553 = vpack.c.b16 %v1353, %v1352
      %v1554 = vpack.c.b16 %v1355, %v1354
      %v1555 = vpack.c.b16 %v1357, %v1356
      %v1556 = vpack.c.b16 %v1359, %v1358
      %v1557 = vpack.c.b16 %v1361, %v1360
      %v1558 = vpack.c.b16 %v1363, %v1362
      %v1559 = vpack.c.b16 %v1365, %v1364
      %v1560 = vpack.c.b16 %v1367, %v1366
      %v1561 = vpack.c.b16 %v1369, %v1368
      %v1562 = vpack.c.b16 %v1371, %v1370
      %v1563 = vpack.c.b16 %v1373, %v1372
      %v1564 = vpack.c.b16 %v1375, %v1374
      %v1565 = vpack.c.b16 %v1377, %v1376
      %v1566 = vpack.c.b16 %v1379, %v1378
      %v1567 = vpack.c.b16 %v1381, %v1380
      %v1568 = vpack.c.b16 %v1383, %v1382
      %v1569 = vpack.c.b16 %v1385, %v1384
      %v1570 = vpack.c.b16 %v1387, %v1386
      %v1571 = vpack.c.b16 %v1389, %v1388
      %v1572 = vpack.c.b16 %v1391, %v1390
      %v1573 = vpack.c.b16 %v1393, %v1392
      %v1574 = vpack.c.b16 %v1395, %v1394
      %v1575 = vpack.c.b16 %v1397, %v1396
      %v1576 = vpack.c.b16 %v1399, %v1398
      %v1577 = vpack.c.b16 %v1401, %v1400
      %v1578 = vpack.c.b16 %v1403, %v1402
      %v1579 = vpack.c.b16 %v1405, %v1404
      %v1580 = vpack.c.b16 %v1407, %v1406
      %v1581 = vpack.c.b16 %v1409, %v1408
      %v1582 = vpack.c.b16 %v1411, %v1410
      %v1583 = vpack.c.b16 %v1413, %v1412
      %v1584 = vpack.c.b16 %v1415, %v1414
      %v1585 = vpack.c.b16 %v1417, %v1416
      %v1586 = vpack.c.b16 %v1419, %v1418
      %v1587 = vpack.c.b16 %v1421, %v1420
      %v1588 = vpack.c.b16 %v1423, %v1422
      %v1589 = vpack.c.b16 %v1425, %v1424
      %v1590 = vpack.c.b16 %v1427, %v1426
      %v1591 = vpack.c.b16 %v1429, %v1428
      %v1592 = vpack.c.b16 %v1431, %v1430
      %v1593 = vpack.c.b16 %v1433, %v1432
      %v1594 = vpack.c.b16 %v1435, %v1434
      %v1595 = vpack.c.b16 %v1437, %v1436
      %v1596 = vpack.c.b16 %v1439, %v1438
      %v1597 = vpack.c.b16 %v1441, %v1440
      %v1598 = vpack.c.b16 %v1443, %v1442
      %v1599 = vpack.c.b16 %v1445, %v1444
      %v1600 = vpack.c.b16 %v1447, %v1446
      %v1601 = vpack.c.b16 %v1449, %v1448
      %v1602 = vpack.c.b16 %v1451, %v1450
      %v1603 = vpack.c.b16 %v1453, %v1452
      %v1604 = vpack.c.b16 %v1455, %v1454
      %v1605 = vpack.c.b16 %v1457, %v1456
      %v1606 = vpack.c.b16 %v1459, %v1458
      %v1607 = vpack.c.b16 %v1461, %v1460
      %v1608 = vpack.c.b16 %v1463, %v1462
      %v1609 = vpack.c.b16 %v1465, %v1464
      %v1610 = vpack.c.b16 %v1467, %v1466
      %v1611 = vpack.c.b16 %v1469, %v1468
      %v1612 = vpack.c.b16 %v1471, %v1470
      %v1613 = vpack.c.b16 %v1473, %v1472
      %v1614 = vpack.c.b16 %v1475, %v1474
      %v1615 = vpack.c.b16 %v1477, %v1476
      %v1616 = vpack.c.b16 %v1479, %v1478
      %v1617 = vpack.c.b16 %v1481, %v1480
      %v1618 = vpack.c.b16 %v1483, %v1482
      %v1619 = vpack.c.b16 %v1485, %v1484
      %v1620 = vpack.c.b16 %v1487, %v1486
      %v1621 = vpack.c.b16 %v1489, %v1488
      %v1622 = vpack.c.b16 %v1491, %v1490
      %v1623 = vpack.c.b16 %v1493, %v1492
      %v1624 = vpack.c.b16 %v1495, %v1494
      %v1625 = vpack.c.b16 %v1497, %v1496
      %1754 = vst [vmem:[#allocation2] sm:$0xff] %v1498
      %1755 = vst [vmem:[#allocation2 + $0x8] sm:$0xff] %v1499
      %1756 = vst [vmem:[#allocation2 + $0x10] sm:$0xff] %v1500
      %1757 = vst [vmem:[#allocation2 + $0x18] sm:$0xff] %v1501
      %1758 = vst [vmem:[#allocation2 + $0x20] sm:$0xff] %v1502
      %1759 = vst [vmem:[#allocation2 + $0x28] sm:$0xff] %v1503
      %1760 = vst [vmem:[#allocation2 + $0x30] sm:$0xff] %v1504
      %1761 = vst [vmem:[#allocation2 + $0x38] sm:$0xff] %v1505
      %1762 = vst [vmem:[#allocation2 + $0x40] sm:$0xff] %v1506
      %1763 = vst [vmem:[#allocation2 + $0x48] sm:$0xff] %v1507
      %1764 = vst [vmem:[#allocation2 + $0x50] sm:$0xff] %v1508
      %1765 = vst [vmem:[#allocation2 + $0x58] sm:$0xff] %v1509
      %1766 = vst [vmem:[#allocation2 + $0x60] sm:$0xff] %v1510
      %1767 = vst [vmem:[#allocation2 + $0x68] sm:$0xff] %v1511
      %1768 = vst [vmem:[#allocation2 + $0x70] sm:$0xff] %v1512
      %1769 = vst [vmem:[#allocation2 + $0x78] sm:$0xff] %v1513
      %1770 = vst [vmem:[#allocation2 + $0x80] sm:$0xff] %v1514
      %1771 = vst [vmem:[#allocation2 + $0x88] sm:$0xff] %v1515
      %1772 = vst [vmem:[#allocation2 + $0x90] sm:$0xff] %v1516
      %1773 = vst [vmem:[#allocation2 + $0x98] sm:$0xff] %v1517
      %1774 = vst [vmem:[#allocation2 + $0xa0] sm:$0xff] %v1518
      %1775 = vst [vmem:[#allocation2 + $0xa8] sm:$0xff] %v1519
      %1776 = vst [vmem:[#allocation2 + $0xb0] sm:$0xff] %v1520
      %1777 = vst [vmem:[#allocation2 + $0xb8] sm:$0xff] %v1521
      %1778 = vst [vmem:[#allocation2 + $0xc0] sm:$0xff] %v1522
      %1779 = vst [vmem:[#allocation2 + $0xc8] sm:$0xff] %v1523
      %1780 = vst [vmem:[#allocation2 + $0xd0] sm:$0xff] %v1524
      %1781 = vst [vmem:[#allocation2 + $0xd8] sm:$0xff] %v1525
      %1782 = vst [vmem:[#allocation2 + $0xe0] sm:$0xff] %v1526
      %1783 = vst [vmem:[#allocation2 + $0xe8] sm:$0xff] %v1527
      %1784 = vst [vmem:[#allocation2 + $0xf0] sm:$0xff] %v1528
      %1785 = vst [vmem:[#allocation2 + $0xf8] sm:$0xff] %v1529
      %1786 = vst [vmem:[#allocation2 + $0x100] sm:$0xff] %v1530
      %1787 = vst [vmem:[#allocation2 + $0x108] sm:$0xff] %v1531
      %1788 = vst [vmem:[#allocation2 + $0x110] sm:$0xff] %v1532
      %1789 = vst [vmem:[#allocation2 + $0x118] sm:$0xff] %v1533
      %1790 = vst [vmem:[#allocation2 + $0x120] sm:$0xff] %v1534
      %1791 = vst [vmem:[#allocation2 + $0x128] sm:$0xff] %v1535
      %1792 = vst [vmem:[#allocation2 + $0x130] sm:$0xff] %v1536
      %1793 = vst [vmem:[#allocation2 + $0x138] sm:$0xff] %v1537
      %1794 = vst [vmem:[#allocation2 + $0x140] sm:$0xff] %v1538
      %1795 = vst [vmem:[#allocation2 + $0x148] sm:$0xff] %v1539
      %1796 = vst [vmem:[#allocation2 + $0x150] sm:$0xff] %v1540
      %1797 = vst [vmem:[#allocation2 + $0x158] sm:$0xff] %v1541
      %1798 = vst [vmem:[#allocation2 + $0x160] sm:$0xff] %v1542
      %1799 = vst [vmem:[#allocation2 + $0x168] sm:$0xff] %v1543
      %1800 = vst [vmem:[#allocation2 + $0x170] sm:$0xff] %v1544
      %1801 = vst [vmem:[#allocation2 + $0x178] sm:$0xff] %v1545
      %1802 = vst [vmem:[#allocation2 + $0x180] sm:$0xff] %v1546
      %1803 = vst [vmem:[#allocation2 + $0x188] sm:$0xff] %v1547
      %1804 = vst [vmem:[#allocation2 + $0x190] sm:$0xff] %v1548
      %1805 = vst [vmem:[#allocation2 + $0x198] sm:$0xff] %v1549
      %1806 = vst [vmem:[#allocation2 + $0x1a0] sm:$0xff] %v1550
      %1807 = vst [vmem:[#allocation2 + $0x1a8] sm:$0xff] %v1551
      %1808 = vst [vmem:[#allocation2 + $0x1b0] sm:$0xff] %v1552
      %1809 = vst [vmem:[#allocation2 + $0x1b8] sm:$0xff] %v1553
      %1810 = vst [vmem:[#allocation2 + $0x1c0] sm:$0xff] %v1554
      %1811 = vst [vmem:[#allocation2 + $0x1c8] sm:$0xff] %v1555
      %1812 = vst [vmem:[#allocation2 + $0x1d0] sm:$0xff] %v1556
      %1813 = vst [vmem:[#allocation2 + $0x1d8] sm:$0xff] %v1557
      %1814 = vst [vmem:[#allocation2 + $0x1e0] sm:$0xff] %v1558
      %1815 = vst [vmem:[#allocation2 + $0x1e8] sm:$0xff] %v1559
      %1816 = vst [vmem:[#allocation2 + $0x1f0] sm:$0xff] %v1560
      %1817 = vst [vmem:[#allocation2 + $0x1f8] sm:$0xff] %v1561
      %1818 = vst [vmem:[#allocation2 + $0x200] sm:$0xff] %v1562
      %1819 = vst [vmem:[#allocation2 + $0x208] sm:$0xff] %v1563
      %1820 = vst [vmem:[#allocation2 + $0x210] sm:$0xff] %v1564
      %1821 = vst [vmem:[#allocation2 + $0x218] sm:$0xff] %v1565
      %1822 = vst [vmem:[#allocation2 + $0x220] sm:$0xff] %v1566
      %1823 = vst [vmem:[#allocation2 + $0x228] sm:$0xff] %v1567
      %1824 = vst [vmem:[#allocation2 + $0x230] sm:$0xff] %v1568
      %1825 = vst [vmem:[#allocation2 + $0x238] sm:$0xff] %v1569
      %1826 = vst [vmem:[#allocation2 + $0x240] sm:$0xff] %v1570
      %1827 = vst [vmem:[#allocation2 + $0x248] sm:$0xff] %v1571
      %1828 = vst [vmem:[#allocation2 + $0x250] sm:$0xff] %v1572
      %1829 = vst [vmem:[#allocation2 + $0x258] sm:$0xff] %v1573
      %1830 = vst [vmem:[#allocation2 + $0x260] sm:$0xff] %v1574
      %1831 = vst [vmem:[#allocation2 + $0x268] sm:$0xff] %v1575
      %1832 = vst [vmem:[#allocation2 + $0x270] sm:$0xff] %v1576
      %1833 = vst [vmem:[#allocation2 + $0x278] sm:$0xff] %v1577
      %1834 = vst [vmem:[#allocation2 + $0x280] sm:$0xff] %v1578
      %1835 = vst [vmem:[#allocation2 + $0x288] sm:$0xff] %v1579
      %1836 = vst [vmem:[#allocation2 + $0x290] sm:$0xff] %v1580
      %1837 = vst [vmem:[#allocation2 + $0x298] sm:$0xff] %v1581
      %1838 = vst [vmem:[#allocation2 + $0x2a0] sm:$0xff] %v1582
      %1839 = vst [vmem:[#allocation2 + $0x2a8] sm:$0xff] %v1583
      %1840 = vst [vmem:[#allocation2 + $0x2b0] sm:$0xff] %v1584
      %1841 = vst [vmem:[#allocation2 + $0x2b8] sm:$0xff] %v1585
      %1842 = vst [vmem:[#allocation2 + $0x2c0] sm:$0xff] %v1586
      %1843 = vst [vmem:[#allocation2 + $0x2c8] sm:$0xff] %v1587
      %1844 = vst [vmem:[#allocation2 + $0x2d0] sm:$0xff] %v1588
      %1845 = vst [vmem:[#allocation2 + $0x2d8] sm:$0xff] %v1589
      %1846 = vst [vmem:[#allocation2 + $0x2e0] sm:$0xff] %v1590
      %1847 = vst [vmem:[#allocation2 + $0x2e8] sm:$0xff] %v1591
      %1848 = vst [vmem:[#allocation2 + $0x2f0] sm:$0xff] %v1592
      %1849 = vst [vmem:[#allocation2 + $0x2f8] sm:$0xff] %v1593
      %1850 = vst [vmem:[#allocation2 + $0x300] sm:$0xff] %v1594
      %1851 = vst [vmem:[#allocation2 + $0x308] sm:$0xff] %v1595
      %1852 = vst [vmem:[#allocation2 + $0x310] sm:$0xff] %v1596
      %1853 = vst [vmem:[#allocation2 + $0x318] sm:$0xff] %v1597
      %1854 = vst [vmem:[#allocation2 + $0x320] sm:$0xff] %v1598
      %1855 = vst [vmem:[#allocation2 + $0x328] sm:$0xff] %v1599
      %1856 = vst [vmem:[#allocation2 + $0x330] sm:$0xff] %v1600
      %1857 = vst [vmem:[#allocation2 + $0x338] sm:$0xff] %v1601
      %1858 = vst [vmem:[#allocation2 + $0x340] sm:$0xff] %v1602
      %1859 = vst [vmem:[#allocation2 + $0x348] sm:$0xff] %v1603
      %1860 = vst [vmem:[#allocation2 + $0x350] sm:$0xff] %v1604
      %1861 = vst [vmem:[#allocation2 + $0x358] sm:$0xff] %v1605
      %1862 = vst [vmem:[#allocation2 + $0x360] sm:$0xff] %v1606
      %1863 = vst [vmem:[#allocation2 + $0x368] sm:$0xff] %v1607
      %1864 = vst [vmem:[#allocation2 + $0x370] sm:$0xff] %v1608
      %1865 = vst [vmem:[#allocation2 + $0x378] sm:$0xff] %v1609
      %1866 = vst [vmem:[#allocation2 + $0x380] sm:$0xff] %v1610
      %1867 = vst [vmem:[#allocation2 + $0x388] sm:$0xff] %v1611
      %1868 = vst [vmem:[#allocation2 + $0x390] sm:$0xff] %v1612
      %1869 = vst [vmem:[#allocation2 + $0x398] sm:$0xff] %v1613
      %1870 = vst [vmem:[#allocation2 + $0x3a0] sm:$0xff] %v1614
      %1871 = vst [vmem:[#allocation2 + $0x3a8] sm:$0xff] %v1615
      %1872 = vst [vmem:[#allocation2 + $0x3b0] sm:$0xff] %v1616
      %1873 = vst [vmem:[#allocation2 + $0x3b8] sm:$0xff] %v1617
      %1874 = vst [vmem:[#allocation2 + $0x3c0] sm:$0xff] %v1618
      %1875 = vst [vmem:[#allocation2 + $0x3c8] sm:$0xff] %v1619
      %1876 = vst [vmem:[#allocation2 + $0x3d0] sm:$0xff] %v1620
      %1877 = vst [vmem:[#allocation2 + $0x3d8] sm:$0xff] %v1621
      %1878 = vst [vmem:[#allocation2 + $0x3e0] sm:$0xff] %v1622
      %1879 = vst [vmem:[#allocation2 + $0x3e8] sm:$0xff] %v1623
      %1880 = vst [vmem:[#allocation2 + $0x3f0] sm:$0xff] %v1624
      %1881 = vst [vmem:[#allocation2 + $0x3f8] sm:$0xff] %v1625
      %v1882 = vld [vmem:[#allocation8] sm:$0xff]
      %v1883 = vld [vmem:[#allocation8 + $0x8] sm:$0xff]
      %v1884 = vld [vmem:[#allocation8 + $0x10] sm:$0xff]
      %v1885 = vld [vmem:[#allocation8 + $0x18] sm:$0xff]
      %v1886 = vld [vmem:[#allocation8 + $0x20] sm:$0xff]
      %v1887 = vld [vmem:[#allocation8 + $0x28] sm:$0xff]
      %v1888 = vld [vmem:[#allocation8 + $0x30] sm:$0xff]
      %v1889 = vld [vmem:[#allocation8 + $0x38] sm:$0xff]
      %v1890 = vld [vmem:[#allocation8 + $0x40] sm:$0xff]
      %v1891 = vld [vmem:[#allocation8 + $0x48] sm:$0xff]
      %v1892 = vld [vmem:[#allocation8 + $0x50] sm:$0xff]
      %v1893 = vld [vmem:[#allocation8 + $0x58] sm:$0xff]
      %v1894 = vld [vmem:[#allocation8 + $0x60] sm:$0xff]
      %v1895 = vld [vmem:[#allocation8 + $0x68] sm:$0xff]
      %v1896 = vld [vmem:[#allocation8 + $0x70] sm:$0xff]
      %v1897 = vld [vmem:[#allocation8 + $0x78] sm:$0xff]
      %v1898 = vld [vmem:[#allocation8 + $0x80] sm:$0xff]
      %v1899 = vld [vmem:[#allocation8 + $0x88] sm:$0xff]
      %v1900 = vld [vmem:[#allocation8 + $0x90] sm:$0xff]
      %v1901 = vld [vmem:[#allocation8 + $0x98] sm:$0xff]
      %v1902 = vld [vmem:[#allocation8 + $0xa0] sm:$0xff]
      %v1903 = vld [vmem:[#allocation8 + $0xa8] sm:$0xff]
      %v1904 = vld [vmem:[#allocation8 + $0xb0] sm:$0xff]
      %v1905 = vld [vmem:[#allocation8 + $0xb8] sm:$0xff]
      %v1906 = vld [vmem:[#allocation8 + $0xc0] sm:$0xff]
      %v1907 = vld [vmem:[#allocation8 + $0xc8] sm:$0xff]
      %v1908 = vld [vmem:[#allocation8 + $0xd0] sm:$0xff]
      %v1909 = vld [vmem:[#allocation8 + $0xd8] sm:$0xff]
      %v1910 = vld [vmem:[#allocation8 + $0xe0] sm:$0xff]
      %v1911 = vld [vmem:[#allocation8 + $0xe8] sm:$0xff]
      %v1912 = vld [vmem:[#allocation8 + $0xf0] sm:$0xff]
      %v1913 = vld [vmem:[#allocation8 + $0xf8] sm:$0xff]
      %v1914 = vld [vmem:[#allocation8 + $0x100] sm:$0xff]
      %v1915 = vld [vmem:[#allocation8 + $0x108] sm:$0xff]
      %v1916 = vld [vmem:[#allocation8 + $0x110] sm:$0xff]
      %v1917 = vld [vmem:[#allocation8 + $0x118] sm:$0xff]
      %v1918 = vld [vmem:[#allocation8 + $0x120] sm:$0xff]
      %v1919 = vld [vmem:[#allocation8 + $0x128] sm:$0xff]
      %v1920 = vld [vmem:[#allocation8 + $0x130] sm:$0xff]
      %v1921 = vld [vmem:[#allocation8 + $0x138] sm:$0xff]
      %v1922 = vld [vmem:[#allocation8 + $0x140] sm:$0xff]
      %v1923 = vld [vmem:[#allocation8 + $0x148] sm:$0xff]
      %v1924 = vld [vmem:[#allocation8 + $0x150] sm:$0xff]
      %v1925 = vld [vmem:[#allocation8 + $0x158] sm:$0xff]
      %v1926 = vld [vmem:[#allocation8 + $0x160] sm:$0xff]
      %v1927 = vld [vmem:[#allocation8 + $0x168] sm:$0xff]
      %v1928 = vld [vmem:[#allocation8 + $0x170] sm:$0xff]
      %v1929 = vld [vmem:[#allocation8 + $0x178] sm:$0xff]
      %v1930 = vld [vmem:[#allocation8 + $0x180] sm:$0xff]
      %v1931 = vld [vmem:[#allocation8 + $0x188] sm:$0xff]
      %v1932 = vld [vmem:[#allocation8 + $0x190] sm:$0xff]
      %v1933 = vld [vmem:[#allocation8 + $0x198] sm:$0xff]
      %v1934 = vld [vmem:[#allocation8 + $0x1a0] sm:$0xff]
      %v1935 = vld [vmem:[#allocation8 + $0x1a8] sm:$0xff]
      %v1936 = vld [vmem:[#allocation8 + $0x1b0] sm:$0xff]
      %v1937 = vld [vmem:[#allocation8 + $0x1b8] sm:$0xff]
      %v1938 = vld [vmem:[#allocation8 + $0x1c0] sm:$0xff]
      %v1939 = vld [vmem:[#allocation8 + $0x1c8] sm:$0xff]
      %v1940 = vld [vmem:[#allocation8 + $0x1d0] sm:$0xff]
      %v1941 = vld [vmem:[#allocation8 + $0x1d8] sm:$0xff]
      %v1942 = vld [vmem:[#allocation8 + $0x1e0] sm:$0xff]
      %v1943 = vld [vmem:[#allocation8 + $0x1e8] sm:$0xff]
      %v1944 = vld [vmem:[#allocation8 + $0x1f0] sm:$0xff]
      %v1945 = vld [vmem:[#allocation8 + $0x1f8] sm:$0xff]
      %v1946 = vld [vmem:[#allocation8 + $0x200] sm:$0xff]
      %v1947 = vld [vmem:[#allocation8 + $0x208] sm:$0xff]
      %v1948 = vld [vmem:[#allocation8 + $0x210] sm:$0xff]
      %v1949 = vld [vmem:[#allocation8 + $0x218] sm:$0xff]
      %v1950 = vld [vmem:[#allocation8 + $0x220] sm:$0xff]
      %v1951 = vld [vmem:[#allocation8 + $0x228] sm:$0xff]
      %v1952 = vld [vmem:[#allocation8 + $0x230] sm:$0xff]
      %v1953 = vld [vmem:[#allocation8 + $0x238] sm:$0xff]
      %v1954 = vld [vmem:[#allocation8 + $0x240] sm:$0xff]
      %v1955 = vld [vmem:[#allocation8 + $0x248] sm:$0xff]
      %v1956 = vld [vmem:[#allocation8 + $0x250] sm:$0xff]
      %v1957 = vld [vmem:[#allocation8 + $0x258] sm:$0xff]
      %v1958 = vld [vmem:[#allocation8 + $0x260] sm:$0xff]
      %v1959 = vld [vmem:[#allocation8 + $0x268] sm:$0xff]
      %v1960 = vld [vmem:[#allocation8 + $0x270] sm:$0xff]
      %v1961 = vld [vmem:[#allocation8 + $0x278] sm:$0xff]
      %v1962 = vld [vmem:[#allocation8 + $0x280] sm:$0xff]
      %v1963 = vld [vmem:[#allocation8 + $0x288] sm:$0xff]
      %v1964 = vld [vmem:[#allocation8 + $0x290] sm:$0xff]
      %v1965 = vld [vmem:[#allocation8 + $0x298] sm:$0xff]
      %v1966 = vld [vmem:[#allocation8 + $0x2a0] sm:$0xff]
      %v1967 = vld [vmem:[#allocation8 + $0x2a8] sm:$0xff]
      %v1968 = vld [vmem:[#allocation8 + $0x2b0] sm:$0xff]
      %v1969 = vld [vmem:[#allocation8 + $0x2b8] sm:$0xff]
      %v1970 = vld [vmem:[#allocation8 + $0x2c0] sm:$0xff]
      %v1971 = vld [vmem:[#allocation8 + $0x2c8] sm:$0xff]
      %v1972 = vld [vmem:[#allocation8 + $0x2d0] sm:$0xff]
      %v1973 = vld [vmem:[#allocation8 + $0x2d8] sm:$0xff]
      %v1974 = vld [vmem:[#allocation8 + $0x2e0] sm:$0xff]
      %v1975 = vld [vmem:[#allocation8 + $0x2e8] sm:$0xff]
      %v1976 = vld [vmem:[#allocation8 + $0x2f0] sm:$0xff]
      %v1977 = vld [vmem:[#allocation8 + $0x2f8] sm:$0xff]
      %v1978 = vld [vmem:[#allocation8 + $0x300] sm:$0xff]
      %v1979 = vld [vmem:[#allocation8 + $0x308] sm:$0xff]
      %v1980 = vld [vmem:[#allocation8 + $0x310] sm:$0xff]
      %v1981 = vld [vmem:[#allocation8 + $0x318] sm:$0xff]
      %v1982 = vld [vmem:[#allocation8 + $0x320] sm:$0xff]
      %v1983 = vld [vmem:[#allocation8 + $0x328] sm:$0xff]
      %v1984 = vld [vmem:[#allocation8 + $0x330] sm:$0xff]
      %v1985 = vld [vmem:[#allocation8 + $0x338] sm:$0xff]
      %v1986 = vld [vmem:[#allocation8 + $0x340] sm:$0xff]
      %v1987 = vld [vmem:[#allocation8 + $0x348] sm:$0xff]
      %v1988 = vld [vmem:[#allocation8 + $0x350] sm:$0xff]
      %v1989 = vld [vmem:[#allocation8 + $0x358] sm:$0xff]
      %v1990 = vld [vmem:[#allocation8 + $0x360] sm:$0xff]
      %v1991 = vld [vmem:[#allocation8 + $0x368] sm:$0xff]
      %v1992 = vld [vmem:[#allocation8 + $0x370] sm:$0xff]
      %v1993 = vld [vmem:[#allocation8 + $0x378] sm:$0xff]
      %v1994 = vld [vmem:[#allocation8 + $0x380] sm:$0xff]
      %v1995 = vld [vmem:[#allocation8 + $0x388] sm:$0xff]
      %v1996 = vld [vmem:[#allocation8 + $0x390] sm:$0xff]
      %v1997 = vld [vmem:[#allocation8 + $0x398] sm:$0xff]
      %v1998 = vld [vmem:[#allocation8 + $0x3a0] sm:$0xff]
      %v1999 = vld [vmem:[#allocation8 + $0x3a8] sm:$0xff]
      %v2000 = vld [vmem:[#allocation8 + $0x3b0] sm:$0xff]
      %v2001 = vld [vmem:[#allocation8 + $0x3b8] sm:$0xff]
      %v2002 = vld [vmem:[#allocation8 + $0x3c0] sm:$0xff]
      %v2003 = vld [vmem:[#allocation8 + $0x3c8] sm:$0xff]
      %v2004 = vld [vmem:[#allocation8 + $0x3d0] sm:$0xff]
      %v2005 = vld [vmem:[#allocation8 + $0x3d8] sm:$0xff]
      %v2006 = vld [vmem:[#allocation8 + $0x3e0] sm:$0xff]
      %v2007 = vld [vmem:[#allocation8 + $0x3e8] sm:$0xff]
      %v2008 = vld [vmem:[#allocation8 + $0x3f0] sm:$0xff]
      %v2009 = vld [vmem:[#allocation8 + $0x3f8] sm:$0xff]
      %v2010 = vld [vmem:[#allocation8 + $0x400] sm:$0xff]
      %v2011 = vld [vmem:[#allocation8 + $0x408] sm:$0xff]
      %v2012 = vld [vmem:[#allocation8 + $0x410] sm:$0xff]
      %v2013 = vld [vmem:[#allocation8 + $0x418] sm:$0xff]
      %v2014 = vld [vmem:[#allocation8 + $0x420] sm:$0xff]
      %v2015 = vld [vmem:[#allocation8 + $0x428] sm:$0xff]
      %v2016 = vld [vmem:[#allocation8 + $0x430] sm:$0xff]
      %v2017 = vld [vmem:[#allocation8 + $0x438] sm:$0xff]
      %v2018 = vld [vmem:[#allocation8 + $0x440] sm:$0xff]
      %v2019 = vld [vmem:[#allocation8 + $0x448] sm:$0xff]
      %v2020 = vld [vmem:[#allocation8 + $0x450] sm:$0xff]
      %v2021 = vld [vmem:[#allocation8 + $0x458] sm:$0xff]
      %v2022 = vld [vmem:[#allocation8 + $0x460] sm:$0xff]
      %v2023 = vld [vmem:[#allocation8 + $0x468] sm:$0xff]
      %v2024 = vld [vmem:[#allocation8 + $0x470] sm:$0xff]
      %v2025 = vld [vmem:[#allocation8 + $0x478] sm:$0xff]
      %v2026 = vld [vmem:[#allocation8 + $0x480] sm:$0xff]
      %v2027 = vld [vmem:[#allocation8 + $0x488] sm:$0xff]
      %v2028 = vld [vmem:[#allocation8 + $0x490] sm:$0xff]
      %v2029 = vld [vmem:[#allocation8 + $0x498] sm:$0xff]
      %v2030 = vld [vmem:[#allocation8 + $0x4a0] sm:$0xff]
      %v2031 = vld [vmem:[#allocation8 + $0x4a8] sm:$0xff]
      %v2032 = vld [vmem:[#allocation8 + $0x4b0] sm:$0xff]
      %v2033 = vld [vmem:[#allocation8 + $0x4b8] sm:$0xff]
      %v2034 = vld [vmem:[#allocation8 + $0x4c0] sm:$0xff]
      %v2035 = vld [vmem:[#allocation8 + $0x4c8] sm:$0xff]
      %v2036 = vld [vmem:[#allocation8 + $0x4d0] sm:$0xff]
      %v2037 = vld [vmem:[#allocation8 + $0x4d8] sm:$0xff]
      %v2038 = vld [vmem:[#allocation8 + $0x4e0] sm:$0xff]
      %v2039 = vld [vmem:[#allocation8 + $0x4e8] sm:$0xff]
      %v2040 = vld [vmem:[#allocation8 + $0x4f0] sm:$0xff]
      %v2041 = vld [vmem:[#allocation8 + $0x4f8] sm:$0xff]
      %v2042 = vld [vmem:[#allocation8 + $0x500] sm:$0xff]
      %v2043 = vld [vmem:[#allocation8 + $0x508] sm:$0xff]
      %v2044 = vld [vmem:[#allocation8 + $0x510] sm:$0xff]
      %v2045 = vld [vmem:[#allocation8 + $0x518] sm:$0xff]
      %v2046 = vld [vmem:[#allocation8 + $0x520] sm:$0xff]
      %v2047 = vld [vmem:[#allocation8 + $0x528] sm:$0xff]
      %v2048 = vld [vmem:[#allocation8 + $0x530] sm:$0xff]
      %v2049 = vld [vmem:[#allocation8 + $0x538] sm:$0xff]
      %v2050 = vld [vmem:[#allocation8 + $0x540] sm:$0xff]
      %v2051 = vld [vmem:[#allocation8 + $0x548] sm:$0xff]
      %v2052 = vld [vmem:[#allocation8 + $0x550] sm:$0xff]
      %v2053 = vld [vmem:[#allocation8 + $0x558] sm:$0xff]
      %v2054 = vld [vmem:[#allocation8 + $0x560] sm:$0xff]
      %v2055 = vld [vmem:[#allocation8 + $0x568] sm:$0xff]
      %v2056 = vld [vmem:[#allocation8 + $0x570] sm:$0xff]
      %v2057 = vld [vmem:[#allocation8 + $0x578] sm:$0xff]
      %v2058 = vld [vmem:[#allocation8 + $0x580] sm:$0xff]
      %v2059 = vld [vmem:[#allocation8 + $0x588] sm:$0xff]
      %v2060 = vld [vmem:[#allocation8 + $0x590] sm:$0xff]
      %v2061 = vld [vmem:[#allocation8 + $0x598] sm:$0xff]
      %v2062 = vld [vmem:[#allocation8 + $0x5a0] sm:$0xff]
      %v2063 = vld [vmem:[#allocation8 + $0x5a8] sm:$0xff]
      %v2064 = vld [vmem:[#allocation8 + $0x5b0] sm:$0xff]
      %v2065 = vld [vmem:[#allocation8 + $0x5b8] sm:$0xff]
      %v2066 = vld [vmem:[#allocation8 + $0x5c0] sm:$0xff]
      %v2067 = vld [vmem:[#allocation8 + $0x5c8] sm:$0xff]
      %v2068 = vld [vmem:[#allocation8 + $0x5d0] sm:$0xff]
      %v2069 = vld [vmem:[#allocation8 + $0x5d8] sm:$0xff]
      %v2070 = vld [vmem:[#allocation8 + $0x5e0] sm:$0xff]
      %v2071 = vld [vmem:[#allocation8 + $0x5e8] sm:$0xff]
      %v2072 = vld [vmem:[#allocation8 + $0x5f0] sm:$0xff]
      %v2073 = vld [vmem:[#allocation8 + $0x5f8] sm:$0xff]
      %v2074 = vunpack.c.0.s8 %v1882
      %v2075 = vunpack.c.0.s8 %v1883
      %v2076 = vunpack.c.0.s8 %v1884
      %v2077 = vunpack.c.0.s8 %v1885
      %v2078 = vunpack.c.0.s8 %v1886
      %v2079 = vunpack.c.0.s8 %v1887
      %v2080 = vunpack.c.1.s8 %v1882
      %v2081 = vunpack.c.1.s8 %v1883
      %v2082 = vunpack.c.1.s8 %v1884
      %v2083 = vunpack.c.1.s8 %v1885
      %v2084 = vunpack.c.1.s8 %v1886
      %v2085 = vunpack.c.1.s8 %v1887
      %v2086 = vunpack.c.2.s8 %v1882
      %v2087 = vunpack.c.2.s8 %v1883
      %v2088 = vunpack.c.2.s8 %v1884
      %v2089 = vunpack.c.2.s8 %v1885
      %v2090 = vunpack.c.2.s8 %v1886
      %v2091 = vunpack.c.2.s8 %v1887
      %v2092 = vunpack.c.3.s8 %v1882
      %v2093 = vunpack.c.3.s8 %v1883
      %v2094 = vunpack.c.3.s8 %v1884
      %v2095 = vunpack.c.3.s8 %v1885
      %v2096 = vunpack.c.3.s8 %v1886
      %v2097 = vunpack.c.3.s8 %v1887
      %v2098 = vunpack.c.0.s8 %v1888
      %v2099 = vunpack.c.0.s8 %v1889
      %v2100 = vunpack.c.0.s8 %v1890
      %v2101 = vunpack.c.0.s8 %v1891
      %v2102 = vunpack.c.0.s8 %v1892
      %v2103 = vunpack.c.0.s8 %v1893
      %v2104 = vunpack.c.1.s8 %v1888
      %v2105 = vunpack.c.1.s8 %v1889
      %v2106 = vunpack.c.1.s8 %v1890
      %v2107 = vunpack.c.1.s8 %v1891
      %v2108 = vunpack.c.1.s8 %v1892
      %v2109 = vunpack.c.1.s8 %v1893
      %v2110 = vunpack.c.2.s8 %v1888
      %v2111 = vunpack.c.2.s8 %v1889
      %v2112 = vunpack.c.2.s8 %v1890
      %v2113 = vunpack.c.2.s8 %v1891
      %v2114 = vunpack.c.2.s8 %v1892
      %v2115 = vunpack.c.2.s8 %v1893
      %v2116 = vunpack.c.3.s8 %v1888
      %v2117 = vunpack.c.3.s8 %v1889
      %v2118 = vunpack.c.3.s8 %v1890
      %v2119 = vunpack.c.3.s8 %v1891
      %v2120 = vunpack.c.3.s8 %v1892
      %v2121 = vunpack.c.3.s8 %v1893
      %v2122 = vunpack.c.0.s8 %v1894
      %v2123 = vunpack.c.0.s8 %v1895
      %v2124 = vunpack.c.0.s8 %v1896
      %v2125 = vunpack.c.0.s8 %v1897
      %v2126 = vunpack.c.0.s8 %v1898
      %v2127 = vunpack.c.0.s8 %v1899
      %v2128 = vunpack.c.1.s8 %v1894
      %v2129 = vunpack.c.1.s8 %v1895
      %v2130 = vunpack.c.1.s8 %v1896
      %v2131 = vunpack.c.1.s8 %v1897
      %v2132 = vunpack.c.1.s8 %v1898
      %v2133 = vunpack.c.1.s8 %v1899
      %v2134 = vunpack.c.2.s8 %v1894
      %v2135 = vunpack.c.2.s8 %v1895
      %v2136 = vunpack.c.2.s8 %v1896
      %v2137 = vunpack.c.2.s8 %v1897
      %v2138 = vunpack.c.2.s8 %v1898
      %v2139 = vunpack.c.2.s8 %v1899
      %v2140 = vunpack.c.3.s8 %v1894
      %v2141 = vunpack.c.3.s8 %v1895
      %v2142 = vunpack.c.3.s8 %v1896
      %v2143 = vunpack.c.3.s8 %v1897
      %v2144 = vunpack.c.3.s8 %v1898
      %v2145 = vunpack.c.3.s8 %v1899
      %v2146 = vunpack.c.0.s8 %v1900
      %v2147 = vunpack.c.0.s8 %v1901
      %v2148 = vunpack.c.0.s8 %v1902
      %v2149 = vunpack.c.0.s8 %v1903
      %v2150 = vunpack.c.0.s8 %v1904
      %v2151 = vunpack.c.0.s8 %v1905
      %v2152 = vunpack.c.1.s8 %v1900
      %v2153 = vunpack.c.1.s8 %v1901
      %v2154 = vunpack.c.1.s8 %v1902
      %v2155 = vunpack.c.1.s8 %v1903
      %v2156 = vunpack.c.1.s8 %v1904
      %v2157 = vunpack.c.1.s8 %v1905
      %v2158 = vunpack.c.2.s8 %v1900
      %v2159 = vunpack.c.2.s8 %v1901
      %v2160 = vunpack.c.2.s8 %v1902
      %v2161 = vunpack.c.2.s8 %v1903
      %v2162 = vunpack.c.2.s8 %v1904
      %v2163 = vunpack.c.2.s8 %v1905
      %v2164 = vunpack.c.3.s8 %v1900
      %v2165 = vunpack.c.3.s8 %v1901
      %v2166 = vunpack.c.3.s8 %v1902
      %v2167 = vunpack.c.3.s8 %v1903
      %v2168 = vunpack.c.3.s8 %v1904
      %v2169 = vunpack.c.3.s8 %v1905
      %v2170 = vunpack.c.0.s8 %v1906
      %v2171 = vunpack.c.0.s8 %v1907
      %v2172 = vunpack.c.0.s8 %v1908
      %v2173 = vunpack.c.0.s8 %v1909
      %v2174 = vunpack.c.0.s8 %v1910
      %v2175 = vunpack.c.0.s8 %v1911
      %v2176 = vunpack.c.1.s8 %v1906
      %v2177 = vunpack.c.1.s8 %v1907
      %v2178 = vunpack.c.1.s8 %v1908
      %v2179 = vunpack.c.1.s8 %v1909
      %v2180 = vunpack.c.1.s8 %v1910
      %v2181 = vunpack.c.1.s8 %v1911
      %v2182 = vunpack.c.2.s8 %v1906
      %v2183 = vunpack.c.2.s8 %v1907
      %v2184 = vunpack.c.2.s8 %v1908
      %v2185 = vunpack.c.2.s8 %v1909
      %v2186 = vunpack.c.2.s8 %v1910
      %v2187 = vunpack.c.2.s8 %v1911
      %v2188 = vunpack.c.3.s8 %v1906
      %v2189 = vunpack.c.3.s8 %v1907
      %v2190 = vunpack.c.3.s8 %v1908
      %v2191 = vunpack.c.3.s8 %v1909
      %v2192 = vunpack.c.3.s8 %v1910
      %v2193 = vunpack.c.3.s8 %v1911
      %v2194 = vunpack.c.0.s8 %v1912
      %v2195 = vunpack.c.0.s8 %v1913
      %v2196 = vunpack.c.0.s8 %v1914
      %v2197 = vunpack.c.0.s8 %v1915
      %v2198 = vunpack.c.0.s8 %v1916
      %v2199 = vunpack.c.0.s8 %v1917
      %v2200 = vunpack.c.1.s8 %v1912
      %v2201 = vunpack.c.1.s8 %v1913
      %v2202 = vunpack.c.1.s8 %v1914
      %v2203 = vunpack.c.1.s8 %v1915
      %v2204 = vunpack.c.1.s8 %v1916
      %v2205 = vunpack.c.1.s8 %v1917
      %v2206 = vunpack.c.2.s8 %v1912
      %v2207 = vunpack.c.2.s8 %v1913
      %v2208 = vunpack.c.2.s8 %v1914
      %v2209 = vunpack.c.2.s8 %v1915
      %v2210 = vunpack.c.2.s8 %v1916
      %v2211 = vunpack.c.2.s8 %v1917
      %v2212 = vunpack.c.3.s8 %v1912
      %v2213 = vunpack.c.3.s8 %v1913
      %v2214 = vunpack.c.3.s8 %v1914
      %v2215 = vunpack.c.3.s8 %v1915
      %v2216 = vunpack.c.3.s8 %v1916
      %v2217 = vunpack.c.3.s8 %v1917
      %v2218 = vunpack.c.0.s8 %v1918
      %v2219 = vunpack.c.0.s8 %v1919
      %v2220 = vunpack.c.0.s8 %v1920
      %v2221 = vunpack.c.0.s8 %v1921
      %v2222 = vunpack.c.0.s8 %v1922
      %v2223 = vunpack.c.0.s8 %v1923
      %v2224 = vunpack.c.1.s8 %v1918
      %v2225 = vunpack.c.1.s8 %v1919
      %v2226 = vunpack.c.1.s8 %v1920
      %v2227 = vunpack.c.1.s8 %v1921
      %v2228 = vunpack.c.1.s8 %v1922
      %v2229 = vunpack.c.1.s8 %v1923
      %v2230 = vunpack.c.2.s8 %v1918
      %v2231 = vunpack.c.2.s8 %v1919
      %v2232 = vunpack.c.2.s8 %v1920
      %v2233 = vunpack.c.2.s8 %v1921
      %v2234 = vunpack.c.2.s8 %v1922
      %v2235 = vunpack.c.2.s8 %v1923
      %v2236 = vunpack.c.3.s8 %v1918
      %v2237 = vunpack.c.3.s8 %v1919
      %v2238 = vunpack.c.3.s8 %v1920
      %v2239 = vunpack.c.3.s8 %v1921
      %v2240 = vunpack.c.3.s8 %v1922
      %v2241 = vunpack.c.3.s8 %v1923
      %v2242 = vunpack.c.0.s8 %v1924
      %v2243 = vunpack.c.0.s8 %v1925
      %v2244 = vunpack.c.0.s8 %v1926
      %v2245 = vunpack.c.0.s8 %v1927
      %v2246 = vunpack.c.0.s8 %v1928
      %v2247 = vunpack.c.0.s8 %v1929
      %v2248 = vunpack.c.1.s8 %v1924
      %v2249 = vunpack.c.1.s8 %v1925
      %v2250 = vunpack.c.1.s8 %v1926
      %v2251 = vunpack.c.1.s8 %v1927
      %v2252 = vunpack.c.1.s8 %v1928
      %v2253 = vunpack.c.1.s8 %v1929
      %v2254 = vunpack.c.2.s8 %v1924
      %v2255 = vunpack.c.2.s8 %v1925
      %v2256 = vunpack.c.2.s8 %v1926
      %v2257 = vunpack.c.2.s8 %v1927
      %v2258 = vunpack.c.2.s8 %v1928
      %v2259 = vunpack.c.2.s8 %v1929
      %v2260 = vunpack.c.3.s8 %v1924
      %v2261 = vunpack.c.3.s8 %v1925
      %v2262 = vunpack.c.3.s8 %v1926
      %v2263 = vunpack.c.3.s8 %v1927
      %v2264 = vunpack.c.3.s8 %v1928
      %v2265 = vunpack.c.3.s8 %v1929
      %v2266 = vunpack.c.0.s8 %v1930
      %v2267 = vunpack.c.0.s8 %v1931
      %v2268 = vunpack.c.0.s8 %v1932
      %v2269 = vunpack.c.0.s8 %v1933
      %v2270 = vunpack.c.0.s8 %v1934
      %v2271 = vunpack.c.0.s8 %v1935
      %v2272 = vunpack.c.1.s8 %v1930
      %v2273 = vunpack.c.1.s8 %v1931
      %v2274 = vunpack.c.1.s8 %v1932
      %v2275 = vunpack.c.1.s8 %v1933
      %v2276 = vunpack.c.1.s8 %v1934
      %v2277 = vunpack.c.1.s8 %v1935
      %v2278 = vunpack.c.2.s8 %v1930
      %v2279 = vunpack.c.2.s8 %v1931
      %v2280 = vunpack.c.2.s8 %v1932
      %v2281 = vunpack.c.2.s8 %v1933
      %v2282 = vunpack.c.2.s8 %v1934
      %v2283 = vunpack.c.2.s8 %v1935
      %v2284 = vunpack.c.3.s8 %v1930
      %v2285 = vunpack.c.3.s8 %v1931
      %v2286 = vunpack.c.3.s8 %v1932
      %v2287 = vunpack.c.3.s8 %v1933
      %v2288 = vunpack.c.3.s8 %v1934
      %v2289 = vunpack.c.3.s8 %v1935
      %v2290 = vunpack.c.0.s8 %v1936
      %v2291 = vunpack.c.0.s8 %v1937
      %v2292 = vunpack.c.0.s8 %v1938
      %v2293 = vunpack.c.0.s8 %v1939
      %v2294 = vunpack.c.0.s8 %v1940
      %v2295 = vunpack.c.0.s8 %v1941
      %v2296 = vunpack.c.1.s8 %v1936
      %v2297 = vunpack.c.1.s8 %v1937
      %v2298 = vunpack.c.1.s8 %v1938
      %v2299 = vunpack.c.1.s8 %v1939
      %v2300 = vunpack.c.1.s8 %v1940
      %v2301 = vunpack.c.1.s8 %v1941
      %v2302 = vunpack.c.2.s8 %v1936
      %v2303 = vunpack.c.2.s8 %v1937
      %v2304 = vunpack.c.2.s8 %v1938
      %v2305 = vunpack.c.2.s8 %v1939
      %v2306 = vunpack.c.2.s8 %v1940
      %v2307 = vunpack.c.2.s8 %v1941
      %v2308 = vunpack.c.3.s8 %v1936
      %v2309 = vunpack.c.3.s8 %v1937
      %v2310 = vunpack.c.3.s8 %v1938
      %v2311 = vunpack.c.3.s8 %v1939
      %v2312 = vunpack.c.3.s8 %v1940
      %v2313 = vunpack.c.3.s8 %v1941
      %v2314 = vunpack.c.0.s8 %v1942
      %v2315 = vunpack.c.0.s8 %v1943
      %v2316 = vunpack.c.0.s8 %v1944
      %v2317 = vunpack.c.0.s8 %v1945
      %v2318 = vunpack.c.0.s8 %v1946
      %v2319 = vunpack.c.0.s8 %v1947
      %v2320 = vunpack.c.1.s8 %v1942
      %v2321 = vunpack.c.1.s8 %v1943
      %v2322 = vunpack.c.1.s8 %v1944
      %v2323 = vunpack.c.1.s8 %v1945
      %v2324 = vunpack.c.1.s8 %v1946
      %v2325 = vunpack.c.1.s8 %v1947
      %v2326 = vunpack.c.2.s8 %v1942
      %v2327 = vunpack.c.2.s8 %v1943
      %v2328 = vunpack.c.2.s8 %v1944
      %v2329 = vunpack.c.2.s8 %v1945
      %v2330 = vunpack.c.2.s8 %v1946
      %v2331 = vunpack.c.2.s8 %v1947
      %v2332 = vunpack.c.3.s8 %v1942
      %v2333 = vunpack.c.3.s8 %v1943
      %v2334 = vunpack.c.3.s8 %v1944
      %v2335 = vunpack.c.3.s8 %v1945
      %v2336 = vunpack.c.3.s8 %v1946
      %v2337 = vunpack.c.3.s8 %v1947
      %v2338 = vunpack.c.0.s8 %v1948
      %v2339 = vunpack.c.0.s8 %v1949
      %v2340 = vunpack.c.0.s8 %v1950
      %v2341 = vunpack.c.0.s8 %v1951
      %v2342 = vunpack.c.0.s8 %v1952
      %v2343 = vunpack.c.0.s8 %v1953
      %v2344 = vunpack.c.1.s8 %v1948
      %v2345 = vunpack.c.1.s8 %v1949
      %v2346 = vunpack.c.1.s8 %v1950
      %v2347 = vunpack.c.1.s8 %v1951
      %v2348 = vunpack.c.1.s8 %v1952
      %v2349 = vunpack.c.1.s8 %v1953
      %v2350 = vunpack.c.2.s8 %v1948
      %v2351 = vunpack.c.2.s8 %v1949
      %v2352 = vunpack.c.2.s8 %v1950
      %v2353 = vunpack.c.2.s8 %v1951
      %v2354 = vunpack.c.2.s8 %v1952
      %v2355 = vunpack.c.2.s8 %v1953
      %v2356 = vunpack.c.3.s8 %v1948
      %v2357 = vunpack.c.3.s8 %v1949
      %v2358 = vunpack.c.3.s8 %v1950
      %v2359 = vunpack.c.3.s8 %v1951
      %v2360 = vunpack.c.3.s8 %v1952
      %v2361 = vunpack.c.3.s8 %v1953
      %v2362 = vunpack.c.0.s8 %v1954
      %v2363 = vunpack.c.0.s8 %v1955
      %v2364 = vunpack.c.0.s8 %v1956
      %v2365 = vunpack.c.0.s8 %v1957
      %v2366 = vunpack.c.0.s8 %v1958
      %v2367 = vunpack.c.0.s8 %v1959
      %v2368 = vunpack.c.1.s8 %v1954
      %v2369 = vunpack.c.1.s8 %v1955
      %v2370 = vunpack.c.1.s8 %v1956
      %v2371 = vunpack.c.1.s8 %v1957
      %v2372 = vunpack.c.1.s8 %v1958
      %v2373 = vunpack.c.1.s8 %v1959
      %v2374 = vunpack.c.2.s8 %v1954
      %v2375 = vunpack.c.2.s8 %v1955
      %v2376 = vunpack.c.2.s8 %v1956
      %v2377 = vunpack.c.2.s8 %v1957
      %v2378 = vunpack.c.2.s8 %v1958
      %v2379 = vunpack.c.2.s8 %v1959
      %v2380 = vunpack.c.3.s8 %v1954
      %v2381 = vunpack.c.3.s8 %v1955
      %v2382 = vunpack.c.3.s8 %v1956
      %v2383 = vunpack.c.3.s8 %v1957
      %v2384 = vunpack.c.3.s8 %v1958
      %v2385 = vunpack.c.3.s8 %v1959
      %v2386 = vunpack.c.0.s8 %v1960
      %v2387 = vunpack.c.0.s8 %v1961
      %v2388 = vunpack.c.0.s8 %v1962
      %v2389 = vunpack.c.0.s8 %v1963
      %v2390 = vunpack.c.0.s8 %v1964
      %v2391 = vunpack.c.0.s8 %v1965
      %v2392 = vunpack.c.1.s8 %v1960
      %v2393 = vunpack.c.1.s8 %v1961
      %v2394 = vunpack.c.1.s8 %v1962
      %v2395 = vunpack.c.1.s8 %v1963
      %v2396 = vunpack.c.1.s8 %v1964
      %v2397 = vunpack.c.1.s8 %v1965
      %v2398 = vunpack.c.2.s8 %v1960
      %v2399 = vunpack.c.2.s8 %v1961
      %v2400 = vunpack.c.2.s8 %v1962
      %v2401 = vunpack.c.2.s8 %v1963
      %v2402 = vunpack.c.2.s8 %v1964
      %v2403 = vunpack.c.2.s8 %v1965
      %v2404 = vunpack.c.3.s8 %v1960
      %v2405 = vunpack.c.3.s8 %v1961
      %v2406 = vunpack.c.3.s8 %v1962
      %v2407 = vunpack.c.3.s8 %v1963
      %v2408 = vunpack.c.3.s8 %v1964
      %v2409 = vunpack.c.3.s8 %v1965
      %v2410 = vunpack.c.0.s8 %v1966
      %v2411 = vunpack.c.0.s8 %v1967
      %v2412 = vunpack.c.0.s8 %v1968
      %v2413 = vunpack.c.0.s8 %v1969
      %v2414 = vunpack.c.0.s8 %v1970
      %v2415 = vunpack.c.0.s8 %v1971
      %v2416 = vunpack.c.1.s8 %v1966
      %v2417 = vunpack.c.1.s8 %v1967
      %v2418 = vunpack.c.1.s8 %v1968
      %v2419 = vunpack.c.1.s8 %v1969
      %v2420 = vunpack.c.1.s8 %v1970
      %v2421 = vunpack.c.1.s8 %v1971
      %v2422 = vunpack.c.2.s8 %v1966
      %v2423 = vunpack.c.2.s8 %v1967
      %v2424 = vunpack.c.2.s8 %v1968
      %v2425 = vunpack.c.2.s8 %v1969
      %v2426 = vunpack.c.2.s8 %v1970
      %v2427 = vunpack.c.2.s8 %v1971
      %v2428 = vunpack.c.3.s8 %v1966
      %v2429 = vunpack.c.3.s8 %v1967
      %v2430 = vunpack.c.3.s8 %v1968
      %v2431 = vunpack.c.3.s8 %v1969
      %v2432 = vunpack.c.3.s8 %v1970
      %v2433 = vunpack.c.3.s8 %v1971
      %v2434 = vunpack.c.0.s8 %v1972
      %v2435 = vunpack.c.0.s8 %v1973
      %v2436 = vunpack.c.0.s8 %v1974
      %v2437 = vunpack.c.0.s8 %v1975
      %v2438 = vunpack.c.0.s8 %v1976
      %v2439 = vunpack.c.0.s8 %v1977
      %v2440 = vunpack.c.1.s8 %v1972
      %v2441 = vunpack.c.1.s8 %v1973
      %v2442 = vunpack.c.1.s8 %v1974
      %v2443 = vunpack.c.1.s8 %v1975
      %v2444 = vunpack.c.1.s8 %v1976
      %v2445 = vunpack.c.1.s8 %v1977
      %v2446 = vunpack.c.2.s8 %v1972
      %v2447 = vunpack.c.2.s8 %v1973
      %v2448 = vunpack.c.2.s8 %v1974
      %v2449 = vunpack.c.2.s8 %v1975
      %v2450 = vunpack.c.2.s8 %v1976
      %v2451 = vunpack.c.2.s8 %v1977
      %v2452 = vunpack.c.3.s8 %v1972
      %v2453 = vunpack.c.3.s8 %v1973
      %v2454 = vunpack.c.3.s8 %v1974
      %v2455 = vunpack.c.3.s8 %v1975
      %v2456 = vunpack.c.3.s8 %v1976
      %v2457 = vunpack.c.3.s8 %v1977
      %v2458 = vunpack.c.0.s8 %v1978
      %v2459 = vunpack.c.0.s8 %v1979
      %v2460 = vunpack.c.0.s8 %v1980
      %v2461 = vunpack.c.0.s8 %v1981
      %v2462 = vunpack.c.0.s8 %v1982
      %v2463 = vunpack.c.0.s8 %v1983
      %v2464 = vunpack.c.1.s8 %v1978
      %v2465 = vunpack.c.1.s8 %v1979
      %v2466 = vunpack.c.1.s8 %v1980
      %v2467 = vunpack.c.1.s8 %v1981
      %v2468 = vunpack.c.1.s8 %v1982
      %v2469 = vunpack.c.1.s8 %v1983
      %v2470 = vunpack.c.2.s8 %v1978
      %v2471 = vunpack.c.2.s8 %v1979
      %v2472 = vunpack.c.2.s8 %v1980
      %v2473 = vunpack.c.2.s8 %v1981
      %v2474 = vunpack.c.2.s8 %v1982
      %v2475 = vunpack.c.2.s8 %v1983
      %v2476 = vunpack.c.3.s8 %v1978
      %v2477 = vunpack.c.3.s8 %v1979
      %v2478 = vunpack.c.3.s8 %v1980
      %v2479 = vunpack.c.3.s8 %v1981
      %v2480 = vunpack.c.3.s8 %v1982
      %v2481 = vunpack.c.3.s8 %v1983
      %v2482 = vunpack.c.0.s8 %v1984
      %v2483 = vunpack.c.0.s8 %v1985
      %v2484 = vunpack.c.0.s8 %v1986
      %v2485 = vunpack.c.0.s8 %v1987
      %v2486 = vunpack.c.0.s8 %v1988
      %v2487 = vunpack.c.0.s8 %v1989
      %v2488 = vunpack.c.1.s8 %v1984
      %v2489 = vunpack.c.1.s8 %v1985
      %v2490 = vunpack.c.1.s8 %v1986
      %v2491 = vunpack.c.1.s8 %v1987
      %v2492 = vunpack.c.1.s8 %v1988
      %v2493 = vunpack.c.1.s8 %v1989
      %v2494 = vunpack.c.2.s8 %v1984
      %v2495 = vunpack.c.2.s8 %v1985
      %v2496 = vunpack.c.2.s8 %v1986
      %v2497 = vunpack.c.2.s8 %v1987
      %v2498 = vunpack.c.2.s8 %v1988
      %v2499 = vunpack.c.2.s8 %v1989
      %v2500 = vunpack.c.3.s8 %v1984
      %v2501 = vunpack.c.3.s8 %v1985
      %v2502 = vunpack.c.3.s8 %v1986
      %v2503 = vunpack.c.3.s8 %v1987
      %v2504 = vunpack.c.3.s8 %v1988
      %v2505 = vunpack.c.3.s8 %v1989
      %v2506 = vunpack.c.0.s8 %v1990
      %v2507 = vunpack.c.0.s8 %v1991
      %v2508 = vunpack.c.0.s8 %v1992
      %v2509 = vunpack.c.0.s8 %v1993
      %v2510 = vunpack.c.0.s8 %v1994
      %v2511 = vunpack.c.0.s8 %v1995
      %v2512 = vunpack.c.1.s8 %v1990
      %v2513 = vunpack.c.1.s8 %v1991
      %v2514 = vunpack.c.1.s8 %v1992
      %v2515 = vunpack.c.1.s8 %v1993
      %v2516 = vunpack.c.1.s8 %v1994
      %v2517 = vunpack.c.1.s8 %v1995
      %v2518 = vunpack.c.2.s8 %v1990
      %v2519 = vunpack.c.2.s8 %v1991
      %v2520 = vunpack.c.2.s8 %v1992
      %v2521 = vunpack.c.2.s8 %v1993
      %v2522 = vunpack.c.2.s8 %v1994
      %v2523 = vunpack.c.2.s8 %v1995
      %v2524 = vunpack.c.3.s8 %v1990
      %v2525 = vunpack.c.3.s8 %v1991
      %v2526 = vunpack.c.3.s8 %v1992
      %v2527 = vunpack.c.3.s8 %v1993
      %v2528 = vunpack.c.3.s8 %v1994
      %v2529 = vunpack.c.3.s8 %v1995
      %v2530 = vunpack.c.0.s8 %v1996
      %v2531 = vunpack.c.0.s8 %v1997
      %v2532 = vunpack.c.0.s8 %v1998
      %v2533 = vunpack.c.0.s8 %v1999
      %v2534 = vunpack.c.0.s8 %v2000
      %v2535 = vunpack.c.0.s8 %v2001
      %v2536 = vunpack.c.1.s8 %v1996
      %v2537 = vunpack.c.1.s8 %v1997
      %v2538 = vunpack.c.1.s8 %v1998
      %v2539 = vunpack.c.1.s8 %v1999
      %v2540 = vunpack.c.1.s8 %v2000
      %v2541 = vunpack.c.1.s8 %v2001
      %v2542 = vunpack.c.2.s8 %v1996
      %v2543 = vunpack.c.2.s8 %v1997
      %v2544 = vunpack.c.2.s8 %v1998
      %v2545 = vunpack.c.2.s8 %v1999
      %v2546 = vunpack.c.2.s8 %v2000
      %v2547 = vunpack.c.2.s8 %v2001
      %v2548 = vunpack.c.3.s8 %v1996
      %v2549 = vunpack.c.3.s8 %v1997
      %v2550 = vunpack.c.3.s8 %v1998
      %v2551 = vunpack.c.3.s8 %v1999
      %v2552 = vunpack.c.3.s8 %v2000
      %v2553 = vunpack.c.3.s8 %v2001
      %v2554 = vunpack.c.0.s8 %v2002
      %v2555 = vunpack.c.0.s8 %v2003
      %v2556 = vunpack.c.0.s8 %v2004
      %v2557 = vunpack.c.0.s8 %v2005
      %v2558 = vunpack.c.0.s8 %v2006
      %v2559 = vunpack.c.0.s8 %v2007
      %v2560 = vunpack.c.1.s8 %v2002
      %v2561 = vunpack.c.1.s8 %v2003
      %v2562 = vunpack.c.1.s8 %v2004
      %v2563 = vunpack.c.1.s8 %v2005
      %v2564 = vunpack.c.1.s8 %v2006
      %v2565 = vunpack.c.1.s8 %v2007
      %v2566 = vunpack.c.2.s8 %v2002
      %v2567 = vunpack.c.2.s8 %v2003
      %v2568 = vunpack.c.2.s8 %v2004
      %v2569 = vunpack.c.2.s8 %v2005
      %v2570 = vunpack.c.2.s8 %v2006
      %v2571 = vunpack.c.2.s8 %v2007
      %v2572 = vunpack.c.3.s8 %v2002
      %v2573 = vunpack.c.3.s8 %v2003
      %v2574 = vunpack.c.3.s8 %v2004
      %v2575 = vunpack.c.3.s8 %v2005
      %v2576 = vunpack.c.3.s8 %v2006
      %v2577 = vunpack.c.3.s8 %v2007
      %v2578 = vunpack.c.0.s8 %v2008
      %v2579 = vunpack.c.0.s8 %v2009
      %v2580 = vunpack.c.0.s8 %v2010
      %v2581 = vunpack.c.0.s8 %v2011
      %v2582 = vunpack.c.0.s8 %v2012
      %v2583 = vunpack.c.0.s8 %v2013
      %v2584 = vunpack.c.1.s8 %v2008
      %v2585 = vunpack.c.1.s8 %v2009
      %v2586 = vunpack.c.1.s8 %v2010
      %v2587 = vunpack.c.1.s8 %v2011
      %v2588 = vunpack.c.1.s8 %v2012
      %v2589 = vunpack.c.1.s8 %v2013
      %v2590 = vunpack.c.2.s8 %v2008
      %v2591 = vunpack.c.2.s8 %v2009
      %v2592 = vunpack.c.2.s8 %v2010
      %v2593 = vunpack.c.2.s8 %v2011
      %v2594 = vunpack.c.2.s8 %v2012
      %v2595 = vunpack.c.2.s8 %v2013
      %v2596 = vunpack.c.3.s8 %v2008
      %v2597 = vunpack.c.3.s8 %v2009
      %v2598 = vunpack.c.3.s8 %v2010
      %v2599 = vunpack.c.3.s8 %v2011
      %v2600 = vunpack.c.3.s8 %v2012
      %v2601 = vunpack.c.3.s8 %v2013
      %v2602 = vunpack.c.0.s8 %v2014
      %v2603 = vunpack.c.0.s8 %v2015
      %v2604 = vunpack.c.0.s8 %v2016
      %v2605 = vunpack.c.0.s8 %v2017
      %v2606 = vunpack.c.0.s8 %v2018
      %v2607 = vunpack.c.0.s8 %v2019
      %v2608 = vunpack.c.1.s8 %v2014
      %v2609 = vunpack.c.1.s8 %v2015
      %v2610 = vunpack.c.1.s8 %v2016
      %v2611 = vunpack.c.1.s8 %v2017
      %v2612 = vunpack.c.1.s8 %v2018
      %v2613 = vunpack.c.1.s8 %v2019
      %v2614 = vunpack.c.2.s8 %v2014
      %v2615 = vunpack.c.2.s8 %v2015
      %v2616 = vunpack.c.2.s8 %v2016
      %v2617 = vunpack.c.2.s8 %v2017
      %v2618 = vunpack.c.2.s8 %v2018
      %v2619 = vunpack.c.2.s8 %v2019
      %v2620 = vunpack.c.3.s8 %v2014
      %v2621 = vunpack.c.3.s8 %v2015
      %v2622 = vunpack.c.3.s8 %v2016
      %v2623 = vunpack.c.3.s8 %v2017
      %v2624 = vunpack.c.3.s8 %v2018
      %v2625 = vunpack.c.3.s8 %v2019
      %v2626 = vunpack.c.0.s8 %v2020
      %v2627 = vunpack.c.0.s8 %v2021
      %v2628 = vunpack.c.0.s8 %v2022
      %v2629 = vunpack.c.0.s8 %v2023
      %v2630 = vunpack.c.0.s8 %v2024
      %v2631 = vunpack.c.0.s8 %v2025
      %v2632 = vunpack.c.1.s8 %v2020
      %v2633 = vunpack.c.1.s8 %v2021
      %v2634 = vunpack.c.1.s8 %v2022
      %v2635 = vunpack.c.1.s8 %v2023
      %v2636 = vunpack.c.1.s8 %v2024
      %v2637 = vunpack.c.1.s8 %v2025
      %v2638 = vunpack.c.2.s8 %v2020
      %v2639 = vunpack.c.2.s8 %v2021
      %v2640 = vunpack.c.2.s8 %v2022
      %v2641 = vunpack.c.2.s8 %v2023
      %v2642 = vunpack.c.2.s8 %v2024
      %v2643 = vunpack.c.2.s8 %v2025
      %v2644 = vunpack.c.3.s8 %v2020
      %v2645 = vunpack.c.3.s8 %v2021
      %v2646 = vunpack.c.3.s8 %v2022
      %v2647 = vunpack.c.3.s8 %v2023
      %v2648 = vunpack.c.3.s8 %v2024
      %v2649 = vunpack.c.3.s8 %v2025
      %v2650 = vunpack.c.0.s8 %v2026
      %v2651 = vunpack.c.0.s8 %v2027
      %v2652 = vunpack.c.0.s8 %v2028
      %v2653 = vunpack.c.0.s8 %v2029
      %v2654 = vunpack.c.0.s8 %v2030
      %v2655 = vunpack.c.0.s8 %v2031
      %v2656 = vunpack.c.1.s8 %v2026
      %v2657 = vunpack.c.1.s8 %v2027
      %v2658 = vunpack.c.1.s8 %v2028
      %v2659 = vunpack.c.1.s8 %v2029
      %v2660 = vunpack.c.1.s8 %v2030
      %v2661 = vunpack.c.1.s8 %v2031
      %v2662 = vunpack.c.2.s8 %v2026
      %v2663 = vunpack.c.2.s8 %v2027
      %v2664 = vunpack.c.2.s8 %v2028
      %v2665 = vunpack.c.2.s8 %v2029
      %v2666 = vunpack.c.2.s8 %v2030
      %v2667 = vunpack.c.2.s8 %v2031
      %v2668 = vunpack.c.3.s8 %v2026
      %v2669 = vunpack.c.3.s8 %v2027
      %v2670 = vunpack.c.3.s8 %v2028
      %v2671 = vunpack.c.3.s8 %v2029
      %v2672 = vunpack.c.3.s8 %v2030
      %v2673 = vunpack.c.3.s8 %v2031
      %v2674 = vunpack.c.0.s8 %v2032
      %v2675 = vunpack.c.0.s8 %v2033
      %v2676 = vunpack.c.0.s8 %v2034
      %v2677 = vunpack.c.0.s8 %v2035
      %v2678 = vunpack.c.0.s8 %v2036
      %v2679 = vunpack.c.0.s8 %v2037
      %v2680 = vunpack.c.1.s8 %v2032
      %v2681 = vunpack.c.1.s8 %v2033
      %v2682 = vunpack.c.1.s8 %v2034
      %v2683 = vunpack.c.1.s8 %v2035
      %v2684 = vunpack.c.1.s8 %v2036
      %v2685 = vunpack.c.1.s8 %v2037
      %v2686 = vunpack.c.2.s8 %v2032
      %v2687 = vunpack.c.2.s8 %v2033
      %v2688 = vunpack.c.2.s8 %v2034
      %v2689 = vunpack.c.2.s8 %v2035
      %v2690 = vunpack.c.2.s8 %v2036
      %v2691 = vunpack.c.2.s8 %v2037
      %v2692 = vunpack.c.3.s8 %v2032
      %v2693 = vunpack.c.3.s8 %v2033
      %v2694 = vunpack.c.3.s8 %v2034
      %v2695 = vunpack.c.3.s8 %v2035
      %v2696 = vunpack.c.3.s8 %v2036
      %v2697 = vunpack.c.3.s8 %v2037
      %v2698 = vunpack.c.0.s8 %v2038
      %v2699 = vunpack.c.0.s8 %v2039
      %v2700 = vunpack.c.0.s8 %v2040
      %v2701 = vunpack.c.0.s8 %v2041
      %v2702 = vunpack.c.0.s8 %v2042
      %v2703 = vunpack.c.0.s8 %v2043
      %v2704 = vunpack.c.1.s8 %v2038
      %v2705 = vunpack.c.1.s8 %v2039
      %v2706 = vunpack.c.1.s8 %v2040
      %v2707 = vunpack.c.1.s8 %v2041
      %v2708 = vunpack.c.1.s8 %v2042
      %v2709 = vunpack.c.1.s8 %v2043
      %v2710 = vunpack.c.2.s8 %v2038
      %v2711 = vunpack.c.2.s8 %v2039
      %v2712 = vunpack.c.2.s8 %v2040
      %v2713 = vunpack.c.2.s8 %v2041
      %v2714 = vunpack.c.2.s8 %v2042
      %v2715 = vunpack.c.2.s8 %v2043
      %v2716 = vunpack.c.3.s8 %v2038
      %v2717 = vunpack.c.3.s8 %v2039
      %v2718 = vunpack.c.3.s8 %v2040
      %v2719 = vunpack.c.3.s8 %v2041
      %v2720 = vunpack.c.3.s8 %v2042
      %v2721 = vunpack.c.3.s8 %v2043
      %v2722 = vunpack.c.0.s8 %v2044
      %v2723 = vunpack.c.0.s8 %v2045
      %v2724 = vunpack.c.0.s8 %v2046
      %v2725 = vunpack.c.0.s8 %v2047
      %v2726 = vunpack.c.0.s8 %v2048
      %v2727 = vunpack.c.0.s8 %v2049
      %v2728 = vunpack.c.1.s8 %v2044
      %v2729 = vunpack.c.1.s8 %v2045
      %v2730 = vunpack.c.1.s8 %v2046
      %v2731 = vunpack.c.1.s8 %v2047
      %v2732 = vunpack.c.1.s8 %v2048
      %v2733 = vunpack.c.1.s8 %v2049
      %v2734 = vunpack.c.2.s8 %v2044
      %v2735 = vunpack.c.2.s8 %v2045
      %v2736 = vunpack.c.2.s8 %v2046
      %v2737 = vunpack.c.2.s8 %v2047
      %v2738 = vunpack.c.2.s8 %v2048
      %v2739 = vunpack.c.2.s8 %v2049
      %v2740 = vunpack.c.3.s8 %v2044
      %v2741 = vunpack.c.3.s8 %v2045
      %v2742 = vunpack.c.3.s8 %v2046
      %v2743 = vunpack.c.3.s8 %v2047
      %v2744 = vunpack.c.3.s8 %v2048
      %v2745 = vunpack.c.3.s8 %v2049
      %v2746 = vunpack.c.0.s8 %v2050
      %v2747 = vunpack.c.0.s8 %v2051
      %v2748 = vunpack.c.0.s8 %v2052
      %v2749 = vunpack.c.0.s8 %v2053
      %v2750 = vunpack.c.0.s8 %v2054
      %v2751 = vunpack.c.0.s8 %v2055
      %v2752 = vunpack.c.1.s8 %v2050
      %v2753 = vunpack.c.1.s8 %v2051
      %v2754 = vunpack.c.1.s8 %v2052
      %v2755 = vunpack.c.1.s8 %v2053
      %v2756 = vunpack.c.1.s8 %v2054
      %v2757 = vunpack.c.1.s8 %v2055
      %v2758 = vunpack.c.2.s8 %v2050
      %v2759 = vunpack.c.2.s8 %v2051
      %v2760 = vunpack.c.2.s8 %v2052
      %v2761 = vunpack.c.2.s8 %v2053
      %v2762 = vunpack.c.2.s8 %v2054
      %v2763 = vunpack.c.2.s8 %v2055
      %v2764 = vunpack.c.3.s8 %v2050
      %v2765 = vunpack.c.3.s8 %v2051
      %v2766 = vunpack.c.3.s8 %v2052
      %v2767 = vunpack.c.3.s8 %v2053
      %v2768 = vunpack.c.3.s8 %v2054
      %v2769 = vunpack.c.3.s8 %v2055
      %v2770 = vunpack.c.0.s8 %v2056
      %v2771 = vunpack.c.0.s8 %v2057
      %v2772 = vunpack.c.0.s8 %v2058
      %v2773 = vunpack.c.0.s8 %v2059
      %v2774 = vunpack.c.0.s8 %v2060
      %v2775 = vunpack.c.0.s8 %v2061
      %v2776 = vunpack.c.1.s8 %v2056
      %v2777 = vunpack.c.1.s8 %v2057
      %v2778 = vunpack.c.1.s8 %v2058
      %v2779 = vunpack.c.1.s8 %v2059
      %v2780 = vunpack.c.1.s8 %v2060
      %v2781 = vunpack.c.1.s8 %v2061
      %v2782 = vunpack.c.2.s8 %v2056
      %v2783 = vunpack.c.2.s8 %v2057
      %v2784 = vunpack.c.2.s8 %v2058
      %v2785 = vunpack.c.2.s8 %v2059
      %v2786 = vunpack.c.2.s8 %v2060
      %v2787 = vunpack.c.2.s8 %v2061
      %v2788 = vunpack.c.3.s8 %v2056
      %v2789 = vunpack.c.3.s8 %v2057
      %v2790 = vunpack.c.3.s8 %v2058
      %v2791 = vunpack.c.3.s8 %v2059
      %v2792 = vunpack.c.3.s8 %v2060
      %v2793 = vunpack.c.3.s8 %v2061
      %v2794 = vunpack.c.0.s8 %v2062
      %v2795 = vunpack.c.0.s8 %v2063
      %v2796 = vunpack.c.0.s8 %v2064
      %v2797 = vunpack.c.0.s8 %v2065
      %v2798 = vunpack.c.0.s8 %v2066
      %v2799 = vunpack.c.0.s8 %v2067
      %v2800 = vunpack.c.1.s8 %v2062
      %v2801 = vunpack.c.1.s8 %v2063
      %v2802 = vunpack.c.1.s8 %v2064
      %v2803 = vunpack.c.1.s8 %v2065
      %v2804 = vunpack.c.1.s8 %v2066
      %v2805 = vunpack.c.1.s8 %v2067
      %v2806 = vunpack.c.2.s8 %v2062
      %v2807 = vunpack.c.2.s8 %v2063
      %v2808 = vunpack.c.2.s8 %v2064
      %v2809 = vunpack.c.2.s8 %v2065
      %v2810 = vunpack.c.2.s8 %v2066
      %v2811 = vunpack.c.2.s8 %v2067
      %v2812 = vunpack.c.3.s8 %v2062
      %v2813 = vunpack.c.3.s8 %v2063
      %v2814 = vunpack.c.3.s8 %v2064
      %v2815 = vunpack.c.3.s8 %v2065
      %v2816 = vunpack.c.3.s8 %v2066
      %v2817 = vunpack.c.3.s8 %v2067
      %v2818 = vunpack.c.0.s8 %v2068
      %v2819 = vunpack.c.0.s8 %v2069
      %v2820 = vunpack.c.0.s8 %v2070
      %v2821 = vunpack.c.0.s8 %v2071
      %v2822 = vunpack.c.0.s8 %v2072
      %v2823 = vunpack.c.0.s8 %v2073
      %v2824 = vunpack.c.1.s8 %v2068
      %v2825 = vunpack.c.1.s8 %v2069
      %v2826 = vunpack.c.1.s8 %v2070
      %v2827 = vunpack.c.1.s8 %v2071
      %v2828 = vunpack.c.1.s8 %v2072
      %v2829 = vunpack.c.1.s8 %v2073
      %v2830 = vunpack.c.2.s8 %v2068
      %v2831 = vunpack.c.2.s8 %v2069
      %v2832 = vunpack.c.2.s8 %v2070
      %v2833 = vunpack.c.2.s8 %v2071
      %v2834 = vunpack.c.2.s8 %v2072
      %v2835 = vunpack.c.2.s8 %v2073
      %v2836 = vunpack.c.3.s8 %v2068
      %v2837 = vunpack.c.3.s8 %v2069
      %v2838 = vunpack.c.3.s8 %v2070
      %v2839 = vunpack.c.3.s8 %v2071
      %v2840 = vunpack.c.3.s8 %v2072
      %v2841 = vunpack.c.3.s8 %v2073
      %v2842 = vcvt.s32.f32 %v2074
      %v2843 = vcvt.s32.f32 %v2075
      %v2844 = vcvt.s32.f32 %v2076
      %v2845 = vcvt.s32.f32 %v2077
      %v2846 = vcvt.s32.f32 %v2078
      %v2847 = vcvt.s32.f32 %v2079
      %v2848 = vcvt.s32.f32 %v2080
      %v2849 = vcvt.s32.f32 %v2081
      %v2850 = vcvt.s32.f32 %v2082
      %v2851 = vcvt.s32.f32 %v2083
      %v2852 = vcvt.s32.f32 %v2084
      %v2853 = vcvt.s32.f32 %v2085
      %v2854 = vcvt.s32.f32 %v2086
      %v2855 = vcvt.s32.f32 %v2087
      %v2856 = vcvt.s32.f32 %v2088
      %v2857 = vcvt.s32.f32 %v2089
      %v2858 = vcvt.s32.f32 %v2090
      %v2859 = vcvt.s32.f32 %v2091
      %v2860 = vcvt.s32.f32 %v2092
      %v2861 = vcvt.s32.f32 %v2093
      %v2862 = vcvt.s32.f32 %v2094
      %v2863 = vcvt.s32.f32 %v2095
      %v2864 = vcvt.s32.f32 %v2096
      %v2865 = vcvt.s32.f32 %v2097
      %v2866 = vcvt.s32.f32 %v2098
      %v2867 = vcvt.s32.f32 %v2099
      %v2868 = vcvt.s32.f32 %v2100
      %v2869 = vcvt.s32.f32 %v2101
      %v2870 = vcvt.s32.f32 %v2102
      %v2871 = vcvt.s32.f32 %v2103
      %v2872 = vcvt.s32.f32 %v2104
      %v2873 = vcvt.s32.f32 %v2105
      %v2874 = vcvt.s32.f32 %v2106
      %v2875 = vcvt.s32.f32 %v2107
      %v2876 = vcvt.s32.f32 %v2108
      %v2877 = vcvt.s32.f32 %v2109
      %v2878 = vcvt.s32.f32 %v2110
      %v2879 = vcvt.s32.f32 %v2111
      %v2880 = vcvt.s32.f32 %v2112
      %v2881 = vcvt.s32.f32 %v2113
      %v2882 = vcvt.s32.f32 %v2114
      %v2883 = vcvt.s32.f32 %v2115
      %v2884 = vcvt.s32.f32 %v2116
      %v2885 = vcvt.s32.f32 %v2117
      %v2886 = vcvt.s32.f32 %v2118
      %v2887 = vcvt.s32.f32 %v2119
      %v2888 = vcvt.s32.f32 %v2120
      %v2889 = vcvt.s32.f32 %v2121
      %v2890 = vcvt.s32.f32 %v2122
      %v2891 = vcvt.s32.f32 %v2123
      %v2892 = vcvt.s32.f32 %v2124
      %v2893 = vcvt.s32.f32 %v2125
      %v2894 = vcvt.s32.f32 %v2126
      %v2895 = vcvt.s32.f32 %v2127
      %v2896 = vcvt.s32.f32 %v2128
      %v2897 = vcvt.s32.f32 %v2129
      %v2898 = vcvt.s32.f32 %v2130
      %v2899 = vcvt.s32.f32 %v2131
      %v2900 = vcvt.s32.f32 %v2132
      %v2901 = vcvt.s32.f32 %v2133
      %v2902 = vcvt.s32.f32 %v2134
      %v2903 = vcvt.s32.f32 %v2135
      %v2904 = vcvt.s32.f32 %v2136
      %v2905 = vcvt.s32.f32 %v2137
      %v2906 = vcvt.s32.f32 %v2138
      %v2907 = vcvt.s32.f32 %v2139
      %v2908 = vcvt.s32.f32 %v2140
      %v2909 = vcvt.s32.f32 %v2141
      %v2910 = vcvt.s32.f32 %v2142
      %v2911 = vcvt.s32.f32 %v2143
      %v2912 = vcvt.s32.f32 %v2144
      %v2913 = vcvt.s32.f32 %v2145
      %v2914 = vcvt.s32.f32 %v2146
      %v2915 = vcvt.s32.f32 %v2147
      %v2916 = vcvt.s32.f32 %v2148
      %v2917 = vcvt.s32.f32 %v2149
      %v2918 = vcvt.s32.f32 %v2150
      %v2919 = vcvt.s32.f32 %v2151
      %v2920 = vcvt.s32.f32 %v2152
      %v2921 = vcvt.s32.f32 %v2153
      %v2922 = vcvt.s32.f32 %v2154
      %v2923 = vcvt.s32.f32 %v2155
      %v2924 = vcvt.s32.f32 %v2156
      %v2925 = vcvt.s32.f32 %v2157
      %v2926 = vcvt.s32.f32 %v2158
      %v2927 = vcvt.s32.f32 %v2159
      %v2928 = vcvt.s32.f32 %v2160
      %v2929 = vcvt.s32.f32 %v2161
      %v2930 = vcvt.s32.f32 %v2162
      %v2931 = vcvt.s32.f32 %v2163
      %v2932 = vcvt.s32.f32 %v2164
      %v2933 = vcvt.s32.f32 %v2165
      %v2934 = vcvt.s32.f32 %v2166
      %v2935 = vcvt.s32.f32 %v2167
      %v2936 = vcvt.s32.f32 %v2168
      %v2937 = vcvt.s32.f32 %v2169
      %v2938 = vcvt.s32.f32 %v2170
      %v2939 = vcvt.s32.f32 %v2171
      %v2940 = vcvt.s32.f32 %v2172
      %v2941 = vcvt.s32.f32 %v2173
      %v2942 = vcvt.s32.f32 %v2174
      %v2943 = vcvt.s32.f32 %v2175
      %v2944 = vcvt.s32.f32 %v2176
      %v2945 = vcvt.s32.f32 %v2177
      %v2946 = vcvt.s32.f32 %v2178
      %v2947 = vcvt.s32.f32 %v2179
      %v2948 = vcvt.s32.f32 %v2180
      %v2949 = vcvt.s32.f32 %v2181
      %v2950 = vcvt.s32.f32 %v2182
      %v2951 = vcvt.s32.f32 %v2183
      %v2952 = vcvt.s32.f32 %v2184
      %v2953 = vcvt.s32.f32 %v2185
      %v2954 = vcvt.s32.f32 %v2186
      %v2955 = vcvt.s32.f32 %v2187
      %v2956 = vcvt.s32.f32 %v2188
      %v2957 = vcvt.s32.f32 %v2189
      %v2958 = vcvt.s32.f32 %v2190
      %v2959 = vcvt.s32.f32 %v2191
      %v2960 = vcvt.s32.f32 %v2192
      %v2961 = vcvt.s32.f32 %v2193
      %v2962 = vcvt.s32.f32 %v2194
      %v2963 = vcvt.s32.f32 %v2195
      %v2964 = vcvt.s32.f32 %v2196
      %v2965 = vcvt.s32.f32 %v2197
      %v2966 = vcvt.s32.f32 %v2198
      %v2967 = vcvt.s32.f32 %v2199
      %v2968 = vcvt.s32.f32 %v2200
      %v2969 = vcvt.s32.f32 %v2201
      %v2970 = vcvt.s32.f32 %v2202
      %v2971 = vcvt.s32.f32 %v2203
      %v2972 = vcvt.s32.f32 %v2204
      %v2973 = vcvt.s32.f32 %v2205
      %v2974 = vcvt.s32.f32 %v2206
      %v2975 = vcvt.s32.f32 %v2207
      %v2976 = vcvt.s32.f32 %v2208
      %v2977 = vcvt.s32.f32 %v2209
      %v2978 = vcvt.s32.f32 %v2210
      %v2979 = vcvt.s32.f32 %v2211
      %v2980 = vcvt.s32.f32 %v2212
      %v2981 = vcvt.s32.f32 %v2213
      %v2982 = vcvt.s32.f32 %v2214
      %v2983 = vcvt.s32.f32 %v2215
      %v2984 = vcvt.s32.f32 %v2216
      %v2985 = vcvt.s32.f32 %v2217
      %v2986 = vcvt.s32.f32 %v2218
      %v2987 = vcvt.s32.f32 %v2219
      %v2988 = vcvt.s32.f32 %v2220
      %v2989 = vcvt.s32.f32 %v2221
      %v2990 = vcvt.s32.f32 %v2222
      %v2991 = vcvt.s32.f32 %v2223
      %v2992 = vcvt.s32.f32 %v2224
      %v2993 = vcvt.s32.f32 %v2225
      %v2994 = vcvt.s32.f32 %v2226
      %v2995 = vcvt.s32.f32 %v2227
      %v2996 = vcvt.s32.f32 %v2228
      %v2997 = vcvt.s32.f32 %v2229
      %v2998 = vcvt.s32.f32 %v2230
      %v2999 = vcvt.s32.f32 %v2231
      %v3000 = vcvt.s32.f32 %v2232
      %v3001 = vcvt.s32.f32 %v2233
      %v3002 = vcvt.s32.f32 %v2234
      %v3003 = vcvt.s32.f32 %v2235
      %v3004 = vcvt.s32.f32 %v2236
      %v3005 = vcvt.s32.f32 %v2237
      %v3006 = vcvt.s32.f32 %v2238
      %v3007 = vcvt.s32.f32 %v2239
      %v3008 = vcvt.s32.f32 %v2240
      %v3009 = vcvt.s32.f32 %v2241
      %v3010 = vcvt.s32.f32 %v2242
      %v3011 = vcvt.s32.f32 %v2243
      %v3012 = vcvt.s32.f32 %v2244
      %v3013 = vcvt.s32.f32 %v2245
      %v3014 = vcvt.s32.f32 %v2246
      %v3015 = vcvt.s32.f32 %v2247
      %v3016 = vcvt.s32.f32 %v2248
      %v3017 = vcvt.s32.f32 %v2249
      %v3018 = vcvt.s32.f32 %v2250
      %v3019 = vcvt.s32.f32 %v2251
      %v3020 = vcvt.s32.f32 %v2252
      %v3021 = vcvt.s32.f32 %v2253
      %v3022 = vcvt.s32.f32 %v2254
      %v3023 = vcvt.s32.f32 %v2255
      %v3024 = vcvt.s32.f32 %v2256
      %v3025 = vcvt.s32.f32 %v2257
      %v3026 = vcvt.s32.f32 %v2258
      %v3027 = vcvt.s32.f32 %v2259
      %v3028 = vcvt.s32.f32 %v2260
      %v3029 = vcvt.s32.f32 %v2261
      %v3030 = vcvt.s32.f32 %v2262
      %v3031 = vcvt.s32.f32 %v2263
      %v3032 = vcvt.s32.f32 %v2264
      %v3033 = vcvt.s32.f32 %v2265
      %v3034 = vcvt.s32.f32 %v2266
      %v3035 = vcvt.s32.f32 %v2267
      %v3036 = vcvt.s32.f32 %v2268
      %v3037 = vcvt.s32.f32 %v2269
      %v3038 = vcvt.s32.f32 %v2270
      %v3039 = vcvt.s32.f32 %v2271
      %v3040 = vcvt.s32.f32 %v2272
      %v3041 = vcvt.s32.f32 %v2273
      %v3042 = vcvt.s32.f32 %v2274
      %v3043 = vcvt.s32.f32 %v2275
      %v3044 = vcvt.s32.f32 %v2276
      %v3045 = vcvt.s32.f32 %v2277
      %v3046 = vcvt.s32.f32 %v2278
      %v3047 = vcvt.s32.f32 %v2279
      %v3048 = vcvt.s32.f32 %v2280
      %v3049 = vcvt.s32.f32 %v2281
      %v3050 = vcvt.s32.f32 %v2282
      %v3051 = vcvt.s32.f32 %v2283
      %v3052 = vcvt.s32.f32 %v2284
      %v3053 = vcvt.s32.f32 %v2285
      %v3054 = vcvt.s32.f32 %v2286
      %v3055 = vcvt.s32.f32 %v2287
      %v3056 = vcvt.s32.f32 %v2288
      %v3057 = vcvt.s32.f32 %v2289
      %v3058 = vcvt.s32.f32 %v2290
      %v3059 = vcvt.s32.f32 %v2291
      %v3060 = vcvt.s32.f32 %v2292
      %v3061 = vcvt.s32.f32 %v2293
      %v3062 = vcvt.s32.f32 %v2294
      %v3063 = vcvt.s32.f32 %v2295
      %v3064 = vcvt.s32.f32 %v2296
      %v3065 = vcvt.s32.f32 %v2297
      %v3066 = vcvt.s32.f32 %v2298
      %v3067 = vcvt.s32.f32 %v2299
      %v3068 = vcvt.s32.f32 %v2300
      %v3069 = vcvt.s32.f32 %v2301
      %v3070 = vcvt.s32.f32 %v2302
      %v3071 = vcvt.s32.f32 %v2303
      %v3072 = vcvt.s32.f32 %v2304
      %v3073 = vcvt.s32.f32 %v2305
      %v3074 = vcvt.s32.f32 %v2306
      %v3075 = vcvt.s32.f32 %v2307
      %v3076 = vcvt.s32.f32 %v2308
      %v3077 = vcvt.s32.f32 %v2309
      %v3078 = vcvt.s32.f32 %v2310
      %v3079 = vcvt.s32.f32 %v2311
      %v3080 = vcvt.s32.f32 %v2312
      %v3081 = vcvt.s32.f32 %v2313
      %v3082 = vcvt.s32.f32 %v2314
      %v3083 = vcvt.s32.f32 %v2315
      %v3084 = vcvt.s32.f32 %v2316
      %v3085 = vcvt.s32.f32 %v2317
      %v3086 = vcvt.s32.f32 %v2318
      %v3087 = vcvt.s32.f32 %v2319
      %v3088 = vcvt.s32.f32 %v2320
      %v3089 = vcvt.s32.f32 %v2321
      %v3090 = vcvt.s32.f32 %v2322
      %v3091 = vcvt.s32.f32 %v2323
      %v3092 = vcvt.s32.f32 %v2324
      %v3093 = vcvt.s32.f32 %v2325
      %v3094 = vcvt.s32.f32 %v2326
      %v3095 = vcvt.s32.f32 %v2327
      %v3096 = vcvt.s32.f32 %v2328
      %v3097 = vcvt.s32.f32 %v2329
      %v3098 = vcvt.s32.f32 %v2330
      %v3099 = vcvt.s32.f32 %v2331
      %v3100 = vcvt.s32.f32 %v2332
      %v3101 = vcvt.s32.f32 %v2333
      %v3102 = vcvt.s32.f32 %v2334
      %v3103 = vcvt.s32.f32 %v2335
      %v3104 = vcvt.s32.f32 %v2336
      %v3105 = vcvt.s32.f32 %v2337
      %v3106 = vcvt.s32.f32 %v2338
      %v3107 = vcvt.s32.f32 %v2339
      %v3108 = vcvt.s32.f32 %v2340
      %v3109 = vcvt.s32.f32 %v2341
      %v3110 = vcvt.s32.f32 %v2342
      %v3111 = vcvt.s32.f32 %v2343
      %v3112 = vcvt.s32.f32 %v2344
      %v3113 = vcvt.s32.f32 %v2345
      %v3114 = vcvt.s32.f32 %v2346
      %v3115 = vcvt.s32.f32 %v2347
      %v3116 = vcvt.s32.f32 %v2348
      %v3117 = vcvt.s32.f32 %v2349
      %v3118 = vcvt.s32.f32 %v2350
      %v3119 = vcvt.s32.f32 %v2351
      %v3120 = vcvt.s32.f32 %v2352
      %v3121 = vcvt.s32.f32 %v2353
      %v3122 = vcvt.s32.f32 %v2354
      %v3123 = vcvt.s32.f32 %v2355
      %v3124 = vcvt.s32.f32 %v2356
      %v3125 = vcvt.s32.f32 %v2357
      %v3126 = vcvt.s32.f32 %v2358
      %v3127 = vcvt.s32.f32 %v2359
      %v3128 = vcvt.s32.f32 %v2360
      %v3129 = vcvt.s32.f32 %v2361
      %v3130 = vcvt.s32.f32 %v2362
      %v3131 = vcvt.s32.f32 %v2363
      %v3132 = vcvt.s32.f32 %v2364
      %v3133 = vcvt.s32.f32 %v2365
      %v3134 = vcvt.s32.f32 %v2366
      %v3135 = vcvt.s32.f32 %v2367
      %v3136 = vcvt.s32.f32 %v2368
      %v3137 = vcvt.s32.f32 %v2369
      %v3138 = vcvt.s32.f32 %v2370
      %v3139 = vcvt.s32.f32 %v2371
      %v3140 = vcvt.s32.f32 %v2372
      %v3141 = vcvt.s32.f32 %v2373
      %v3142 = vcvt.s32.f32 %v2374
      %v3143 = vcvt.s32.f32 %v2375
      %v3144 = vcvt.s32.f32 %v2376
      %v3145 = vcvt.s32.f32 %v2377
      %v3146 = vcvt.s32.f32 %v2378
      %v3147 = vcvt.s32.f32 %v2379
      %v3148 = vcvt.s32.f32 %v2380
      %v3149 = vcvt.s32.f32 %v2381
      %v3150 = vcvt.s32.f32 %v2382
      %v3151 = vcvt.s32.f32 %v2383
      %v3152 = vcvt.s32.f32 %v2384
      %v3153 = vcvt.s32.f32 %v2385
      %v3154 = vcvt.s32.f32 %v2386
      %v3155 = vcvt.s32.f32 %v2387
      %v3156 = vcvt.s32.f32 %v2388
      %v3157 = vcvt.s32.f32 %v2389
      %v3158 = vcvt.s32.f32 %v2390
      %v3159 = vcvt.s32.f32 %v2391
      %v3160 = vcvt.s32.f32 %v2392
      %v3161 = vcvt.s32.f32 %v2393
      %v3162 = vcvt.s32.f32 %v2394
      %v3163 = vcvt.s32.f32 %v2395
      %v3164 = vcvt.s32.f32 %v2396
      %v3165 = vcvt.s32.f32 %v2397
      %v3166 = vcvt.s32.f32 %v2398
      %v3167 = vcvt.s32.f32 %v2399
      %v3168 = vcvt.s32.f32 %v2400
      %v3169 = vcvt.s32.f32 %v2401
      %v3170 = vcvt.s32.f32 %v2402
      %v3171 = vcvt.s32.f32 %v2403
      %v3172 = vcvt.s32.f32 %v2404
      %v3173 = vcvt.s32.f32 %v2405
      %v3174 = vcvt.s32.f32 %v2406
      %v3175 = vcvt.s32.f32 %v2407
      %v3176 = vcvt.s32.f32 %v2408
      %v3177 = vcvt.s32.f32 %v2409
      %v3178 = vcvt.s32.f32 %v2410
      %v3179 = vcvt.s32.f32 %v2411
      %v3180 = vcvt.s32.f32 %v2412
      %v3181 = vcvt.s32.f32 %v2413
      %v3182 = vcvt.s32.f32 %v2414
      %v3183 = vcvt.s32.f32 %v2415
      %v3184 = vcvt.s32.f32 %v2416
      %v3185 = vcvt.s32.f32 %v2417
      %v3186 = vcvt.s32.f32 %v2418
      %v3187 = vcvt.s32.f32 %v2419
      %v3188 = vcvt.s32.f32 %v2420
      %v3189 = vcvt.s32.f32 %v2421
      %v3190 = vcvt.s32.f32 %v2422
      %v3191 = vcvt.s32.f32 %v2423
      %v3192 = vcvt.s32.f32 %v2424
      %v3193 = vcvt.s32.f32 %v2425
      %v3194 = vcvt.s32.f32 %v2426
      %v3195 = vcvt.s32.f32 %v2427
      %v3196 = vcvt.s32.f32 %v2428
      %v3197 = vcvt.s32.f32 %v2429
      %v3198 = vcvt.s32.f32 %v2430
      %v3199 = vcvt.s32.f32 %v2431
      %v3200 = vcvt.s32.f32 %v2432
      %v3201 = vcvt.s32.f32 %v2433
      %v3202 = vcvt.s32.f32 %v2434
      %v3203 = vcvt.s32.f32 %v2435
      %v3204 = vcvt.s32.f32 %v2436
      %v3205 = vcvt.s32.f32 %v2437
      %v3206 = vcvt.s32.f32 %v2438
      %v3207 = vcvt.s32.f32 %v2439
      %v3208 = vcvt.s32.f32 %v2440
      %v3209 = vcvt.s32.f32 %v2441
      %v3210 = vcvt.s32.f32 %v2442
      %v3211 = vcvt.s32.f32 %v2443
      %v3212 = vcvt.s32.f32 %v2444
      %v3213 = vcvt.s32.f32 %v2445
      %v3214 = vcvt.s32.f32 %v2446
      %v3215 = vcvt.s32.f32 %v2447
      %v3216 = vcvt.s32.f32 %v2448
      %v3217 = vcvt.s32.f32 %v2449
      %v3218 = vcvt.s32.f32 %v2450
      %v3219 = vcvt.s32.f32 %v2451
      %v3220 = vcvt.s32.f32 %v2452
      %v3221 = vcvt.s32.f32 %v2453
      %v3222 = vcvt.s32.f32 %v2454
      %v3223 = vcvt.s32.f32 %v2455
      %v3224 = vcvt.s32.f32 %v2456
      %v3225 = vcvt.s32.f32 %v2457
      %v3226 = vcvt.s32.f32 %v2458
      %v3227 = vcvt.s32.f32 %v2459
      %v3228 = vcvt.s32.f32 %v2460
      %v3229 = vcvt.s32.f32 %v2461
      %v3230 = vcvt.s32.f32 %v2462
      %v3231 = vcvt.s32.f32 %v2463
      %v3232 = vcvt.s32.f32 %v2464
      %v3233 = vcvt.s32.f32 %v2465
      %v3234 = vcvt.s32.f32 %v2466
      %v3235 = vcvt.s32.f32 %v2467
      %v3236 = vcvt.s32.f32 %v2468
      %v3237 = vcvt.s32.f32 %v2469
      %v3238 = vcvt.s32.f32 %v2470
      %v3239 = vcvt.s32.f32 %v2471
      %v3240 = vcvt.s32.f32 %v2472
      %v3241 = vcvt.s32.f32 %v2473
      %v3242 = vcvt.s32.f32 %v2474
      %v3243 = vcvt.s32.f32 %v2475
      %v3244 = vcvt.s32.f32 %v2476
      %v3245 = vcvt.s32.f32 %v2477
      %v3246 = vcvt.s32.f32 %v2478
      %v3247 = vcvt.s32.f32 %v2479
      %v3248 = vcvt.s32.f32 %v2480
      %v3249 = vcvt.s32.f32 %v2481
      %v3250 = vcvt.s32.f32 %v2482
      %v3251 = vcvt.s32.f32 %v2483
      %v3252 = vcvt.s32.f32 %v2484
      %v3253 = vcvt.s32.f32 %v2485
      %v3254 = vcvt.s32.f32 %v2486
      %v3255 = vcvt.s32.f32 %v2487
      %v3256 = vcvt.s32.f32 %v2488
      %v3257 = vcvt.s32.f32 %v2489
      %v3258 = vcvt.s32.f32 %v2490
      %v3259 = vcvt.s32.f32 %v2491
      %v3260 = vcvt.s32.f32 %v2492
      %v3261 = vcvt.s32.f32 %v2493
      %v3262 = vcvt.s32.f32 %v2494
      %v3263 = vcvt.s32.f32 %v2495
      %v3264 = vcvt.s32.f32 %v2496
      %v3265 = vcvt.s32.f32 %v2497
      %v3266 = vcvt.s32.f32 %v2498
      %v3267 = vcvt.s32.f32 %v2499
      %v3268 = vcvt.s32.f32 %v2500
      %v3269 = vcvt.s32.f32 %v2501
      %v3270 = vcvt.s32.f32 %v2502
      %v3271 = vcvt.s32.f32 %v2503
      %v3272 = vcvt.s32.f32 %v2504
      %v3273 = vcvt.s32.f32 %v2505
      %v3274 = vcvt.s32.f32 %v2506
      %v3275 = vcvt.s32.f32 %v2507
      %v3276 = vcvt.s32.f32 %v2508
      %v3277 = vcvt.s32.f32 %v2509
      %v3278 = vcvt.s32.f32 %v2510
      %v3279 = vcvt.s32.f32 %v2511
      %v3280 = vcvt.s32.f32 %v2512
      %v3281 = vcvt.s32.f32 %v2513
      %v3282 = vcvt.s32.f32 %v2514
      %v3283 = vcvt.s32.f32 %v2515
      %v3284 = vcvt.s32.f32 %v2516
      %v3285 = vcvt.s32.f32 %v2517
      %v3286 = vcvt.s32.f32 %v2518
      %v3287 = vcvt.s32.f32 %v2519
      %v3288 = vcvt.s32.f32 %v2520
      %v3289 = vcvt.s32.f32 %v2521
      %v3290 = vcvt.s32.f32 %v2522
      %v3291 = vcvt.s32.f32 %v2523
      %v3292 = vcvt.s32.f32 %v2524
      %v3293 = vcvt.s32.f32 %v2525
      %v3294 = vcvt.s32.f32 %v2526
      %v3295 = vcvt.s32.f32 %v2527
      %v3296 = vcvt.s32.f32 %v2528
      %v3297 = vcvt.s32.f32 %v2529
      %v3298 = vcvt.s32.f32 %v2530
      %v3299 = vcvt.s32.f32 %v2531
      %v3300 = vcvt.s32.f32 %v2532
      %v3301 = vcvt.s32.f32 %v2533
      %v3302 = vcvt.s32.f32 %v2534
      %v3303 = vcvt.s32.f32 %v2535
      %v3304 = vcvt.s32.f32 %v2536
      %v3305 = vcvt.s32.f32 %v2537
      %v3306 = vcvt.s32.f32 %v2538
      %v3307 = vcvt.s32.f32 %v2539
      %v3308 = vcvt.s32.f32 %v2540
      %v3309 = vcvt.s32.f32 %v2541
      %v3310 = vcvt.s32.f32 %v2542
      %v3311 = vcvt.s32.f32 %v2543
      %v3312 = vcvt.s32.f32 %v2544
      %v3313 = vcvt.s32.f32 %v2545
      %v3314 = vcvt.s32.f32 %v2546
      %v3315 = vcvt.s32.f32 %v2547
      %v3316 = vcvt.s32.f32 %v2548
      %v3317 = vcvt.s32.f32 %v2549
      %v3318 = vcvt.s32.f32 %v2550
      %v3319 = vcvt.s32.f32 %v2551
      %v3320 = vcvt.s32.f32 %v2552
      %v3321 = vcvt.s32.f32 %v2553
      %v3322 = vcvt.s32.f32 %v2554
      %v3323 = vcvt.s32.f32 %v2555
      %v3324 = vcvt.s32.f32 %v2556
      %v3325 = vcvt.s32.f32 %v2557
      %v3326 = vcvt.s32.f32 %v2558
      %v3327 = vcvt.s32.f32 %v2559
      %v3328 = vcvt.s32.f32 %v2560
      %v3329 = vcvt.s32.f32 %v2561
      %v3330 = vcvt.s32.f32 %v2562
      %v3331 = vcvt.s32.f32 %v2563
      %v3332 = vcvt.s32.f32 %v2564
      %v3333 = vcvt.s32.f32 %v2565
      %v3334 = vcvt.s32.f32 %v2566
      %v3335 = vcvt.s32.f32 %v2567
      %v3336 = vcvt.s32.f32 %v2568
      %v3337 = vcvt.s32.f32 %v2569
      %v3338 = vcvt.s32.f32 %v2570
      %v3339 = vcvt.s32.f32 %v2571
      %v3340 = vcvt.s32.f32 %v2572
      %v3341 = vcvt.s32.f32 %v2573
      %v3342 = vcvt.s32.f32 %v2574
      %v3343 = vcvt.s32.f32 %v2575
      %v3344 = vcvt.s32.f32 %v2576
      %v3345 = vcvt.s32.f32 %v2577
      %v3346 = vcvt.s32.f32 %v2578
      %v3347 = vcvt.s32.f32 %v2579
      %v3348 = vcvt.s32.f32 %v2580
      %v3349 = vcvt.s32.f32 %v2581
      %v3350 = vcvt.s32.f32 %v2582
      %v3351 = vcvt.s32.f32 %v2583
      %v3352 = vcvt.s32.f32 %v2584
      %v3353 = vcvt.s32.f32 %v2585
      %v3354 = vcvt.s32.f32 %v2586
      %v3355 = vcvt.s32.f32 %v2587
      %v3356 = vcvt.s32.f32 %v2588
      %v3357 = vcvt.s32.f32 %v2589
      %v3358 = vcvt.s32.f32 %v2590
      %v3359 = vcvt.s32.f32 %v2591
      %v3360 = vcvt.s32.f32 %v2592
      %v3361 = vcvt.s32.f32 %v2593
      %v3362 = vcvt.s32.f32 %v2594
      %v3363 = vcvt.s32.f32 %v2595
      %v3364 = vcvt.s32.f32 %v2596
      %v3365 = vcvt.s32.f32 %v2597
      %v3366 = vcvt.s32.f32 %v2598
      %v3367 = vcvt.s32.f32 %v2599
      %v3368 = vcvt.s32.f32 %v2600
      %v3369 = vcvt.s32.f32 %v2601
      %v3370 = vcvt.s32.f32 %v2602
      %v3371 = vcvt.s32.f32 %v2603
      %v3372 = vcvt.s32.f32 %v2604
      %v3373 = vcvt.s32.f32 %v2605
      %v3374 = vcvt.s32.f32 %v2606
      %v3375 = vcvt.s32.f32 %v2607
      %v3376 = vcvt.s32.f32 %v2608
      %v3377 = vcvt.s32.f32 %v2609
      %v3378 = vcvt.s32.f32 %v2610
      %v3379 = vcvt.s32.f32 %v2611
      %v3380 = vcvt.s32.f32 %v2612
      %v3381 = vcvt.s32.f32 %v2613
      %v3382 = vcvt.s32.f32 %v2614
      %v3383 = vcvt.s32.f32 %v2615
      %v3384 = vcvt.s32.f32 %v2616
      %v3385 = vcvt.s32.f32 %v2617
      %v3386 = vcvt.s32.f32 %v2618
      %v3387 = vcvt.s32.f32 %v2619
      %v3388 = vcvt.s32.f32 %v2620
      %v3389 = vcvt.s32.f32 %v2621
      %v3390 = vcvt.s32.f32 %v2622
      %v3391 = vcvt.s32.f32 %v2623
      %v3392 = vcvt.s32.f32 %v2624
      %v3393 = vcvt.s32.f32 %v2625
      %v3394 = vcvt.s32.f32 %v2626
      %v3395 = vcvt.s32.f32 %v2627
      %v3396 = vcvt.s32.f32 %v2628
      %v3397 = vcvt.s32.f32 %v2629
      %v3398 = vcvt.s32.f32 %v2630
      %v3399 = vcvt.s32.f32 %v2631
      %v3400 = vcvt.s32.f32 %v2632
      %v3401 = vcvt.s32.f32 %v2633
      %v3402 = vcvt.s32.f32 %v2634
      %v3403 = vcvt.s32.f32 %v2635
      %v3404 = vcvt.s32.f32 %v2636
      %v3405 = vcvt.s32.f32 %v2637
      %v3406 = vcvt.s32.f32 %v2638
      %v3407 = vcvt.s32.f32 %v2639
      %v3408 = vcvt.s32.f32 %v2640
      %v3409 = vcvt.s32.f32 %v2641
      %v3410 = vcvt.s32.f32 %v2642
      %v3411 = vcvt.s32.f32 %v2643
      %v3412 = vcvt.s32.f32 %v2644
      %v3413 = vcvt.s32.f32 %v2645
      %v3414 = vcvt.s32.f32 %v2646
      %v3415 = vcvt.s32.f32 %v2647
      %v3416 = vcvt.s32.f32 %v2648
      %v3417 = vcvt.s32.f32 %v2649
      %v3418 = vcvt.s32.f32 %v2650
      %v3419 = vcvt.s32.f32 %v2651
      %v3420 = vcvt.s32.f32 %v2652
      %v3421 = vcvt.s32.f32 %v2653
      %v3422 = vcvt.s32.f32 %v2654
      %v3423 = vcvt.s32.f32 %v2655
      %v3424 = vcvt.s32.f32 %v2656
      %v3425 = vcvt.s32.f32 %v2657
      %v3426 = vcvt.s32.f32 %v2658
      %v3427 = vcvt.s32.f32 %v2659
      %v3428 = vcvt.s32.f32 %v2660
      %v3429 = vcvt.s32.f32 %v2661
      %v3430 = vcvt.s32.f32 %v2662
      %v3431 = vcvt.s32.f32 %v2663
      %v3432 = vcvt.s32.f32 %v2664
      %v3433 = vcvt.s32.f32 %v2665
      %v3434 = vcvt.s32.f32 %v2666
      %v3435 = vcvt.s32.f32 %v2667
      %v3436 = vcvt.s32.f32 %v2668
      %v3437 = vcvt.s32.f32 %v2669
      %v3438 = vcvt.s32.f32 %v2670
      %v3439 = vcvt.s32.f32 %v2671
      %v3440 = vcvt.s32.f32 %v2672
      %v3441 = vcvt.s32.f32 %v2673
      %v3442 = vcvt.s32.f32 %v2674
      %v3443 = vcvt.s32.f32 %v2675
      %v3444 = vcvt.s32.f32 %v2676
      %v3445 = vcvt.s32.f32 %v2677
      %v3446 = vcvt.s32.f32 %v2678
      %v3447 = vcvt.s32.f32 %v2679
      %v3448 = vcvt.s32.f32 %v2680
      %v3449 = vcvt.s32.f32 %v2681
      %v3450 = vcvt.s32.f32 %v2682
      %v3451 = vcvt.s32.f32 %v2683
      %v3452 = vcvt.s32.f32 %v2684
      %v3453 = vcvt.s32.f32 %v2685
      %v3454 = vcvt.s32.f32 %v2686
      %v3455 = vcvt.s32.f32 %v2687
      %v3456 = vcvt.s32.f32 %v2688
      %v3457 = vcvt.s32.f32 %v2689
      %v3458 = vcvt.s32.f32 %v2690
      %v3459 = vcvt.s32.f32 %v2691
      %v3460 = vcvt.s32.f32 %v2692
      %v3461 = vcvt.s32.f32 %v2693
      %v3462 = vcvt.s32.f32 %v2694
      %v3463 = vcvt.s32.f32 %v2695
      %v3464 = vcvt.s32.f32 %v2696
      %v3465 = vcvt.s32.f32 %v2697
      %v3466 = vcvt.s32.f32 %v2698
      %v3467 = vcvt.s32.f32 %v2699
      %v3468 = vcvt.s32.f32 %v2700
      %v3469 = vcvt.s32.f32 %v2701
      %v3470 = vcvt.s32.f32 %v2702
      %v3471 = vcvt.s32.f32 %v2703
      %v3472 = vcvt.s32.f32 %v2704
      %v3473 = vcvt.s32.f32 %v2705
      %v3474 = vcvt.s32.f32 %v2706
      %v3475 = vcvt.s32.f32 %v2707
      %v3476 = vcvt.s32.f32 %v2708
      %v3477 = vcvt.s32.f32 %v2709
      %v3478 = vcvt.s32.f32 %v2710
      %v3479 = vcvt.s32.f32 %v2711
      %v3480 = vcvt.s32.f32 %v2712
      %v3481 = vcvt.s32.f32 %v2713
      %v3482 = vcvt.s32.f32 %v2714
      %v3483 = vcvt.s32.f32 %v2715
      %v3484 = vcvt.s32.f32 %v2716
      %v3485 = vcvt.s32.f32 %v2717
      %v3486 = vcvt.s32.f32 %v2718
      %v3487 = vcvt.s32.f32 %v2719
      %v3488 = vcvt.s32.f32 %v2720
      %v3489 = vcvt.s32.f32 %v2721
      %v3490 = vcvt.s32.f32 %v2722
      %v3491 = vcvt.s32.f32 %v2723
      %v3492 = vcvt.s32.f32 %v2724
      %v3493 = vcvt.s32.f32 %v2725
      %v3494 = vcvt.s32.f32 %v2726
      %v3495 = vcvt.s32.f32 %v2727
      %v3496 = vcvt.s32.f32 %v2728
      %v3497 = vcvt.s32.f32 %v2729
      %v3498 = vcvt.s32.f32 %v2730
      %v3499 = vcvt.s32.f32 %v2731
      %v3500 = vcvt.s32.f32 %v2732
      %v3501 = vcvt.s32.f32 %v2733
      %v3502 = vcvt.s32.f32 %v2734
      %v3503 = vcvt.s32.f32 %v2735
      %v3504 = vcvt.s32.f32 %v2736
      %v3505 = vcvt.s32.f32 %v2737
      %v3506 = vcvt.s32.f32 %v2738
      %v3507 = vcvt.s32.f32 %v2739
      %v3508 = vcvt.s32.f32 %v2740
      %v3509 = vcvt.s32.f32 %v2741
      %v3510 = vcvt.s32.f32 %v2742
      %v3511 = vcvt.s32.f32 %v2743
      %v3512 = vcvt.s32.f32 %v2744
      %v3513 = vcvt.s32.f32 %v2745
      %v3514 = vcvt.s32.f32 %v2746
      %v3515 = vcvt.s32.f32 %v2747
      %v3516 = vcvt.s32.f32 %v2748
      %v3517 = vcvt.s32.f32 %v2749
      %v3518 = vcvt.s32.f32 %v2750
      %v3519 = vcvt.s32.f32 %v2751
      %v3520 = vcvt.s32.f32 %v2752
      %v3521 = vcvt.s32.f32 %v2753
      %v3522 = vcvt.s32.f32 %v2754
      %v3523 = vcvt.s32.f32 %v2755
      %v3524 = vcvt.s32.f32 %v2756
      %v3525 = vcvt.s32.f32 %v2757
      %v3526 = vcvt.s32.f32 %v2758
      %v3527 = vcvt.s32.f32 %v2759
      %v3528 = vcvt.s32.f32 %v2760
      %v3529 = vcvt.s32.f32 %v2761
      %v3530 = vcvt.s32.f32 %v2762
      %v3531 = vcvt.s32.f32 %v2763
      %v3532 = vcvt.s32.f32 %v2764
      %v3533 = vcvt.s32.f32 %v2765
      %v3534 = vcvt.s32.f32 %v2766
      %v3535 = vcvt.s32.f32 %v2767
      %v3536 = vcvt.s32.f32 %v2768
      %v3537 = vcvt.s32.f32 %v2769
      %v3538 = vcvt.s32.f32 %v2770
      %v3539 = vcvt.s32.f32 %v2771
      %v3540 = vcvt.s32.f32 %v2772
      %v3541 = vcvt.s32.f32 %v2773
      %v3542 = vcvt.s32.f32 %v2774
      %v3543 = vcvt.s32.f32 %v2775
      %v3544 = vcvt.s32.f32 %v2776
      %v3545 = vcvt.s32.f32 %v2777
      %v3546 = vcvt.s32.f32 %v2778
      %v3547 = vcvt.s32.f32 %v2779
      %v3548 = vcvt.s32.f32 %v2780
      %v3549 = vcvt.s32.f32 %v2781
      %v3550 = vcvt.s32.f32 %v2782
      %v3551 = vcvt.s32.f32 %v2783
      %v3552 = vcvt.s32.f32 %v2784
      %v3553 = vcvt.s32.f32 %v2785
      %v3554 = vcvt.s32.f32 %v2786
      %v3555 = vcvt.s32.f32 %v2787
      %v3556 = vcvt.s32.f32 %v2788
      %v3557 = vcvt.s32.f32 %v2789
      %v3558 = vcvt.s32.f32 %v2790
      %v3559 = vcvt.s32.f32 %v2791
      %v3560 = vcvt.s32.f32 %v2792
      %v3561 = vcvt.s32.f32 %v2793
      %v3562 = vcvt.s32.f32 %v2794
      %v3563 = vcvt.s32.f32 %v2795
      %v3564 = vcvt.s32.f32 %v2796
      %v3565 = vcvt.s32.f32 %v2797
      %v3566 = vcvt.s32.f32 %v2798
      %v3567 = vcvt.s32.f32 %v2799
      %v3568 = vcvt.s32.f32 %v2800
      %v3569 = vcvt.s32.f32 %v2801
      %v3570 = vcvt.s32.f32 %v2802
      %v3571 = vcvt.s32.f32 %v2803
      %v3572 = vcvt.s32.f32 %v2804
      %v3573 = vcvt.s32.f32 %v2805
      %v3574 = vcvt.s32.f32 %v2806
      %v3575 = vcvt.s32.f32 %v2807
      %v3576 = vcvt.s32.f32 %v2808
      %v3577 = vcvt.s32.f32 %v2809
      %v3578 = vcvt.s32.f32 %v2810
      %v3579 = vcvt.s32.f32 %v2811
      %v3580 = vcvt.s32.f32 %v2812
      %v3581 = vcvt.s32.f32 %v2813
      %v3582 = vcvt.s32.f32 %v2814
      %v3583 = vcvt.s32.f32 %v2815
      %v3584 = vcvt.s32.f32 %v2816
      %v3585 = vcvt.s32.f32 %v2817
      %v3586 = vcvt.s32.f32 %v2818
      %v3587 = vcvt.s32.f32 %v2819
      %v3588 = vcvt.s32.f32 %v2820
      %v3589 = vcvt.s32.f32 %v2821
      %v3590 = vcvt.s32.f32 %v2822
      %v3591 = vcvt.s32.f32 %v2823
      %v3592 = vcvt.s32.f32 %v2824
      %v3593 = vcvt.s32.f32 %v2825
      %v3594 = vcvt.s32.f32 %v2826
      %v3595 = vcvt.s32.f32 %v2827
      %v3596 = vcvt.s32.f32 %v2828
      %v3597 = vcvt.s32.f32 %v2829
      %v3598 = vcvt.s32.f32 %v2830
      %v3599 = vcvt.s32.f32 %v2831
      %v3600 = vcvt.s32.f32 %v2832
      %v3601 = vcvt.s32.f32 %v2833
      %v3602 = vcvt.s32.f32 %v2834
      %v3603 = vcvt.s32.f32 %v2835
      %v3604 = vcvt.s32.f32 %v2836
      %v3605 = vcvt.s32.f32 %v2837
      %v3606 = vcvt.s32.f32 %v2838
      %v3607 = vcvt.s32.f32 %v2839
      %v3608 = vcvt.s32.f32 %v2840
      %v3609 = vcvt.s32.f32 %v2841
      %v3610 = vld [vmem:[%s13] sm:$0x3f]
      %v3612 = vlaneseq
      %v3613 = vshrl.u32 %v3612, 7
      %v3614 = vsub.s32 0, %v3613
      %v3615 = vrot.slane %v3610, %v3614
      %v3616 = vlaneseq
      %v3617 = vshrl.u32 %v3616, 7
      %v3618 = vsub.s32 1, %v3617
      %v3619 = vrot.slane %v3610, %v3618
      %v3620 = vlaneseq
      %v3621 = vshrl.u32 %v3620, 7
      %v3622 = vsub.s32 2, %v3621
      %v3623 = vrot.slane %v3610, %v3622
      %v3624 = vlaneseq
      %v3625 = vshrl.u32 %v3624, 7
      %v3626 = vsub.s32 3, %v3625
      %v3627 = vrot.slane %v3610, %v3626
      %v3628 = vlaneseq
      %v3629 = vshrl.u32 %v3628, 7
      %v3630 = vsub.s32 4, %v3629
      %v3631 = vrot.slane %v3610, %v3630
      %v3632 = vlaneseq
      %v3633 = vshrl.u32 %v3632, 7
      %v3634 = vsub.s32 5, %v3633
      %v3635 = vrot.slane %v3610, %v3634
      %v3642 = vmul.f32 %v2842, %v3615
      %v3643 = vmul.f32 %v2843, %v3619
      %v3644 = vmul.f32 %v2844, %v3623
      %v3645 = vmul.f32 %v2845, %v3627
      %v3646 = vmul.f32 %v2846, %v3631
      %v3647 = vmul.f32 %v2847, %v3635
      %v3648 = vmul.f32 %v2848, %v3615
      %v3649 = vmul.f32 %v2849, %v3619
      %v3650 = vmul.f32 %v2850, %v3623
      %v3651 = vmul.f32 %v2851, %v3627
      %v3652 = vmul.f32 %v2852, %v3631
      %v3653 = vmul.f32 %v2853, %v3635
      %v3654 = vmul.f32 %v2854, %v3615
      %v3655 = vmul.f32 %v2855, %v3619
      %v3656 = vmul.f32 %v2856, %v3623
      %v3657 = vmul.f32 %v2857, %v3627
      %v3658 = vmul.f32 %v2858, %v3631
      %v3659 = vmul.f32 %v2859, %v3635
      %v3660 = vmul.f32 %v2860, %v3615
      %v3661 = vmul.f32 %v2861, %v3619
      %v3662 = vmul.f32 %v2862, %v3623
      %v3663 = vmul.f32 %v2863, %v3627
      %v3664 = vmul.f32 %v2864, %v3631
      %v3665 = vmul.f32 %v2865, %v3635
      %v3666 = vmul.f32 %v2866, %v3615
      %v3667 = vmul.f32 %v2867, %v3619
      %v3668 = vmul.f32 %v2868, %v3623
      %v3669 = vmul.f32 %v2869, %v3627
      %v3670 = vmul.f32 %v2870, %v3631
      %v3671 = vmul.f32 %v2871, %v3635
      %v3672 = vmul.f32 %v2872, %v3615
      %v3673 = vmul.f32 %v2873, %v3619
      %v3674 = vmul.f32 %v2874, %v3623
      %v3675 = vmul.f32 %v2875, %v3627
      %v3676 = vmul.f32 %v2876, %v3631
      %v3677 = vmul.f32 %v2877, %v3635
      %v3678 = vmul.f32 %v2878, %v3615
      %v3679 = vmul.f32 %v2879, %v3619
      %v3680 = vmul.f32 %v2880, %v3623
      %v3681 = vmul.f32 %v2881, %v3627
      %v3682 = vmul.f32 %v2882, %v3631
      %v3683 = vmul.f32 %v2883, %v3635
      %v3684 = vmul.f32 %v2884, %v3615
      %v3685 = vmul.f32 %v2885, %v3619
      %v3686 = vmul.f32 %v2886, %v3623
      %v3687 = vmul.f32 %v2887, %v3627
      %v3688 = vmul.f32 %v2888, %v3631
      %v3689 = vmul.f32 %v2889, %v3635
      %v3690 = vmul.f32 %v2890, %v3615
      %v3691 = vmul.f32 %v2891, %v3619
      %v3692 = vmul.f32 %v2892, %v3623
      %v3693 = vmul.f32 %v2893, %v3627
      %v3694 = vmul.f32 %v2894, %v3631
      %v3695 = vmul.f32 %v2895, %v3635
      %v3696 = vmul.f32 %v2896, %v3615
      %v3697 = vmul.f32 %v2897, %v3619
      %v3698 = vmul.f32 %v2898, %v3623
      %v3699 = vmul.f32 %v2899, %v3627
      %v3700 = vmul.f32 %v2900, %v3631
      %v3701 = vmul.f32 %v2901, %v3635
      %v3702 = vmul.f32 %v2902, %v3615
      %v3703 = vmul.f32 %v2903, %v3619
      %v3704 = vmul.f32 %v2904, %v3623
      %v3705 = vmul.f32 %v2905, %v3627
      %v3706 = vmul.f32 %v2906, %v3631
      %v3707 = vmul.f32 %v2907, %v3635
      %v3708 = vmul.f32 %v2908, %v3615
      %v3709 = vmul.f32 %v2909, %v3619
      %v3710 = vmul.f32 %v2910, %v3623
      %v3711 = vmul.f32 %v2911, %v3627
      %v3712 = vmul.f32 %v2912, %v3631
      %v3713 = vmul.f32 %v2913, %v3635
      %v3714 = vmul.f32 %v2914, %v3615
      %v3715 = vmul.f32 %v2915, %v3619
      %v3716 = vmul.f32 %v2916, %v3623
      %v3717 = vmul.f32 %v2917, %v3627
      %v3718 = vmul.f32 %v2918, %v3631
      %v3719 = vmul.f32 %v2919, %v3635
      %v3720 = vmul.f32 %v2920, %v3615
      %v3721 = vmul.f32 %v2921, %v3619
      %v3722 = vmul.f32 %v2922, %v3623
      %v3723 = vmul.f32 %v2923, %v3627
      %v3724 = vmul.f32 %v2924, %v3631
      %v3725 = vmul.f32 %v2925, %v3635
      %v3726 = vmul.f32 %v2926, %v3615
      %v3727 = vmul.f32 %v2927, %v3619
      %v3728 = vmul.f32 %v2928, %v3623
      %v3729 = vmul.f32 %v2929, %v3627
      %v3730 = vmul.f32 %v2930, %v3631
      %v3731 = vmul.f32 %v2931, %v3635
      %v3732 = vmul.f32 %v2932, %v3615
      %v3733 = vmul.f32 %v2933, %v3619
      %v3734 = vmul.f32 %v2934, %v3623
      %v3735 = vmul.f32 %v2935, %v3627
      %v3736 = vmul.f32 %v2936, %v3631
      %v3737 = vmul.f32 %v2937, %v3635
      %v3738 = vmul.f32 %v2938, %v3615
      %v3739 = vmul.f32 %v2939, %v3619
      %v3740 = vmul.f32 %v2940, %v3623
      %v3741 = vmul.f32 %v2941, %v3627
      %v3742 = vmul.f32 %v2942, %v3631
      %v3743 = vmul.f32 %v2943, %v3635
      %v3744 = vmul.f32 %v2944, %v3615
      %v3745 = vmul.f32 %v2945, %v3619
      %v3746 = vmul.f32 %v2946, %v3623
      %v3747 = vmul.f32 %v2947, %v3627
      %v3748 = vmul.f32 %v2948, %v3631
      %v3749 = vmul.f32 %v2949, %v3635
      %v3750 = vmul.f32 %v2950, %v3615
      %v3751 = vmul.f32 %v2951, %v3619
      %v3752 = vmul.f32 %v2952, %v3623
      %v3753 = vmul.f32 %v2953, %v3627
      %v3754 = vmul.f32 %v2954, %v3631
      %v3755 = vmul.f32 %v2955, %v3635
      %v3756 = vmul.f32 %v2956, %v3615
      %v3757 = vmul.f32 %v2957, %v3619
      %v3758 = vmul.f32 %v2958, %v3623
      %v3759 = vmul.f32 %v2959, %v3627
      %v3760 = vmul.f32 %v2960, %v3631
      %v3761 = vmul.f32 %v2961, %v3635
      %v3762 = vmul.f32 %v2962, %v3615
      %v3763 = vmul.f32 %v2963, %v3619
      %v3764 = vmul.f32 %v2964, %v3623
      %v3765 = vmul.f32 %v2965, %v3627
      %v3766 = vmul.f32 %v2966, %v3631
      %v3767 = vmul.f32 %v2967, %v3635
      %v3768 = vmul.f32 %v2968, %v3615
      %v3769 = vmul.f32 %v2969, %v3619
      %v3770 = vmul.f32 %v2970, %v3623
      %v3771 = vmul.f32 %v2971, %v3627
      %v3772 = vmul.f32 %v2972, %v3631
      %v3773 = vmul.f32 %v2973, %v3635
      %v3774 = vmul.f32 %v2974, %v3615
      %v3775 = vmul.f32 %v2975, %v3619
      %v3776 = vmul.f32 %v2976, %v3623
      %v3777 = vmul.f32 %v2977, %v3627
      %v3778 = vmul.f32 %v2978, %v3631
      %v3779 = vmul.f32 %v2979, %v3635
      %v3780 = vmul.f32 %v2980, %v3615
      %v3781 = vmul.f32 %v2981, %v3619
      %v3782 = vmul.f32 %v2982, %v3623
      %v3783 = vmul.f32 %v2983, %v3627
      %v3784 = vmul.f32 %v2984, %v3631
      %v3785 = vmul.f32 %v2985, %v3635
      %v3786 = vmul.f32 %v2986, %v3615
      %v3787 = vmul.f32 %v2987, %v3619
      %v3788 = vmul.f32 %v2988, %v3623
      %v3789 = vmul.f32 %v2989, %v3627
      %v3790 = vmul.f32 %v2990, %v3631
      %v3791 = vmul.f32 %v2991, %v3635
      %v3792 = vmul.f32 %v2992, %v3615
      %v3793 = vmul.f32 %v2993, %v3619
      %v3794 = vmul.f32 %v2994, %v3623
      %v3795 = vmul.f32 %v2995, %v3627
      %v3796 = vmul.f32 %v2996, %v3631
      %v3797 = vmul.f32 %v2997, %v3635
      %v3798 = vmul.f32 %v2998, %v3615
      %v3799 = vmul.f32 %v2999, %v3619
      %v3800 = vmul.f32 %v3000, %v3623
      %v3801 = vmul.f32 %v3001, %v3627
      %v3802 = vmul.f32 %v3002, %v3631
      %v3803 = vmul.f32 %v3003, %v3635
      %v3804 = vmul.f32 %v3004, %v3615
      %v3805 = vmul.f32 %v3005, %v3619
      %v3806 = vmul.f32 %v3006, %v3623
      %v3807 = vmul.f32 %v3007, %v3627
      %v3808 = vmul.f32 %v3008, %v3631
      %v3809 = vmul.f32 %v3009, %v3635
      %v3810 = vmul.f32 %v3010, %v3615
      %v3811 = vmul.f32 %v3011, %v3619
      %v3812 = vmul.f32 %v3012, %v3623
      %v3813 = vmul.f32 %v3013, %v3627
      %v3814 = vmul.f32 %v3014, %v3631
      %v3815 = vmul.f32 %v3015, %v3635
      %v3816 = vmul.f32 %v3016, %v3615
      %v3817 = vmul.f32 %v3017, %v3619
      %v3818 = vmul.f32 %v3018, %v3623
      %v3819 = vmul.f32 %v3019, %v3627
      %v3820 = vmul.f32 %v3020, %v3631
      %v3821 = vmul.f32 %v3021, %v3635
      %v3822 = vmul.f32 %v3022, %v3615
      %v3823 = vmul.f32 %v3023, %v3619
      %v3824 = vmul.f32 %v3024, %v3623
      %v3825 = vmul.f32 %v3025, %v3627
      %v3826 = vmul.f32 %v3026, %v3631
      %v3827 = vmul.f32 %v3027, %v3635
      %v3828 = vmul.f32 %v3028, %v3615
      %v3829 = vmul.f32 %v3029, %v3619
      %v3830 = vmul.f32 %v3030, %v3623
      %v3831 = vmul.f32 %v3031, %v3627
      %v3832 = vmul.f32 %v3032, %v3631
      %v3833 = vmul.f32 %v3033, %v3635
      %v3834 = vmul.f32 %v3034, %v3615
      %v3835 = vmul.f32 %v3035, %v3619
      %v3836 = vmul.f32 %v3036, %v3623
      %v3837 = vmul.f32 %v3037, %v3627
      %v3838 = vmul.f32 %v3038, %v3631
      %v3839 = vmul.f32 %v3039, %v3635
      %v3840 = vmul.f32 %v3040, %v3615
      %v3841 = vmul.f32 %v3041, %v3619
      %v3842 = vmul.f32 %v3042, %v3623
      %v3843 = vmul.f32 %v3043, %v3627
      %v3844 = vmul.f32 %v3044, %v3631
      %v3845 = vmul.f32 %v3045, %v3635
      %v3846 = vmul.f32 %v3046, %v3615
      %v3847 = vmul.f32 %v3047, %v3619
      %v3848 = vmul.f32 %v3048, %v3623
      %v3849 = vmul.f32 %v3049, %v3627
      %v3850 = vmul.f32 %v3050, %v3631
      %v3851 = vmul.f32 %v3051, %v3635
      %v3852 = vmul.f32 %v3052, %v3615
      %v3853 = vmul.f32 %v3053, %v3619
      %v3854 = vmul.f32 %v3054, %v3623
      %v3855 = vmul.f32 %v3055, %v3627
      %v3856 = vmul.f32 %v3056, %v3631
      %v3857 = vmul.f32 %v3057, %v3635
      %v3858 = vmul.f32 %v3058, %v3615
      %v3859 = vmul.f32 %v3059, %v3619
      %v3860 = vmul.f32 %v3060, %v3623
      %v3861 = vmul.f32 %v3061, %v3627
      %v3862 = vmul.f32 %v3062, %v3631
      %v3863 = vmul.f32 %v3063, %v3635
      %v3864 = vmul.f32 %v3064, %v3615
      %v3865 = vmul.f32 %v3065, %v3619
      %v3866 = vmul.f32 %v3066, %v3623
      %v3867 = vmul.f32 %v3067, %v3627
      %v3868 = vmul.f32 %v3068, %v3631
      %v3869 = vmul.f32 %v3069, %v3635
      %v3870 = vmul.f32 %v3070, %v3615
      %v3871 = vmul.f32 %v3071, %v3619
      %v3872 = vmul.f32 %v3072, %v3623
      %v3873 = vmul.f32 %v3073, %v3627
      %v3874 = vmul.f32 %v3074, %v3631
      %v3875 = vmul.f32 %v3075, %v3635
      %v3876 = vmul.f32 %v3076, %v3615
      %v3877 = vmul.f32 %v3077, %v3619
      %v3878 = vmul.f32 %v3078, %v3623
      %v3879 = vmul.f32 %v3079, %v3627
      %v3880 = vmul.f32 %v3080, %v3631
      %v3881 = vmul.f32 %v3081, %v3635
      %v3882 = vmul.f32 %v3082, %v3615
      %v3883 = vmul.f32 %v3083, %v3619
      %v3884 = vmul.f32 %v3084, %v3623
      %v3885 = vmul.f32 %v3085, %v3627
      %v3886 = vmul.f32 %v3086, %v3631
      %v3887 = vmul.f32 %v3087, %v3635
      %v3888 = vmul.f32 %v3088, %v3615
      %v3889 = vmul.f32 %v3089, %v3619
      %v3890 = vmul.f32 %v3090, %v3623
      %v3891 = vmul.f32 %v3091, %v3627
      %v3892 = vmul.f32 %v3092, %v3631
      %v3893 = vmul.f32 %v3093, %v3635
      %v3894 = vmul.f32 %v3094, %v3615
      %v3895 = vmul.f32 %v3095, %v3619
      %v3896 = vmul.f32 %v3096, %v3623
      %v3897 = vmul.f32 %v3097, %v3627
      %v3898 = vmul.f32 %v3098, %v3631
      %v3899 = vmul.f32 %v3099, %v3635
      %v3900 = vmul.f32 %v3100, %v3615
      %v3901 = vmul.f32 %v3101, %v3619
      %v3902 = vmul.f32 %v3102, %v3623
      %v3903 = vmul.f32 %v3103, %v3627
      %v3904 = vmul.f32 %v3104, %v3631
      %v3905 = vmul.f32 %v3105, %v3635
      %v3906 = vmul.f32 %v3106, %v3615
      %v3907 = vmul.f32 %v3107, %v3619
      %v3908 = vmul.f32 %v3108, %v3623
      %v3909 = vmul.f32 %v3109, %v3627
      %v3910 = vmul.f32 %v3110, %v3631
      %v3911 = vmul.f32 %v3111, %v3635
      %v3912 = vmul.f32 %v3112, %v3615
      %v3913 = vmul.f32 %v3113, %v3619
      %v3914 = vmul.f32 %v3114, %v3623
      %v3915 = vmul.f32 %v3115, %v3627
      %v3916 = vmul.f32 %v3116, %v3631
      %v3917 = vmul.f32 %v3117, %v3635
      %v3918 = vmul.f32 %v3118, %v3615
      %v3919 = vmul.f32 %v3119, %v3619
      %v3920 = vmul.f32 %v3120, %v3623
      %v3921 = vmul.f32 %v3121, %v3627
      %v3922 = vmul.f32 %v3122, %v3631
      %v3923 = vmul.f32 %v3123, %v3635
      %v3924 = vmul.f32 %v3124, %v3615
      %v3925 = vmul.f32 %v3125, %v3619
      %v3926 = vmul.f32 %v3126, %v3623
      %v3927 = vmul.f32 %v3127, %v3627
      %v3928 = vmul.f32 %v3128, %v3631
      %v3929 = vmul.f32 %v3129, %v3635
      %v3930 = vmul.f32 %v3130, %v3615
      %v3931 = vmul.f32 %v3131, %v3619
      %v3932 = vmul.f32 %v3132, %v3623
      %v3933 = vmul.f32 %v3133, %v3627
      %v3934 = vmul.f32 %v3134, %v3631
      %v3935 = vmul.f32 %v3135, %v3635
      %v3936 = vmul.f32 %v3136, %v3615
      %v3937 = vmul.f32 %v3137, %v3619
      %v3938 = vmul.f32 %v3138, %v3623
      %v3939 = vmul.f32 %v3139, %v3627
      %v3940 = vmul.f32 %v3140, %v3631
      %v3941 = vmul.f32 %v3141, %v3635
      %v3942 = vmul.f32 %v3142, %v3615
      %v3943 = vmul.f32 %v3143, %v3619
      %v3944 = vmul.f32 %v3144, %v3623
      %v3945 = vmul.f32 %v3145, %v3627
      %v3946 = vmul.f32 %v3146, %v3631
      %v3947 = vmul.f32 %v3147, %v3635
      %v3948 = vmul.f32 %v3148, %v3615
      %v3949 = vmul.f32 %v3149, %v3619
      %v3950 = vmul.f32 %v3150, %v3623
      %v3951 = vmul.f32 %v3151, %v3627
      %v3952 = vmul.f32 %v3152, %v3631
      %v3953 = vmul.f32 %v3153, %v3635
      %v3954 = vmul.f32 %v3154, %v3615
      %v3955 = vmul.f32 %v3155, %v3619
      %v3956 = vmul.f32 %v3156, %v3623
      %v3957 = vmul.f32 %v3157, %v3627
      %v3958 = vmul.f32 %v3158, %v3631
      %v3959 = vmul.f32 %v3159, %v3635
      %v3960 = vmul.f32 %v3160, %v3615
      %v3961 = vmul.f32 %v3161, %v3619
      %v3962 = vmul.f32 %v3162, %v3623
      %v3963 = vmul.f32 %v3163, %v3627
      %v3964 = vmul.f32 %v3164, %v3631
      %v3965 = vmul.f32 %v3165, %v3635
      %v3966 = vmul.f32 %v3166, %v3615
      %v3967 = vmul.f32 %v3167, %v3619
      %v3968 = vmul.f32 %v3168, %v3623
      %v3969 = vmul.f32 %v3169, %v3627
      %v3970 = vmul.f32 %v3170, %v3631
      %v3971 = vmul.f32 %v3171, %v3635
      %v3972 = vmul.f32 %v3172, %v3615
      %v3973 = vmul.f32 %v3173, %v3619
      %v3974 = vmul.f32 %v3174, %v3623
      %v3975 = vmul.f32 %v3175, %v3627
      %v3976 = vmul.f32 %v3176, %v3631
      %v3977 = vmul.f32 %v3177, %v3635
      %v3978 = vmul.f32 %v3178, %v3615
      %v3979 = vmul.f32 %v3179, %v3619
      %v3980 = vmul.f32 %v3180, %v3623
      %v3981 = vmul.f32 %v3181, %v3627
      %v3982 = vmul.f32 %v3182, %v3631
      %v3983 = vmul.f32 %v3183, %v3635
      %v3984 = vmul.f32 %v3184, %v3615
      %v3985 = vmul.f32 %v3185, %v3619
      %v3986 = vmul.f32 %v3186, %v3623
      %v3987 = vmul.f32 %v3187, %v3627
      %v3988 = vmul.f32 %v3188, %v3631
      %v3989 = vmul.f32 %v3189, %v3635
      %v3990 = vmul.f32 %v3190, %v3615
      %v3991 = vmul.f32 %v3191, %v3619
      %v3992 = vmul.f32 %v3192, %v3623
      %v3993 = vmul.f32 %v3193, %v3627
      %v3994 = vmul.f32 %v3194, %v3631
      %v3995 = vmul.f32 %v3195, %v3635
      %v3996 = vmul.f32 %v3196, %v3615
      %v3997 = vmul.f32 %v3197, %v3619
      %v3998 = vmul.f32 %v3198, %v3623
      %v3999 = vmul.f32 %v3199, %v3627
      %v4000 = vmul.f32 %v3200, %v3631
      %v4001 = vmul.f32 %v3201, %v3635
      %v4002 = vmul.f32 %v3202, %v3615
      %v4003 = vmul.f32 %v3203, %v3619
      %v4004 = vmul.f32 %v3204, %v3623
      %v4005 = vmul.f32 %v3205, %v3627
      %v4006 = vmul.f32 %v3206, %v3631
      %v4007 = vmul.f32 %v3207, %v3635
      %v4008 = vmul.f32 %v3208, %v3615
      %v4009 = vmul.f32 %v3209, %v3619
      %v4010 = vmul.f32 %v3210, %v3623
      %v4011 = vmul.f32 %v3211, %v3627
      %v4012 = vmul.f32 %v3212, %v3631
      %v4013 = vmul.f32 %v3213, %v3635
      %v4014 = vmul.f32 %v3214, %v3615
      %v4015 = vmul.f32 %v3215, %v3619
      %v4016 = vmul.f32 %v3216, %v3623
      %v4017 = vmul.f32 %v3217, %v3627
      %v4018 = vmul.f32 %v3218, %v3631
      %v4019 = vmul.f32 %v3219, %v3635
      %v4020 = vmul.f32 %v3220, %v3615
      %v4021 = vmul.f32 %v3221, %v3619
      %v4022 = vmul.f32 %v3222, %v3623
      %v4023 = vmul.f32 %v3223, %v3627
      %v4024 = vmul.f32 %v3224, %v3631
      %v4025 = vmul.f32 %v3225, %v3635
      %v4026 = vmul.f32 %v3226, %v3615
      %v4027 = vmul.f32 %v3227, %v3619
      %v4028 = vmul.f32 %v3228, %v3623
      %v4029 = vmul.f32 %v3229, %v3627
      %v4030 = vmul.f32 %v3230, %v3631
      %v4031 = vmul.f32 %v3231, %v3635
      %v4032 = vmul.f32 %v3232, %v3615
      %v4033 = vmul.f32 %v3233, %v3619
      %v4034 = vmul.f32 %v3234, %v3623
      %v4035 = vmul.f32 %v3235, %v3627
      %v4036 = vmul.f32 %v3236, %v3631
      %v4037 = vmul.f32 %v3237, %v3635
      %v4038 = vmul.f32 %v3238, %v3615
      %v4039 = vmul.f32 %v3239, %v3619
      %v4040 = vmul.f32 %v3240, %v3623
      %v4041 = vmul.f32 %v3241, %v3627
      %v4042 = vmul.f32 %v3242, %v3631
      %v4043 = vmul.f32 %v3243, %v3635
      %v4044 = vmul.f32 %v3244, %v3615
      %v4045 = vmul.f32 %v3245, %v3619
      %v4046 = vmul.f32 %v3246, %v3623
      %v4047 = vmul.f32 %v3247, %v3627
      %v4048 = vmul.f32 %v3248, %v3631
      %v4049 = vmul.f32 %v3249, %v3635
      %v4050 = vmul.f32 %v3250, %v3615
      %v4051 = vmul.f32 %v3251, %v3619
      %v4052 = vmul.f32 %v3252, %v3623
      %v4053 = vmul.f32 %v3253, %v3627
      %v4054 = vmul.f32 %v3254, %v3631
      %v4055 = vmul.f32 %v3255, %v3635
      %v4056 = vmul.f32 %v3256, %v3615
      %v4057 = vmul.f32 %v3257, %v3619
      %v4058 = vmul.f32 %v3258, %v3623
      %v4059 = vmul.f32 %v3259, %v3627
      %v4060 = vmul.f32 %v3260, %v3631
      %v4061 = vmul.f32 %v3261, %v3635
      %v4062 = vmul.f32 %v3262, %v3615
      %v4063 = vmul.f32 %v3263, %v3619
      %v4064 = vmul.f32 %v3264, %v3623
      %v4065 = vmul.f32 %v3265, %v3627
      %v4066 = vmul.f32 %v3266, %v3631
      %v4067 = vmul.f32 %v3267, %v3635
      %v4068 = vmul.f32 %v3268, %v3615
      %v4069 = vmul.f32 %v3269, %v3619
      %v4070 = vmul.f32 %v3270, %v3623
      %v4071 = vmul.f32 %v3271, %v3627
      %v4072 = vmul.f32 %v3272, %v3631
      %v4073 = vmul.f32 %v3273, %v3635
      %v4074 = vmul.f32 %v3274, %v3615
      %v4075 = vmul.f32 %v3275, %v3619
      %v4076 = vmul.f32 %v3276, %v3623
      %v4077 = vmul.f32 %v3277, %v3627
      %v4078 = vmul.f32 %v3278, %v3631
      %v4079 = vmul.f32 %v3279, %v3635
      %v4080 = vmul.f32 %v3280, %v3615
      %v4081 = vmul.f32 %v3281, %v3619
      %v4082 = vmul.f32 %v3282, %v3623
      %v4083 = vmul.f32 %v3283, %v3627
      %v4084 = vmul.f32 %v3284, %v3631
      %v4085 = vmul.f32 %v3285, %v3635
      %v4086 = vmul.f32 %v3286, %v3615
      %v4087 = vmul.f32 %v3287, %v3619
      %v4088 = vmul.f32 %v3288, %v3623
      %v4089 = vmul.f32 %v3289, %v3627
      %v4090 = vmul.f32 %v3290, %v3631
      %v4091 = vmul.f32 %v3291, %v3635
      %v4092 = vmul.f32 %v3292, %v3615
      %v4093 = vmul.f32 %v3293, %v3619
      %v4094 = vmul.f32 %v3294, %v3623
      %v4095 = vmul.f32 %v3295, %v3627
      %v4096 = vmul.f32 %v3296, %v3631
      %v4097 = vmul.f32 %v3297, %v3635
      %v4098 = vmul.f32 %v3298, %v3615
      %v4099 = vmul.f32 %v3299, %v3619
      %v4100 = vmul.f32 %v3300, %v3623
      %v4101 = vmul.f32 %v3301, %v3627
      %v4102 = vmul.f32 %v3302, %v3631
      %v4103 = vmul.f32 %v3303, %v3635
      %v4104 = vmul.f32 %v3304, %v3615
      %v4105 = vmul.f32 %v3305, %v3619
      %v4106 = vmul.f32 %v3306, %v3623
      %v4107 = vmul.f32 %v3307, %v3627
      %v4108 = vmul.f32 %v3308, %v3631
      %v4109 = vmul.f32 %v3309, %v3635
      %v4110 = vmul.f32 %v3310, %v3615
      %v4111 = vmul.f32 %v3311, %v3619
      %v4112 = vmul.f32 %v3312, %v3623
      %v4113 = vmul.f32 %v3313, %v3627
      %v4114 = vmul.f32 %v3314, %v3631
      %v4115 = vmul.f32 %v3315, %v3635
      %v4116 = vmul.f32 %v3316, %v3615
      %v4117 = vmul.f32 %v3317, %v3619
      %v4118 = vmul.f32 %v3318, %v3623
      %v4119 = vmul.f32 %v3319, %v3627
      %v4120 = vmul.f32 %v3320, %v3631
      %v4121 = vmul.f32 %v3321, %v3635
      %v4122 = vmul.f32 %v3322, %v3615
      %v4123 = vmul.f32 %v3323, %v3619
      %v4124 = vmul.f32 %v3324, %v3623
      %v4125 = vmul.f32 %v3325, %v3627
      %v4126 = vmul.f32 %v3326, %v3631
      %v4127 = vmul.f32 %v3327, %v3635
      %v4128 = vmul.f32 %v3328, %v3615
      %v4129 = vmul.f32 %v3329, %v3619
      %v4130 = vmul.f32 %v3330, %v3623
      %v4131 = vmul.f32 %v3331, %v3627
      %v4132 = vmul.f32 %v3332, %v3631
      %v4133 = vmul.f32 %v3333, %v3635
      %v4134 = vmul.f32 %v3334, %v3615
      %v4135 = vmul.f32 %v3335, %v3619
      %v4136 = vmul.f32 %v3336, %v3623
      %v4137 = vmul.f32 %v3337, %v3627
      %v4138 = vmul.f32 %v3338, %v3631
      %v4139 = vmul.f32 %v3339, %v3635
      %v4140 = vmul.f32 %v3340, %v3615
      %v4141 = vmul.f32 %v3341, %v3619
      %v4142 = vmul.f32 %v3342, %v3623
      %v4143 = vmul.f32 %v3343, %v3627
      %v4144 = vmul.f32 %v3344, %v3631
      %v4145 = vmul.f32 %v3345, %v3635
      %v4146 = vmul.f32 %v3346, %v3615
      %v4147 = vmul.f32 %v3347, %v3619
      %v4148 = vmul.f32 %v3348, %v3623
      %v4149 = vmul.f32 %v3349, %v3627
      %v4150 = vmul.f32 %v3350, %v3631
      %v4151 = vmul.f32 %v3351, %v3635
      %v4152 = vmul.f32 %v3352, %v3615
      %v4153 = vmul.f32 %v3353, %v3619
      %v4154 = vmul.f32 %v3354, %v3623
      %v4155 = vmul.f32 %v3355, %v3627
      %v4156 = vmul.f32 %v3356, %v3631
      %v4157 = vmul.f32 %v3357, %v3635
      %v4158 = vmul.f32 %v3358, %v3615
      %v4159 = vmul.f32 %v3359, %v3619
      %v4160 = vmul.f32 %v3360, %v3623
      %v4161 = vmul.f32 %v3361, %v3627
      %v4162 = vmul.f32 %v3362, %v3631
      %v4163 = vmul.f32 %v3363, %v3635
      %v4164 = vmul.f32 %v3364, %v3615
      %v4165 = vmul.f32 %v3365, %v3619
      %v4166 = vmul.f32 %v3366, %v3623
      %v4167 = vmul.f32 %v3367, %v3627
      %v4168 = vmul.f32 %v3368, %v3631
      %v4169 = vmul.f32 %v3369, %v3635
      %v4170 = vmul.f32 %v3370, %v3615
      %v4171 = vmul.f32 %v3371, %v3619
      %v4172 = vmul.f32 %v3372, %v3623
      %v4173 = vmul.f32 %v3373, %v3627
      %v4174 = vmul.f32 %v3374, %v3631
      %v4175 = vmul.f32 %v3375, %v3635
      %v4176 = vmul.f32 %v3376, %v3615
      %v4177 = vmul.f32 %v3377, %v3619
      %v4178 = vmul.f32 %v3378, %v3623
      %v4179 = vmul.f32 %v3379, %v3627
      %v4180 = vmul.f32 %v3380, %v3631
      %v4181 = vmul.f32 %v3381, %v3635
      %v4182 = vmul.f32 %v3382, %v3615
      %v4183 = vmul.f32 %v3383, %v3619
      %v4184 = vmul.f32 %v3384, %v3623
      %v4185 = vmul.f32 %v3385, %v3627
      %v4186 = vmul.f32 %v3386, %v3631
      %v4187 = vmul.f32 %v3387, %v3635
      %v4188 = vmul.f32 %v3388, %v3615
      %v4189 = vmul.f32 %v3389, %v3619
      %v4190 = vmul.f32 %v3390, %v3623
      %v4191 = vmul.f32 %v3391, %v3627
      %v4192 = vmul.f32 %v3392, %v3631
      %v4193 = vmul.f32 %v3393, %v3635
      %v4194 = vmul.f32 %v3394, %v3615
      %v4195 = vmul.f32 %v3395, %v3619
      %v4196 = vmul.f32 %v3396, %v3623
      %v4197 = vmul.f32 %v3397, %v3627
      %v4198 = vmul.f32 %v3398, %v3631
      %v4199 = vmul.f32 %v3399, %v3635
      %v4200 = vmul.f32 %v3400, %v3615
      %v4201 = vmul.f32 %v3401, %v3619
      %v4202 = vmul.f32 %v3402, %v3623
      %v4203 = vmul.f32 %v3403, %v3627
      %v4204 = vmul.f32 %v3404, %v3631
      %v4205 = vmul.f32 %v3405, %v3635
      %v4206 = vmul.f32 %v3406, %v3615
      %v4207 = vmul.f32 %v3407, %v3619
      %v4208 = vmul.f32 %v3408, %v3623
      %v4209 = vmul.f32 %v3409, %v3627
      %v4210 = vmul.f32 %v3410, %v3631
      %v4211 = vmul.f32 %v3411, %v3635
      %v4212 = vmul.f32 %v3412, %v3615
      %v4213 = vmul.f32 %v3413, %v3619
      %v4214 = vmul.f32 %v3414, %v3623
      %v4215 = vmul.f32 %v3415, %v3627
      %v4216 = vmul.f32 %v3416, %v3631
      %v4217 = vmul.f32 %v3417, %v3635
      %v4218 = vmul.f32 %v3418, %v3615
      %v4219 = vmul.f32 %v3419, %v3619
      %v4220 = vmul.f32 %v3420, %v3623
      %v4221 = vmul.f32 %v3421, %v3627
      %v4222 = vmul.f32 %v3422, %v3631
      %v4223 = vmul.f32 %v3423, %v3635
      %v4224 = vmul.f32 %v3424, %v3615
      %v4225 = vmul.f32 %v3425, %v3619
      %v4226 = vmul.f32 %v3426, %v3623
      %v4227 = vmul.f32 %v3427, %v3627
      %v4228 = vmul.f32 %v3428, %v3631
      %v4229 = vmul.f32 %v3429, %v3635
      %v4230 = vmul.f32 %v3430, %v3615
      %v4231 = vmul.f32 %v3431, %v3619
      %v4232 = vmul.f32 %v3432, %v3623
      %v4233 = vmul.f32 %v3433, %v3627
      %v4234 = vmul.f32 %v3434, %v3631
      %v4235 = vmul.f32 %v3435, %v3635
      %v4236 = vmul.f32 %v3436, %v3615
      %v4237 = vmul.f32 %v3437, %v3619
      %v4238 = vmul.f32 %v3438, %v3623
      %v4239 = vmul.f32 %v3439, %v3627
      %v4240 = vmul.f32 %v3440, %v3631
      %v4241 = vmul.f32 %v3441, %v3635
      %v4242 = vmul.f32 %v3442, %v3615
      %v4243 = vmul.f32 %v3443, %v3619
      %v4244 = vmul.f32 %v3444, %v3623
      %v4245 = vmul.f32 %v3445, %v3627
      %v4246 = vmul.f32 %v3446, %v3631
      %v4247 = vmul.f32 %v3447, %v3635
      %v4248 = vmul.f32 %v3448, %v3615
      %v4249 = vmul.f32 %v3449, %v3619
      %v4250 = vmul.f32 %v3450, %v3623
      %v4251 = vmul.f32 %v3451, %v3627
      %v4252 = vmul.f32 %v3452, %v3631
      %v4253 = vmul.f32 %v3453, %v3635
      %v4254 = vmul.f32 %v3454, %v3615
      %v4255 = vmul.f32 %v3455, %v3619
      %v4256 = vmul.f32 %v3456, %v3623
      %v4257 = vmul.f32 %v3457, %v3627
      %v4258 = vmul.f32 %v3458, %v3631
      %v4259 = vmul.f32 %v3459, %v3635
      %v4260 = vmul.f32 %v3460, %v3615
      %v4261 = vmul.f32 %v3461, %v3619
      %v4262 = vmul.f32 %v3462, %v3623
      %v4263 = vmul.f32 %v3463, %v3627
      %v4264 = vmul.f32 %v3464, %v3631
      %v4265 = vmul.f32 %v3465, %v3635
      %v4266 = vmul.f32 %v3466, %v3615
      %v4267 = vmul.f32 %v3467, %v3619
      %v4268 = vmul.f32 %v3468, %v3623
      %v4269 = vmul.f32 %v3469, %v3627
      %v4270 = vmul.f32 %v3470, %v3631
      %v4271 = vmul.f32 %v3471, %v3635
      %v4272 = vmul.f32 %v3472, %v3615
      %v4273 = vmul.f32 %v3473, %v3619
      %v4274 = vmul.f32 %v3474, %v3623
      %v4275 = vmul.f32 %v3475, %v3627
      %v4276 = vmul.f32 %v3476, %v3631
      %v4277 = vmul.f32 %v3477, %v3635
      %v4278 = vmul.f32 %v3478, %v3615
      %v4279 = vmul.f32 %v3479, %v3619
      %v4280 = vmul.f32 %v3480, %v3623
      %v4281 = vmul.f32 %v3481, %v3627
      %v4282 = vmul.f32 %v3482, %v3631
      %v4283 = vmul.f32 %v3483, %v3635
      %v4284 = vmul.f32 %v3484, %v3615
      %v4285 = vmul.f32 %v3485, %v3619
      %v4286 = vmul.f32 %v3486, %v3623
      %v4287 = vmul.f32 %v3487, %v3627
      %v4288 = vmul.f32 %v3488, %v3631
      %v4289 = vmul.f32 %v3489, %v3635
      %v4290 = vmul.f32 %v3490, %v3615
      %v4291 = vmul.f32 %v3491, %v3619
      %v4292 = vmul.f32 %v3492, %v3623
      %v4293 = vmul.f32 %v3493, %v3627
      %v4294 = vmul.f32 %v3494, %v3631
      %v4295 = vmul.f32 %v3495, %v3635
      %v4296 = vmul.f32 %v3496, %v3615
      %v4297 = vmul.f32 %v3497, %v3619
      %v4298 = vmul.f32 %v3498, %v3623
      %v4299 = vmul.f32 %v3499, %v3627
      %v4300 = vmul.f32 %v3500, %v3631
      %v4301 = vmul.f32 %v3501, %v3635
      %v4302 = vmul.f32 %v3502, %v3615
      %v4303 = vmul.f32 %v3503, %v3619
      %v4304 = vmul.f32 %v3504, %v3623
      %v4305 = vmul.f32 %v3505, %v3627
      %v4306 = vmul.f32 %v3506, %v3631
      %v4307 = vmul.f32 %v3507, %v3635
      %v4308 = vmul.f32 %v3508, %v3615
      %v4309 = vmul.f32 %v3509, %v3619
      %v4310 = vmul.f32 %v3510, %v3623
      %v4311 = vmul.f32 %v3511, %v3627
      %v4312 = vmul.f32 %v3512, %v3631
      %v4313 = vmul.f32 %v3513, %v3635
      %v4314 = vmul.f32 %v3514, %v3615
      %v4315 = vmul.f32 %v3515, %v3619
      %v4316 = vmul.f32 %v3516, %v3623
      %v4317 = vmul.f32 %v3517, %v3627
      %v4318 = vmul.f32 %v3518, %v3631
      %v4319 = vmul.f32 %v3519, %v3635
      %v4320 = vmul.f32 %v3520, %v3615
      %v4321 = vmul.f32 %v3521, %v3619
      %v4322 = vmul.f32 %v3522, %v3623
      %v4323 = vmul.f32 %v3523, %v3627
      %v4324 = vmul.f32 %v3524, %v3631
      %v4325 = vmul.f32 %v3525, %v3635
      %v4326 = vmul.f32 %v3526, %v3615
      %v4327 = vmul.f32 %v3527, %v3619
      %v4328 = vmul.f32 %v3528, %v3623
      %v4329 = vmul.f32 %v3529, %v3627
      %v4330 = vmul.f32 %v3530, %v3631
      %v4331 = vmul.f32 %v3531, %v3635
      %v4332 = vmul.f32 %v3532, %v3615
      %v4333 = vmul.f32 %v3533, %v3619
      %v4334 = vmul.f32 %v3534, %v3623
      %v4335 = vmul.f32 %v3535, %v3627
      %v4336 = vmul.f32 %v3536, %v3631
      %v4337 = vmul.f32 %v3537, %v3635
      %v4338 = vmul.f32 %v3538, %v3615
      %v4339 = vmul.f32 %v3539, %v3619
      %v4340 = vmul.f32 %v3540, %v3623
      %v4341 = vmul.f32 %v3541, %v3627
      %v4342 = vmul.f32 %v3542, %v3631
      %v4343 = vmul.f32 %v3543, %v3635
      %v4344 = vmul.f32 %v3544, %v3615
      %v4345 = vmul.f32 %v3545, %v3619
      %v4346 = vmul.f32 %v3546, %v3623
      %v4347 = vmul.f32 %v3547, %v3627
      %v4348 = vmul.f32 %v3548, %v3631
      %v4349 = vmul.f32 %v3549, %v3635
      %v4350 = vmul.f32 %v3550, %v3615
      %v4351 = vmul.f32 %v3551, %v3619
      %v4352 = vmul.f32 %v3552, %v3623
      %v4353 = vmul.f32 %v3553, %v3627
      %v4354 = vmul.f32 %v3554, %v3631
      %v4355 = vmul.f32 %v3555, %v3635
      %v4356 = vmul.f32 %v3556, %v3615
      %v4357 = vmul.f32 %v3557, %v3619
      %v4358 = vmul.f32 %v3558, %v3623
      %v4359 = vmul.f32 %v3559, %v3627
      %v4360 = vmul.f32 %v3560, %v3631
      %v4361 = vmul.f32 %v3561, %v3635
      %v4362 = vmul.f32 %v3562, %v3615
      %v4363 = vmul.f32 %v3563, %v3619
      %v4364 = vmul.f32 %v3564, %v3623
      %v4365 = vmul.f32 %v3565, %v3627
      %v4366 = vmul.f32 %v3566, %v3631
      %v4367 = vmul.f32 %v3567, %v3635
      %v4368 = vmul.f32 %v3568, %v3615
      %v4369 = vmul.f32 %v3569, %v3619
      %v4370 = vmul.f32 %v3570, %v3623
      %v4371 = vmul.f32 %v3571, %v3627
      %v4372 = vmul.f32 %v3572, %v3631
      %v4373 = vmul.f32 %v3573, %v3635
      %v4374 = vmul.f32 %v3574, %v3615
      %v4375 = vmul.f32 %v3575, %v3619
      %v4376 = vmul.f32 %v3576, %v3623
      %v4377 = vmul.f32 %v3577, %v3627
      %v4378 = vmul.f32 %v3578, %v3631
      %v4379 = vmul.f32 %v3579, %v3635
      %v4380 = vmul.f32 %v3580, %v3615
      %v4381 = vmul.f32 %v3581, %v3619
      %v4382 = vmul.f32 %v3582, %v3623
      %v4383 = vmul.f32 %v3583, %v3627
      %v4384 = vmul.f32 %v3584, %v3631
      %v4385 = vmul.f32 %v3585, %v3635
      %v4386 = vmul.f32 %v3586, %v3615
      %v4387 = vmul.f32 %v3587, %v3619
      %v4388 = vmul.f32 %v3588, %v3623
      %v4389 = vmul.f32 %v3589, %v3627
      %v4390 = vmul.f32 %v3590, %v3631
      %v4391 = vmul.f32 %v3591, %v3635
      %v4392 = vmul.f32 %v3592, %v3615
      %v4393 = vmul.f32 %v3593, %v3619
      %v4394 = vmul.f32 %v3594, %v3623
      %v4395 = vmul.f32 %v3595, %v3627
      %v4396 = vmul.f32 %v3596, %v3631
      %v4397 = vmul.f32 %v3597, %v3635
      %v4398 = vmul.f32 %v3598, %v3615
      %v4399 = vmul.f32 %v3599, %v3619
      %v4400 = vmul.f32 %v3600, %v3623
      %v4401 = vmul.f32 %v3601, %v3627
      %v4402 = vmul.f32 %v3602, %v3631
      %v4403 = vmul.f32 %v3603, %v3635
      %v4404 = vmul.f32 %v3604, %v3615
      %v4405 = vmul.f32 %v3605, %v3619
      %v4406 = vmul.f32 %v3606, %v3623
      %v4407 = vmul.f32 %v3607, %v3627
      %v4408 = vmul.f32 %v3608, %v3631
      %v4409 = vmul.f32 %v3609, %v3635
      %v4410 = vpack.c.bf16 %v3648, %v3642
      %v4411 = vpack.c.bf16 %v3649, %v3643
      %v4412 = vpack.c.bf16 %v3650, %v3644
      %v4413 = vpack.c.bf16 %v3651, %v3645
      %v4414 = vpack.c.bf16 %v3652, %v3646
      %v4415 = vpack.c.bf16 %v3653, %v3647
      %v4416 = vpack.c.bf16 %v3660, %v3654
      %v4417 = vpack.c.bf16 %v3661, %v3655
      %v4418 = vpack.c.bf16 %v3662, %v3656
      %v4419 = vpack.c.bf16 %v3663, %v3657
      %v4420 = vpack.c.bf16 %v3664, %v3658
      %v4421 = vpack.c.bf16 %v3665, %v3659
      %v4422 = vpack.c.bf16 %v3672, %v3666
      %v4423 = vpack.c.bf16 %v3673, %v3667
      %v4424 = vpack.c.bf16 %v3674, %v3668
      %v4425 = vpack.c.bf16 %v3675, %v3669
      %v4426 = vpack.c.bf16 %v3676, %v3670
      %v4427 = vpack.c.bf16 %v3677, %v3671
      %v4428 = vpack.c.bf16 %v3684, %v3678
      %v4429 = vpack.c.bf16 %v3685, %v3679
      %v4430 = vpack.c.bf16 %v3686, %v3680
      %v4431 = vpack.c.bf16 %v3687, %v3681
      %v4432 = vpack.c.bf16 %v3688, %v3682
      %v4433 = vpack.c.bf16 %v3689, %v3683
      %v4434 = vpack.c.bf16 %v3696, %v3690
      %v4435 = vpack.c.bf16 %v3697, %v3691
      %v4436 = vpack.c.bf16 %v3698, %v3692
      %v4437 = vpack.c.bf16 %v3699, %v3693
      %v4438 = vpack.c.bf16 %v3700, %v3694
      %v4439 = vpack.c.bf16 %v3701, %v3695
      %v4440 = vpack.c.bf16 %v3708, %v3702
      %v4441 = vpack.c.bf16 %v3709, %v3703
      %v4442 = vpack.c.bf16 %v3710, %v3704
      %v4443 = vpack.c.bf16 %v3711, %v3705
      %v4444 = vpack.c.bf16 %v3712, %v3706
      %v4445 = vpack.c.bf16 %v3713, %v3707
      %v4446 = vpack.c.bf16 %v3720, %v3714
      %v4447 = vpack.c.bf16 %v3721, %v3715
      %v4448 = vpack.c.bf16 %v3722, %v3716
      %v4449 = vpack.c.bf16 %v3723, %v3717
      %v4450 = vpack.c.bf16 %v3724, %v3718
      %v4451 = vpack.c.bf16 %v3725, %v3719
      %v4452 = vpack.c.bf16 %v3732, %v3726
      %v4453 = vpack.c.bf16 %v3733, %v3727
      %v4454 = vpack.c.bf16 %v3734, %v3728
      %v4455 = vpack.c.bf16 %v3735, %v3729
      %v4456 = vpack.c.bf16 %v3736, %v3730
      %v4457 = vpack.c.bf16 %v3737, %v3731
      %v4458 = vpack.c.bf16 %v3744, %v3738
      %v4459 = vpack.c.bf16 %v3745, %v3739
      %v4460 = vpack.c.bf16 %v3746, %v3740
      %v4461 = vpack.c.bf16 %v3747, %v3741
      %v4462 = vpack.c.bf16 %v3748, %v3742
      %v4463 = vpack.c.bf16 %v3749, %v3743
      %v4464 = vpack.c.bf16 %v3756, %v3750
      %v4465 = vpack.c.bf16 %v3757, %v3751
      %v4466 = vpack.c.bf16 %v3758, %v3752
      %v4467 = vpack.c.bf16 %v3759, %v3753
      %v4468 = vpack.c.bf16 %v3760, %v3754
      %v4469 = vpack.c.bf16 %v3761, %v3755
      %v4470 = vpack.c.bf16 %v3768, %v3762
      %v4471 = vpack.c.bf16 %v3769, %v3763
      %v4472 = vpack.c.bf16 %v3770, %v3764
      %v4473 = vpack.c.bf16 %v3771, %v3765
      %v4474 = vpack.c.bf16 %v3772, %v3766
      %v4475 = vpack.c.bf16 %v3773, %v3767
      %v4476 = vpack.c.bf16 %v3780, %v3774
      %v4477 = vpack.c.bf16 %v3781, %v3775
      %v4478 = vpack.c.bf16 %v3782, %v3776
      %v4479 = vpack.c.bf16 %v3783, %v3777
      %v4480 = vpack.c.bf16 %v3784, %v3778
      %v4481 = vpack.c.bf16 %v3785, %v3779
      %v4482 = vpack.c.bf16 %v3792, %v3786
      %v4483 = vpack.c.bf16 %v3793, %v3787
      %v4484 = vpack.c.bf16 %v3794, %v3788
      %v4485 = vpack.c.bf16 %v3795, %v3789
      %v4486 = vpack.c.bf16 %v3796, %v3790
      %v4487 = vpack.c.bf16 %v3797, %v3791
      %v4488 = vpack.c.bf16 %v3804, %v3798
      %v4489 = vpack.c.bf16 %v3805, %v3799
      %v4490 = vpack.c.bf16 %v3806, %v3800
      %v4491 = vpack.c.bf16 %v3807, %v3801
      %v4492 = vpack.c.bf16 %v3808, %v3802
      %v4493 = vpack.c.bf16 %v3809, %v3803
      %v4494 = vpack.c.bf16 %v3816, %v3810
      %v4495 = vpack.c.bf16 %v3817, %v3811
      %v4496 = vpack.c.bf16 %v3818, %v3812
      %v4497 = vpack.c.bf16 %v3819, %v3813
      %v4498 = vpack.c.bf16 %v3820, %v3814
      %v4499 = vpack.c.bf16 %v3821, %v3815
      %v4500 = vpack.c.bf16 %v3828, %v3822
      %v4501 = vpack.c.bf16 %v3829, %v3823
      %v4502 = vpack.c.bf16 %v3830, %v3824
      %v4503 = vpack.c.bf16 %v3831, %v3825
      %v4504 = vpack.c.bf16 %v3832, %v3826
      %v4505 = vpack.c.bf16 %v3833, %v3827
      %v4506 = vpack.c.bf16 %v3840, %v3834
      %v4507 = vpack.c.bf16 %v3841, %v3835
      %v4508 = vpack.c.bf16 %v3842, %v3836
      %v4509 = vpack.c.bf16 %v3843, %v3837
      %v4510 = vpack.c.bf16 %v3844, %v3838
      %v4511 = vpack.c.bf16 %v3845, %v3839
      %v4512 = vpack.c.bf16 %v3852, %v3846
      %v4513 = vpack.c.bf16 %v3853, %v3847
      %v4514 = vpack.c.bf16 %v3854, %v3848
      %v4515 = vpack.c.bf16 %v3855, %v3849
      %v4516 = vpack.c.bf16 %v3856, %v3850
      %v4517 = vpack.c.bf16 %v3857, %v3851
      %v4518 = vpack.c.bf16 %v3864, %v3858
      %v4519 = vpack.c.bf16 %v3865, %v3859
      %v4520 = vpack.c.bf16 %v3866, %v3860
      %v4521 = vpack.c.bf16 %v3867, %v3861
      %v4522 = vpack.c.bf16 %v3868, %v3862
      %v4523 = vpack.c.bf16 %v3869, %v3863
      %v4524 = vpack.c.bf16 %v3876, %v3870
      %v4525 = vpack.c.bf16 %v3877, %v3871
      %v4526 = vpack.c.bf16 %v3878, %v3872
      %v4527 = vpack.c.bf16 %v3879, %v3873
      %v4528 = vpack.c.bf16 %v3880, %v3874
      %v4529 = vpack.c.bf16 %v3881, %v3875
      %v4530 = vpack.c.bf16 %v3888, %v3882
      %v4531 = vpack.c.bf16 %v3889, %v3883
      %v4532 = vpack.c.bf16 %v3890, %v3884
      %v4533 = vpack.c.bf16 %v3891, %v3885
      %v4534 = vpack.c.bf16 %v3892, %v3886
      %v4535 = vpack.c.bf16 %v3893, %v3887
      %v4536 = vpack.c.bf16 %v3900, %v3894
      %v4537 = vpack.c.bf16 %v3901, %v3895
      %v4538 = vpack.c.bf16 %v3902, %v3896
      %v4539 = vpack.c.bf16 %v3903, %v3897
      %v4540 = vpack.c.bf16 %v3904, %v3898
      %v4541 = vpack.c.bf16 %v3905, %v3899
      %v4542 = vpack.c.bf16 %v3912, %v3906
      %v4543 = vpack.c.bf16 %v3913, %v3907
      %v4544 = vpack.c.bf16 %v3914, %v3908
      %v4545 = vpack.c.bf16 %v3915, %v3909
      %v4546 = vpack.c.bf16 %v3916, %v3910
      %v4547 = vpack.c.bf16 %v3917, %v3911
      %v4548 = vpack.c.bf16 %v3924, %v3918
      %v4549 = vpack.c.bf16 %v3925, %v3919
      %v4550 = vpack.c.bf16 %v3926, %v3920
      %v4551 = vpack.c.bf16 %v3927, %v3921
      %v4552 = vpack.c.bf16 %v3928, %v3922
      %v4553 = vpack.c.bf16 %v3929, %v3923
      %v4554 = vpack.c.bf16 %v3936, %v3930
      %v4555 = vpack.c.bf16 %v3937, %v3931
      %v4556 = vpack.c.bf16 %v3938, %v3932
      %v4557 = vpack.c.bf16 %v3939, %v3933
      %v4558 = vpack.c.bf16 %v3940, %v3934
      %v4559 = vpack.c.bf16 %v3941, %v3935
      %v4560 = vpack.c.bf16 %v3948, %v3942
      %v4561 = vpack.c.bf16 %v3949, %v3943
      %v4562 = vpack.c.bf16 %v3950, %v3944
      %v4563 = vpack.c.bf16 %v3951, %v3945
      %v4564 = vpack.c.bf16 %v3952, %v3946
      %v4565 = vpack.c.bf16 %v3953, %v3947
      %v4566 = vpack.c.bf16 %v3960, %v3954
      %v4567 = vpack.c.bf16 %v3961, %v3955
      %v4568 = vpack.c.bf16 %v3962, %v3956
      %v4569 = vpack.c.bf16 %v3963, %v3957
      %v4570 = vpack.c.bf16 %v3964, %v3958
      %v4571 = vpack.c.bf16 %v3965, %v3959
      %v4572 = vpack.c.bf16 %v3972, %v3966
      %v4573 = vpack.c.bf16 %v3973, %v3967
      %v4574 = vpack.c.bf16 %v3974, %v3968
      %v4575 = vpack.c.bf16 %v3975, %v3969
      %v4576 = vpack.c.bf16 %v3976, %v3970
      %v4577 = vpack.c.bf16 %v3977, %v3971
      %v4578 = vpack.c.bf16 %v3984, %v3978
      %v4579 = vpack.c.bf16 %v3985, %v3979
      %v4580 = vpack.c.bf16 %v3986, %v3980
      %v4581 = vpack.c.bf16 %v3987, %v3981
      %v4582 = vpack.c.bf16 %v3988, %v3982
      %v4583 = vpack.c.bf16 %v3989, %v3983
      %v4584 = vpack.c.bf16 %v3996, %v3990
      %v4585 = vpack.c.bf16 %v3997, %v3991
      %v4586 = vpack.c.bf16 %v3998, %v3992
      %v4587 = vpack.c.bf16 %v3999, %v3993
      %v4588 = vpack.c.bf16 %v4000, %v3994
      %v4589 = vpack.c.bf16 %v4001, %v3995
      %v4590 = vpack.c.bf16 %v4008, %v4002
      %v4591 = vpack.c.bf16 %v4009, %v4003
      %v4592 = vpack.c.bf16 %v4010, %v4004
      %v4593 = vpack.c.bf16 %v4011, %v4005
      %v4594 = vpack.c.bf16 %v4012, %v4006
      %v4595 = vpack.c.bf16 %v4013, %v4007
      %v4596 = vpack.c.bf16 %v4020, %v4014
      %v4597 = vpack.c.bf16 %v4021, %v4015
      %v4598 = vpack.c.bf16 %v4022, %v4016
      %v4599 = vpack.c.bf16 %v4023, %v4017
      %v4600 = vpack.c.bf16 %v4024, %v4018
      %v4601 = vpack.c.bf16 %v4025, %v4019
      %v4602 = vpack.c.bf16 %v4032, %v4026
      %v4603 = vpack.c.bf16 %v4033, %v4027
      %v4604 = vpack.c.bf16 %v4034, %v4028
      %v4605 = vpack.c.bf16 %v4035, %v4029
      %v4606 = vpack.c.bf16 %v4036, %v4030
      %v4607 = vpack.c.bf16 %v4037, %v4031
      %v4608 = vpack.c.bf16 %v4044, %v4038
      %v4609 = vpack.c.bf16 %v4045, %v4039
      %v4610 = vpack.c.bf16 %v4046, %v4040
      %v4611 = vpack.c.bf16 %v4047, %v4041
      %v4612 = vpack.c.bf16 %v4048, %v4042
      %v4613 = vpack.c.bf16 %v4049, %v4043
      %v4614 = vpack.c.bf16 %v4056, %v4050
      %v4615 = vpack.c.bf16 %v4057, %v4051
      %v4616 = vpack.c.bf16 %v4058, %v4052
      %v4617 = vpack.c.bf16 %v4059, %v4053
      %v4618 = vpack.c.bf16 %v4060, %v4054
      %v4619 = vpack.c.bf16 %v4061, %v4055
      %v4620 = vpack.c.bf16 %v4068, %v4062
      %v4621 = vpack.c.bf16 %v4069, %v4063
      %v4622 = vpack.c.bf16 %v4070, %v4064
      %v4623 = vpack.c.bf16 %v4071, %v4065
      %v4624 = vpack.c.bf16 %v4072, %v4066
      %v4625 = vpack.c.bf16 %v4073, %v4067
      %v4626 = vpack.c.bf16 %v4080, %v4074
      %v4627 = vpack.c.bf16 %v4081, %v4075
      %v4628 = vpack.c.bf16 %v4082, %v4076
      %v4629 = vpack.c.bf16 %v4083, %v4077
      %v4630 = vpack.c.bf16 %v4084, %v4078
      %v4631 = vpack.c.bf16 %v4085, %v4079
      %v4632 = vpack.c.bf16 %v4092, %v4086
      %v4633 = vpack.c.bf16 %v4093, %v4087
      %v4634 = vpack.c.bf16 %v4094, %v4088
      %v4635 = vpack.c.bf16 %v4095, %v4089
      %v4636 = vpack.c.bf16 %v4096, %v4090
      %v4637 = vpack.c.bf16 %v4097, %v4091
      %v4638 = vpack.c.bf16 %v4104, %v4098
      %v4639 = vpack.c.bf16 %v4105, %v4099
      %v4640 = vpack.c.bf16 %v4106, %v4100
      %v4641 = vpack.c.bf16 %v4107, %v4101
      %v4642 = vpack.c.bf16 %v4108, %v4102
      %v4643 = vpack.c.bf16 %v4109, %v4103
      %v4644 = vpack.c.bf16 %v4116, %v4110
      %v4645 = vpack.c.bf16 %v4117, %v4111
      %v4646 = vpack.c.bf16 %v4118, %v4112
      %v4647 = vpack.c.bf16 %v4119, %v4113
      %v4648 = vpack.c.bf16 %v4120, %v4114
      %v4649 = vpack.c.bf16 %v4121, %v4115
      %v4650 = vpack.c.bf16 %v4128, %v4122
      %v4651 = vpack.c.bf16 %v4129, %v4123
      %v4652 = vpack.c.bf16 %v4130, %v4124
      %v4653 = vpack.c.bf16 %v4131, %v4125
      %v4654 = vpack.c.bf16 %v4132, %v4126
      %v4655 = vpack.c.bf16 %v4133, %v4127
      %v4656 = vpack.c.bf16 %v4140, %v4134
      %v4657 = vpack.c.bf16 %v4141, %v4135
      %v4658 = vpack.c.bf16 %v4142, %v4136
      %v4659 = vpack.c.bf16 %v4143, %v4137
      %v4660 = vpack.c.bf16 %v4144, %v4138
      %v4661 = vpack.c.bf16 %v4145, %v4139
      %v4662 = vpack.c.bf16 %v4152, %v4146
      %v4663 = vpack.c.bf16 %v4153, %v4147
      %v4664 = vpack.c.bf16 %v4154, %v4148
      %v4665 = vpack.c.bf16 %v4155, %v4149
      %v4666 = vpack.c.bf16 %v4156, %v4150
      %v4667 = vpack.c.bf16 %v4157, %v4151
      %v4668 = vpack.c.bf16 %v4164, %v4158
      %v4669 = vpack.c.bf16 %v4165, %v4159
      %v4670 = vpack.c.bf16 %v4166, %v4160
      %v4671 = vpack.c.bf16 %v4167, %v4161
      %v4672 = vpack.c.bf16 %v4168, %v4162
      %v4673 = vpack.c.bf16 %v4169, %v4163
      %v4674 = vpack.c.bf16 %v4176, %v4170
      %v4675 = vpack.c.bf16 %v4177, %v4171
      %v4676 = vpack.c.bf16 %v4178, %v4172
      %v4677 = vpack.c.bf16 %v4179, %v4173
      %v4678 = vpack.c.bf16 %v4180, %v4174
      %v4679 = vpack.c.bf16 %v4181, %v4175
      %v4680 = vpack.c.bf16 %v4188, %v4182
      %v4681 = vpack.c.bf16 %v4189, %v4183
      %v4682 = vpack.c.bf16 %v4190, %v4184
      %v4683 = vpack.c.bf16 %v4191, %v4185
      %v4684 = vpack.c.bf16 %v4192, %v4186
      %v4685 = vpack.c.bf16 %v4193, %v4187
      %v4686 = vpack.c.bf16 %v4200, %v4194
      %v4687 = vpack.c.bf16 %v4201, %v4195
      %v4688 = vpack.c.bf16 %v4202, %v4196
      %v4689 = vpack.c.bf16 %v4203, %v4197
      %v4690 = vpack.c.bf16 %v4204, %v4198
      %v4691 = vpack.c.bf16 %v4205, %v4199
      %v4692 = vpack.c.bf16 %v4212, %v4206
      %v4693 = vpack.c.bf16 %v4213, %v4207
      %v4694 = vpack.c.bf16 %v4214, %v4208
      %v4695 = vpack.c.bf16 %v4215, %v4209
      %v4696 = vpack.c.bf16 %v4216, %v4210
      %v4697 = vpack.c.bf16 %v4217, %v4211
      %v4698 = vpack.c.bf16 %v4224, %v4218
      %v4699 = vpack.c.bf16 %v4225, %v4219
      %v4700 = vpack.c.bf16 %v4226, %v4220
      %v4701 = vpack.c.bf16 %v4227, %v4221
      %v4702 = vpack.c.bf16 %v4228, %v4222
      %v4703 = vpack.c.bf16 %v4229, %v4223
      %v4704 = vpack.c.bf16 %v4236, %v4230
      %v4705 = vpack.c.bf16 %v4237, %v4231
      %v4706 = vpack.c.bf16 %v4238, %v4232
      %v4707 = vpack.c.bf16 %v4239, %v4233
      %v4708 = vpack.c.bf16 %v4240, %v4234
      %v4709 = vpack.c.bf16 %v4241, %v4235
      %v4710 = vpack.c.bf16 %v4248, %v4242
      %v4711 = vpack.c.bf16 %v4249, %v4243
      %v4712 = vpack.c.bf16 %v4250, %v4244
      %v4713 = vpack.c.bf16 %v4251, %v4245
      %v4714 = vpack.c.bf16 %v4252, %v4246
      %v4715 = vpack.c.bf16 %v4253, %v4247
      %v4716 = vpack.c.bf16 %v4260, %v4254
      %v4717 = vpack.c.bf16 %v4261, %v4255
      %v4718 = vpack.c.bf16 %v4262, %v4256
      %v4719 = vpack.c.bf16 %v4263, %v4257
      %v4720 = vpack.c.bf16 %v4264, %v4258
      %v4721 = vpack.c.bf16 %v4265, %v4259
      %v4722 = vpack.c.bf16 %v4272, %v4266
      %v4723 = vpack.c.bf16 %v4273, %v4267
      %v4724 = vpack.c.bf16 %v4274, %v4268
      %v4725 = vpack.c.bf16 %v4275, %v4269
      %v4726 = vpack.c.bf16 %v4276, %v4270
      %v4727 = vpack.c.bf16 %v4277, %v4271
      %v4728 = vpack.c.bf16 %v4284, %v4278
      %v4729 = vpack.c.bf16 %v4285, %v4279
      %v4730 = vpack.c.bf16 %v4286, %v4280
      %v4731 = vpack.c.bf16 %v4287, %v4281
      %v4732 = vpack.c.bf16 %v4288, %v4282
      %v4733 = vpack.c.bf16 %v4289, %v4283
      %v4734 = vpack.c.bf16 %v4296, %v4290
      %v4735 = vpack.c.bf16 %v4297, %v4291
      %v4736 = vpack.c.bf16 %v4298, %v4292
      %v4737 = vpack.c.bf16 %v4299, %v4293
      %v4738 = vpack.c.bf16 %v4300, %v4294
      %v4739 = vpack.c.bf16 %v4301, %v4295
      %v4740 = vpack.c.bf16 %v4308, %v4302
      %v4741 = vpack.c.bf16 %v4309, %v4303
      %v4742 = vpack.c.bf16 %v4310, %v4304
      %v4743 = vpack.c.bf16 %v4311, %v4305
      %v4744 = vpack.c.bf16 %v4312, %v4306
      %v4745 = vpack.c.bf16 %v4313, %v4307
      %v4746 = vpack.c.bf16 %v4320, %v4314
      %v4747 = vpack.c.bf16 %v4321, %v4315
      %v4748 = vpack.c.bf16 %v4322, %v4316
      %v4749 = vpack.c.bf16 %v4323, %v4317
      %v4750 = vpack.c.bf16 %v4324, %v4318
      %v4751 = vpack.c.bf16 %v4325, %v4319
      %v4752 = vpack.c.bf16 %v4332, %v4326
      %v4753 = vpack.c.bf16 %v4333, %v4327
      %v4754 = vpack.c.bf16 %v4334, %v4328
      %v4755 = vpack.c.bf16 %v4335, %v4329
      %v4756 = vpack.c.bf16 %v4336, %v4330
      %v4757 = vpack.c.bf16 %v4337, %v4331
      %v4758 = vpack.c.bf16 %v4344, %v4338
      %v4759 = vpack.c.bf16 %v4345, %v4339
      %v4760 = vpack.c.bf16 %v4346, %v4340
      %v4761 = vpack.c.bf16 %v4347, %v4341
      %v4762 = vpack.c.bf16 %v4348, %v4342
      %v4763 = vpack.c.bf16 %v4349, %v4343
      %v4764 = vpack.c.bf16 %v4356, %v4350
      %v4765 = vpack.c.bf16 %v4357, %v4351
      %v4766 = vpack.c.bf16 %v4358, %v4352
      %v4767 = vpack.c.bf16 %v4359, %v4353
      %v4768 = vpack.c.bf16 %v4360, %v4354
      %v4769 = vpack.c.bf16 %v4361, %v4355
      %v4770 = vpack.c.bf16 %v4368, %v4362
      %v4771 = vpack.c.bf16 %v4369, %v4363
      %v4772 = vpack.c.bf16 %v4370, %v4364
      %v4773 = vpack.c.bf16 %v4371, %v4365
      %v4774 = vpack.c.bf16 %v4372, %v4366
      %v4775 = vpack.c.bf16 %v4373, %v4367
      %v4776 = vpack.c.bf16 %v4380, %v4374
      %v4777 = vpack.c.bf16 %v4381, %v4375
      %v4778 = vpack.c.bf16 %v4382, %v4376
      %v4779 = vpack.c.bf16 %v4383, %v4377
      %v4780 = vpack.c.bf16 %v4384, %v4378
      %v4781 = vpack.c.bf16 %v4385, %v4379
      %v4782 = vpack.c.bf16 %v4392, %v4386
      %v4783 = vpack.c.bf16 %v4393, %v4387
      %v4784 = vpack.c.bf16 %v4394, %v4388
      %v4785 = vpack.c.bf16 %v4395, %v4389
      %v4786 = vpack.c.bf16 %v4396, %v4390
      %v4787 = vpack.c.bf16 %v4397, %v4391
      %v4788 = vpack.c.bf16 %v4404, %v4398
      %v4789 = vpack.c.bf16 %v4405, %v4399
      %v4790 = vpack.c.bf16 %v4406, %v4400
      %v4791 = vpack.c.bf16 %v4407, %v4401
      %v4792 = vpack.c.bf16 %v4408, %v4402
      %v4793 = vpack.c.bf16 %v4409, %v4403
      %v5178 = vunpack.c.l.b16 %v4410
      %v5179 = vunpack.c.l.b16 %v4411
      %v5180 = vunpack.c.l.b16 %v4412
      %v5181 = vunpack.c.l.b16 %v4413
      %v5182 = vunpack.c.l.b16 %v4414
      %v5183 = vunpack.c.l.b16 %v4415
      %v5184 = vunpack.c.h.b16 %v4410
      %v5185 = vunpack.c.h.b16 %v4411
      %v5186 = vunpack.c.h.b16 %v4412
      %v5187 = vunpack.c.h.b16 %v4413
      %v5188 = vunpack.c.h.b16 %v4414
      %v5189 = vunpack.c.h.b16 %v4415
      %v5190 = vunpack.c.l.b16 %v4416
      %v5191 = vunpack.c.l.b16 %v4417
      %v5192 = vunpack.c.l.b16 %v4418
      %v5193 = vunpack.c.l.b16 %v4419
      %v5194 = vunpack.c.l.b16 %v4420
      %v5195 = vunpack.c.l.b16 %v4421
      %v5196 = vunpack.c.h.b16 %v4416
      %v5197 = vunpack.c.h.b16 %v4417
      %v5198 = vunpack.c.h.b16 %v4418
      %v5199 = vunpack.c.h.b16 %v4419
      %v5200 = vunpack.c.h.b16 %v4420
      %v5201 = vunpack.c.h.b16 %v4421
      %v5202 = vunpack.c.l.b16 %v4422
      %v5203 = vunpack.c.l.b16 %v4423
      %v5204 = vunpack.c.l.b16 %v4424
      %v5205 = vunpack.c.l.b16 %v4425
      %v5206 = vunpack.c.l.b16 %v4426
      %v5207 = vunpack.c.l.b16 %v4427
      %v5208 = vunpack.c.h.b16 %v4422
      %v5209 = vunpack.c.h.b16 %v4423
      %v5210 = vunpack.c.h.b16 %v4424
      %v5211 = vunpack.c.h.b16 %v4425
      %v5212 = vunpack.c.h.b16 %v4426
      %v5213 = vunpack.c.h.b16 %v4427
      %v5214 = vunpack.c.l.b16 %v4428
      %v5215 = vunpack.c.l.b16 %v4429
      %v5216 = vunpack.c.l.b16 %v4430
      %v5217 = vunpack.c.l.b16 %v4431
      %v5218 = vunpack.c.l.b16 %v4432
      %v5219 = vunpack.c.l.b16 %v4433
      %v5220 = vunpack.c.h.b16 %v4428
      %v5221 = vunpack.c.h.b16 %v4429
      %v5222 = vunpack.c.h.b16 %v4430
      %v5223 = vunpack.c.h.b16 %v4431
      %v5224 = vunpack.c.h.b16 %v4432
      %v5225 = vunpack.c.h.b16 %v4433
      %v5226 = vunpack.c.l.b16 %v4434
      %v5227 = vunpack.c.l.b16 %v4435
      %v5228 = vunpack.c.l.b16 %v4436
      %v5229 = vunpack.c.l.b16 %v4437
      %v5230 = vunpack.c.l.b16 %v4438
      %v5231 = vunpack.c.l.b16 %v4439
      %v5232 = vunpack.c.h.b16 %v4434
      %v5233 = vunpack.c.h.b16 %v4435
      %v5234 = vunpack.c.h.b16 %v4436
      %v5235 = vunpack.c.h.b16 %v4437
      %v5236 = vunpack.c.h.b16 %v4438
      %v5237 = vunpack.c.h.b16 %v4439
      %v5238 = vunpack.c.l.b16 %v4440
      %v5239 = vunpack.c.l.b16 %v4441
      %v5240 = vunpack.c.l.b16 %v4442
      %v5241 = vunpack.c.l.b16 %v4443
      %v5242 = vunpack.c.l.b16 %v4444
      %v5243 = vunpack.c.l.b16 %v4445
      %v5244 = vunpack.c.h.b16 %v4440
      %v5245 = vunpack.c.h.b16 %v4441
      %v5246 = vunpack.c.h.b16 %v4442
      %v5247 = vunpack.c.h.b16 %v4443
      %v5248 = vunpack.c.h.b16 %v4444
      %v5249 = vunpack.c.h.b16 %v4445
      %v5250 = vunpack.c.l.b16 %v4446
      %v5251 = vunpack.c.l.b16 %v4447
      %v5252 = vunpack.c.l.b16 %v4448
      %v5253 = vunpack.c.l.b16 %v4449
      %v5254 = vunpack.c.l.b16 %v4450
      %v5255 = vunpack.c.l.b16 %v4451
      %v5256 = vunpack.c.h.b16 %v4446
      %v5257 = vunpack.c.h.b16 %v4447
      %v5258 = vunpack.c.h.b16 %v4448
      %v5259 = vunpack.c.h.b16 %v4449
      %v5260 = vunpack.c.h.b16 %v4450
      %v5261 = vunpack.c.h.b16 %v4451
      %v5262 = vunpack.c.l.b16 %v4452
      %v5263 = vunpack.c.l.b16 %v4453
      %v5264 = vunpack.c.l.b16 %v4454
      %v5265 = vunpack.c.l.b16 %v4455
      %v5266 = vunpack.c.l.b16 %v4456
      %v5267 = vunpack.c.l.b16 %v4457
      %v5268 = vunpack.c.h.b16 %v4452
      %v5269 = vunpack.c.h.b16 %v4453
      %v5270 = vunpack.c.h.b16 %v4454
      %v5271 = vunpack.c.h.b16 %v4455
      %v5272 = vunpack.c.h.b16 %v4456
      %v5273 = vunpack.c.h.b16 %v4457
      %v5274 = vunpack.c.l.b16 %v4458
      %v5275 = vunpack.c.l.b16 %v4459
      %v5276 = vunpack.c.l.b16 %v4460
      %v5277 = vunpack.c.l.b16 %v4461
      %v5278 = vunpack.c.l.b16 %v4462
      %v5279 = vunpack.c.l.b16 %v4463
      %v5280 = vunpack.c.h.b16 %v4458
      %v5281 = vunpack.c.h.b16 %v4459
      %v5282 = vunpack.c.h.b16 %v4460
      %v5283 = vunpack.c.h.b16 %v4461
      %v5284 = vunpack.c.h.b16 %v4462
      %v5285 = vunpack.c.h.b16 %v4463
      %v5286 = vunpack.c.l.b16 %v4464
      %v5287 = vunpack.c.l.b16 %v4465
      %v5288 = vunpack.c.l.b16 %v4466
      %v5289 = vunpack.c.l.b16 %v4467
      %v5290 = vunpack.c.l.b16 %v4468
      %v5291 = vunpack.c.l.b16 %v4469
      %v5292 = vunpack.c.h.b16 %v4464
      %v5293 = vunpack.c.h.b16 %v4465
      %v5294 = vunpack.c.h.b16 %v4466
      %v5295 = vunpack.c.h.b16 %v4467
      %v5296 = vunpack.c.h.b16 %v4468
      %v5297 = vunpack.c.h.b16 %v4469
      %v5298 = vunpack.c.l.b16 %v4470
      %v5299 = vunpack.c.l.b16 %v4471
      %v5300 = vunpack.c.l.b16 %v4472
      %v5301 = vunpack.c.l.b16 %v4473
      %v5302 = vunpack.c.l.b16 %v4474
      %v5303 = vunpack.c.l.b16 %v4475
      %v5304 = vunpack.c.h.b16 %v4470
      %v5305 = vunpack.c.h.b16 %v4471
      %v5306 = vunpack.c.h.b16 %v4472
      %v5307 = vunpack.c.h.b16 %v4473
      %v5308 = vunpack.c.h.b16 %v4474
      %v5309 = vunpack.c.h.b16 %v4475
      %v5310 = vunpack.c.l.b16 %v4476
      %v5311 = vunpack.c.l.b16 %v4477
      %v5312 = vunpack.c.l.b16 %v4478
      %v5313 = vunpack.c.l.b16 %v4479
      %v5314 = vunpack.c.l.b16 %v4480
      %v5315 = vunpack.c.l.b16 %v4481
      %v5316 = vunpack.c.h.b16 %v4476
      %v5317 = vunpack.c.h.b16 %v4477
      %v5318 = vunpack.c.h.b16 %v4478
      %v5319 = vunpack.c.h.b16 %v4479
      %v5320 = vunpack.c.h.b16 %v4480
      %v5321 = vunpack.c.h.b16 %v4481
      %v5322 = vunpack.c.l.b16 %v4482
      %v5323 = vunpack.c.l.b16 %v4483
      %v5324 = vunpack.c.l.b16 %v4484
      %v5325 = vunpack.c.l.b16 %v4485
      %v5326 = vunpack.c.l.b16 %v4486
      %v5327 = vunpack.c.l.b16 %v4487
      %v5328 = vunpack.c.h.b16 %v4482
      %v5329 = vunpack.c.h.b16 %v4483
      %v5330 = vunpack.c.h.b16 %v4484
      %v5331 = vunpack.c.h.b16 %v4485
      %v5332 = vunpack.c.h.b16 %v4486
      %v5333 = vunpack.c.h.b16 %v4487
      %v5334 = vunpack.c.l.b16 %v4488
      %v5335 = vunpack.c.l.b16 %v4489
      %v5336 = vunpack.c.l.b16 %v4490
      %v5337 = vunpack.c.l.b16 %v4491
      %v5338 = vunpack.c.l.b16 %v4492
      %v5339 = vunpack.c.l.b16 %v4493
      %v5340 = vunpack.c.h.b16 %v4488
      %v5341 = vunpack.c.h.b16 %v4489
      %v5342 = vunpack.c.h.b16 %v4490
      %v5343 = vunpack.c.h.b16 %v4491
      %v5344 = vunpack.c.h.b16 %v4492
      %v5345 = vunpack.c.h.b16 %v4493
      %v5346 = vunpack.c.l.b16 %v4494
      %v5347 = vunpack.c.l.b16 %v4495
      %v5348 = vunpack.c.l.b16 %v4496
      %v5349 = vunpack.c.l.b16 %v4497
      %v5350 = vunpack.c.l.b16 %v4498
      %v5351 = vunpack.c.l.b16 %v4499
      %v5352 = vunpack.c.h.b16 %v4494
      %v5353 = vunpack.c.h.b16 %v4495
      %v5354 = vunpack.c.h.b16 %v4496
      %v5355 = vunpack.c.h.b16 %v4497
      %v5356 = vunpack.c.h.b16 %v4498
      %v5357 = vunpack.c.h.b16 %v4499
      %v5358 = vunpack.c.l.b16 %v4500
      %v5359 = vunpack.c.l.b16 %v4501
      %v5360 = vunpack.c.l.b16 %v4502
      %v5361 = vunpack.c.l.b16 %v4503
      %v5362 = vunpack.c.l.b16 %v4504
      %v5363 = vunpack.c.l.b16 %v4505
      %v5364 = vunpack.c.h.b16 %v4500
      %v5365 = vunpack.c.h.b16 %v4501
      %v5366 = vunpack.c.h.b16 %v4502
      %v5367 = vunpack.c.h.b16 %v4503
      %v5368 = vunpack.c.h.b16 %v4504
      %v5369 = vunpack.c.h.b16 %v4505
      %v5370 = vunpack.c.l.b16 %v4506
      %v5371 = vunpack.c.l.b16 %v4507
      %v5372 = vunpack.c.l.b16 %v4508
      %v5373 = vunpack.c.l.b16 %v4509
      %v5374 = vunpack.c.l.b16 %v4510
      %v5375 = vunpack.c.l.b16 %v4511
      %v5376 = vunpack.c.h.b16 %v4506
      %v5377 = vunpack.c.h.b16 %v4507
      %v5378 = vunpack.c.h.b16 %v4508
      %v5379 = vunpack.c.h.b16 %v4509
      %v5380 = vunpack.c.h.b16 %v4510
      %v5381 = vunpack.c.h.b16 %v4511
      %v5382 = vunpack.c.l.b16 %v4512
      %v5383 = vunpack.c.l.b16 %v4513
      %v5384 = vunpack.c.l.b16 %v4514
      %v5385 = vunpack.c.l.b16 %v4515
      %v5386 = vunpack.c.l.b16 %v4516
      %v5387 = vunpack.c.l.b16 %v4517
      %v5388 = vunpack.c.h.b16 %v4512
      %v5389 = vunpack.c.h.b16 %v4513
      %v5390 = vunpack.c.h.b16 %v4514
      %v5391 = vunpack.c.h.b16 %v4515
      %v5392 = vunpack.c.h.b16 %v4516
      %v5393 = vunpack.c.h.b16 %v4517
      %v5394 = vunpack.c.l.b16 %v4518
      %v5395 = vunpack.c.l.b16 %v4519
      %v5396 = vunpack.c.l.b16 %v4520
      %v5397 = vunpack.c.l.b16 %v4521
      %v5398 = vunpack.c.l.b16 %v4522
      %v5399 = vunpack.c.l.b16 %v4523
      %v5400 = vunpack.c.h.b16 %v4518
      %v5401 = vunpack.c.h.b16 %v4519
      %v5402 = vunpack.c.h.b16 %v4520
      %v5403 = vunpack.c.h.b16 %v4521
      %v5404 = vunpack.c.h.b16 %v4522
      %v5405 = vunpack.c.h.b16 %v4523
      %v5406 = vunpack.c.l.b16 %v4524
      %v5407 = vunpack.c.l.b16 %v4525
      %v5408 = vunpack.c.l.b16 %v4526
      %v5409 = vunpack.c.l.b16 %v4527
      %v5410 = vunpack.c.l.b16 %v4528
      %v5411 = vunpack.c.l.b16 %v4529
      %v5412 = vunpack.c.h.b16 %v4524
      %v5413 = vunpack.c.h.b16 %v4525
      %v5414 = vunpack.c.h.b16 %v4526
      %v5415 = vunpack.c.h.b16 %v4527
      %v5416 = vunpack.c.h.b16 %v4528
      %v5417 = vunpack.c.h.b16 %v4529
      %v5418 = vunpack.c.l.b16 %v4530
      %v5419 = vunpack.c.l.b16 %v4531
      %v5420 = vunpack.c.l.b16 %v4532
      %v5421 = vunpack.c.l.b16 %v4533
      %v5422 = vunpack.c.l.b16 %v4534
      %v5423 = vunpack.c.l.b16 %v4535
      %v5424 = vunpack.c.h.b16 %v4530
      %v5425 = vunpack.c.h.b16 %v4531
      %v5426 = vunpack.c.h.b16 %v4532
      %v5427 = vunpack.c.h.b16 %v4533
      %v5428 = vunpack.c.h.b16 %v4534
      %v5429 = vunpack.c.h.b16 %v4535
      %v5430 = vunpack.c.l.b16 %v4536
      %v5431 = vunpack.c.l.b16 %v4537
      %v5432 = vunpack.c.l.b16 %v4538
      %v5433 = vunpack.c.l.b16 %v4539
      %v5434 = vunpack.c.l.b16 %v4540
      %v5435 = vunpack.c.l.b16 %v4541
      %v5436 = vunpack.c.h.b16 %v4536
      %v5437 = vunpack.c.h.b16 %v4537
      %v5438 = vunpack.c.h.b16 %v4538
      %v5439 = vunpack.c.h.b16 %v4539
      %v5440 = vunpack.c.h.b16 %v4540
      %v5441 = vunpack.c.h.b16 %v4541
      %v5442 = vunpack.c.l.b16 %v4542
      %v5443 = vunpack.c.l.b16 %v4543
      %v5444 = vunpack.c.l.b16 %v4544
      %v5445 = vunpack.c.l.b16 %v4545
      %v5446 = vunpack.c.l.b16 %v4546
      %v5447 = vunpack.c.l.b16 %v4547
      %v5448 = vunpack.c.h.b16 %v4542
      %v5449 = vunpack.c.h.b16 %v4543
      %v5450 = vunpack.c.h.b16 %v4544
      %v5451 = vunpack.c.h.b16 %v4545
      %v5452 = vunpack.c.h.b16 %v4546
      %v5453 = vunpack.c.h.b16 %v4547
      %v5454 = vunpack.c.l.b16 %v4548
      %v5455 = vunpack.c.l.b16 %v4549
      %v5456 = vunpack.c.l.b16 %v4550
      %v5457 = vunpack.c.l.b16 %v4551
      %v5458 = vunpack.c.l.b16 %v4552
      %v5459 = vunpack.c.l.b16 %v4553
      %v5460 = vunpack.c.h.b16 %v4548
      %v5461 = vunpack.c.h.b16 %v4549
      %v5462 = vunpack.c.h.b16 %v4550
      %v5463 = vunpack.c.h.b16 %v4551
      %v5464 = vunpack.c.h.b16 %v4552
      %v5465 = vunpack.c.h.b16 %v4553
      %v5466 = vunpack.c.l.b16 %v4554
      %v5467 = vunpack.c.l.b16 %v4555
      %v5468 = vunpack.c.l.b16 %v4556
      %v5469 = vunpack.c.l.b16 %v4557
      %v5470 = vunpack.c.l.b16 %v4558
      %v5471 = vunpack.c.l.b16 %v4559
      %v5472 = vunpack.c.h.b16 %v4554
      %v5473 = vunpack.c.h.b16 %v4555
      %v5474 = vunpack.c.h.b16 %v4556
      %v5475 = vunpack.c.h.b16 %v4557
      %v5476 = vunpack.c.h.b16 %v4558
      %v5477 = vunpack.c.h.b16 %v4559
      %v5478 = vunpack.c.l.b16 %v4560
      %v5479 = vunpack.c.l.b16 %v4561
      %v5480 = vunpack.c.l.b16 %v4562
      %v5481 = vunpack.c.l.b16 %v4563
      %v5482 = vunpack.c.l.b16 %v4564
      %v5483 = vunpack.c.l.b16 %v4565
      %v5484 = vunpack.c.h.b16 %v4560
      %v5485 = vunpack.c.h.b16 %v4561
      %v5486 = vunpack.c.h.b16 %v4562
      %v5487 = vunpack.c.h.b16 %v4563
      %v5488 = vunpack.c.h.b16 %v4564
      %v5489 = vunpack.c.h.b16 %v4565
      %v5490 = vunpack.c.l.b16 %v4566
      %v5491 = vunpack.c.l.b16 %v4567
      %v5492 = vunpack.c.l.b16 %v4568
      %v5493 = vunpack.c.l.b16 %v4569
      %v5494 = vunpack.c.l.b16 %v4570
      %v5495 = vunpack.c.l.b16 %v4571
      %v5496 = vunpack.c.h.b16 %v4566
      %v5497 = vunpack.c.h.b16 %v4567
      %v5498 = vunpack.c.h.b16 %v4568
      %v5499 = vunpack.c.h.b16 %v4569
      %v5500 = vunpack.c.h.b16 %v4570
      %v5501 = vunpack.c.h.b16 %v4571
      %v5502 = vunpack.c.l.b16 %v4572
      %v5503 = vunpack.c.l.b16 %v4573
      %v5504 = vunpack.c.l.b16 %v4574
      %v5505 = vunpack.c.l.b16 %v4575
      %v5506 = vunpack.c.l.b16 %v4576
      %v5507 = vunpack.c.l.b16 %v4577
      %v5508 = vunpack.c.h.b16 %v4572
      %v5509 = vunpack.c.h.b16 %v4573
      %v5510 = vunpack.c.h.b16 %v4574
      %v5511 = vunpack.c.h.b16 %v4575
      %v5512 = vunpack.c.h.b16 %v4576
      %v5513 = vunpack.c.h.b16 %v4577
      %v5514 = vunpack.c.l.b16 %v4578
      %v5515 = vunpack.c.l.b16 %v4579
      %v5516 = vunpack.c.l.b16 %v4580
      %v5517 = vunpack.c.l.b16 %v4581
      %v5518 = vunpack.c.l.b16 %v4582
      %v5519 = vunpack.c.l.b16 %v4583
      %v5520 = vunpack.c.h.b16 %v4578
      %v5521 = vunpack.c.h.b16 %v4579
      %v5522 = vunpack.c.h.b16 %v4580
      %v5523 = vunpack.c.h.b16 %v4581
      %v5524 = vunpack.c.h.b16 %v4582
      %v5525 = vunpack.c.h.b16 %v4583
      %v5526 = vunpack.c.l.b16 %v4584
      %v5527 = vunpack.c.l.b16 %v4585
      %v5528 = vunpack.c.l.b16 %v4586
      %v5529 = vunpack.c.l.b16 %v4587
      %v5530 = vunpack.c.l.b16 %v4588
      %v5531 = vunpack.c.l.b16 %v4589
      %v5532 = vunpack.c.h.b16 %v4584
      %v5533 = vunpack.c.h.b16 %v4585
      %v5534 = vunpack.c.h.b16 %v4586
      %v5535 = vunpack.c.h.b16 %v4587
      %v5536 = vunpack.c.h.b16 %v4588
      %v5537 = vunpack.c.h.b16 %v4589
      %v5538 = vunpack.c.l.b16 %v4590
      %v5539 = vunpack.c.l.b16 %v4591
      %v5540 = vunpack.c.l.b16 %v4592
      %v5541 = vunpack.c.l.b16 %v4593
      %v5542 = vunpack.c.l.b16 %v4594
      %v5543 = vunpack.c.l.b16 %v4595
      %v5544 = vunpack.c.h.b16 %v4590
      %v5545 = vunpack.c.h.b16 %v4591
      %v5546 = vunpack.c.h.b16 %v4592
      %v5547 = vunpack.c.h.b16 %v4593
      %v5548 = vunpack.c.h.b16 %v4594
      %v5549 = vunpack.c.h.b16 %v4595
      %v5550 = vunpack.c.l.b16 %v4596
      %v5551 = vunpack.c.l.b16 %v4597
      %v5552 = vunpack.c.l.b16 %v4598
      %v5553 = vunpack.c.l.b16 %v4599
      %v5554 = vunpack.c.l.b16 %v4600
      %v5555 = vunpack.c.l.b16 %v4601
      %v5556 = vunpack.c.h.b16 %v4596
      %v5557 = vunpack.c.h.b16 %v4597
      %v5558 = vunpack.c.h.b16 %v4598
      %v5559 = vunpack.c.h.b16 %v4599
      %v5560 = vunpack.c.h.b16 %v4600
      %v5561 = vunpack.c.h.b16 %v4601
      %v5562 = vunpack.c.l.b16 %v4602
      %v5563 = vunpack.c.l.b16 %v4603
      %v5564 = vunpack.c.l.b16 %v4604
      %v5565 = vunpack.c.l.b16 %v4605
      %v5566 = vunpack.c.l.b16 %v4606
      %v5567 = vunpack.c.l.b16 %v4607
      %v5568 = vunpack.c.h.b16 %v4602
      %v5569 = vunpack.c.h.b16 %v4603
      %v5570 = vunpack.c.h.b16 %v4604
      %v5571 = vunpack.c.h.b16 %v4605
      %v5572 = vunpack.c.h.b16 %v4606
      %v5573 = vunpack.c.h.b16 %v4607
      %v5574 = vunpack.c.l.b16 %v4608
      %v5575 = vunpack.c.l.b16 %v4609
      %v5576 = vunpack.c.l.b16 %v4610
      %v5577 = vunpack.c.l.b16 %v4611
      %v5578 = vunpack.c.l.b16 %v4612
      %v5579 = vunpack.c.l.b16 %v4613
      %v5580 = vunpack.c.h.b16 %v4608
      %v5581 = vunpack.c.h.b16 %v4609
      %v5582 = vunpack.c.h.b16 %v4610
      %v5583 = vunpack.c.h.b16 %v4611
      %v5584 = vunpack.c.h.b16 %v4612
      %v5585 = vunpack.c.h.b16 %v4613
      %v5586 = vunpack.c.l.b16 %v4614
      %v5587 = vunpack.c.l.b16 %v4615
      %v5588 = vunpack.c.l.b16 %v4616
      %v5589 = vunpack.c.l.b16 %v4617
      %v5590 = vunpack.c.l.b16 %v4618
      %v5591 = vunpack.c.l.b16 %v4619
      %v5592 = vunpack.c.h.b16 %v4614
      %v5593 = vunpack.c.h.b16 %v4615
      %v5594 = vunpack.c.h.b16 %v4616
      %v5595 = vunpack.c.h.b16 %v4617
      %v5596 = vunpack.c.h.b16 %v4618
      %v5597 = vunpack.c.h.b16 %v4619
      %v5598 = vunpack.c.l.b16 %v4620
      %v5599 = vunpack.c.l.b16 %v4621
      %v5600 = vunpack.c.l.b16 %v4622
      %v5601 = vunpack.c.l.b16 %v4623
      %v5602 = vunpack.c.l.b16 %v4624
      %v5603 = vunpack.c.l.b16 %v4625
      %v5604 = vunpack.c.h.b16 %v4620
      %v5605 = vunpack.c.h.b16 %v4621
      %v5606 = vunpack.c.h.b16 %v4622
      %v5607 = vunpack.c.h.b16 %v4623
      %v5608 = vunpack.c.h.b16 %v4624
      %v5609 = vunpack.c.h.b16 %v4625
      %v5610 = vunpack.c.l.b16 %v4626
      %v5611 = vunpack.c.l.b16 %v4627
      %v5612 = vunpack.c.l.b16 %v4628
      %v5613 = vunpack.c.l.b16 %v4629
      %v5614 = vunpack.c.l.b16 %v4630
      %v5615 = vunpack.c.l.b16 %v4631
      %v5616 = vunpack.c.h.b16 %v4626
      %v5617 = vunpack.c.h.b16 %v4627
      %v5618 = vunpack.c.h.b16 %v4628
      %v5619 = vunpack.c.h.b16 %v4629
      %v5620 = vunpack.c.h.b16 %v4630
      %v5621 = vunpack.c.h.b16 %v4631
      %v5622 = vunpack.c.l.b16 %v4632
      %v5623 = vunpack.c.l.b16 %v4633
      %v5624 = vunpack.c.l.b16 %v4634
      %v5625 = vunpack.c.l.b16 %v4635
      %v5626 = vunpack.c.l.b16 %v4636
      %v5627 = vunpack.c.l.b16 %v4637
      %v5628 = vunpack.c.h.b16 %v4632
      %v5629 = vunpack.c.h.b16 %v4633
      %v5630 = vunpack.c.h.b16 %v4634
      %v5631 = vunpack.c.h.b16 %v4635
      %v5632 = vunpack.c.h.b16 %v4636
      %v5633 = vunpack.c.h.b16 %v4637
      %v5634 = vunpack.c.l.b16 %v4638
      %v5635 = vunpack.c.l.b16 %v4639
      %v5636 = vunpack.c.l.b16 %v4640
      %v5637 = vunpack.c.l.b16 %v4641
      %v5638 = vunpack.c.l.b16 %v4642
      %v5639 = vunpack.c.l.b16 %v4643
      %v5640 = vunpack.c.h.b16 %v4638
      %v5641 = vunpack.c.h.b16 %v4639
      %v5642 = vunpack.c.h.b16 %v4640
      %v5643 = vunpack.c.h.b16 %v4641
      %v5644 = vunpack.c.h.b16 %v4642
      %v5645 = vunpack.c.h.b16 %v4643
      %v5646 = vunpack.c.l.b16 %v4644
      %v5647 = vunpack.c.l.b16 %v4645
      %v5648 = vunpack.c.l.b16 %v4646
      %v5649 = vunpack.c.l.b16 %v4647
      %v5650 = vunpack.c.l.b16 %v4648
      %v5651 = vunpack.c.l.b16 %v4649
      %v5652 = vunpack.c.h.b16 %v4644
      %v5653 = vunpack.c.h.b16 %v4645
      %v5654 = vunpack.c.h.b16 %v4646
      %v5655 = vunpack.c.h.b16 %v4647
      %v5656 = vunpack.c.h.b16 %v4648
      %v5657 = vunpack.c.h.b16 %v4649
      %v5658 = vunpack.c.l.b16 %v4650
      %v5659 = vunpack.c.l.b16 %v4651
      %v5660 = vunpack.c.l.b16 %v4652
      %v5661 = vunpack.c.l.b16 %v4653
      %v5662 = vunpack.c.l.b16 %v4654
      %v5663 = vunpack.c.l.b16 %v4655
      %v5664 = vunpack.c.h.b16 %v4650
      %v5665 = vunpack.c.h.b16 %v4651
      %v5666 = vunpack.c.h.b16 %v4652
      %v5667 = vunpack.c.h.b16 %v4653
      %v5668 = vunpack.c.h.b16 %v4654
      %v5669 = vunpack.c.h.b16 %v4655
      %v5670 = vunpack.c.l.b16 %v4656
      %v5671 = vunpack.c.l.b16 %v4657
      %v5672 = vunpack.c.l.b16 %v4658
      %v5673 = vunpack.c.l.b16 %v4659
      %v5674 = vunpack.c.l.b16 %v4660
      %v5675 = vunpack.c.l.b16 %v4661
      %v5676 = vunpack.c.h.b16 %v4656
      %v5677 = vunpack.c.h.b16 %v4657
      %v5678 = vunpack.c.h.b16 %v4658
      %v5679 = vunpack.c.h.b16 %v4659
      %v5680 = vunpack.c.h.b16 %v4660
      %v5681 = vunpack.c.h.b16 %v4661
      %v5682 = vunpack.c.l.b16 %v4662
      %v5683 = vunpack.c.l.b16 %v4663
      %v5684 = vunpack.c.l.b16 %v4664
      %v5685 = vunpack.c.l.b16 %v4665
      %v5686 = vunpack.c.l.b16 %v4666
      %v5687 = vunpack.c.l.b16 %v4667
      %v5688 = vunpack.c.h.b16 %v4662
      %v5689 = vunpack.c.h.b16 %v4663
      %v5690 = vunpack.c.h.b16 %v4664
      %v5691 = vunpack.c.h.b16 %v4665
      %v5692 = vunpack.c.h.b16 %v4666
      %v5693 = vunpack.c.h.b16 %v4667
      %v5694 = vunpack.c.l.b16 %v4668
      %v5695 = vunpack.c.l.b16 %v4669
      %v5696 = vunpack.c.l.b16 %v4670
      %v5697 = vunpack.c.l.b16 %v4671
      %v5698 = vunpack.c.l.b16 %v4672
      %v5699 = vunpack.c.l.b16 %v4673
      %v5700 = vunpack.c.h.b16 %v4668
      %v5701 = vunpack.c.h.b16 %v4669
      %v5702 = vunpack.c.h.b16 %v4670
      %v5703 = vunpack.c.h.b16 %v4671
      %v5704 = vunpack.c.h.b16 %v4672
      %v5705 = vunpack.c.h.b16 %v4673
      %v5706 = vunpack.c.l.b16 %v4674
      %v5707 = vunpack.c.l.b16 %v4675
      %v5708 = vunpack.c.l.b16 %v4676
      %v5709 = vunpack.c.l.b16 %v4677
      %v5710 = vunpack.c.l.b16 %v4678
      %v5711 = vunpack.c.l.b16 %v4679
      %v5712 = vunpack.c.h.b16 %v4674
      %v5713 = vunpack.c.h.b16 %v4675
      %v5714 = vunpack.c.h.b16 %v4676
      %v5715 = vunpack.c.h.b16 %v4677
      %v5716 = vunpack.c.h.b16 %v4678
      %v5717 = vunpack.c.h.b16 %v4679
      %v5718 = vunpack.c.l.b16 %v4680
      %v5719 = vunpack.c.l.b16 %v4681
      %v5720 = vunpack.c.l.b16 %v4682
      %v5721 = vunpack.c.l.b16 %v4683
      %v5722 = vunpack.c.l.b16 %v4684
      %v5723 = vunpack.c.l.b16 %v4685
      %v5724 = vunpack.c.h.b16 %v4680
      %v5725 = vunpack.c.h.b16 %v4681
      %v5726 = vunpack.c.h.b16 %v4682
      %v5727 = vunpack.c.h.b16 %v4683
      %v5728 = vunpack.c.h.b16 %v4684
      %v5729 = vunpack.c.h.b16 %v4685
      %v5730 = vunpack.c.l.b16 %v4686
      %v5731 = vunpack.c.l.b16 %v4687
      %v5732 = vunpack.c.l.b16 %v4688
      %v5733 = vunpack.c.l.b16 %v4689
      %v5734 = vunpack.c.l.b16 %v4690
      %v5735 = vunpack.c.l.b16 %v4691
      %v5736 = vunpack.c.h.b16 %v4686
      %v5737 = vunpack.c.h.b16 %v4687
      %v5738 = vunpack.c.h.b16 %v4688
      %v5739 = vunpack.c.h.b16 %v4689
      %v5740 = vunpack.c.h.b16 %v4690
      %v5741 = vunpack.c.h.b16 %v4691
      %v5742 = vunpack.c.l.b16 %v4692
      %v5743 = vunpack.c.l.b16 %v4693
      %v5744 = vunpack.c.l.b16 %v4694
      %v5745 = vunpack.c.l.b16 %v4695
      %v5746 = vunpack.c.l.b16 %v4696
      %v5747 = vunpack.c.l.b16 %v4697
      %v5748 = vunpack.c.h.b16 %v4692
      %v5749 = vunpack.c.h.b16 %v4693
      %v5750 = vunpack.c.h.b16 %v4694
      %v5751 = vunpack.c.h.b16 %v4695
      %v5752 = vunpack.c.h.b16 %v4696
      %v5753 = vunpack.c.h.b16 %v4697
      %v5754 = vunpack.c.l.b16 %v4698
      %v5755 = vunpack.c.l.b16 %v4699
      %v5756 = vunpack.c.l.b16 %v4700
      %v5757 = vunpack.c.l.b16 %v4701
      %v5758 = vunpack.c.l.b16 %v4702
      %v5759 = vunpack.c.l.b16 %v4703
      %v5760 = vunpack.c.h.b16 %v4698
      %v5761 = vunpack.c.h.b16 %v4699
      %v5762 = vunpack.c.h.b16 %v4700
      %v5763 = vunpack.c.h.b16 %v4701
      %v5764 = vunpack.c.h.b16 %v4702
      %v5765 = vunpack.c.h.b16 %v4703
      %v5766 = vunpack.c.l.b16 %v4704
      %v5767 = vunpack.c.l.b16 %v4705
      %v5768 = vunpack.c.l.b16 %v4706
      %v5769 = vunpack.c.l.b16 %v4707
      %v5770 = vunpack.c.l.b16 %v4708
      %v5771 = vunpack.c.l.b16 %v4709
      %v5772 = vunpack.c.h.b16 %v4704
      %v5773 = vunpack.c.h.b16 %v4705
      %v5774 = vunpack.c.h.b16 %v4706
      %v5775 = vunpack.c.h.b16 %v4707
      %v5776 = vunpack.c.h.b16 %v4708
      %v5777 = vunpack.c.h.b16 %v4709
      %v5778 = vunpack.c.l.b16 %v4710
      %v5779 = vunpack.c.l.b16 %v4711
      %v5780 = vunpack.c.l.b16 %v4712
      %v5781 = vunpack.c.l.b16 %v4713
      %v5782 = vunpack.c.l.b16 %v4714
      %v5783 = vunpack.c.l.b16 %v4715
      %v5784 = vunpack.c.h.b16 %v4710
      %v5785 = vunpack.c.h.b16 %v4711
      %v5786 = vunpack.c.h.b16 %v4712
      %v5787 = vunpack.c.h.b16 %v4713
      %v5788 = vunpack.c.h.b16 %v4714
      %v5789 = vunpack.c.h.b16 %v4715
      %v5790 = vunpack.c.l.b16 %v4716
      %v5791 = vunpack.c.l.b16 %v4717
      %v5792 = vunpack.c.l.b16 %v4718
      %v5793 = vunpack.c.l.b16 %v4719
      %v5794 = vunpack.c.l.b16 %v4720
      %v5795 = vunpack.c.l.b16 %v4721
      %v5796 = vunpack.c.h.b16 %v4716
      %v5797 = vunpack.c.h.b16 %v4717
      %v5798 = vunpack.c.h.b16 %v4718
      %v5799 = vunpack.c.h.b16 %v4719
      %v5800 = vunpack.c.h.b16 %v4720
      %v5801 = vunpack.c.h.b16 %v4721
      %v5802 = vunpack.c.l.b16 %v4722
      %v5803 = vunpack.c.l.b16 %v4723
      %v5804 = vunpack.c.l.b16 %v4724
      %v5805 = vunpack.c.l.b16 %v4725
      %v5806 = vunpack.c.l.b16 %v4726
      %v5807 = vunpack.c.l.b16 %v4727
      %v5808 = vunpack.c.h.b16 %v4722
      %v5809 = vunpack.c.h.b16 %v4723
      %v5810 = vunpack.c.h.b16 %v4724
      %v5811 = vunpack.c.h.b16 %v4725
      %v5812 = vunpack.c.h.b16 %v4726
      %v5813 = vunpack.c.h.b16 %v4727
      %v5814 = vunpack.c.l.b16 %v4728
      %v5815 = vunpack.c.l.b16 %v4729
      %v5816 = vunpack.c.l.b16 %v4730
      %v5817 = vunpack.c.l.b16 %v4731
      %v5818 = vunpack.c.l.b16 %v4732
      %v5819 = vunpack.c.l.b16 %v4733
      %v5820 = vunpack.c.h.b16 %v4728
      %v5821 = vunpack.c.h.b16 %v4729
      %v5822 = vunpack.c.h.b16 %v4730
      %v5823 = vunpack.c.h.b16 %v4731
      %v5824 = vunpack.c.h.b16 %v4732
      %v5825 = vunpack.c.h.b16 %v4733
      %v5826 = vunpack.c.l.b16 %v4734
      %v5827 = vunpack.c.l.b16 %v4735
      %v5828 = vunpack.c.l.b16 %v4736
      %v5829 = vunpack.c.l.b16 %v4737
      %v5830 = vunpack.c.l.b16 %v4738
      %v5831 = vunpack.c.l.b16 %v4739
      %v5832 = vunpack.c.h.b16 %v4734
      %v5833 = vunpack.c.h.b16 %v4735
      %v5834 = vunpack.c.h.b16 %v4736
      %v5835 = vunpack.c.h.b16 %v4737
      %v5836 = vunpack.c.h.b16 %v4738
      %v5837 = vunpack.c.h.b16 %v4739
      %v5838 = vunpack.c.l.b16 %v4740
      %v5839 = vunpack.c.l.b16 %v4741
      %v5840 = vunpack.c.l.b16 %v4742
      %v5841 = vunpack.c.l.b16 %v4743
      %v5842 = vunpack.c.l.b16 %v4744
      %v5843 = vunpack.c.l.b16 %v4745
      %v5844 = vunpack.c.h.b16 %v4740
      %v5845 = vunpack.c.h.b16 %v4741
      %v5846 = vunpack.c.h.b16 %v4742
      %v5847 = vunpack.c.h.b16 %v4743
      %v5848 = vunpack.c.h.b16 %v4744
      %v5849 = vunpack.c.h.b16 %v4745
      %v5850 = vunpack.c.l.b16 %v4746
      %v5851 = vunpack.c.l.b16 %v4747
      %v5852 = vunpack.c.l.b16 %v4748
      %v5853 = vunpack.c.l.b16 %v4749
      %v5854 = vunpack.c.l.b16 %v4750
      %v5855 = vunpack.c.l.b16 %v4751
      %v5856 = vunpack.c.h.b16 %v4746
      %v5857 = vunpack.c.h.b16 %v4747
      %v5858 = vunpack.c.h.b16 %v4748
      %v5859 = vunpack.c.h.b16 %v4749
      %v5860 = vunpack.c.h.b16 %v4750
      %v5861 = vunpack.c.h.b16 %v4751
      %v5862 = vunpack.c.l.b16 %v4752
      %v5863 = vunpack.c.l.b16 %v4753
      %v5864 = vunpack.c.l.b16 %v4754
      %v5865 = vunpack.c.l.b16 %v4755
      %v5866 = vunpack.c.l.b16 %v4756
      %v5867 = vunpack.c.l.b16 %v4757
      %v5868 = vunpack.c.h.b16 %v4752
      %v5869 = vunpack.c.h.b16 %v4753
      %v5870 = vunpack.c.h.b16 %v4754
      %v5871 = vunpack.c.h.b16 %v4755
      %v5872 = vunpack.c.h.b16 %v4756
      %v5873 = vunpack.c.h.b16 %v4757
      %v5874 = vunpack.c.l.b16 %v4758
      %v5875 = vunpack.c.l.b16 %v4759
      %v5876 = vunpack.c.l.b16 %v4760
      %v5877 = vunpack.c.l.b16 %v4761
      %v5878 = vunpack.c.l.b16 %v4762
      %v5879 = vunpack.c.l.b16 %v4763
      %v5880 = vunpack.c.h.b16 %v4758
      %v5881 = vunpack.c.h.b16 %v4759
      %v5882 = vunpack.c.h.b16 %v4760
      %v5883 = vunpack.c.h.b16 %v4761
      %v5884 = vunpack.c.h.b16 %v4762
      %v5885 = vunpack.c.h.b16 %v4763
      %v5886 = vunpack.c.l.b16 %v4764
      %v5887 = vunpack.c.l.b16 %v4765
      %v5888 = vunpack.c.l.b16 %v4766
      %v5889 = vunpack.c.l.b16 %v4767
      %v5890 = vunpack.c.l.b16 %v4768
      %v5891 = vunpack.c.l.b16 %v4769
      %v5892 = vunpack.c.h.b16 %v4764
      %v5893 = vunpack.c.h.b16 %v4765
      %v5894 = vunpack.c.h.b16 %v4766
      %v5895 = vunpack.c.h.b16 %v4767
      %v5896 = vunpack.c.h.b16 %v4768
      %v5897 = vunpack.c.h.b16 %v4769
      %v5898 = vunpack.c.l.b16 %v4770
      %v5899 = vunpack.c.l.b16 %v4771
      %v5900 = vunpack.c.l.b16 %v4772
      %v5901 = vunpack.c.l.b16 %v4773
      %v5902 = vunpack.c.l.b16 %v4774
      %v5903 = vunpack.c.l.b16 %v4775
      %v5904 = vunpack.c.h.b16 %v4770
      %v5905 = vunpack.c.h.b16 %v4771
      %v5906 = vunpack.c.h.b16 %v4772
      %v5907 = vunpack.c.h.b16 %v4773
      %v5908 = vunpack.c.h.b16 %v4774
      %v5909 = vunpack.c.h.b16 %v4775
      %v5910 = vunpack.c.l.b16 %v4776
      %v5911 = vunpack.c.l.b16 %v4777
      %v5912 = vunpack.c.l.b16 %v4778
      %v5913 = vunpack.c.l.b16 %v4779
      %v5914 = vunpack.c.l.b16 %v4780
      %v5915 = vunpack.c.l.b16 %v4781
      %v5916 = vunpack.c.h.b16 %v4776
      %v5917 = vunpack.c.h.b16 %v4777
      %v5918 = vunpack.c.h.b16 %v4778
      %v5919 = vunpack.c.h.b16 %v4779
      %v5920 = vunpack.c.h.b16 %v4780
      %v5921 = vunpack.c.h.b16 %v4781
      %v5922 = vunpack.c.l.b16 %v4782
      %v5923 = vunpack.c.l.b16 %v4783
      %v5924 = vunpack.c.l.b16 %v4784
      %v5925 = vunpack.c.l.b16 %v4785
      %v5926 = vunpack.c.l.b16 %v4786
      %v5927 = vunpack.c.l.b16 %v4787
      %v5928 = vunpack.c.h.b16 %v4782
      %v5929 = vunpack.c.h.b16 %v4783
      %v5930 = vunpack.c.h.b16 %v4784
      %v5931 = vunpack.c.h.b16 %v4785
      %v5932 = vunpack.c.h.b16 %v4786
      %v5933 = vunpack.c.h.b16 %v4787
      %v5934 = vunpack.c.l.b16 %v4788
      %v5935 = vunpack.c.l.b16 %v4789
      %v5936 = vunpack.c.l.b16 %v4790
      %v5937 = vunpack.c.l.b16 %v4791
      %v5938 = vunpack.c.l.b16 %v4792
      %v5939 = vunpack.c.l.b16 %v4793
      %v5940 = vunpack.c.h.b16 %v4788
      %v5941 = vunpack.c.h.b16 %v4789
      %v5942 = vunpack.c.h.b16 %v4790
      %v5943 = vunpack.c.h.b16 %v4791
      %v5944 = vunpack.c.h.b16 %v4792
      %v5945 = vunpack.c.h.b16 %v4793
      %v5946 = vpack.c.b16 %v5179, %v5178
      %v5947 = vpack.c.b16 %v5181, %v5180
      %v5948 = vpack.c.b16 %v5183, %v5182
      %v5949 = vpack.c.b16 %v5185, %v5184
      %v5950 = vpack.c.b16 %v5187, %v5186
      %v5951 = vpack.c.b16 %v5189, %v5188
      %v5952 = vpack.c.b16 %v5191, %v5190
      %v5953 = vpack.c.b16 %v5193, %v5192
      %v5954 = vpack.c.b16 %v5195, %v5194
      %v5955 = vpack.c.b16 %v5197, %v5196
      %v5956 = vpack.c.b16 %v5199, %v5198
      %v5957 = vpack.c.b16 %v5201, %v5200
      %v5958 = vpack.c.b16 %v5203, %v5202
      %v5959 = vpack.c.b16 %v5205, %v5204
      %v5960 = vpack.c.b16 %v5207, %v5206
      %v5961 = vpack.c.b16 %v5209, %v5208
      %v5962 = vpack.c.b16 %v5211, %v5210
      %v5963 = vpack.c.b16 %v5213, %v5212
      %v5964 = vpack.c.b16 %v5215, %v5214
      %v5965 = vpack.c.b16 %v5217, %v5216
      %v5966 = vpack.c.b16 %v5219, %v5218
      %v5967 = vpack.c.b16 %v5221, %v5220
      %v5968 = vpack.c.b16 %v5223, %v5222
      %v5969 = vpack.c.b16 %v5225, %v5224
      %v5970 = vpack.c.b16 %v5227, %v5226
      %v5971 = vpack.c.b16 %v5229, %v5228
      %v5972 = vpack.c.b16 %v5231, %v5230
      %v5973 = vpack.c.b16 %v5233, %v5232
      %v5974 = vpack.c.b16 %v5235, %v5234
      %v5975 = vpack.c.b16 %v5237, %v5236
      %v5976 = vpack.c.b16 %v5239, %v5238
      %v5977 = vpack.c.b16 %v5241, %v5240
      %v5978 = vpack.c.b16 %v5243, %v5242
      %v5979 = vpack.c.b16 %v5245, %v5244
      %v5980 = vpack.c.b16 %v5247, %v5246
      %v5981 = vpack.c.b16 %v5249, %v5248
      %v5982 = vpack.c.b16 %v5251, %v5250
      %v5983 = vpack.c.b16 %v5253, %v5252
      %v5984 = vpack.c.b16 %v5255, %v5254
      %v5985 = vpack.c.b16 %v5257, %v5256
      %v5986 = vpack.c.b16 %v5259, %v5258
      %v5987 = vpack.c.b16 %v5261, %v5260
      %v5988 = vpack.c.b16 %v5263, %v5262
      %v5989 = vpack.c.b16 %v5265, %v5264
      %v5990 = vpack.c.b16 %v5267, %v5266
      %v5991 = vpack.c.b16 %v5269, %v5268
      %v5992 = vpack.c.b16 %v5271, %v5270
      %v5993 = vpack.c.b16 %v5273, %v5272
      %v5994 = vpack.c.b16 %v5275, %v5274
      %v5995 = vpack.c.b16 %v5277, %v5276
      %v5996 = vpack.c.b16 %v5279, %v5278
      %v5997 = vpack.c.b16 %v5281, %v5280
      %v5998 = vpack.c.b16 %v5283, %v5282
      %v5999 = vpack.c.b16 %v5285, %v5284
      %v6000 = vpack.c.b16 %v5287, %v5286
      %v6001 = vpack.c.b16 %v5289, %v5288
      %v6002 = vpack.c.b16 %v5291, %v5290
      %v6003 = vpack.c.b16 %v5293, %v5292
      %v6004 = vpack.c.b16 %v5295, %v5294
      %v6005 = vpack.c.b16 %v5297, %v5296
      %v6006 = vpack.c.b16 %v5299, %v5298
      %v6007 = vpack.c.b16 %v5301, %v5300
      %v6008 = vpack.c.b16 %v5303, %v5302
      %v6009 = vpack.c.b16 %v5305, %v5304
      %v6010 = vpack.c.b16 %v5307, %v5306
      %v6011 = vpack.c.b16 %v5309, %v5308
      %v6012 = vpack.c.b16 %v5311, %v5310
      %v6013 = vpack.c.b16 %v5313, %v5312
      %v6014 = vpack.c.b16 %v5315, %v5314
      %v6015 = vpack.c.b16 %v5317, %v5316
      %v6016 = vpack.c.b16 %v5319, %v5318
      %v6017 = vpack.c.b16 %v5321, %v5320
      %v6018 = vpack.c.b16 %v5323, %v5322
      %v6019 = vpack.c.b16 %v5325, %v5324
      %v6020 = vpack.c.b16 %v5327, %v5326
      %v6021 = vpack.c.b16 %v5329, %v5328
      %v6022 = vpack.c.b16 %v5331, %v5330
      %v6023 = vpack.c.b16 %v5333, %v5332
      %v6024 = vpack.c.b16 %v5335, %v5334
      %v6025 = vpack.c.b16 %v5337, %v5336
      %v6026 = vpack.c.b16 %v5339, %v5338
      %v6027 = vpack.c.b16 %v5341, %v5340
      %v6028 = vpack.c.b16 %v5343, %v5342
      %v6029 = vpack.c.b16 %v5345, %v5344
      %v6030 = vpack.c.b16 %v5347, %v5346
      %v6031 = vpack.c.b16 %v5349, %v5348
      %v6032 = vpack.c.b16 %v5351, %v5350
      %v6033 = vpack.c.b16 %v5353, %v5352
      %v6034 = vpack.c.b16 %v5355, %v5354
      %v6035 = vpack.c.b16 %v5357, %v5356
      %v6036 = vpack.c.b16 %v5359, %v5358
      %v6037 = vpack.c.b16 %v5361, %v5360
      %v6038 = vpack.c.b16 %v5363, %v5362
      %v6039 = vpack.c.b16 %v5365, %v5364
      %v6040 = vpack.c.b16 %v5367, %v5366
      %v6041 = vpack.c.b16 %v5369, %v5368
      %v6042 = vpack.c.b16 %v5371, %v5370
      %v6043 = vpack.c.b16 %v5373, %v5372
      %v6044 = vpack.c.b16 %v5375, %v5374
      %v6045 = vpack.c.b16 %v5377, %v5376
      %v6046 = vpack.c.b16 %v5379, %v5378
      %v6047 = vpack.c.b16 %v5381, %v5380
      %v6048 = vpack.c.b16 %v5383, %v5382
      %v6049 = vpack.c.b16 %v5385, %v5384
      %v6050 = vpack.c.b16 %v5387, %v5386
      %v6051 = vpack.c.b16 %v5389, %v5388
      %v6052 = vpack.c.b16 %v5391, %v5390
      %v6053 = vpack.c.b16 %v5393, %v5392
      %v6054 = vpack.c.b16 %v5395, %v5394
      %v6055 = vpack.c.b16 %v5397, %v5396
      %v6056 = vpack.c.b16 %v5399, %v5398
      %v6057 = vpack.c.b16 %v5401, %v5400
      %v6058 = vpack.c.b16 %v5403, %v5402
      %v6059 = vpack.c.b16 %v5405, %v5404
      %v6060 = vpack.c.b16 %v5407, %v5406
      %v6061 = vpack.c.b16 %v5409, %v5408
      %v6062 = vpack.c.b16 %v5411, %v5410
      %v6063 = vpack.c.b16 %v5413, %v5412
      %v6064 = vpack.c.b16 %v5415, %v5414
      %v6065 = vpack.c.b16 %v5417, %v5416
      %v6066 = vpack.c.b16 %v5419, %v5418
      %v6067 = vpack.c.b16 %v5421, %v5420
      %v6068 = vpack.c.b16 %v5423, %v5422
      %v6069 = vpack.c.b16 %v5425, %v5424
      %v6070 = vpack.c.b16 %v5427, %v5426
      %v6071 = vpack.c.b16 %v5429, %v5428
      %v6072 = vpack.c.b16 %v5431, %v5430
      %v6073 = vpack.c.b16 %v5433, %v5432
      %v6074 = vpack.c.b16 %v5435, %v5434
      %v6075 = vpack.c.b16 %v5437, %v5436
      %v6076 = vpack.c.b16 %v5439, %v5438
      %v6077 = vpack.c.b16 %v5441, %v5440
      %v6078 = vpack.c.b16 %v5443, %v5442
      %v6079 = vpack.c.b16 %v5445, %v5444
      %v6080 = vpack.c.b16 %v5447, %v5446
      %v6081 = vpack.c.b16 %v5449, %v5448
      %v6082 = vpack.c.b16 %v5451, %v5450
      %v6083 = vpack.c.b16 %v5453, %v5452
      %v6084 = vpack.c.b16 %v5455, %v5454
      %v6085 = vpack.c.b16 %v5457, %v5456
      %v6086 = vpack.c.b16 %v5459, %v5458
      %v6087 = vpack.c.b16 %v5461, %v5460
      %v6088 = vpack.c.b16 %v5463, %v5462
      %v6089 = vpack.c.b16 %v5465, %v5464
      %v6090 = vpack.c.b16 %v5467, %v5466
      %v6091 = vpack.c.b16 %v5469, %v5468
      %v6092 = vpack.c.b16 %v5471, %v5470
      %v6093 = vpack.c.b16 %v5473, %v5472
      %v6094 = vpack.c.b16 %v5475, %v5474
      %v6095 = vpack.c.b16 %v5477, %v5476
      %v6096 = vpack.c.b16 %v5479, %v5478
      %v6097 = vpack.c.b16 %v5481, %v5480
      %v6098 = vpack.c.b16 %v5483, %v5482
      %v6099 = vpack.c.b16 %v5485, %v5484
      %v6100 = vpack.c.b16 %v5487, %v5486
      %v6101 = vpack.c.b16 %v5489, %v5488
      %v6102 = vpack.c.b16 %v5491, %v5490
      %v6103 = vpack.c.b16 %v5493, %v5492
      %v6104 = vpack.c.b16 %v5495, %v5494
      %v6105 = vpack.c.b16 %v5497, %v5496
      %v6106 = vpack.c.b16 %v5499, %v5498
      %v6107 = vpack.c.b16 %v5501, %v5500
      %v6108 = vpack.c.b16 %v5503, %v5502
      %v6109 = vpack.c.b16 %v5505, %v5504
      %v6110 = vpack.c.b16 %v5507, %v5506
      %v6111 = vpack.c.b16 %v5509, %v5508
      %v6112 = vpack.c.b16 %v5511, %v5510
      %v6113 = vpack.c.b16 %v5513, %v5512
      %v6114 = vpack.c.b16 %v5515, %v5514
      %v6115 = vpack.c.b16 %v5517, %v5516
      %v6116 = vpack.c.b16 %v5519, %v5518
      %v6117 = vpack.c.b16 %v5521, %v5520
      %v6118 = vpack.c.b16 %v5523, %v5522
      %v6119 = vpack.c.b16 %v5525, %v5524
      %v6120 = vpack.c.b16 %v5527, %v5526
      %v6121 = vpack.c.b16 %v5529, %v5528
      %v6122 = vpack.c.b16 %v5531, %v5530
      %v6123 = vpack.c.b16 %v5533, %v5532
      %v6124 = vpack.c.b16 %v5535, %v5534
      %v6125 = vpack.c.b16 %v5537, %v5536
      %v6126 = vpack.c.b16 %v5539, %v5538
      %v6127 = vpack.c.b16 %v5541, %v5540
      %v6128 = vpack.c.b16 %v5543, %v5542
      %v6129 = vpack.c.b16 %v5545, %v5544
      %v6130 = vpack.c.b16 %v5547, %v5546
      %v6131 = vpack.c.b16 %v5549, %v5548
      %v6132 = vpack.c.b16 %v5551, %v5550
      %v6133 = vpack.c.b16 %v5553, %v5552
      %v6134 = vpack.c.b16 %v5555, %v5554
      %v6135 = vpack.c.b16 %v5557, %v5556
      %v6136 = vpack.c.b16 %v5559, %v5558
      %v6137 = vpack.c.b16 %v5561, %v5560
      %v6138 = vpack.c.b16 %v5563, %v5562
      %v6139 = vpack.c.b16 %v5565, %v5564
      %v6140 = vpack.c.b16 %v5567, %v5566
      %v6141 = vpack.c.b16 %v5569, %v5568
      %v6142 = vpack.c.b16 %v5571, %v5570
      %v6143 = vpack.c.b16 %v5573, %v5572
      %v6144 = vpack.c.b16 %v5575, %v5574
      %v6145 = vpack.c.b16 %v5577, %v5576
      %v6146 = vpack.c.b16 %v5579, %v5578
      %v6147 = vpack.c.b16 %v5581, %v5580
      %v6148 = vpack.c.b16 %v5583, %v5582
      %v6149 = vpack.c.b16 %v5585, %v5584
      %v6150 = vpack.c.b16 %v5587, %v5586
      %v6151 = vpack.c.b16 %v5589, %v5588
      %v6152 = vpack.c.b16 %v5591, %v5590
      %v6153 = vpack.c.b16 %v5593, %v5592
      %v6154 = vpack.c.b16 %v5595, %v5594
      %v6155 = vpack.c.b16 %v5597, %v5596
      %v6156 = vpack.c.b16 %v5599, %v5598
      %v6157 = vpack.c.b16 %v5601, %v5600
      %v6158 = vpack.c.b16 %v5603, %v5602
      %v6159 = vpack.c.b16 %v5605, %v5604
      %v6160 = vpack.c.b16 %v5607, %v5606
      %v6161 = vpack.c.b16 %v5609, %v5608
      %v6162 = vpack.c.b16 %v5611, %v5610
      %v6163 = vpack.c.b16 %v5613, %v5612
      %v6164 = vpack.c.b16 %v5615, %v5614
      %v6165 = vpack.c.b16 %v5617, %v5616
      %v6166 = vpack.c.b16 %v5619, %v5618
      %v6167 = vpack.c.b16 %v5621, %v5620
      %v6168 = vpack.c.b16 %v5623, %v5622
      %v6169 = vpack.c.b16 %v5625, %v5624
      %v6170 = vpack.c.b16 %v5627, %v5626
      %v6171 = vpack.c.b16 %v5629, %v5628
      %v6172 = vpack.c.b16 %v5631, %v5630
      %v6173 = vpack.c.b16 %v5633, %v5632
      %v6174 = vpack.c.b16 %v5635, %v5634
      %v6175 = vpack.c.b16 %v5637, %v5636
      %v6176 = vpack.c.b16 %v5639, %v5638
      %v6177 = vpack.c.b16 %v5641, %v5640
      %v6178 = vpack.c.b16 %v5643, %v5642
      %v6179 = vpack.c.b16 %v5645, %v5644
      %v6180 = vpack.c.b16 %v5647, %v5646
      %v6181 = vpack.c.b16 %v5649, %v5648
      %v6182 = vpack.c.b16 %v5651, %v5650
      %v6183 = vpack.c.b16 %v5653, %v5652
      %v6184 = vpack.c.b16 %v5655, %v5654
      %v6185 = vpack.c.b16 %v5657, %v5656
      %v6186 = vpack.c.b16 %v5659, %v5658
      %v6187 = vpack.c.b16 %v5661, %v5660
      %v6188 = vpack.c.b16 %v5663, %v5662
      %v6189 = vpack.c.b16 %v5665, %v5664
      %v6190 = vpack.c.b16 %v5667, %v5666
      %v6191 = vpack.c.b16 %v5669, %v5668
      %v6192 = vpack.c.b16 %v5671, %v5670
      %v6193 = vpack.c.b16 %v5673, %v5672
      %v6194 = vpack.c.b16 %v5675, %v5674
      %v6195 = vpack.c.b16 %v5677, %v5676
      %v6196 = vpack.c.b16 %v5679, %v5678
      %v6197 = vpack.c.b16 %v5681, %v5680
      %v6198 = vpack.c.b16 %v5683, %v5682
      %v6199 = vpack.c.b16 %v5685, %v5684
      %v6200 = vpack.c.b16 %v5687, %v5686
      %v6201 = vpack.c.b16 %v5689, %v5688
      %v6202 = vpack.c.b16 %v5691, %v5690
      %v6203 = vpack.c.b16 %v5693, %v5692
      %v6204 = vpack.c.b16 %v5695, %v5694
      %v6205 = vpack.c.b16 %v5697, %v5696
      %v6206 = vpack.c.b16 %v5699, %v5698
      %v6207 = vpack.c.b16 %v5701, %v5700
      %v6208 = vpack.c.b16 %v5703, %v5702
      %v6209 = vpack.c.b16 %v5705, %v5704
      %v6210 = vpack.c.b16 %v5707, %v5706
      %v6211 = vpack.c.b16 %v5709, %v5708
      %v6212 = vpack.c.b16 %v5711, %v5710
      %v6213 = vpack.c.b16 %v5713, %v5712
      %v6214 = vpack.c.b16 %v5715, %v5714
      %v6215 = vpack.c.b16 %v5717, %v5716
      %v6216 = vpack.c.b16 %v5719, %v5718
      %v6217 = vpack.c.b16 %v5721, %v5720
      %v6218 = vpack.c.b16 %v5723, %v5722
      %v6219 = vpack.c.b16 %v5725, %v5724
      %v6220 = vpack.c.b16 %v5727, %v5726
      %v6221 = vpack.c.b16 %v5729, %v5728
      %v6222 = vpack.c.b16 %v5731, %v5730
      %v6223 = vpack.c.b16 %v5733, %v5732
      %v6224 = vpack.c.b16 %v5735, %v5734
      %v6225 = vpack.c.b16 %v5737, %v5736
      %v6226 = vpack.c.b16 %v5739, %v5738
      %v6227 = vpack.c.b16 %v5741, %v5740
      %v6228 = vpack.c.b16 %v5743, %v5742
      %v6229 = vpack.c.b16 %v5745, %v5744
      %v6230 = vpack.c.b16 %v5747, %v5746
      %v6231 = vpack.c.b16 %v5749, %v5748
      %v6232 = vpack.c.b16 %v5751, %v5750
      %v6233 = vpack.c.b16 %v5753, %v5752
      %v6234 = vpack.c.b16 %v5755, %v5754
      %v6235 = vpack.c.b16 %v5757, %v5756
      %v6236 = vpack.c.b16 %v5759, %v5758
      %v6237 = vpack.c.b16 %v5761, %v5760
      %v6238 = vpack.c.b16 %v5763, %v5762
      %v6239 = vpack.c.b16 %v5765, %v5764
      %v6240 = vpack.c.b16 %v5767, %v5766
      %v6241 = vpack.c.b16 %v5769, %v5768
      %v6242 = vpack.c.b16 %v5771, %v5770
      %v6243 = vpack.c.b16 %v5773, %v5772
      %v6244 = vpack.c.b16 %v5775, %v5774
      %v6245 = vpack.c.b16 %v5777, %v5776
      %v6246 = vpack.c.b16 %v5779, %v5778
      %v6247 = vpack.c.b16 %v5781, %v5780
      %v6248 = vpack.c.b16 %v5783, %v5782
      %v6249 = vpack.c.b16 %v5785, %v5784
      %v6250 = vpack.c.b16 %v5787, %v5786
      %v6251 = vpack.c.b16 %v5789, %v5788
      %v6252 = vpack.c.b16 %v5791, %v5790
      %v6253 = vpack.c.b16 %v5793, %v5792
      %v6254 = vpack.c.b16 %v5795, %v5794
      %v6255 = vpack.c.b16 %v5797, %v5796
      %v6256 = vpack.c.b16 %v5799, %v5798
      %v6257 = vpack.c.b16 %v5801, %v5800
      %v6258 = vpack.c.b16 %v5803, %v5802
      %v6259 = vpack.c.b16 %v5805, %v5804
      %v6260 = vpack.c.b16 %v5807, %v5806
      %v6261 = vpack.c.b16 %v5809, %v5808
      %v6262 = vpack.c.b16 %v5811, %v5810
      %v6263 = vpack.c.b16 %v5813, %v5812
      %v6264 = vpack.c.b16 %v5815, %v5814
      %v6265 = vpack.c.b16 %v5817, %v5816
      %v6266 = vpack.c.b16 %v5819, %v5818
      %v6267 = vpack.c.b16 %v5821, %v5820
      %v6268 = vpack.c.b16 %v5823, %v5822
      %v6269 = vpack.c.b16 %v5825, %v5824
      %v6270 = vpack.c.b16 %v5827, %v5826
      %v6271 = vpack.c.b16 %v5829, %v5828
      %v6272 = vpack.c.b16 %v5831, %v5830
      %v6273 = vpack.c.b16 %v5833, %v5832
      %v6274 = vpack.c.b16 %v5835, %v5834
      %v6275 = vpack.c.b16 %v5837, %v5836
      %v6276 = vpack.c.b16 %v5839, %v5838
      %v6277 = vpack.c.b16 %v5841, %v5840
      %v6278 = vpack.c.b16 %v5843, %v5842
      %v6279 = vpack.c.b16 %v5845, %v5844
      %v6280 = vpack.c.b16 %v5847, %v5846
      %v6281 = vpack.c.b16 %v5849, %v5848
      %v6282 = vpack.c.b16 %v5851, %v5850
      %v6283 = vpack.c.b16 %v5853, %v5852
      %v6284 = vpack.c.b16 %v5855, %v5854
      %v6285 = vpack.c.b16 %v5857, %v5856
      %v6286 = vpack.c.b16 %v5859, %v5858
      %v6287 = vpack.c.b16 %v5861, %v5860
      %v6288 = vpack.c.b16 %v5863, %v5862
      %v6289 = vpack.c.b16 %v5865, %v5864
      %v6290 = vpack.c.b16 %v5867, %v5866
      %v6291 = vpack.c.b16 %v5869, %v5868
      %v6292 = vpack.c.b16 %v5871, %v5870
      %v6293 = vpack.c.b16 %v5873, %v5872
      %v6294 = vpack.c.b16 %v5875, %v5874
      %v6295 = vpack.c.b16 %v5877, %v5876
      %v6296 = vpack.c.b16 %v5879, %v5878
      %v6297 = vpack.c.b16 %v5881, %v5880
      %v6298 = vpack.c.b16 %v5883, %v5882
      %v6299 = vpack.c.b16 %v5885, %v5884
      %v6300 = vpack.c.b16 %v5887, %v5886
      %v6301 = vpack.c.b16 %v5889, %v5888
      %v6302 = vpack.c.b16 %v5891, %v5890
      %v6303 = vpack.c.b16 %v5893, %v5892
      %v6304 = vpack.c.b16 %v5895, %v5894
      %v6305 = vpack.c.b16 %v5897, %v5896
      %v6306 = vpack.c.b16 %v5899, %v5898
      %v6307 = vpack.c.b16 %v5901, %v5900
      %v6308 = vpack.c.b16 %v5903, %v5902
      %v6309 = vpack.c.b16 %v5905, %v5904
      %v6310 = vpack.c.b16 %v5907, %v5906
      %v6311 = vpack.c.b16 %v5909, %v5908
      %v6312 = vpack.c.b16 %v5911, %v5910
      %v6313 = vpack.c.b16 %v5913, %v5912
      %v6314 = vpack.c.b16 %v5915, %v5914
      %v6315 = vpack.c.b16 %v5917, %v5916
      %v6316 = vpack.c.b16 %v5919, %v5918
      %v6317 = vpack.c.b16 %v5921, %v5920
      %v6318 = vpack.c.b16 %v5923, %v5922
      %v6319 = vpack.c.b16 %v5925, %v5924
      %v6320 = vpack.c.b16 %v5927, %v5926
      %v6321 = vpack.c.b16 %v5929, %v5928
      %v6322 = vpack.c.b16 %v5931, %v5930
      %v6323 = vpack.c.b16 %v5933, %v5932
      %v6324 = vpack.c.b16 %v5935, %v5934
      %v6325 = vpack.c.b16 %v5937, %v5936
      %v6326 = vpack.c.b16 %v5939, %v5938
      %v6327 = vpack.c.b16 %v5941, %v5940
      %v6328 = vpack.c.b16 %v5943, %v5942
      %v6329 = vpack.c.b16 %v5945, %v5944
      %6714 = vst [vmem:[#allocation3] sm:$0xff] %v5946
      %6715 = vst [vmem:[#allocation3 + $0x8] sm:$0xff] %v5947
      %6716 = vst [vmem:[#allocation3 + $0x10] sm:$0xff] %v5948
      %6717 = vst [vmem:[#allocation3 + $0x18] sm:$0xff] %v5949
      %6718 = vst [vmem:[#allocation3 + $0x20] sm:$0xff] %v5950
      %6719 = vst [vmem:[#allocation3 + $0x28] sm:$0xff] %v5951
      %6720 = vst [vmem:[#allocation3 + $0x30] sm:$0xff] %v5952
      %6721 = vst [vmem:[#allocation3 + $0x38] sm:$0xff] %v5953
      %6722 = vst [vmem:[#allocation3 + $0x40] sm:$0xff] %v5954
      %6723 = vst [vmem:[#allocation3 + $0x48] sm:$0xff] %v5955
      %6724 = vst [vmem:[#allocation3 + $0x50] sm:$0xff] %v5956
      %6725 = vst [vmem:[#allocation3 + $0x58] sm:$0xff] %v5957
      %6726 = vst [vmem:[#allocation3 + $0x60] sm:$0xff] %v5958
      %6727 = vst [vmem:[#allocation3 + $0x68] sm:$0xff] %v5959
      %6728 = vst [vmem:[#allocation3 + $0x70] sm:$0xff] %v5960
      %6729 = vst [vmem:[#allocation3 + $0x78] sm:$0xff] %v5961
      %6730 = vst [vmem:[#allocation3 + $0x80] sm:$0xff] %v5962
      %6731 = vst [vmem:[#allocation3 + $0x88] sm:$0xff] %v5963
      %6732 = vst [vmem:[#allocation3 + $0x90] sm:$0xff] %v5964
      %6733 = vst [vmem:[#allocation3 + $0x98] sm:$0xff] %v5965
      %6734 = vst [vmem:[#allocation3 + $0xa0] sm:$0xff] %v5966
      %6735 = vst [vmem:[#allocation3 + $0xa8] sm:$0xff] %v5967
      %6736 = vst [vmem:[#allocation3 + $0xb0] sm:$0xff] %v5968
      %6737 = vst [vmem:[#allocation3 + $0xb8] sm:$0xff] %v5969
      %6738 = vst [vmem:[#allocation3 + $0xc0] sm:$0xff] %v5970
      %6739 = vst [vmem:[#allocation3 + $0xc8] sm:$0xff] %v5971
      %6740 = vst [vmem:[#allocation3 + $0xd0] sm:$0xff] %v5972
      %6741 = vst [vmem:[#allocation3 + $0xd8] sm:$0xff] %v5973
      %6742 = vst [vmem:[#allocation3 + $0xe0] sm:$0xff] %v5974
      %6743 = vst [vmem:[#allocation3 + $0xe8] sm:$0xff] %v5975
      %6744 = vst [vmem:[#allocation3 + $0xf0] sm:$0xff] %v5976
      %6745 = vst [vmem:[#allocation3 + $0xf8] sm:$0xff] %v5977
      %6746 = vst [vmem:[#allocation3 + $0x100] sm:$0xff] %v5978
      %6747 = vst [vmem:[#allocation3 + $0x108] sm:$0xff] %v5979
      %6748 = vst [vmem:[#allocation3 + $0x110] sm:$0xff] %v5980
      %6749 = vst [vmem:[#allocation3 + $0x118] sm:$0xff] %v5981
      %6750 = vst [vmem:[#allocation3 + $0x120] sm:$0xff] %v5982
      %6751 = vst [vmem:[#allocation3 + $0x128] sm:$0xff] %v5983
      %6752 = vst [vmem:[#allocation3 + $0x130] sm:$0xff] %v5984
      %6753 = vst [vmem:[#allocation3 + $0x138] sm:$0xff] %v5985
      %6754 = vst [vmem:[#allocation3 + $0x140] sm:$0xff] %v5986
      %6755 = vst [vmem:[#allocation3 + $0x148] sm:$0xff] %v5987
      %6756 = vst [vmem:[#allocation3 + $0x150] sm:$0xff] %v5988
      %6757 = vst [vmem:[#allocation3 + $0x158] sm:$0xff] %v5989
      %6758 = vst [vmem:[#allocation3 + $0x160] sm:$0xff] %v5990
      %6759 = vst [vmem:[#allocation3 + $0x168] sm:$0xff] %v5991
      %6760 = vst [vmem:[#allocation3 + $0x170] sm:$0xff] %v5992
      %6761 = vst [vmem:[#allocation3 + $0x178] sm:$0xff] %v5993
      %6762 = vst [vmem:[#allocation3 + $0x180] sm:$0xff] %v5994
      %6763 = vst [vmem:[#allocation3 + $0x188] sm:$0xff] %v5995
      %6764 = vst [vmem:[#allocation3 + $0x190] sm:$0xff] %v5996
      %6765 = vst [vmem:[#allocation3 + $0x198] sm:$0xff] %v5997
      %6766 = vst [vmem:[#allocation3 + $0x1a0] sm:$0xff] %v5998
      %6767 = vst [vmem:[#allocation3 + $0x1a8] sm:$0xff] %v5999
      %6768 = vst [vmem:[#allocation3 + $0x1b0] sm:$0xff] %v6000
      %6769 = vst [vmem:[#allocation3 + $0x1b8] sm:$0xff] %v6001
      %6770 = vst [vmem:[#allocation3 + $0x1c0] sm:$0xff] %v6002
      %6771 = vst [vmem:[#allocation3 + $0x1c8] sm:$0xff] %v6003
      %6772 = vst [vmem:[#allocation3 + $0x1d0] sm:$0xff] %v6004
      %6773 = vst [vmem:[#allocation3 + $0x1d8] sm:$0xff] %v6005
      %6774 = vst [vmem:[#allocation3 + $0x1e0] sm:$0xff] %v6006
      %6775 = vst [vmem:[#allocation3 + $0x1e8] sm:$0xff] %v6007
      %6776 = vst [vmem:[#allocation3 + $0x1f0] sm:$0xff] %v6008
      %6777 = vst [vmem:[#allocation3 + $0x1f8] sm:$0xff] %v6009
      %6778 = vst [vmem:[#allocation3 + $0x200] sm:$0xff] %v6010
      %6779 = vst [vmem:[#allocation3 + $0x208] sm:$0xff] %v6011
      %6780 = vst [vmem:[#allocation3 + $0x210] sm:$0xff] %v6012
      %6781 = vst [vmem:[#allocation3 + $0x218] sm:$0xff] %v6013
      %6782 = vst [vmem:[#allocation3 + $0x220] sm:$0xff] %v6014
      %6783 = vst [vmem:[#allocation3 + $0x228] sm:$0xff] %v6015
      %6784 = vst [vmem:[#allocation3 + $0x230] sm:$0xff] %v6016
      %6785 = vst [vmem:[#allocation3 + $0x238] sm:$0xff] %v6017
      %6786 = vst [vmem:[#allocation3 + $0x240] sm:$0xff] %v6018
      %6787 = vst [vmem:[#allocation3 + $0x248] sm:$0xff] %v6019
      %6788 = vst [vmem:[#allocation3 + $0x250] sm:$0xff] %v6020
      %6789 = vst [vmem:[#allocation3 + $0x258] sm:$0xff] %v6021
      %6790 = vst [vmem:[#allocation3 + $0x260] sm:$0xff] %v6022
      %6791 = vst [vmem:[#allocation3 + $0x268] sm:$0xff] %v6023
      %6792 = vst [vmem:[#allocation3 + $0x270] sm:$0xff] %v6024
      %6793 = vst [vmem:[#allocation3 + $0x278] sm:$0xff] %v6025
      %6794 = vst [vmem:[#allocation3 + $0x280] sm:$0xff] %v6026
      %6795 = vst [vmem:[#allocation3 + $0x288] sm:$0xff] %v6027
      %6796 = vst [vmem:[#allocation3 + $0x290] sm:$0xff] %v6028
      %6797 = vst [vmem:[#allocation3 + $0x298] sm:$0xff] %v6029
      %6798 = vst [vmem:[#allocation3 + $0x2a0] sm:$0xff] %v6030
      %6799 = vst [vmem:[#allocation3 + $0x2a8] sm:$0xff] %v6031
      %6800 = vst [vmem:[#allocation3 + $0x2b0] sm:$0xff] %v6032
      %6801 = vst [vmem:[#allocation3 + $0x2b8] sm:$0xff] %v6033
      %6802 = vst [vmem:[#allocation3 + $0x2c0] sm:$0xff] %v6034
      %6803 = vst [vmem:[#allocation3 + $0x2c8] sm:$0xff] %v6035
      %6804 = vst [vmem:[#allocation3 + $0x2d0] sm:$0xff] %v6036
      %6805 = vst [vmem:[#allocation3 + $0x2d8] sm:$0xff] %v6037
      %6806 = vst [vmem:[#allocation3 + $0x2e0] sm:$0xff] %v6038
      %6807 = vst [vmem:[#allocation3 + $0x2e8] sm:$0xff] %v6039
      %6808 = vst [vmem:[#allocation3 + $0x2f0] sm:$0xff] %v6040
      %6809 = vst [vmem:[#allocation3 + $0x2f8] sm:$0xff] %v6041
      %6810 = vst [vmem:[#allocation3 + $0x300] sm:$0xff] %v6042
      %6811 = vst [vmem:[#allocation3 + $0x308] sm:$0xff] %v6043
      %6812 = vst [vmem:[#allocation3 + $0x310] sm:$0xff] %v6044
      %6813 = vst [vmem:[#allocation3 + $0x318] sm:$0xff] %v6045
      %6814 = vst [vmem:[#allocation3 + $0x320] sm:$0xff] %v6046
      %6815 = vst [vmem:[#allocation3 + $0x328] sm:$0xff] %v6047
      %6816 = vst [vmem:[#allocation3 + $0x330] sm:$0xff] %v6048
      %6817 = vst [vmem:[#allocation3 + $0x338] sm:$0xff] %v6049
      %6818 = vst [vmem:[#allocation3 + $0x340] sm:$0xff] %v6050
      %6819 = vst [vmem:[#allocation3 + $0x348] sm:$0xff] %v6051
      %6820 = vst [vmem:[#allocation3 + $0x350] sm:$0xff] %v6052
      %6821 = vst [vmem:[#allocation3 + $0x358] sm:$0xff] %v6053
      %6822 = vst [vmem:[#allocation3 + $0x360] sm:$0xff] %v6054
      %6823 = vst [vmem:[#allocation3 + $0x368] sm:$0xff] %v6055
      %6824 = vst [vmem:[#allocation3 + $0x370] sm:$0xff] %v6056
      %6825 = vst [vmem:[#allocation3 + $0x378] sm:$0xff] %v6057
      %6826 = vst [vmem:[#allocation3 + $0x380] sm:$0xff] %v6058
      %6827 = vst [vmem:[#allocation3 + $0x388] sm:$0xff] %v6059
      %6828 = vst [vmem:[#allocation3 + $0x390] sm:$0xff] %v6060
      %6829 = vst [vmem:[#allocation3 + $0x398] sm:$0xff] %v6061
      %6830 = vst [vmem:[#allocation3 + $0x3a0] sm:$0xff] %v6062
      %6831 = vst [vmem:[#allocation3 + $0x3a8] sm:$0xff] %v6063
      %6832 = vst [vmem:[#allocation3 + $0x3b0] sm:$0xff] %v6064
      %6833 = vst [vmem:[#allocation3 + $0x3b8] sm:$0xff] %v6065
      %6834 = vst [vmem:[#allocation3 + $0x3c0] sm:$0xff] %v6066
      %6835 = vst [vmem:[#allocation3 + $0x3c8] sm:$0xff] %v6067
      %6836 = vst [vmem:[#allocation3 + $0x3d0] sm:$0xff] %v6068
      %6837 = vst [vmem:[#allocation3 + $0x3d8] sm:$0xff] %v6069
      %6838 = vst [vmem:[#allocation3 + $0x3e0] sm:$0xff] %v6070
      %6839 = vst [vmem:[#allocation3 + $0x3e8] sm:$0xff] %v6071
      %6840 = vst [vmem:[#allocation3 + $0x3f0] sm:$0xff] %v6072
      %6841 = vst [vmem:[#allocation3 + $0x3f8] sm:$0xff] %v6073
      %6842 = vst [vmem:[#allocation3 + $0x400] sm:$0xff] %v6074
      %6843 = vst [vmem:[#allocation3 + $0x408] sm:$0xff] %v6075
      %6844 = vst [vmem:[#allocation3 + $0x410] sm:$0xff] %v6076
      %6845 = vst [vmem:[#allocation3 + $0x418] sm:$0xff] %v6077
      %6846 = vst [vmem:[#allocation3 + $0x420] sm:$0xff] %v6078
      %6847 = vst [vmem:[#allocation3 + $0x428] sm:$0xff] %v6079
      %6848 = vst [vmem:[#allocation3 + $0x430] sm:$0xff] %v6080
      %6849 = vst [vmem:[#allocation3 + $0x438] sm:$0xff] %v6081
      %6850 = vst [vmem:[#allocation3 + $0x440] sm:$0xff] %v6082
      %6851 = vst [vmem:[#allocation3 + $0x448] sm:$0xff] %v6083
      %6852 = vst [vmem:[#allocation3 + $0x450] sm:$0xff] %v6084
      %6853 = vst [vmem:[#allocation3 + $0x458] sm:$0xff] %v6085
      %6854 = vst [vmem:[#allocation3 + $0x460] sm:$0xff] %v6086
      %6855 = vst [vmem:[#allocation3 + $0x468] sm:$0xff] %v6087
      %6856 = vst [vmem:[#allocation3 + $0x470] sm:$0xff] %v6088
      %6857 = vst [vmem:[#allocation3 + $0x478] sm:$0xff] %v6089
      %6858 = vst [vmem:[#allocation3 + $0x480] sm:$0xff] %v6090
      %6859 = vst [vmem:[#allocation3 + $0x488] sm:$0xff] %v6091
      %6860 = vst [vmem:[#allocation3 + $0x490] sm:$0xff] %v6092
      %6861 = vst [vmem:[#allocation3 + $0x498] sm:$0xff] %v6093
      %6862 = vst [vmem:[#allocation3 + $0x4a0] sm:$0xff] %v6094
      %6863 = vst [vmem:[#allocation3 + $0x4a8] sm:$0xff] %v6095
      %6864 = vst [vmem:[#allocation3 + $0x4b0] sm:$0xff] %v6096
      %6865 = vst [vmem:[#allocation3 + $0x4b8] sm:$0xff] %v6097
      %6866 = vst [vmem:[#allocation3 + $0x4c0] sm:$0xff] %v6098
      %6867 = vst [vmem:[#allocation3 + $0x4c8] sm:$0xff] %v6099
      %6868 = vst [vmem:[#allocation3 + $0x4d0] sm:$0xff] %v6100
      %6869 = vst [vmem:[#allocation3 + $0x4d8] sm:$0xff] %v6101
      %6870 = vst [vmem:[#allocation3 + $0x4e0] sm:$0xff] %v6102
      %6871 = vst [vmem:[#allocation3 + $0x4e8] sm:$0xff] %v6103
      %6872 = vst [vmem:[#allocation3 + $0x4f0] sm:$0xff] %v6104
      %6873 = vst [vmem:[#allocation3 + $0x4f8] sm:$0xff] %v6105
      %6874 = vst [vmem:[#allocation3 + $0x500] sm:$0xff] %v6106
      %6875 = vst [vmem:[#allocation3 + $0x508] sm:$0xff] %v6107
      %6876 = vst [vmem:[#allocation3 + $0x510] sm:$0xff] %v6108
      %6877 = vst [vmem:[#allocation3 + $0x518] sm:$0xff] %v6109
      %6878 = vst [vmem:[#allocation3 + $0x520] sm:$0xff] %v6110
      %6879 = vst [vmem:[#allocation3 + $0x528] sm:$0xff] %v6111
      %6880 = vst [vmem:[#allocation3 + $0x530] sm:$0xff] %v6112
      %6881 = vst [vmem:[#allocation3 + $0x538] sm:$0xff] %v6113
      %6882 = vst [vmem:[#allocation3 + $0x540] sm:$0xff] %v6114
      %6883 = vst [vmem:[#allocation3 + $0x548] sm:$0xff] %v6115
      %6884 = vst [vmem:[#allocation3 + $0x550] sm:$0xff] %v6116
      %6885 = vst [vmem:[#allocation3 + $0x558] sm:$0xff] %v6117
      %6886 = vst [vmem:[#allocation3 + $0x560] sm:$0xff] %v6118
      %6887 = vst [vmem:[#allocation3 + $0x568] sm:$0xff] %v6119
      %6888 = vst [vmem:[#allocation3 + $0x570] sm:$0xff] %v6120
      %6889 = vst [vmem:[#allocation3 + $0x578] sm:$0xff] %v6121
      %6890 = vst [vmem:[#allocation3 + $0x580] sm:$0xff] %v6122
      %6891 = vst [vmem:[#allocation3 + $0x588] sm:$0xff] %v6123
      %6892 = vst [vmem:[#allocation3 + $0x590] sm:$0xff] %v6124
      %6893 = vst [vmem:[#allocation3 + $0x598] sm:$0xff] %v6125
      %6894 = vst [vmem:[#allocation3 + $0x5a0] sm:$0xff] %v6126
      %6895 = vst [vmem:[#allocation3 + $0x5a8] sm:$0xff] %v6127
      %6896 = vst [vmem:[#allocation3 + $0x5b0] sm:$0xff] %v6128
      %6897 = vst [vmem:[#allocation3 + $0x5b8] sm:$0xff] %v6129
      %6898 = vst [vmem:[#allocation3 + $0x5c0] sm:$0xff] %v6130
      %6899 = vst [vmem:[#allocation3 + $0x5c8] sm:$0xff] %v6131
      %6900 = vst [vmem:[#allocation3 + $0x5d0] sm:$0xff] %v6132
      %6901 = vst [vmem:[#allocation3 + $0x5d8] sm:$0xff] %v6133
      %6902 = vst [vmem:[#allocation3 + $0x5e0] sm:$0xff] %v6134
      %6903 = vst [vmem:[#allocation3 + $0x5e8] sm:$0xff] %v6135
      %6904 = vst [vmem:[#allocation3 + $0x5f0] sm:$0xff] %v6136
      %6905 = vst [vmem:[#allocation3 + $0x5f8] sm:$0xff] %v6137
      %6906 = vst [vmem:[#allocation3 + $0x600] sm:$0xff] %v6138
      %6907 = vst [vmem:[#allocation3 + $0x608] sm:$0xff] %v6139
      %6908 = vst [vmem:[#allocation3 + $0x610] sm:$0xff] %v6140
      %6909 = vst [vmem:[#allocation3 + $0x618] sm:$0xff] %v6141
      %6910 = vst [vmem:[#allocation3 + $0x620] sm:$0xff] %v6142
      %6911 = vst [vmem:[#allocation3 + $0x628] sm:$0xff] %v6143
      %6912 = vst [vmem:[#allocation3 + $0x630] sm:$0xff] %v6144
      %6913 = vst [vmem:[#allocation3 + $0x638] sm:$0xff] %v6145
      %6914 = vst [vmem:[#allocation3 + $0x640] sm:$0xff] %v6146
      %6915 = vst [vmem:[#allocation3 + $0x648] sm:$0xff] %v6147
      %6916 = vst [vmem:[#allocation3 + $0x650] sm:$0xff] %v6148
      %6917 = vst [vmem:[#allocation3 + $0x658] sm:$0xff] %v6149
      %6918 = vst [vmem:[#allocation3 + $0x660] sm:$0xff] %v6150
      %6919 = vst [vmem:[#allocation3 + $0x668] sm:$0xff] %v6151
      %6920 = vst [vmem:[#allocation3 + $0x670] sm:$0xff] %v6152
      %6921 = vst [vmem:[#allocation3 + $0x678] sm:$0xff] %v6153
      %6922 = vst [vmem:[#allocation3 + $0x680] sm:$0xff] %v6154
      %6923 = vst [vmem:[#allocation3 + $0x688] sm:$0xff] %v6155
      %6924 = vst [vmem:[#allocation3 + $0x690] sm:$0xff] %v6156
      %6925 = vst [vmem:[#allocation3 + $0x698] sm:$0xff] %v6157
      %6926 = vst [vmem:[#allocation3 + $0x6a0] sm:$0xff] %v6158
      %6927 = vst [vmem:[#allocation3 + $0x6a8] sm:$0xff] %v6159
      %6928 = vst [vmem:[#allocation3 + $0x6b0] sm:$0xff] %v6160
      %6929 = vst [vmem:[#allocation3 + $0x6b8] sm:$0xff] %v6161
      %6930 = vst [vmem:[#allocation3 + $0x6c0] sm:$0xff] %v6162
      %6931 = vst [vmem:[#allocation3 + $0x6c8] sm:$0xff] %v6163
      %6932 = vst [vmem:[#allocation3 + $0x6d0] sm:$0xff] %v6164
      %6933 = vst [vmem:[#allocation3 + $0x6d8] sm:$0xff] %v6165
      %6934 = vst [vmem:[#allocation3 + $0x6e0] sm:$0xff] %v6166
      %6935 = vst [vmem:[#allocation3 + $0x6e8] sm:$0xff] %v6167
      %6936 = vst [vmem:[#allocation3 + $0x6f0] sm:$0xff] %v6168
      %6937 = vst [vmem:[#allocation3 + $0x6f8] sm:$0xff] %v6169
      %6938 = vst [vmem:[#allocation3 + $0x700] sm:$0xff] %v6170
      %6939 = vst [vmem:[#allocation3 + $0x708] sm:$0xff] %v6171
      %6940 = vst [vmem:[#allocation3 + $0x710] sm:$0xff] %v6172
      %6941 = vst [vmem:[#allocation3 + $0x718] sm:$0xff] %v6173
      %6942 = vst [vmem:[#allocation3 + $0x720] sm:$0xff] %v6174
      %6943 = vst [vmem:[#allocation3 + $0x728] sm:$0xff] %v6175
      %6944 = vst [vmem:[#allocation3 + $0x730] sm:$0xff] %v6176
      %6945 = vst [vmem:[#allocation3 + $0x738] sm:$0xff] %v6177
      %6946 = vst [vmem:[#allocation3 + $0x740] sm:$0xff] %v6178
      %6947 = vst [vmem:[#allocation3 + $0x748] sm:$0xff] %v6179
      %6948 = vst [vmem:[#allocation3 + $0x750] sm:$0xff] %v6180
      %6949 = vst [vmem:[#allocation3 + $0x758] sm:$0xff] %v6181
      %6950 = vst [vmem:[#allocation3 + $0x760] sm:$0xff] %v6182
      %6951 = vst [vmem:[#allocation3 + $0x768] sm:$0xff] %v6183
      %6952 = vst [vmem:[#allocation3 + $0x770] sm:$0xff] %v6184
      %6953 = vst [vmem:[#allocation3 + $0x778] sm:$0xff] %v6185
      %6954 = vst [vmem:[#allocation3 + $0x780] sm:$0xff] %v6186
      %6955 = vst [vmem:[#allocation3 + $0x788] sm:$0xff] %v6187
      %6956 = vst [vmem:[#allocation3 + $0x790] sm:$0xff] %v6188
      %6957 = vst [vmem:[#allocation3 + $0x798] sm:$0xff] %v6189
      %6958 = vst [vmem:[#allocation3 + $0x7a0] sm:$0xff] %v6190
      %6959 = vst [vmem:[#allocation3 + $0x7a8] sm:$0xff] %v6191
      %6960 = vst [vmem:[#allocation3 + $0x7b0] sm:$0xff] %v6192
      %6961 = vst [vmem:[#allocation3 + $0x7b8] sm:$0xff] %v6193
      %6962 = vst [vmem:[#allocation3 + $0x7c0] sm:$0xff] %v6194
      %6963 = vst [vmem:[#allocation3 + $0x7c8] sm:$0xff] %v6195
      %6964 = vst [vmem:[#allocation3 + $0x7d0] sm:$0xff] %v6196
      %6965 = vst [vmem:[#allocation3 + $0x7d8] sm:$0xff] %v6197
      %6966 = vst [vmem:[#allocation3 + $0x7e0] sm:$0xff] %v6198
      %6967 = vst [vmem:[#allocation3 + $0x7e8] sm:$0xff] %v6199
      %6968 = vst [vmem:[#allocation3 + $0x7f0] sm:$0xff] %v6200
      %6969 = vst [vmem:[#allocation3 + $0x7f8] sm:$0xff] %v6201
      %6970 = vst [vmem:[#allocation3 + $0x800] sm:$0xff] %v6202
      %6971 = vst [vmem:[#allocation3 + $0x808] sm:$0xff] %v6203
      %6972 = vst [vmem:[#allocation3 + $0x810] sm:$0xff] %v6204
      %6973 = vst [vmem:[#allocation3 + $0x818] sm:$0xff] %v6205
      %6974 = vst [vmem:[#allocation3 + $0x820] sm:$0xff] %v6206
      %6975 = vst [vmem:[#allocation3 + $0x828] sm:$0xff] %v6207
      %6976 = vst [vmem:[#allocation3 + $0x830] sm:$0xff] %v6208
      %6977 = vst [vmem:[#allocation3 + $0x838] sm:$0xff] %v6209
      %6978 = vst [vmem:[#allocation3 + $0x840] sm:$0xff] %v6210
      %6979 = vst [vmem:[#allocation3 + $0x848] sm:$0xff] %v6211
      %6980 = vst [vmem:[#allocation3 + $0x850] sm:$0xff] %v6212
      %6981 = vst [vmem:[#allocation3 + $0x858] sm:$0xff] %v6213
      %6982 = vst [vmem:[#allocation3 + $0x860] sm:$0xff] %v6214
      %6983 = vst [vmem:[#allocation3 + $0x868] sm:$0xff] %v6215
      %6984 = vst [vmem:[#allocation3 + $0x870] sm:$0xff] %v6216
      %6985 = vst [vmem:[#allocation3 + $0x878] sm:$0xff] %v6217
      %6986 = vst [vmem:[#allocation3 + $0x880] sm:$0xff] %v6218
      %6987 = vst [vmem:[#allocation3 + $0x888] sm:$0xff] %v6219
      %6988 = vst [vmem:[#allocation3 + $0x890] sm:$0xff] %v6220
      %6989 = vst [vmem:[#allocation3 + $0x898] sm:$0xff] %v6221
      %6990 = vst [vmem:[#allocation3 + $0x8a0] sm:$0xff] %v6222
      %6991 = vst [vmem:[#allocation3 + $0x8a8] sm:$0xff] %v6223
      %6992 = vst [vmem:[#allocation3 + $0x8b0] sm:$0xff] %v6224
      %6993 = vst [vmem:[#allocation3 + $0x8b8] sm:$0xff] %v6225
      %6994 = vst [vmem:[#allocation3 + $0x8c0] sm:$0xff] %v6226
      %6995 = vst [vmem:[#allocation3 + $0x8c8] sm:$0xff] %v6227
      %6996 = vst [vmem:[#allocation3 + $0x8d0] sm:$0xff] %v6228
      %6997 = vst [vmem:[#allocation3 + $0x8d8] sm:$0xff] %v6229
      %6998 = vst [vmem:[#allocation3 + $0x8e0] sm:$0xff] %v6230
      %6999 = vst [vmem:[#allocation3 + $0x8e8] sm:$0xff] %v6231
      %7000 = vst [vmem:[#allocation3 + $0x8f0] sm:$0xff] %v6232
      %7001 = vst [vmem:[#allocation3 + $0x8f8] sm:$0xff] %v6233
      %7002 = vst [vmem:[#allocation3 + $0x900] sm:$0xff] %v6234
      %7003 = vst [vmem:[#allocation3 + $0x908] sm:$0xff] %v6235
      %7004 = vst [vmem:[#allocation3 + $0x910] sm:$0xff] %v6236
      %7005 = vst [vmem:[#allocation3 + $0x918] sm:$0xff] %v6237
      %7006 = vst [vmem:[#allocation3 + $0x920] sm:$0xff] %v6238
      %7007 = vst [vmem:[#allocation3 + $0x928] sm:$0xff] %v6239
      %7008 = vst [vmem:[#allocation3 + $0x930] sm:$0xff] %v6240
      %7009 = vst [vmem:[#allocation3 + $0x938] sm:$0xff] %v6241
      %7010 = vst [vmem:[#allocation3 + $0x940] sm:$0xff] %v6242
      %7011 = vst [vmem:[#allocation3 + $0x948] sm:$0xff] %v6243
      %7012 = vst [vmem:[#allocation3 + $0x950] sm:$0xff] %v6244
      %7013 = vst [vmem:[#allocation3 + $0x958] sm:$0xff] %v6245
      %7014 = vst [vmem:[#allocation3 + $0x960] sm:$0xff] %v6246
      %7015 = vst [vmem:[#allocation3 + $0x968] sm:$0xff] %v6247
      %7016 = vst [vmem:[#allocation3 + $0x970] sm:$0xff] %v6248
      %7017 = vst [vmem:[#allocation3 + $0x978] sm:$0xff] %v6249
      %7018 = vst [vmem:[#allocation3 + $0x980] sm:$0xff] %v6250
      %7019 = vst [vmem:[#allocation3 + $0x988] sm:$0xff] %v6251
      %7020 = vst [vmem:[#allocation3 + $0x990] sm:$0xff] %v6252
      %7021 = vst [vmem:[#allocation3 + $0x998] sm:$0xff] %v6253
      %7022 = vst [vmem:[#allocation3 + $0x9a0] sm:$0xff] %v6254
      %7023 = vst [vmem:[#allocation3 + $0x9a8] sm:$0xff] %v6255
      %7024 = vst [vmem:[#allocation3 + $0x9b0] sm:$0xff] %v6256
      %7025 = vst [vmem:[#allocation3 + $0x9b8] sm:$0xff] %v6257
      %7026 = vst [vmem:[#allocation3 + $0x9c0] sm:$0xff] %v6258
      %7027 = vst [vmem:[#allocation3 + $0x9c8] sm:$0xff] %v6259
      %7028 = vst [vmem:[#allocation3 + $0x9d0] sm:$0xff] %v6260
      %7029 = vst [vmem:[#allocation3 + $0x9d8] sm:$0xff] %v6261
      %7030 = vst [vmem:[#allocation3 + $0x9e0] sm:$0xff] %v6262
      %7031 = vst [vmem:[#allocation3 + $0x9e8] sm:$0xff] %v6263
      %7032 = vst [vmem:[#allocation3 + $0x9f0] sm:$0xff] %v6264
      %7033 = vst [vmem:[#allocation3 + $0x9f8] sm:$0xff] %v6265
      %7034 = vst [vmem:[#allocation3 + $0xa00] sm:$0xff] %v6266
      %7035 = vst [vmem:[#allocation3 + $0xa08] sm:$0xff] %v6267
      %7036 = vst [vmem:[#allocation3 + $0xa10] sm:$0xff] %v6268
      %7037 = vst [vmem:[#allocation3 + $0xa18] sm:$0xff] %v6269
      %7038 = vst [vmem:[#allocation3 + $0xa20] sm:$0xff] %v6270
      %7039 = vst [vmem:[#allocation3 + $0xa28] sm:$0xff] %v6271
      %7040 = vst [vmem:[#allocation3 + $0xa30] sm:$0xff] %v6272
      %7041 = vst [vmem:[#allocation3 + $0xa38] sm:$0xff] %v6273
      %7042 = vst [vmem:[#allocation3 + $0xa40] sm:$0xff] %v6274
      %7043 = vst [vmem:[#allocation3 + $0xa48] sm:$0xff] %v6275
      %7044 = vst [vmem:[#allocation3 + $0xa50] sm:$0xff] %v6276
      %7045 = vst [vmem:[#allocation3 + $0xa58] sm:$0xff] %v6277
      %7046 = vst [vmem:[#allocation3 + $0xa60] sm:$0xff] %v6278
      %7047 = vst [vmem:[#allocation3 + $0xa68] sm:$0xff] %v6279
      %7048 = vst [vmem:[#allocation3 + $0xa70] sm:$0xff] %v6280
      %7049 = vst [vmem:[#allocation3 + $0xa78] sm:$0xff] %v6281
      %7050 = vst [vmem:[#allocation3 + $0xa80] sm:$0xff] %v6282
      %7051 = vst [vmem:[#allocation3 + $0xa88] sm:$0xff] %v6283
      %7052 = vst [vmem:[#allocation3 + $0xa90] sm:$0xff] %v6284
      %7053 = vst [vmem:[#allocation3 + $0xa98] sm:$0xff] %v6285
      %7054 = vst [vmem:[#allocation3 + $0xaa0] sm:$0xff] %v6286
      %7055 = vst [vmem:[#allocation3 + $0xaa8] sm:$0xff] %v6287
      %7056 = vst [vmem:[#allocation3 + $0xab0] sm:$0xff] %v6288
      %7057 = vst [vmem:[#allocation3 + $0xab8] sm:$0xff] %v6289
      %7058 = vst [vmem:[#allocation3 + $0xac0] sm:$0xff] %v6290
      %7059 = vst [vmem:[#allocation3 + $0xac8] sm:$0xff] %v6291
      %7060 = vst [vmem:[#allocation3 + $0xad0] sm:$0xff] %v6292
      %7061 = vst [vmem:[#allocation3 + $0xad8] sm:$0xff] %v6293
      %7062 = vst [vmem:[#allocation3 + $0xae0] sm:$0xff] %v6294
      %7063 = vst [vmem:[#allocation3 + $0xae8] sm:$0xff] %v6295
      %7064 = vst [vmem:[#allocation3 + $0xaf0] sm:$0xff] %v6296
      %7065 = vst [vmem:[#allocation3 + $0xaf8] sm:$0xff] %v6297
      %7066 = vst [vmem:[#allocation3 + $0xb00] sm:$0xff] %v6298
      %7067 = vst [vmem:[#allocation3 + $0xb08] sm:$0xff] %v6299
      %7068 = vst [vmem:[#allocation3 + $0xb10] sm:$0xff] %v6300
      %7069 = vst [vmem:[#allocation3 + $0xb18] sm:$0xff] %v6301
      %7070 = vst [vmem:[#allocation3 + $0xb20] sm:$0xff] %v6302
      %7071 = vst [vmem:[#allocation3 + $0xb28] sm:$0xff] %v6303
      %7072 = vst [vmem:[#allocation3 + $0xb30] sm:$0xff] %v6304
      %7073 = vst [vmem:[#allocation3 + $0xb38] sm:$0xff] %v6305
      %7074 = vst [vmem:[#allocation3 + $0xb40] sm:$0xff] %v6306
      %7075 = vst [vmem:[#allocation3 + $0xb48] sm:$0xff] %v6307
      %7076 = vst [vmem:[#allocation3 + $0xb50] sm:$0xff] %v6308
      %7077 = vst [vmem:[#allocation3 + $0xb58] sm:$0xff] %v6309
      %7078 = vst [vmem:[#allocation3 + $0xb60] sm:$0xff] %v6310
      %7079 = vst [vmem:[#allocation3 + $0xb68] sm:$0xff] %v6311
      %7080 = vst [vmem:[#allocation3 + $0xb70] sm:$0xff] %v6312
      %7081 = vst [vmem:[#allocation3 + $0xb78] sm:$0xff] %v6313
      %7082 = vst [vmem:[#allocation3 + $0xb80] sm:$0xff] %v6314
      %7083 = vst [vmem:[#allocation3 + $0xb88] sm:$0xff] %v6315
      %7084 = vst [vmem:[#allocation3 + $0xb90] sm:$0xff] %v6316
      %7085 = vst [vmem:[#allocation3 + $0xb98] sm:$0xff] %v6317
      %7086 = vst [vmem:[#allocation3 + $0xba0] sm:$0xff] %v6318
      %7087 = vst [vmem:[#allocation3 + $0xba8] sm:$0xff] %v6319
      %7088 = vst [vmem:[#allocation3 + $0xbb0] sm:$0xff] %v6320
      %7089 = vst [vmem:[#allocation3 + $0xbb8] sm:$0xff] %v6321
      %7090 = vst [vmem:[#allocation3 + $0xbc0] sm:$0xff] %v6322
      %7091 = vst [vmem:[#allocation3 + $0xbc8] sm:$0xff] %v6323
      %7092 = vst [vmem:[#allocation3 + $0xbd0] sm:$0xff] %v6324
      %7093 = vst [vmem:[#allocation3 + $0xbd8] sm:$0xff] %v6325
      %7094 = vst [vmem:[#allocation3 + $0xbe0] sm:$0xff] %v6326
      %7095 = vst [vmem:[#allocation3 + $0xbe8] sm:$0xff] %v6327
      %7096 = vst [vmem:[#allocation3 + $0xbf0] sm:$0xff] %v6328
      %7097 = vst [vmem:[#allocation3 + $0xbf8] sm:$0xff] %v6329
    $region81: #{dae_forward.1} parent=1 // pred_fallthru
      _
    %v7098 = vld [vmem:[%s0] sm:$0xff]
    %v7099 = vld [vmem:[%s0 + $0x8] sm:$0xff]
    %v7100 = vld [vmem:[%s0 + $0x10] sm:$0xff]
    %v7101 = vld [vmem:[%s0 + $0x18] sm:$0xff]
    %v7102 = vld [vmem:[%s0 + $0x20] sm:$0xff]
    %v7103 = vld [vmem:[%s0 + $0x28] sm:$0xff]
    %v7104 = vld [vmem:[%s1] sm:$0xff]
    %v7105 = vld [vmem:[%s1 + $0x8] sm:$0xff]
    %v7106 = vld [vmem:[%s1 + $0x10] sm:$0xff]
    %v7107 = vld [vmem:[%s1 + $0x18] sm:$0xff]
    %v7108 = vld [vmem:[%s1 + $0x20] sm:$0xff]
    %v7109 = vld [vmem:[%s1 + $0x28] sm:$0xff]
    %v7110 = vmul.f32 %v7104, 0.1
    %v7111 = vmul.f32 %v7105, 0.1
    %v7112 = vmul.f32 %v7106, 0.1
    %v7113 = vmul.f32 %v7107, 0.1
    %v7114 = vmul.f32 %v7108, 0.1
    %v7115 = vmul.f32 %v7109, 0.1
    %v7116 = vadd.f32 %v7098, %v7110
    %v7117 = vadd.f32 %v7099, %v7111
    %v7118 = vadd.f32 %v7100, %v7112
    %v7119 = vadd.f32 %v7101, %v7113
    %v7120 = vadd.f32 %v7102, %v7114
    %v7121 = vadd.f32 %v7103, %v7115
    %v7122 = vld [vmem:[#allocation4] sm:$0xff]
    %v7123 = vld [vmem:[#allocation4 + $0x8] sm:$0xff]
    %v7124 = vld [vmem:[#allocation4 + $0x10] sm:$0xff]
    %v7125 = vld [vmem:[#allocation4 + $0x18] sm:$0xff]
    %v7126 = vld [vmem:[#allocation4 + $0x20] sm:$0xff]
    %v7127 = vld [vmem:[#allocation4 + $0x28] sm:$0xff]
    %v7128 = vld [vmem:[#allocation4 + $0x30] sm:$0xff]
    %v7129 = vld [vmem:[#allocation4 + $0x38] sm:$0xff]
    %v7130 = vld [vmem:[#allocation4 + $0x40] sm:$0xff]
    %v7131 = vld [vmem:[#allocation4 + $0x48] sm:$0xff]
    %v7132 = vld [vmem:[#allocation4 + $0x50] sm:$0xff]
    %v7133 = vld [vmem:[#allocation4 + $0x58] sm:$0xff]
    %v7134 = vld [vmem:[#allocation4 + $0x60] sm:$0xff]
    %v7135 = vld [vmem:[#allocation4 + $0x68] sm:$0xff]
    %v7136 = vld [vmem:[#allocation4 + $0x70] sm:$0xff]
    %v7137 = vld [vmem:[#allocation4 + $0x78] sm:$0xff]
    %v7138 = vld [vmem:[#allocation4 + $0x80] sm:$0xff]
    %v7139 = vld [vmem:[#allocation4 + $0x88] sm:$0xff]
    %v7140 = vld [vmem:[#allocation4 + $0x90] sm:$0xff]
    %v7141 = vld [vmem:[#allocation4 + $0x98] sm:$0xff]
    %v7142 = vld [vmem:[#allocation4 + $0xa0] sm:$0xff]
    %v7143 = vld [vmem:[#allocation4 + $0xa8] sm:$0xff]
    %v7144 = vld [vmem:[#allocation4 + $0xb0] sm:$0xff]
    %v7145 = vld [vmem:[#allocation4 + $0xb8] sm:$0xff]
    %v7146 = vld [vmem:[#allocation4 + $0xc0] sm:$0xff]
    %v7147 = vld [vmem:[#allocation4 + $0xc8] sm:$0xff]
    %v7148 = vld [vmem:[#allocation4 + $0xd0] sm:$0xff]
    %v7149 = vld [vmem:[#allocation4 + $0xd8] sm:$0xff]
    %v7150 = vld [vmem:[#allocation4 + $0xe0] sm:$0xff]
    %v7151 = vld [vmem:[#allocation4 + $0xe8] sm:$0xff]
    %v7152 = vld [vmem:[#allocation4 + $0xf0] sm:$0xff]
    %v7153 = vld [vmem:[#allocation4 + $0xf8] sm:$0xff]
    %v7154 = vld [vmem:[#allocation4 + $0x100] sm:$0xff]
    %v7155 = vld [vmem:[#allocation4 + $0x108] sm:$0xff]
    %v7156 = vld [vmem:[#allocation4 + $0x110] sm:$0xff]
    %v7157 = vld [vmem:[#allocation4 + $0x118] sm:$0xff]
    %v7158 = vld [vmem:[#allocation4 + $0x120] sm:$0xff]
    %v7159 = vld [vmem:[#allocation4 + $0x128] sm:$0xff]
    %v7160 = vld [vmem:[#allocation4 + $0x130] sm:$0xff]
    %v7161 = vld [vmem:[#allocation4 + $0x138] sm:$0xff]
    %v7162 = vld [vmem:[#allocation4 + $0x140] sm:$0xff]
    %v7163 = vld [vmem:[#allocation4 + $0x148] sm:$0xff]
    %v7164 = vld [vmem:[#allocation4 + $0x150] sm:$0xff]
    %v7165 = vld [vmem:[#allocation4 + $0x158] sm:$0xff]
    %v7166 = vld [vmem:[#allocation4 + $0x160] sm:$0xff]
    %v7167 = vld [vmem:[#allocation4 + $0x168] sm:$0xff]
    %v7168 = vld [vmem:[#allocation4 + $0x170] sm:$0xff]
    %v7169 = vld [vmem:[#allocation4 + $0x178] sm:$0xff]
    %v7170 = vld [vmem:[#allocation4 + $0x180] sm:$0xff]
    %v7171 = vld [vmem:[#allocation4 + $0x188] sm:$0xff]
    %v7172 = vld [vmem:[#allocation4 + $0x190] sm:$0xff]
    %v7173 = vld [vmem:[#allocation4 + $0x198] sm:$0xff]
    %v7174 = vld [vmem:[#allocation4 + $0x1a0] sm:$0xff]
    %v7175 = vld [vmem:[#allocation4 + $0x1a8] sm:$0xff]
    %v7176 = vld [vmem:[#allocation4 + $0x1b0] sm:$0xff]
    %v7177 = vld [vmem:[#allocation4 + $0x1b8] sm:$0xff]
    %v7178 = vld [vmem:[#allocation4 + $0x1c0] sm:$0xff]
    %v7179 = vld [vmem:[#allocation4 + $0x1c8] sm:$0xff]
    %v7180 = vld [vmem:[#allocation4 + $0x1d0] sm:$0xff]
    %v7181 = vld [vmem:[#allocation4 + $0x1d8] sm:$0xff]
    %v7182 = vld [vmem:[#allocation4 + $0x1e0] sm:$0xff]
    %v7183 = vld [vmem:[#allocation4 + $0x1e8] sm:$0xff]
    %v7184 = vld [vmem:[#allocation4 + $0x1f0] sm:$0xff]
    %v7185 = vld [vmem:[#allocation4 + $0x1f8] sm:$0xff]
    %v7186 = vld [vmem:[#allocation4 + $0x200] sm:$0xff]
    %v7187 = vld [vmem:[#allocation4 + $0x208] sm:$0xff]
    %v7188 = vld [vmem:[#allocation4 + $0x210] sm:$0xff]
    %v7189 = vld [vmem:[#allocation4 + $0x218] sm:$0xff]
    %v7190 = vld [vmem:[#allocation4 + $0x220] sm:$0xff]
    %v7191 = vld [vmem:[#allocation4 + $0x228] sm:$0xff]
    %v7192 = vld [vmem:[#allocation4 + $0x230] sm:$0xff]
    %v7193 = vld [vmem:[#allocation4 + $0x238] sm:$0xff]
    %v7194 = vld [vmem:[#allocation4 + $0x240] sm:$0xff]
    %v7195 = vld [vmem:[#allocation4 + $0x248] sm:$0xff]
    %v7196 = vld [vmem:[#allocation4 + $0x250] sm:$0xff]
    %v7197 = vld [vmem:[#allocation4 + $0x258] sm:$0xff]
    %v7198 = vld [vmem:[#allocation4 + $0x260] sm:$0xff]
    %v7199 = vld [vmem:[#allocation4 + $0x268] sm:$0xff]
    %v7200 = vld [vmem:[#allocation4 + $0x270] sm:$0xff]
    %v7201 = vld [vmem:[#allocation4 + $0x278] sm:$0xff]
    %v7202 = vld [vmem:[#allocation4 + $0x280] sm:$0xff]
    %v7203 = vld [vmem:[#allocation4 + $0x288] sm:$0xff]
    %v7204 = vld [vmem:[#allocation4 + $0x290] sm:$0xff]
    %v7205 = vld [vmem:[#allocation4 + $0x298] sm:$0xff]
    %v7206 = vld [vmem:[#allocation4 + $0x2a0] sm:$0xff]
    %v7207 = vld [vmem:[#allocation4 + $0x2a8] sm:$0xff]
    %v7208 = vld [vmem:[#allocation4 + $0x2b0] sm:$0xff]
    %v7209 = vld [vmem:[#allocation4 + $0x2b8] sm:$0xff]
    %v7210 = vld [vmem:[#allocation4 + $0x2c0] sm:$0xff]
    %v7211 = vld [vmem:[#allocation4 + $0x2c8] sm:$0xff]
    %v7212 = vld [vmem:[#allocation4 + $0x2d0] sm:$0xff]
    %v7213 = vld [vmem:[#allocation4 + $0x2d8] sm:$0xff]
    %v7214 = vld [vmem:[#allocation4 + $0x2e0] sm:$0xff]
    %v7215 = vld [vmem:[#allocation4 + $0x2e8] sm:$0xff]
    %v7216 = vld [vmem:[#allocation4 + $0x2f0] sm:$0xff]
    %v7217 = vld [vmem:[#allocation4 + $0x2f8] sm:$0xff]
    %v7218 = vld [vmem:[#allocation9] ss:$8 sm:$0x3]
    %v7219 = vpack.c.bf16 %v7116, %v7116
    %v7220 = vpack.c.bf16 %v7117, %v7117
    %v7221 = vpack.c.bf16 %v7118, %v7118
    %v7222 = vpack.c.bf16 %v7119, %v7119
    %v7223 = vpack.c.bf16 %v7120, %v7120
    %v7224 = vpack.c.bf16 %v7121, %v7121
    %v7226 = vlaneseq
    %v7227 = vshrl.u32 %v7226, 7
    %v7228 = vsub.s32 0, %v7227
    %v7229 = vrot.slane %v7218, %v7228
    %v7230 = vlaneseq
    %v7231 = vshrl.u32 %v7230, 7
    %v7232 = vsub.s32 1, %v7231
    %v7233 = vrot.slane %v7218, %v7232
    %v7332 = vunpack.c.l.b16 %v7122
    %v7333 = vunpack.c.h.b16 %v7122
    %v7334 = vunpack.c.l.b16 %v7123
    %v7335 = vunpack.c.h.b16 %v7123
    %v7336 = vunpack.c.l.b16 %v7124
    %v7337 = vunpack.c.h.b16 %v7124
    %v7338 = vunpack.c.l.b16 %v7125
    %v7339 = vunpack.c.h.b16 %v7125
    %v7340 = vunpack.c.l.b16 %v7126
    %v7341 = vunpack.c.h.b16 %v7126
    %v7342 = vunpack.c.l.b16 %v7127
    %v7343 = vunpack.c.h.b16 %v7127
    %v7344 = vunpack.c.l.b16 %v7128
    %v7345 = vunpack.c.h.b16 %v7128
    %v7346 = vunpack.c.l.b16 %v7129
    %v7347 = vunpack.c.h.b16 %v7129
    %v7348 = vunpack.c.l.b16 %v7130
    %v7349 = vunpack.c.h.b16 %v7130
    %v7350 = vunpack.c.l.b16 %v7131
    %v7351 = vunpack.c.h.b16 %v7131
    %v7352 = vunpack.c.l.b16 %v7132
    %v7353 = vunpack.c.h.b16 %v7132
    %v7354 = vunpack.c.l.b16 %v7133
    %v7355 = vunpack.c.h.b16 %v7133
    %v7356 = vunpack.c.l.b16 %v7134
    %v7357 = vunpack.c.h.b16 %v7134
    %v7358 = vunpack.c.l.b16 %v7135
    %v7359 = vunpack.c.h.b16 %v7135
    %v7360 = vunpack.c.l.b16 %v7136
    %v7361 = vunpack.c.h.b16 %v7136
    %v7362 = vunpack.c.l.b16 %v7137
    %v7363 = vunpack.c.h.b16 %v7137
    %v7364 = vunpack.c.l.b16 %v7138
    %v7365 = vunpack.c.h.b16 %v7138
    %v7366 = vunpack.c.l.b16 %v7139
    %v7367 = vunpack.c.h.b16 %v7139
    %v7368 = vunpack.c.l.b16 %v7140
    %v7369 = vunpack.c.h.b16 %v7140
    %v7370 = vunpack.c.l.b16 %v7141
    %v7371 = vunpack.c.h.b16 %v7141
    %v7372 = vunpack.c.l.b16 %v7142
    %v7373 = vunpack.c.h.b16 %v7142
    %v7374 = vunpack.c.l.b16 %v7143
    %v7375 = vunpack.c.h.b16 %v7143
    %v7376 = vunpack.c.l.b16 %v7144
    %v7377 = vunpack.c.h.b16 %v7144
    %v7378 = vunpack.c.l.b16 %v7145
    %v7379 = vunpack.c.h.b16 %v7145
    %v7380 = vunpack.c.l.b16 %v7146
    %v7381 = vunpack.c.h.b16 %v7146
    %v7382 = vunpack.c.l.b16 %v7147
    %v7383 = vunpack.c.h.b16 %v7147
    %v7384 = vunpack.c.l.b16 %v7148
    %v7385 = vunpack.c.h.b16 %v7148
    %v7386 = vunpack.c.l.b16 %v7149
    %v7387 = vunpack.c.h.b16 %v7149
    %v7388 = vunpack.c.l.b16 %v7150
    %v7389 = vunpack.c.h.b16 %v7150
    %v7390 = vunpack.c.l.b16 %v7151
    %v7391 = vunpack.c.h.b16 %v7151
    %v7392 = vunpack.c.l.b16 %v7152
    %v7393 = vunpack.c.h.b16 %v7152
    %v7394 = vunpack.c.l.b16 %v7153
    %v7395 = vunpack.c.h.b16 %v7153
    %v7396 = vunpack.c.l.b16 %v7154
    %v7397 = vunpack.c.h.b16 %v7154
    %v7398 = vunpack.c.l.b16 %v7155
    %v7399 = vunpack.c.h.b16 %v7155
    %v7400 = vunpack.c.l.b16 %v7156
    %v7401 = vunpack.c.h.b16 %v7156
    %v7402 = vunpack.c.l.b16 %v7157
    %v7403 = vunpack.c.h.b16 %v7157
    %v7404 = vunpack.c.l.b16 %v7158
    %v7405 = vunpack.c.h.b16 %v7158
    %v7406 = vunpack.c.l.b16 %v7159
    %v7407 = vunpack.c.h.b16 %v7159
    %v7408 = vunpack.c.l.b16 %v7160
    %v7409 = vunpack.c.h.b16 %v7160
    %v7410 = vunpack.c.l.b16 %v7161
    %v7411 = vunpack.c.h.b16 %v7161
    %v7412 = vunpack.c.l.b16 %v7162
    %v7413 = vunpack.c.h.b16 %v7162
    %v7414 = vunpack.c.l.b16 %v7163
    %v7415 = vunpack.c.h.b16 %v7163
    %v7416 = vunpack.c.l.b16 %v7164
    %v7417 = vunpack.c.h.b16 %v7164
    %v7418 = vunpack.c.l.b16 %v7165
    %v7419 = vunpack.c.h.b16 %v7165
    %v7420 = vunpack.c.l.b16 %v7166
    %v7421 = vunpack.c.h.b16 %v7166
    %v7422 = vunpack.c.l.b16 %v7167
    %v7423 = vunpack.c.h.b16 %v7167
    %v7424 = vunpack.c.l.b16 %v7168
    %v7425 = vunpack.c.h.b16 %v7168
    %v7426 = vunpack.c.l.b16 %v7169
    %v7427 = vunpack.c.h.b16 %v7169
    %v7428 = vunpack.c.l.b16 %v7170
    %v7429 = vunpack.c.h.b16 %v7170
    %v7430 = vunpack.c.l.b16 %v7171
    %v7431 = vunpack.c.h.b16 %v7171
    %v7432 = vunpack.c.l.b16 %v7172
    %v7433 = vunpack.c.h.b16 %v7172
    %v7434 = vunpack.c.l.b16 %v7173
    %v7435 = vunpack.c.h.b16 %v7173
    %v7436 = vunpack.c.l.b16 %v7174
    %v7437 = vunpack.c.h.b16 %v7174
    %v7438 = vunpack.c.l.b16 %v7175
    %v7439 = vunpack.c.h.b16 %v7175
    %v7440 = vunpack.c.l.b16 %v7176
    %v7441 = vunpack.c.h.b16 %v7176
    %v7442 = vunpack.c.l.b16 %v7177
    %v7443 = vunpack.c.h.b16 %v7177
    %v7444 = vunpack.c.l.b16 %v7178
    %v7445 = vunpack.c.h.b16 %v7178
    %v7446 = vunpack.c.l.b16 %v7179
    %v7447 = vunpack.c.h.b16 %v7179
    %v7448 = vunpack.c.l.b16 %v7180
    %v7449 = vunpack.c.h.b16 %v7180
    %v7450 = vunpack.c.l.b16 %v7181
    %v7451 = vunpack.c.h.b16 %v7181
    %v7452 = vunpack.c.l.b16 %v7182
    %v7453 = vunpack.c.h.b16 %v7182
    %v7454 = vunpack.c.l.b16 %v7183
    %v7455 = vunpack.c.h.b16 %v7183
    %v7456 = vunpack.c.l.b16 %v7184
    %v7457 = vunpack.c.h.b16 %v7184
    %v7458 = vunpack.c.l.b16 %v7185
    %v7459 = vunpack.c.h.b16 %v7185
    %v7460 = vunpack.c.l.b16 %v7186
    %v7461 = vunpack.c.h.b16 %v7186
    %v7462 = vunpack.c.l.b16 %v7187
    %v7463 = vunpack.c.h.b16 %v7187
    %v7464 = vunpack.c.l.b16 %v7188
    %v7465 = vunpack.c.h.b16 %v7188
    %v7466 = vunpack.c.l.b16 %v7189
    %v7467 = vunpack.c.h.b16 %v7189
    %v7468 = vunpack.c.l.b16 %v7190
    %v7469 = vunpack.c.h.b16 %v7190
    %v7470 = vunpack.c.l.b16 %v7191
    %v7471 = vunpack.c.h.b16 %v7191
    %v7472 = vunpack.c.l.b16 %v7192
    %v7473 = vunpack.c.h.b16 %v7192
    %v7474 = vunpack.c.l.b16 %v7193
    %v7475 = vunpack.c.h.b16 %v7193
    %v7476 = vunpack.c.l.b16 %v7194
    %v7477 = vunpack.c.h.b16 %v7194
    %v7478 = vunpack.c.l.b16 %v7195
    %v7479 = vunpack.c.h.b16 %v7195
    %v7480 = vunpack.c.l.b16 %v7196
    %v7481 = vunpack.c.h.b16 %v7196
    %v7482 = vunpack.c.l.b16 %v7197
    %v7483 = vunpack.c.h.b16 %v7197
    %v7484 = vunpack.c.l.b16 %v7198
    %v7485 = vunpack.c.h.b16 %v7198
    %v7486 = vunpack.c.l.b16 %v7199
    %v7487 = vunpack.c.h.b16 %v7199
    %v7488 = vunpack.c.l.b16 %v7200
    %v7489 = vunpack.c.h.b16 %v7200
    %v7490 = vunpack.c.l.b16 %v7201
    %v7491 = vunpack.c.h.b16 %v7201
    %v7492 = vunpack.c.l.b16 %v7202
    %v7493 = vunpack.c.h.b16 %v7202
    %v7494 = vunpack.c.l.b16 %v7203
    %v7495 = vunpack.c.h.b16 %v7203
    %v7496 = vunpack.c.l.b16 %v7204
    %v7497 = vunpack.c.h.b16 %v7204
    %v7498 = vunpack.c.l.b16 %v7205
    %v7499 = vunpack.c.h.b16 %v7205
    %v7500 = vunpack.c.l.b16 %v7206
    %v7501 = vunpack.c.h.b16 %v7206
    %v7502 = vunpack.c.l.b16 %v7207
    %v7503 = vunpack.c.h.b16 %v7207
    %v7504 = vunpack.c.l.b16 %v7208
    %v7505 = vunpack.c.h.b16 %v7208
    %v7506 = vunpack.c.l.b16 %v7209
    %v7507 = vunpack.c.h.b16 %v7209
    %v7508 = vunpack.c.l.b16 %v7210
    %v7509 = vunpack.c.h.b16 %v7210
    %v7510 = vunpack.c.l.b16 %v7211
    %v7511 = vunpack.c.h.b16 %v7211
    %v7512 = vunpack.c.l.b16 %v7212
    %v7513 = vunpack.c.h.b16 %v7212
    %v7514 = vunpack.c.l.b16 %v7213
    %v7515 = vunpack.c.h.b16 %v7213
    %v7516 = vunpack.c.l.b16 %v7214
    %v7517 = vunpack.c.h.b16 %v7214
    %v7518 = vunpack.c.l.b16 %v7215
    %v7519 = vunpack.c.h.b16 %v7215
    %v7520 = vunpack.c.l.b16 %v7216
    %v7521 = vunpack.c.h.b16 %v7216
    %v7522 = vunpack.c.l.b16 %v7217
    %v7523 = vunpack.c.h.b16 %v7217
    %v7524 = vpack.c.b16 %v7334, %v7332
    %v7525 = vpack.c.b16 %v7335, %v7333
    %v7526 = vpack.c.b16 %v7338, %v7336
    %v7527 = vpack.c.b16 %v7339, %v7337
    %v7528 = vpack.c.b16 %v7342, %v7340
    %v7529 = vpack.c.b16 %v7343, %v7341
    %v7530 = vpack.c.b16 %v7346, %v7344
    %v7531 = vpack.c.b16 %v7347, %v7345
    %v7532 = vpack.c.b16 %v7350, %v7348
    %v7533 = vpack.c.b16 %v7351, %v7349
    %v7534 = vpack.c.b16 %v7354, %v7352
    %v7535 = vpack.c.b16 %v7355, %v7353
    %v7536 = vpack.c.b16 %v7358, %v7356
    %v7537 = vpack.c.b16 %v7359, %v7357
    %v7538 = vpack.c.b16 %v7362, %v7360
    %v7539 = vpack.c.b16 %v7363, %v7361
    %v7540 = vpack.c.b16 %v7366, %v7364
    %v7541 = vpack.c.b16 %v7367, %v7365
    %v7542 = vpack.c.b16 %v7370, %v7368
    %v7543 = vpack.c.b16 %v7371, %v7369
    %v7544 = vpack.c.b16 %v7374, %v7372
    %v7545 = vpack.c.b16 %v7375, %v7373
    %v7546 = vpack.c.b16 %v7378, %v7376
    %v7547 = vpack.c.b16 %v7379, %v7377
    %v7548 = vpack.c.b16 %v7382, %v7380
    %v7549 = vpack.c.b16 %v7383, %v7381
    %v7550 = vpack.c.b16 %v7386, %v7384
    %v7551 = vpack.c.b16 %v7387, %v7385
    %v7552 = vpack.c.b16 %v7390, %v7388
    %v7553 = vpack.c.b16 %v7391, %v7389
    %v7554 = vpack.c.b16 %v7394, %v7392
    %v7555 = vpack.c.b16 %v7395, %v7393
    %v7556 = vpack.c.b16 %v7398, %v7396
    %v7557 = vpack.c.b16 %v7399, %v7397
    %v7558 = vpack.c.b16 %v7402, %v7400
    %v7559 = vpack.c.b16 %v7403, %v7401
    %v7560 = vpack.c.b16 %v7406, %v7404
    %v7561 = vpack.c.b16 %v7407, %v7405
    %v7562 = vpack.c.b16 %v7410, %v7408
    %v7563 = vpack.c.b16 %v7411, %v7409
    %v7564 = vpack.c.b16 %v7414, %v7412
    %v7565 = vpack.c.b16 %v7415, %v7413
    %v7566 = vpack.c.b16 %v7418, %v7416
    %v7567 = vpack.c.b16 %v7419, %v7417
    %v7568 = vpack.c.b16 %v7422, %v7420
    %v7569 = vpack.c.b16 %v7423, %v7421
    %v7570 = vpack.c.b16 %v7426, %v7424
    %v7571 = vpack.c.b16 %v7427, %v7425
    %v7572 = vpack.c.b16 %v7430, %v7428
    %v7573 = vpack.c.b16 %v7431, %v7429
    %v7574 = vpack.c.b16 %v7434, %v7432
    %v7575 = vpack.c.b16 %v7435, %v7433
    %v7576 = vpack.c.b16 %v7438, %v7436
    %v7577 = vpack.c.b16 %v7439, %v7437
    %v7578 = vpack.c.b16 %v7442, %v7440
    %v7579 = vpack.c.b16 %v7443, %v7441
    %v7580 = vpack.c.b16 %v7446, %v7444
    %v7581 = vpack.c.b16 %v7447, %v7445
    %v7582 = vpack.c.b16 %v7450, %v7448
    %v7583 = vpack.c.b16 %v7451, %v7449
    %v7584 = vpack.c.b16 %v7454, %v7452
    %v7585 = vpack.c.b16 %v7455, %v7453
    %v7586 = vpack.c.b16 %v7458, %v7456
    %v7587 = vpack.c.b16 %v7459, %v7457
    %v7588 = vpack.c.b16 %v7462, %v7460
    %v7589 = vpack.c.b16 %v7463, %v7461
    %v7590 = vpack.c.b16 %v7466, %v7464
    %v7591 = vpack.c.b16 %v7467, %v7465
    %v7592 = vpack.c.b16 %v7470, %v7468
    %v7593 = vpack.c.b16 %v7471, %v7469
    %v7594 = vpack.c.b16 %v7474, %v7472
    %v7595 = vpack.c.b16 %v7475, %v7473
    %v7596 = vpack.c.b16 %v7478, %v7476
    %v7597 = vpack.c.b16 %v7479, %v7477
    %v7598 = vpack.c.b16 %v7482, %v7480
    %v7599 = vpack.c.b16 %v7483, %v7481
    %v7600 = vpack.c.b16 %v7486, %v7484
    %v7601 = vpack.c.b16 %v7487, %v7485
    %v7602 = vpack.c.b16 %v7490, %v7488
    %v7603 = vpack.c.b16 %v7491, %v7489
    %v7604 = vpack.c.b16 %v7494, %v7492
    %v7605 = vpack.c.b16 %v7495, %v7493
    %v7606 = vpack.c.b16 %v7498, %v7496
    %v7607 = vpack.c.b16 %v7499, %v7497
    %v7608 = vpack.c.b16 %v7502, %v7500
    %v7609 = vpack.c.b16 %v7503, %v7501
    %v7610 = vpack.c.b16 %v7506, %v7504
    %v7611 = vpack.c.b16 %v7507, %v7505
    %v7612 = vpack.c.b16 %v7510, %v7508
    %v7613 = vpack.c.b16 %v7511, %v7509
    %v7614 = vpack.c.b16 %v7514, %v7512
    %v7615 = vpack.c.b16 %v7515, %v7513
    %v7616 = vpack.c.b16 %v7518, %v7516
    %v7617 = vpack.c.b16 %v7519, %v7517
    %v7618 = vpack.c.b16 %v7522, %v7520
    %v7619 = vpack.c.b16 %v7523, %v7521
    %7716 = vmatprep.subr.bf16.mxu0 %v7539
    %7717 = vmatpush1.bf16.msra.mxu0 %v7538
    %7718 = vmatprep.subr.bf16.mxu0 %v7537
    %7719 = vmatpush1.bf16.msra.mxu0 %v7536
    %7720 = vmatprep.subr.bf16.mxu0 %v7535
    %7721 = vmatpush1.bf16.msra.mxu0 %v7534
    %7722 = vmatprep.subr.bf16.mxu0 %v7533
    %7723 = vmatpush1.bf16.msra.mxu0 %v7532
    %7724 = vmatprep.subr.bf16.mxu0 %v7531
    %7725 = vmatpush1.bf16.msra.mxu0 %v7530
    %7726 = vmatprep.subr.bf16.mxu0 %v7529
    %7727 = vmatpush1.bf16.msra.mxu0 %v7528
    %7728 = vmatprep.subr.bf16.mxu0 %v7527
    %7729 = vmatpush1.bf16.msra.mxu0 %v7526
    %7730 = vmatprep.subr.bf16.mxu0 %v7525
    %7731 = vmatpush1.bf16.msra.mxu0 %v7524
    %7732 = vmatprep.subr.bf16.mxu0 %v7555
    %7733 = vmatpush2.bf16.msra.mxu0 %v7554
    %7734 = vmatprep.subr.bf16.mxu0 %v7553
    %7735 = vmatpush2.bf16.msra.mxu0 %v7552
    %7736 = vmatprep.subr.bf16.mxu0 %v7551
    %7737 = vmatpush2.bf16.msra.mxu0 %v7550
    %7738 = vmatprep.subr.bf16.mxu0 %v7549
    %7739 = vmatpush2.bf16.msra.mxu0 %v7548
    %7740 = vmatprep.subr.bf16.mxu0 %v7547
    %7741 = vmatpush2.bf16.msra.mxu0 %v7546
    %7742 = vmatprep.subr.bf16.mxu0 %v7545
    %7743 = vmatpush2.bf16.msra.mxu0 %v7544
    %7744 = vmatprep.subr.bf16.mxu0 %v7543
    %7745 = vmatpush2.bf16.msra.mxu0 %v7542
    %7746 = vmatprep.subr.bf16.mxu0 %v7541
    %7747 = vmatpush2.bf16.msra.mxu0 %v7540
    %7748 = vmatprep.mubr.bf16.mxu0 %v7220
    %7749 = vmatmul.mubr.bf16.gmra.mxu0 %v7219
    %v7750 = vpop.f32.mrf.mxu0
    %v7751 = vadd.f32 %v7229, %v7750
    %v7752 = vpop.f32.mrf.mxu0
    %v7753 = vadd.f32 %v7233, %v7752
    %v7754 = vpop.f32.mrf.mxu0
    %v7755 = vpop.f32.mrf.mxu0
    %7756 = vdwg.mxu0
    %7757 = vmatprep.subr.bf16.mxu0 %v7571
    %7758 = vmatpush1.bf16.msra.mxu0 %v7570
    %7759 = vmatprep.subr.bf16.mxu0 %v7569
    %7760 = vmatpush1.bf16.msra.mxu0 %v7568
    %7761 = vmatprep.subr.bf16.mxu0 %v7567
    %7762 = vmatpush1.bf16.msra.mxu0 %v7566
    %7763 = vmatprep.subr.bf16.mxu0 %v7565
    %7764 = vmatpush1.bf16.msra.mxu0 %v7564
    %7765 = vmatprep.subr.bf16.mxu0 %v7563
    %7766 = vmatpush1.bf16.msra.mxu0 %v7562
    %7767 = vmatprep.subr.bf16.mxu0 %v7561
    %7768 = vmatpush1.bf16.msra.mxu0 %v7560
    %7769 = vmatprep.subr.bf16.mxu0 %v7559
    %7770 = vmatpush1.bf16.msra.mxu0 %v7558
    %7771 = vmatprep.subr.bf16.mxu0 %v7557
    %7772 = vmatpush1.bf16.msra.mxu0 %v7556
    %7773 = vmatprep.subr.bf16.mxu0 %v7587
    %7774 = vmatpush2.bf16.msra.mxu0 %v7586
    %7775 = vmatprep.subr.bf16.mxu0 %v7585
    %7776 = vmatpush2.bf16.msra.mxu0 %v7584
    %7777 = vmatprep.subr.bf16.mxu0 %v7583
    %7778 = vmatpush2.bf16.msra.mxu0 %v7582
    %7779 = vmatprep.subr.bf16.mxu0 %v7581
    %7780 = vmatpush2.bf16.msra.mxu0 %v7580
    %7781 = vmatprep.subr.bf16.mxu0 %v7579
    %7782 = vmatpush2.bf16.msra.mxu0 %v7578
    %7783 = vmatprep.subr.bf16.mxu0 %v7577
    %7784 = vmatpush2.bf16.msra.mxu0 %v7576
    %7785 = vmatprep.subr.bf16.mxu0 %v7575
    %7786 = vmatpush2.bf16.msra.mxu0 %v7574
    %7787 = vmatprep.subr.bf16.mxu0 %v7573
    %7788 = vmatpush2.bf16.msra.mxu0 %v7572
    %7789 = vmatprep.mubr.bf16.mxu0 %v7222
    %7790 = vmatmul.mubr.bf16.gmra.mxu0 %v7221
    %v7791 = vpop.f32.mrf.mxu0
    %v7792 = vadd.f32 %v7751, %v7791
    %v7793 = vpop.f32.mrf.mxu0
    %v7794 = vadd.f32 %v7753, %v7793
    %v7795 = vpop.f32.mrf.mxu0
    %v7796 = vpop.f32.mrf.mxu0
    %7797 = vdwg.mxu0
    %7798 = vmatprep.subr.bf16.mxu0 %v7603
    %7799 = vmatpush1.bf16.msra.mxu0 %v7602
    %7800 = vmatprep.subr.bf16.mxu0 %v7601
    %7801 = vmatpush1.bf16.msra.mxu0 %v7600
    %7802 = vmatprep.subr.bf16.mxu0 %v7599
    %7803 = vmatpush1.bf16.msra.mxu0 %v7598
    %7804 = vmatprep.subr.bf16.mxu0 %v7597
    %7805 = vmatpush1.bf16.msra.mxu0 %v7596
    %7806 = vmatprep.subr.bf16.mxu0 %v7595
    %7807 = vmatpush1.bf16.msra.mxu0 %v7594
    %7808 = vmatprep.subr.bf16.mxu0 %v7593
    %7809 = vmatpush1.bf16.msra.mxu0 %v7592
    %7810 = vmatprep.subr.bf16.mxu0 %v7591
    %7811 = vmatpush1.bf16.msra.mxu0 %v7590
    %7812 = vmatprep.subr.bf16.mxu0 %v7589
    %7813 = vmatpush1.bf16.msra.mxu0 %v7588
    %7814 = vmatprep.subr.bf16.mxu0 %v7619
    %7815 = vmatpush2.bf16.msra.mxu0 %v7618
    %7816 = vmatprep.subr.bf16.mxu0 %v7617
    %7817 = vmatpush2.bf16.msra.mxu0 %v7616
    %7818 = vmatprep.subr.bf16.mxu0 %v7615
    %7819 = vmatpush2.bf16.msra.mxu0 %v7614
    %7820 = vmatprep.subr.bf16.mxu0 %v7613
    %7821 = vmatpush2.bf16.msra.mxu0 %v7612
    %7822 = vmatprep.subr.bf16.mxu0 %v7611
    %7823 = vmatpush2.bf16.msra.mxu0 %v7610
    %7824 = vmatprep.subr.bf16.mxu0 %v7609
    %7825 = vmatpush2.bf16.msra.mxu0 %v7608
    %7826 = vmatprep.subr.bf16.mxu0 %v7607
    %7827 = vmatpush2.bf16.msra.mxu0 %v7606
    %7828 = vmatprep.subr.bf16.mxu0 %v7605
    %7829 = vmatpush2.bf16.msra.mxu0 %v7604
    %7830 = vmatprep.mubr.bf16.mxu0 %v7224
    %7831 = vmatmul.mubr.bf16.gmra.mxu0 %v7223
    %v7832 = vpop.f32.mrf.mxu0
    %v7833 = vadd.f32 %v7792, %v7832
    %v7834 = vpop.f32.mrf.mxu0
    %v7835 = vadd.f32 %v7794, %v7834
    %v7836 = vpop.f32.mrf.mxu0
    %v7837 = vpop.f32.mrf.mxu0
    %7838 = vdwg.mxu0
    %v7839 = vmax.f32 %v7833, 0.0
    %v7840 = vmax.f32 %v7835, 0.0
    %v7841 = vld [vmem:[%s3] sm:$0xf]
    %v7842 = vld [vmem:[%s3 + $0x4] sm:$0xf]
    %v7843 = vld [vmem:[%s3 + $0x8] sm:$0xf]
    %v7844 = vld [vmem:[%s3 + $0xc] sm:$0xf]
    %v7845 = vld [vmem:[%s3 + $0x10] sm:$0xf]
    %v7846 = vld [vmem:[%s3 + $0x14] sm:$0xf]
    %v7847 = vld [vmem:[%s3 + $0x18] sm:$0xf]
    %v7848 = vld [vmem:[%s3 + $0x1c] sm:$0xf]
    %v7849 = vld [vmem:[%s3 + $0x20] sm:$0xf]
    %v7850 = vld [vmem:[%s3 + $0x24] sm:$0xf]
    %v7851 = vld [vmem:[%s3 + $0x28] sm:$0xf]
    %v7852 = vld [vmem:[%s3 + $0x2c] sm:$0xf]
    %v7853 = vld [vmem:[%s3 + $0x30] sm:$0xf]
    %v7854 = vld [vmem:[%s3 + $0x34] sm:$0xf]
    %v7855 = vld [vmem:[%s3 + $0x38] sm:$0xf]
    %v7856 = vld [vmem:[%s3 + $0x3c] sm:$0xf]
    %v7857 = vld [vmem:[%s3 + $0x40] sm:$0xf]
    %v7858 = vld [vmem:[%s3 + $0x44] sm:$0xf]
    %v7859 = vld [vmem:[%s3 + $0x48] sm:$0xf]
    %v7860 = vld [vmem:[%s3 + $0x4c] sm:$0xf]
    %v7861 = vld [vmem:[%s3 + $0x50] sm:$0xf]
    %v7862 = vld [vmem:[%s3 + $0x54] sm:$0xf]
    %v7863 = vld [vmem:[%s3 + $0x58] sm:$0xf]
    %v7864 = vld [vmem:[%s3 + $0x5c] sm:$0xf]
    %v7865 = vld [vmem:[%s3 + $0x60] sm:$0xf]
    %v7866 = vld [vmem:[%s3 + $0x64] sm:$0xf]
    %v7867 = vld [vmem:[%s3 + $0x68] sm:$0xf]
    %v7868 = vld [vmem:[%s3 + $0x6c] sm:$0xf]
    %v7869 = vld [vmem:[%s3 + $0x70] sm:$0xf]
    %v7870 = vld [vmem:[%s3 + $0x74] sm:$0xf]
    %v7871 = vld [vmem:[%s3 + $0x78] sm:$0xf]
    %v7872 = vld [vmem:[%s3 + $0x7c] sm:$0xf]
    %v7873 = vld [vmem:[#allocation9 + $0x1] ss:$0 sm:$0xff]
    %v7874 = vpack.c.bf16 %v7839, %v7839
    %v7875 = vpack.c.bf16 %v7840, %v7840
    %v7908 = vunpack.c.l.b16 %v7841
    %v7909 = vunpack.c.l.b16 %v7842
    %v7910 = vunpack.c.l.b16 %v7843
    %v7911 = vunpack.c.l.b16 %v7844
    %v7912 = vunpack.c.l.b16 %v7845
    %v7913 = vunpack.c.l.b16 %v7846
    %v7914 = vunpack.c.l.b16 %v7847
    %v7915 = vunpack.c.l.b16 %v7848
    %v7916 = vunpack.c.l.b16 %v7849
    %v7917 = vunpack.c.l.b16 %v7850
    %v7918 = vunpack.c.l.b16 %v7851
    %v7919 = vunpack.c.l.b16 %v7852
    %v7920 = vunpack.c.l.b16 %v7853
    %v7921 = vunpack.c.l.b16 %v7854
    %v7922 = vunpack.c.l.b16 %v7855
    %v7923 = vunpack.c.l.b16 %v7856
    %v7924 = vunpack.c.l.b16 %v7857
    %v7925 = vunpack.c.l.b16 %v7858
    %v7926 = vunpack.c.l.b16 %v7859
    %v7927 = vunpack.c.l.b16 %v7860
    %v7928 = vunpack.c.l.b16 %v7861
    %v7929 = vunpack.c.l.b16 %v7862
    %v7930 = vunpack.c.l.b16 %v7863
    %v7931 = vunpack.c.l.b16 %v7864
    %v7932 = vunpack.c.l.b16 %v7865
    %v7933 = vunpack.c.l.b16 %v7866
    %v7934 = vunpack.c.l.b16 %v7867
    %v7935 = vunpack.c.l.b16 %v7868
    %v7936 = vunpack.c.l.b16 %v7869
    %v7937 = vunpack.c.l.b16 %v7870
    %v7938 = vunpack.c.l.b16 %v7871
    %v7939 = vunpack.c.l.b16 %v7872
    %v7940 = vpack.c.b16 %v7909, %v7908
    %v7941 = vpack.c.b16 %v7911, %v7910
    %v7942 = vpack.c.b16 %v7913, %v7912
    %v7943 = vpack.c.b16 %v7915, %v7914
    %v7944 = vpack.c.b16 %v7917, %v7916
    %v7945 = vpack.c.b16 %v7919, %v7918
    %v7946 = vpack.c.b16 %v7921, %v7920
    %v7947 = vpack.c.b16 %v7923, %v7922
    %v7948 = vpack.c.b16 %v7925, %v7924
    %v7949 = vpack.c.b16 %v7927, %v7926
    %v7950 = vpack.c.b16 %v7929, %v7928
    %v7951 = vpack.c.b16 %v7931, %v7930
    %v7952 = vpack.c.b16 %v7933, %v7932
    %v7953 = vpack.c.b16 %v7935, %v7934
    %v7954 = vpack.c.b16 %v7937, %v7936
    %v7955 = vpack.c.b16 %v7939, %v7938
    %7972 = vmatprep.subr.bf16.mxu0 0
    %7973 = vmatpush1.bf16.msra.mxu0 %v7947
    %7974 = vmatprep.subr.bf16.mxu0 0
    %7975 = vmatpush1.bf16.msra.mxu0 %v7946
    %7976 = vmatprep.subr.bf16.mxu0 0
    %7977 = vmatpush1.bf16.msra.mxu0 %v7945
    %7978 = vmatprep.subr.bf16.mxu0 0
    %7979 = vmatpush1.bf16.msra.mxu0 %v7944
    %7980 = vmatprep.subr.bf16.mxu0 0
    %7981 = vmatpush1.bf16.msra.mxu0 %v7943
    %7982 = vmatprep.subr.bf16.mxu0 0
    %7983 = vmatpush1.bf16.msra.mxu0 %v7942
    %7984 = vmatprep.subr.bf16.mxu0 0
    %7985 = vmatpush1.bf16.msra.mxu0 %v7941
    %7986 = vmatprep.subr.bf16.mxu0 0
    %7987 = vmatpush1.bf16.msra.mxu0 %v7940
    %7988 = vmatprep.subr.bf16.mxu0 0
    %7989 = vmatpush2.bf16.msra.mxu0 %v7955
    %7990 = vmatprep.subr.bf16.mxu0 0
    %7991 = vmatpush2.bf16.msra.mxu0 %v7954
    %7992 = vmatprep.subr.bf16.mxu0 0
    %7993 = vmatpush2.bf16.msra.mxu0 %v7953
    %7994 = vmatprep.subr.bf16.mxu0 0
    %7995 = vmatpush2.bf16.msra.mxu0 %v7952
    %7996 = vmatprep.subr.bf16.mxu0 0
    %7997 = vmatpush2.bf16.msra.mxu0 %v7951
    %7998 = vmatprep.subr.bf16.mxu0 0
    %7999 = vmatpush2.bf16.msra.mxu0 %v7950
    %8000 = vmatprep.subr.bf16.mxu0 0
    %8001 = vmatpush2.bf16.msra.mxu0 %v7949
    %8002 = vmatprep.subr.bf16.mxu0 0
    %8003 = vmatpush2.bf16.msra.mxu0 %v7948
    %8004 = vmatprep.mubr.bf16.mxu0 %v7875
    %8005 = vmatmul.mubr.bf16.gmra.mxu0 %v7874
    %v8006 = vpop.f32.mrf.mxu0
    %v8007 = vadd.f32 %v7873, %v8006
    %v8008 = vpop.f32.mrf.mxu0
    %v8009 = vpop.f32.mrf.mxu0
    %v8010 = vpop.f32.mrf.mxu0
    %8011 = vdwg.mxu0
    %v8012 = vmax.f32 %v8007, 0.0
    %v8013 = vld [vmem:[%s4] sm:$0xf]
    %v8014 = vld [vmem:[%s4 + $0x4] sm:$0xf]
    %v8015 = vld [vmem:[%s4 + $0x8] sm:$0xf]
    %v8016 = vld [vmem:[%s4 + $0xc] sm:$0xf]
    %v8017 = vld [vmem:[%s4 + $0x10] sm:$0xf]
    %v8018 = vld [vmem:[%s4 + $0x14] sm:$0xf]
    %v8019 = vld [vmem:[%s4 + $0x18] sm:$0xf]
    %v8020 = vld [vmem:[%s4 + $0x1c] sm:$0xf]
    %v8021 = vld [vmem:[#allocation9 + $0x2] ss:$0 sm:$0xff]
    %v8022 = vpack.c.bf16 %v8012, %v8012
    %v8031 = vunpack.c.l.b16 %v8013
    %v8032 = vunpack.c.l.b16 %v8014
    %v8033 = vunpack.c.l.b16 %v8015
    %v8034 = vunpack.c.l.b16 %v8016
    %v8035 = vunpack.c.l.b16 %v8017
    %v8036 = vunpack.c.l.b16 %v8018
    %v8037 = vunpack.c.l.b16 %v8019
    %v8038 = vunpack.c.l.b16 %v8020
    %v8039 = vpack.c.b16 %v8032, %v8031
    %v8040 = vpack.c.b16 %v8034, %v8033
    %v8041 = vpack.c.b16 %v8036, %v8035
    %v8042 = vpack.c.b16 %v8038, %v8037
    %vm8047 = vcmask 523264
    %v8049 = vsel %vm8047, %v8022, 0
    %8051 = vmatprep.subr.bf16.mxu0 0
    %8052 = vmatpush1.bf16.msra.mxu0 0
    %8053 = vmatprep.subr.bf16.mxu0 0
    %8054 = vmatpush1.bf16.msra.mxu0 0
    %8055 = vmatprep.subr.bf16.mxu0 0
    %8056 = vmatpush1.bf16.msra.mxu0 0
    %8057 = vmatprep.subr.bf16.mxu0 0
    %8058 = vmatpush1.bf16.msra.mxu0 0
    %8059 = vmatprep.subr.bf16.mxu0 0
    %8060 = vmatpush1.bf16.msra.mxu0 %v8042
    %8061 = vmatprep.subr.bf16.mxu0 0
    %8062 = vmatpush1.bf16.msra.mxu0 %v8041
    %8063 = vmatprep.subr.bf16.mxu0 0
    %8064 = vmatpush1.bf16.msra.mxu0 %v8040
    %8065 = vmatprep.subr.bf16.mxu0 0
    %8066 = vmatpush1.bf16.msra.mxu0 %v8039
    %8067 = vmatprep.subr.bf16.mxu0 0
    %8068 = vmatpush2.bf16.msra.mxu0 0
    %8069 = vmatprep.subr.bf16.mxu0 0
    %8070 = vmatpush2.bf16.msra.mxu0 0
    %8071 = vmatprep.subr.bf16.mxu0 0
    %8072 = vmatpush2.bf16.msra.mxu0 0
    %8073 = vmatprep.subr.bf16.mxu0 0
    %8074 = vmatpush2.bf16.msra.mxu0 0
    %8075 = vmatprep.subr.bf16.mxu0 0
    %8076 = vmatpush2.bf16.msra.mxu0 0
    %8077 = vmatprep.subr.bf16.mxu0 0
    %8078 = vmatpush2.bf16.msra.mxu0 0
    %8079 = vmatprep.subr.bf16.mxu0 0
    %8080 = vmatpush2.bf16.msra.mxu0 0
    %8081 = vmatprep.subr.bf16.mxu0 0
    %8082 = vmatpush2.bf16.msra.mxu0 0
    %8083 = vmatprep.mubr.bf16.mxu0 0
    %8084 = vmatmul.mubr.bf16.gmra.mxu0 %v8049
    %v8085 = vpop.f32.mrf.mxu0
    %v8086 = vadd.f32 %v8021, %v8085
    %v8087 = vpop.f32.mrf.mxu0
    %v8088 = vpop.f32.mrf.mxu0
    %v8089 = vpop.f32.mrf.mxu0
    %8090 = vdwg.mxu0
    %v8091 = vmax.f32 %v8086, 0.0
    %v8092 = vld [vmem:[%s5] sm:$0xf]
    %v8093 = vld [vmem:[%s5 + $0x4] sm:$0xf]
    %v8094 = vld [vmem:[%s5 + $0x8] sm:$0xf]
    %v8095 = vld [vmem:[%s5 + $0xc] sm:$0xf]
    %v8096 = vld [vmem:[#allocation9 + $0x3] ss:$0 sm:$0xff]
    %v8097 = vpack.c.bf16 %v8091, %v8091
    %v8102 = vunpack.c.l.b16 %v8092
    %v8103 = vunpack.c.l.b16 %v8093
    %v8104 = vunpack.c.l.b16 %v8094
    %v8105 = vunpack.c.l.b16 %v8095
    %v8106 = vpack.c.b16 %v8103, %v8102
    %v8107 = vpack.c.b16 %v8105, %v8104
    %vm8110 = vcmask 261120
    %v8112 = vsel %vm8110, %v8097, 0
    %8114 = vmatprep.subr.bf16.mxu0 0
    %8115 = vmatpush1.bf16.msra.mxu0 0
    %8116 = vmatprep.subr.bf16.mxu0 0
    %8117 = vmatpush1.bf16.msra.mxu0 0
    %8118 = vmatprep.subr.bf16.mxu0 0
    %8119 = vmatpush1.bf16.msra.mxu0 0
    %8120 = vmatprep.subr.bf16.mxu0 0
    %8121 = vmatpush1.bf16.msra.mxu0 0
    %8122 = vmatprep.subr.bf16.mxu0 0
    %8123 = vmatpush1.bf16.msra.mxu0 0
    %8124 = vmatprep.subr.bf16.mxu0 0
    %8125 = vmatpush1.bf16.msra.mxu0 0
    %8126 = vmatprep.subr.bf16.mxu0 0
    %8127 = vmatpush1.bf16.msra.mxu0 %v8107
    %8128 = vmatprep.subr.bf16.mxu0 0
    %8129 = vmatpush1.bf16.msra.mxu0 %v8106
    %8130 = vmatprep.subr.bf16.mxu0 0
    %8131 = vmatpush2.bf16.msra.mxu0 0
    %8132 = vmatprep.subr.bf16.mxu0 0
    %8133 = vmatpush2.bf16.msra.mxu0 0
    %8134 = vmatprep.subr.bf16.mxu0 0
    %8135 = vmatpush2.bf16.msra.mxu0 0
    %8136 = vmatprep.subr.bf16.mxu0 0
    %8137 = vmatpush2.bf16.msra.mxu0 0
    %8138 = vmatprep.subr.bf16.mxu0 0
    %8139 = vmatpush2.bf16.msra.mxu0 0
    %8140 = vmatprep.subr.bf16.mxu0 0
    %8141 = vmatpush2.bf16.msra.mxu0 0
    %8142 = vmatprep.subr.bf16.mxu0 0
    %8143 = vmatpush2.bf16.msra.mxu0 0
    %8144 = vmatprep.subr.bf16.mxu0 0
    %8145 = vmatpush2.bf16.msra.mxu0 0
    %8146 = vmatprep.mubr.bf16.mxu0 0
    %8147 = vmatmul.mubr.bf16.gmra.mxu0 %v8112
    %v8148 = vpop.f32.mrf.mxu0
    %v8149 = vadd.f32 %v8096, %v8148
    %v8150 = vpop.f32.mrf.mxu0
    %v8151 = vpop.f32.mrf.mxu0
    %v8152 = vpop.f32.mrf.mxu0
    %8153 = vdwg.mxu0
    %v8154 = vmax.f32 %v8149, 0.0
    %v8155 = vld [vmem:[%s6] sm:$0xff]
    %s8156 = scalar_lea.vmem [#allocation9], 4
    %v8157 = vld [vmem:[%s8156] ss:$8 sm:$0x3]
    %v8158 = vpack.c.bf16 %v8154, %v8154
    %v8160 = vlaneseq
    %v8161 = vshrl.u32 %v8160, 7
    %v8162 = vsub.s32 0, %v8161
    %v8163 = vrot.slane %v8157, %v8162
    %v8164 = vlaneseq
    %v8165 = vshrl.u32 %v8164, 7
    %v8166 = vsub.s32 1, %v8165
    %v8167 = vrot.slane %v8157, %v8166
    %v8171 = vunpack.c.l.b16 %v8155
    %v8172 = vunpack.c.h.b16 %v8155
    %v8173 = vpack.c.b16 %v8171, %v8171
    %v8174 = vpack.c.b16 %v8172, %v8172
    %vm8175 = vcmask 64512
    %v8177 = vsel %vm8175, %v8158, 0
    %vm8179 = vcmask 1043456
    %v8181 = vsel %vm8179, %v8173, 0
    %v8184 = vsel %vm8179, %v8174, 0
    %8186 = vmatprep.subr.bf16.mxu0 0
    %8187 = vmatpush1.bf16.msra.mxu0 0
    %8188 = vmatprep.subr.bf16.mxu0 0
    %8189 = vmatpush1.bf16.msra.mxu0 0
    %8190 = vmatprep.subr.bf16.mxu0 0
    %8191 = vmatpush1.bf16.msra.mxu0 0
    %8192 = vmatprep.subr.bf16.mxu0 0
    %8193 = vmatpush1.bf16.msra.mxu0 0
    %8194 = vmatprep.subr.bf16.mxu0 0
    %8195 = vmatpush1.bf16.msra.mxu0 0
    %8196 = vmatprep.subr.bf16.mxu0 0
    %8197 = vmatpush1.bf16.msra.mxu0 0
    %8198 = vmatprep.subr.bf16.mxu0 0
    %8199 = vmatpush1.bf16.msra.mxu0 0
    %8200 = vmatprep.subr.bf16.mxu0 %v8184
    %8201 = vmatpush1.bf16.msra.mxu0 %v8181
    %8202 = vmatprep.subr.bf16.mxu0 0
    %8203 = vmatpush2.bf16.msra.mxu0 0
    %8204 = vmatprep.subr.bf16.mxu0 0
    %8205 = vmatpush2.bf16.msra.mxu0 0
    %8206 = vmatprep.subr.bf16.mxu0 0
    %8207 = vmatpush2.bf16.msra.mxu0 0
    %8208 = vmatprep.subr.bf16.mxu0 0
    %8209 = vmatpush2.bf16.msra.mxu0 0
    %8210 = vmatprep.subr.bf16.mxu0 0
    %8211 = vmatpush2.bf16.msra.mxu0 0
    %8212 = vmatprep.subr.bf16.mxu0 0
    %8213 = vmatpush2.bf16.msra.mxu0 0
    %8214 = vmatprep.subr.bf16.mxu0 0
    %8215 = vmatpush2.bf16.msra.mxu0 0
    %8216 = vmatprep.subr.bf16.mxu0 0
    %8217 = vmatpush2.bf16.msra.mxu0 0
    %8218 = vmatprep.mubr.bf16.mxu0 0
    %8219 = vmatmul.mubr.bf16.gmra.mxu0 %v8177
    %v8220 = vpop.f32.mrf.mxu0
    %v8221 = vadd.f32 %v8163, %v8220
    %v8222 = vpop.f32.mrf.mxu0
    %v8223 = vadd.f32 %v8167, %v8222
    %v8224 = vpop.f32.mrf.mxu0
    %v8225 = vpop.f32.mrf.mxu0
    %8226 = vdwg.mxu0
    %8227 = vst [vmem:[%s16] sm:$0xff] %v8221
    %v8228 = vld [vmem:[%s7] sm:$0xf]
    %v8229 = vld [vmem:[#allocation9 + $0x5] ss:$0 sm:$0xff]
    %v8230 = vpack.c.bf16 %v8223, %v8223
    %v8232 = vsel %vm8175, %v8230, 0
    %v8235 = vsel %vm8179, %v8228, 0
    %8237 = vmatprep.subr.bf16.mxu0 0
    %8238 = vmatpush1.bf16.msra.mxu0 0
    %8239 = vmatprep.subr.bf16.mxu0 0
    %8240 = vmatpush1.bf16.msra.mxu0 0
    %8241 = vmatprep.subr.bf16.mxu0 0
    %8242 = vmatpush1.bf16.msra.mxu0 0
    %8243 = vmatprep.subr.bf16.mxu0 0
    %8244 = vmatpush1.bf16.msra.mxu0 0
    %8245 = vmatprep.subr.bf16.mxu0 0
    %8246 = vmatpush1.bf16.msra.mxu0 0
    %8247 = vmatprep.subr.bf16.mxu0 0
    %8248 = vmatpush1.bf16.msra.mxu0 0
    %8249 = vmatprep.subr.bf16.mxu0 0
    %8250 = vmatpush1.bf16.msra.mxu0 0
    %8251 = vmatprep.subr.bf16.mxu0 0
    %8252 = vmatpush1.bf16.msra.mxu0 %v8235
    %8253 = vmatprep.subr.bf16.mxu0 0
    %8254 = vmatpush2.bf16.msra.mxu0 0
    %8255 = vmatprep.subr.bf16.mxu0 0
    %8256 = vmatpush2.bf16.msra.mxu0 0
    %8257 = vmatprep.subr.bf16.mxu0 0
    %8258 = vmatpush2.bf16.msra.mxu0 0
    %8259 = vmatprep.subr.bf16.mxu0 0
    %8260 = vmatpush2.bf16.msra.mxu0 0
    %8261 = vmatprep.subr.bf16.mxu0 0
    %8262 = vmatpush2.bf16.msra.mxu0 0
    %8263 = vmatprep.subr.bf16.mxu0 0
    %8264 = vmatpush2.bf16.msra.mxu0 0
    %8265 = vmatprep.subr.bf16.mxu0 0
    %8266 = vmatpush2.bf16.msra.mxu0 0
    %8267 = vmatprep.subr.bf16.mxu0 0
    %8268 = vmatpush2.bf16.msra.mxu0 0
    %8269 = vmatprep.mubr.bf16.mxu0 0
    %8270 = vmatmul.mubr.bf16.gmra.mxu0 %v8232
    %v8271 = vpop.f32.mrf.mxu0
    %v8272 = vadd.f32 %v8229, %v8271
    %v8273 = vpop.f32.mrf.mxu0
    %v8274 = vpop.f32.mrf.mxu0
    %v8275 = vpop.f32.mrf.mxu0
    %8276 = vdwg.mxu0
    %v8277 = vmax.f32 %v8272, 0.0
    %v8278 = vld [vmem:[%s8] sm:$0xf]
    %v8279 = vld [vmem:[%s8 + $0x4] sm:$0xf]
    %v8280 = vld [vmem:[%s8 + $0x8] sm:$0xf]
    %v8281 = vld [vmem:[%s8 + $0xc] sm:$0xf]
    %v8282 = vld [vmem:[#allocation9 + $0x6] ss:$0 sm:$0xff]
    %v8283 = vpack.c.bf16 %v8277, %v8277
    %v8288 = vunpack.c.l.b16 %v8278
    %v8289 = vunpack.c.l.b16 %v8279
    %v8290 = vunpack.c.l.b16 %v8280
    %v8291 = vunpack.c.l.b16 %v8281
    %v8292 = vpack.c.b16 %v8289, %v8288
    %v8293 = vpack.c.b16 %v8291, %v8290
    %v8297 = vsel %vm8110, %v8283, 0
    %8299 = vmatprep.subr.bf16.mxu0 0
    %8300 = vmatpush1.bf16.msra.mxu0 0
    %8301 = vmatprep.subr.bf16.mxu0 0
    %8302 = vmatpush1.bf16.msra.mxu0 0
    %8303 = vmatprep.subr.bf16.mxu0 0
    %8304 = vmatpush1.bf16.msra.mxu0 0
    %8305 = vmatprep.subr.bf16.mxu0 0
    %8306 = vmatpush1.bf16.msra.mxu0 0
    %8307 = vmatprep.subr.bf16.mxu0 0
    %8308 = vmatpush1.bf16.msra.mxu0 0
    %8309 = vmatprep.subr.bf16.mxu0 0
    %8310 = vmatpush1.bf16.msra.mxu0 0
    %8311 = vmatprep.subr.bf16.mxu0 0
    %8312 = vmatpush1.bf16.msra.mxu0 %v8293
    %8313 = vmatprep.subr.bf16.mxu0 0
    %8314 = vmatpush1.bf16.msra.mxu0 %v8292
    %8315 = vmatprep.subr.bf16.mxu0 0
    %8316 = vmatpush2.bf16.msra.mxu0 0
    %8317 = vmatprep.subr.bf16.mxu0 0
    %8318 = vmatpush2.bf16.msra.mxu0 0
    %8319 = vmatprep.subr.bf16.mxu0 0
    %8320 = vmatpush2.bf16.msra.mxu0 0
    %8321 = vmatprep.subr.bf16.mxu0 0
    %8322 = vmatpush2.bf16.msra.mxu0 0
    %8323 = vmatprep.subr.bf16.mxu0 0
    %8324 = vmatpush2.bf16.msra.mxu0 0
    %8325 = vmatprep.subr.bf16.mxu0 0
    %8326 = vmatpush2.bf16.msra.mxu0 0
    %8327 = vmatprep.subr.bf16.mxu0 0
    %8328 = vmatpush2.bf16.msra.mxu0 0
    %8329 = vmatprep.subr.bf16.mxu0 0
    %8330 = vmatpush2.bf16.msra.mxu0 0
    %8331 = vmatprep.mubr.bf16.mxu0 0
    %8332 = vmatmul.mubr.bf16.gmra.mxu0 %v8297
    %v8333 = vpop.f32.mrf.mxu0
    %v8334 = vadd.f32 %v8282, %v8333
    %v8335 = vpop.f32.mrf.mxu0
    %v8336 = vpop.f32.mrf.mxu0
    %v8337 = vpop.f32.mrf.mxu0
    %8338 = vdwg.mxu0
    %v8339 = vmax.f32 %v8334, 0.0
    %v8340 = vld [vmem:[#allocation6] sm:$0xff]
    %v8341 = vld [vmem:[#allocation6 + $0x8] sm:$0xff]
    %v8342 = vld [vmem:[#allocation6 + $0x10] sm:$0xff]
    %v8343 = vld [vmem:[#allocation6 + $0x18] sm:$0xff]
    %v8344 = vld [vmem:[#allocation6 + $0x20] sm:$0xff]
    %v8345 = vld [vmem:[#allocation6 + $0x28] sm:$0xff]
    %v8346 = vld [vmem:[#allocation6 + $0x30] sm:$0xff]
    %v8347 = vld [vmem:[#allocation6 + $0x38] sm:$0xff]
    %v8348 = vld [vmem:[#allocation6 + $0x40] sm:$0xff]
    %v8349 = vld [vmem:[#allocation6 + $0x48] sm:$0xff]
    %v8350 = vld [vmem:[#allocation6 + $0x50] sm:$0xff]
    %v8351 = vld [vmem:[#allocation6 + $0x58] sm:$0xff]
    %v8352 = vld [vmem:[#allocation6 + $0x60] sm:$0xff]
    %v8353 = vld [vmem:[#allocation6 + $0x68] sm:$0xff]
    %v8354 = vld [vmem:[#allocation6 + $0x70] sm:$0xff]
    %v8355 = vld [vmem:[#allocation6 + $0x78] sm:$0xff]
    %s8356 = scalar_lea.vmem [#allocation9], 7
    %v8357 = vld [vmem:[%s8356] ss:$8 sm:$0x3]
    %v8358 = vpack.c.bf16 %v8339, %v8339
    %v8360 = vlaneseq
    %v8361 = vshrl.u32 %v8360, 7
    %v8362 = vsub.s32 0, %v8361
    %v8363 = vrot.slane %v8357, %v8362
    %v8364 = vlaneseq
    %v8365 = vshrl.u32 %v8364, 7
    %v8366 = vsub.s32 1, %v8365
    %v8367 = vrot.slane %v8357, %v8366
    %v8386 = vunpack.c.l.b16 %v8340
    %v8387 = vunpack.c.h.b16 %v8340
    %v8388 = vunpack.c.l.b16 %v8341
    %v8389 = vunpack.c.h.b16 %v8341
    %v8390 = vunpack.c.l.b16 %v8342
    %v8391 = vunpack.c.h.b16 %v8342
    %v8392 = vunpack.c.l.b16 %v8343
    %v8393 = vunpack.c.h.b16 %v8343
    %v8394 = vunpack.c.l.b16 %v8344
    %v8395 = vunpack.c.h.b16 %v8344
    %v8396 = vunpack.c.l.b16 %v8345
    %v8397 = vunpack.c.h.b16 %v8345
    %v8398 = vunpack.c.l.b16 %v8346
    %v8399 = vunpack.c.h.b16 %v8346
    %v8400 = vunpack.c.l.b16 %v8347
    %v8401 = vunpack.c.h.b16 %v8347
    %v8402 = vunpack.c.l.b16 %v8348
    %v8403 = vunpack.c.h.b16 %v8348
    %v8404 = vunpack.c.l.b16 %v8349
    %v8405 = vunpack.c.h.b16 %v8349
    %v8406 = vunpack.c.l.b16 %v8350
    %v8407 = vunpack.c.h.b16 %v8350
    %v8408 = vunpack.c.l.b16 %v8351
    %v8409 = vunpack.c.h.b16 %v8351
    %v8410 = vunpack.c.l.b16 %v8352
    %v8411 = vunpack.c.h.b16 %v8352
    %v8412 = vunpack.c.l.b16 %v8353
    %v8413 = vunpack.c.h.b16 %v8353
    %v8414 = vunpack.c.l.b16 %v8354
    %v8415 = vunpack.c.h.b16 %v8354
    %v8416 = vunpack.c.l.b16 %v8355
    %v8417 = vunpack.c.h.b16 %v8355
    %v8418 = vpack.c.b16 %v8388, %v8386
    %v8419 = vpack.c.b16 %v8389, %v8387
    %v8420 = vpack.c.b16 %v8392, %v8390
    %v8421 = vpack.c.b16 %v8393, %v8391
    %v8422 = vpack.c.b16 %v8396, %v8394
    %v8423 = vpack.c.b16 %v8397, %v8395
    %v8424 = vpack.c.b16 %v8400, %v8398
    %v8425 = vpack.c.b16 %v8401, %v8399
    %v8426 = vpack.c.b16 %v8404, %v8402
    %v8427 = vpack.c.b16 %v8405, %v8403
    %v8428 = vpack.c.b16 %v8408, %v8406
    %v8429 = vpack.c.b16 %v8409, %v8407
    %v8430 = vpack.c.b16 %v8412, %v8410
    %v8431 = vpack.c.b16 %v8413, %v8411
    %v8432 = vpack.c.b16 %v8416, %v8414
    %v8433 = vpack.c.b16 %v8417, %v8415
    %8450 = vmatprep.subr.bf16.mxu0 %v8433
    %8451 = vmatpush1.bf16.msra.mxu0 %v8432
    %8452 = vmatprep.subr.bf16.mxu0 %v8431
    %8453 = vmatpush1.bf16.msra.mxu0 %v8430
    %8454 = vmatprep.subr.bf16.mxu0 %v8429
    %8455 = vmatpush1.bf16.msra.mxu0 %v8428
    %8456 = vmatprep.subr.bf16.mxu0 %v8427
    %8457 = vmatpush1.bf16.msra.mxu0 %v8426
    %8458 = vmatprep.subr.bf16.mxu0 %v8425
    %8459 = vmatpush1.bf16.msra.mxu0 %v8424
    %8460 = vmatprep.subr.bf16.mxu0 %v8423
    %8461 = vmatpush1.bf16.msra.mxu0 %v8422
    %8462 = vmatprep.subr.bf16.mxu0 %v8421
    %8463 = vmatpush1.bf16.msra.mxu0 %v8420
    %8464 = vmatprep.subr.bf16.mxu0 %v8419
    %8465 = vmatpush1.bf16.msra.mxu0 %v8418
    %8466 = vmatprep.subr.bf16.mxu0 0
    %8467 = vmatpush2.bf16.msra.mxu0 0
    %8468 = vmatprep.subr.bf16.mxu0 0
    %8469 = vmatpush2.bf16.msra.mxu0 0
    %8470 = vmatprep.subr.bf16.mxu0 0
    %8471 = vmatpush2.bf16.msra.mxu0 0
    %8472 = vmatprep.subr.bf16.mxu0 0
    %8473 = vmatpush2.bf16.msra.mxu0 0
    %8474 = vmatprep.subr.bf16.mxu0 0
    %8475 = vmatpush2.bf16.msra.mxu0 0
    %8476 = vmatprep.subr.bf16.mxu0 0
    %8477 = vmatpush2.bf16.msra.mxu0 0
    %8478 = vmatprep.subr.bf16.mxu0 0
    %8479 = vmatpush2.bf16.msra.mxu0 0
    %8480 = vmatprep.subr.bf16.mxu0 0
    %8481 = vmatpush2.bf16.msra.mxu0 0
    %8482 = vmatprep.mubr.bf16.mxu0 0
    %8483 = vmatmul.mubr.bf16.gmra.mxu0 %v8358
    %v8484 = vpop.f32.mrf.mxu0
    %v8485 = vadd.f32 %v8363, %v8484
    %v8486 = vpop.f32.mrf.mxu0
    %v8487 = vadd.f32 %v8367, %v8486
    %v8488 = vpop.f32.mrf.mxu0
    %v8489 = vpop.f32.mrf.mxu0
    %8490 = vdwg.mxu0
    %v8491 = vmax.f32 %v8485, 0.0
    %v8492 = vmax.f32 %v8487, 0.0
    %v8493 = vld [vmem:[#allocation2] sm:$0xff]
    %v8494 = vld [vmem:[#allocation2 + $0x8] sm:$0xff]
    %v8495 = vld [vmem:[#allocation2 + $0x10] sm:$0xff]
    %v8496 = vld [vmem:[#allocation2 + $0x18] sm:$0xff]
    %v8497 = vld [vmem:[#allocation2 + $0x20] sm:$0xff]
    %v8498 = vld [vmem:[#allocation2 + $0x28] sm:$0xff]
    %v8499 = vld [vmem:[#allocation2 + $0x30] sm:$0xff]
    %v8500 = vld [vmem:[#allocation2 + $0x38] sm:$0xff]
    %v8501 = vld [vmem:[#allocation2 + $0x40] sm:$0xff]
    %v8502 = vld [vmem:[#allocation2 + $0x48] sm:$0xff]
    %v8503 = vld [vmem:[#allocation2 + $0x50] sm:$0xff]
    %v8504 = vld [vmem:[#allocation2 + $0x58] sm:$0xff]
    %v8505 = vld [vmem:[#allocation2 + $0x60] sm:$0xff]
    %v8506 = vld [vmem:[#allocation2 + $0x68] sm:$0xff]
    %v8507 = vld [vmem:[#allocation2 + $0x70] sm:$0xff]
    %v8508 = vld [vmem:[#allocation2 + $0x78] sm:$0xff]
    %v8509 = vld [vmem:[#allocation2 + $0x80] sm:$0xff]
    %v8510 = vld [vmem:[#allocation2 + $0x88] sm:$0xff]
    %v8511 = vld [vmem:[#allocation2 + $0x90] sm:$0xff]
    %v8512 = vld [vmem:[#allocation2 + $0x98] sm:$0xff]
    %v8513 = vld [vmem:[#allocation2 + $0xa0] sm:$0xff]
    %v8514 = vld [vmem:[#allocation2 + $0xa8] sm:$0xff]
    %v8515 = vld [vmem:[#allocation2 + $0xb0] sm:$0xff]
    %v8516 = vld [vmem:[#allocation2 + $0xb8] sm:$0xff]
    %v8517 = vld [vmem:[#allocation2 + $0xc0] sm:$0xff]
    %v8518 = vld [vmem:[#allocation2 + $0xc8] sm:$0xff]
    %v8519 = vld [vmem:[#allocation2 + $0xd0] sm:$0xff]
    %v8520 = vld [vmem:[#allocation2 + $0xd8] sm:$0xff]
    %v8521 = vld [vmem:[#allocation2 + $0xe0] sm:$0xff]
    %v8522 = vld [vmem:[#allocation2 + $0xe8] sm:$0xff]
    %v8523 = vld [vmem:[#allocation2 + $0xf0] sm:$0xff]
    %v8524 = vld [vmem:[#allocation2 + $0xf8] sm:$0xff]
    %v8525 = vld [vmem:[#allocation2 + $0x100] sm:$0xff]
    %v8526 = vld [vmem:[#allocation2 + $0x108] sm:$0xff]
    %v8527 = vld [vmem:[#allocation2 + $0x110] sm:$0xff]
    %v8528 = vld [vmem:[#allocation2 + $0x118] sm:$0xff]
    %v8529 = vld [vmem:[#allocation2 + $0x120] sm:$0xff]
    %v8530 = vld [vmem:[#allocation2 + $0x128] sm:$0xff]
    %v8531 = vld [vmem:[#allocation2 + $0x130] sm:$0xff]
    %v8532 = vld [vmem:[#allocation2 + $0x138] sm:$0xff]
    %v8533 = vld [vmem:[#allocation2 + $0x140] sm:$0xff]
    %v8534 = vld [vmem:[#allocation2 + $0x148] sm:$0xff]
    %v8535 = vld [vmem:[#allocation2 + $0x150] sm:$0xff]
    %v8536 = vld [vmem:[#allocation2 + $0x158] sm:$0xff]
    %v8537 = vld [vmem:[#allocation2 + $0x160] sm:$0xff]
    %v8538 = vld [vmem:[#allocation2 + $0x168] sm:$0xff]
    %v8539 = vld [vmem:[#allocation2 + $0x170] sm:$0xff]
    %v8540 = vld [vmem:[#allocation2 + $0x178] sm:$0xff]
    %v8541 = vld [vmem:[#allocation2 + $0x180] sm:$0xff]
    %v8542 = vld [vmem:[#allocation2 + $0x188] sm:$0xff]
    %v8543 = vld [vmem:[#allocation2 + $0x190] sm:$0xff]
    %v8544 = vld [vmem:[#allocation2 + $0x198] sm:$0xff]
    %v8545 = vld [vmem:[#allocation2 + $0x1a0] sm:$0xff]
    %v8546 = vld [vmem:[#allocation2 + $0x1a8] sm:$0xff]
    %v8547 = vld [vmem:[#allocation2 + $0x1b0] sm:$0xff]
    %v8548 = vld [vmem:[#allocation2 + $0x1b8] sm:$0xff]
    %v8549 = vld [vmem:[#allocation2 + $0x1c0] sm:$0xff]
    %v8550 = vld [vmem:[#allocation2 + $0x1c8] sm:$0xff]
    %v8551 = vld [vmem:[#allocation2 + $0x1d0] sm:$0xff]
    %v8552 = vld [vmem:[#allocation2 + $0x1d8] sm:$0xff]
    %v8553 = vld [vmem:[#allocation2 + $0x1e0] sm:$0xff]
    %v8554 = vld [vmem:[#allocation2 + $0x1e8] sm:$0xff]
    %v8555 = vld [vmem:[#allocation2 + $0x1f0] sm:$0xff]
    %v8556 = vld [vmem:[#allocation2 + $0x1f8] sm:$0xff]
    %v8557 = vld [vmem:[#allocation2 + $0x200] sm:$0xff]
    %v8558 = vld [vmem:[#allocation2 + $0x208] sm:$0xff]
    %v8559 = vld [vmem:[#allocation2 + $0x210] sm:$0xff]
    %v8560 = vld [vmem:[#allocation2 + $0x218] sm:$0xff]
    %v8561 = vld [vmem:[#allocation2 + $0x220] sm:$0xff]
    %v8562 = vld [vmem:[#allocation2 + $0x228] sm:$0xff]
    %v8563 = vld [vmem:[#allocation2 + $0x230] sm:$0xff]
    %v8564 = vld [vmem:[#allocation2 + $0x238] sm:$0xff]
    %v8565 = vld [vmem:[#allocation2 + $0x240] sm:$0xff]
    %v8566 = vld [vmem:[#allocation2 + $0x248] sm:$0xff]
    %v8567 = vld [vmem:[#allocation2 + $0x250] sm:$0xff]
    %v8568 = vld [vmem:[#allocation2 + $0x258] sm:$0xff]
    %v8569 = vld [vmem:[#allocation2 + $0x260] sm:$0xff]
    %v8570 = vld [vmem:[#allocation2 + $0x268] sm:$0xff]
    %v8571 = vld [vmem:[#allocation2 + $0x270] sm:$0xff]
    %v8572 = vld [vmem:[#allocation2 + $0x278] sm:$0xff]
    %v8573 = vld [vmem:[#allocation2 + $0x280] sm:$0xff]
    %v8574 = vld [vmem:[#allocation2 + $0x288] sm:$0xff]
    %v8575 = vld [vmem:[#allocation2 + $0x290] sm:$0xff]
    %v8576 = vld [vmem:[#allocation2 + $0x298] sm:$0xff]
    %v8577 = vld [vmem:[#allocation2 + $0x2a0] sm:$0xff]
    %v8578 = vld [vmem:[#allocation2 + $0x2a8] sm:$0xff]
    %v8579 = vld [vmem:[#allocation2 + $0x2b0] sm:$0xff]
    %v8580 = vld [vmem:[#allocation2 + $0x2b8] sm:$0xff]
    %v8581 = vld [vmem:[#allocation2 + $0x2c0] sm:$0xff]
    %v8582 = vld [vmem:[#allocation2 + $0x2c8] sm:$0xff]
    %v8583 = vld [vmem:[#allocation2 + $0x2d0] sm:$0xff]
    %v8584 = vld [vmem:[#allocation2 + $0x2d8] sm:$0xff]
    %v8585 = vld [vmem:[#allocation2 + $0x2e0] sm:$0xff]
    %v8586 = vld [vmem:[#allocation2 + $0x2e8] sm:$0xff]
    %v8587 = vld [vmem:[#allocation2 + $0x2f0] sm:$0xff]
    %v8588 = vld [vmem:[#allocation2 + $0x2f8] sm:$0xff]
    %v8589 = vld [vmem:[#allocation2 + $0x300] sm:$0xff]
    %v8590 = vld [vmem:[#allocation2 + $0x308] sm:$0xff]
    %v8591 = vld [vmem:[#allocation2 + $0x310] sm:$0xff]
    %v8592 = vld [vmem:[#allocation2 + $0x318] sm:$0xff]
    %v8593 = vld [vmem:[#allocation2 + $0x320] sm:$0xff]
    %v8594 = vld [vmem:[#allocation2 + $0x328] sm:$0xff]
    %v8595 = vld [vmem:[#allocation2 + $0x330] sm:$0xff]
    %v8596 = vld [vmem:[#allocation2 + $0x338] sm:$0xff]
    %v8597 = vld [vmem:[#allocation2 + $0x340] sm:$0xff]
    %v8598 = vld [vmem:[#allocation2 + $0x348] sm:$0xff]
    %v8599 = vld [vmem:[#allocation2 + $0x350] sm:$0xff]
    %v8600 = vld [vmem:[#allocation2 + $0x358] sm:$0xff]
    %v8601 = vld [vmem:[#allocation2 + $0x360] sm:$0xff]
    %v8602 = vld [vmem:[#allocation2 + $0x368] sm:$0xff]
    %v8603 = vld [vmem:[#allocation2 + $0x370] sm:$0xff]
    %v8604 = vld [vmem:[#allocation2 + $0x378] sm:$0xff]
    %v8605 = vld [vmem:[#allocation2 + $0x380] sm:$0xff]
    %v8606 = vld [vmem:[#allocation2 + $0x388] sm:$0xff]
    %v8607 = vld [vmem:[#allocation2 + $0x390] sm:$0xff]
    %v8608 = vld [vmem:[#allocation2 + $0x398] sm:$0xff]
    %v8609 = vld [vmem:[#allocation2 + $0x3a0] sm:$0xff]
    %v8610 = vld [vmem:[#allocation2 + $0x3a8] sm:$0xff]
    %v8611 = vld [vmem:[#allocation2 + $0x3b0] sm:$0xff]
    %v8612 = vld [vmem:[#allocation2 + $0x3b8] sm:$0xff]
    %v8613 = vld [vmem:[#allocation2 + $0x3c0] sm:$0xff]
    %v8614 = vld [vmem:[#allocation2 + $0x3c8] sm:$0xff]
    %v8615 = vld [vmem:[#allocation2 + $0x3d0] sm:$0xff]
    %v8616 = vld [vmem:[#allocation2 + $0x3d8] sm:$0xff]
    %v8617 = vld [vmem:[#allocation2 + $0x3e0] sm:$0xff]
    %v8618 = vld [vmem:[#allocation2 + $0x3e8] sm:$0xff]
    %v8619 = vld [vmem:[#allocation2 + $0x3f0] sm:$0xff]
    %v8620 = vld [vmem:[#allocation2 + $0x3f8] sm:$0xff]
    %s8621 = scalar_lea.vmem [#allocation9], 64
    %v8622 = vld [vmem:[%s8621] ss:$8 sm:$0xf]
    %v8623 = vld [vmem:[%s8621] ss:$8 sm:$0xf0]
    %v8624 = vor.u32 %v8622, %v8623
    %v8625 = vpack.c.bf16 %v8491, %v8491
    %v8626 = vpack.c.bf16 %v8492, %v8492
    %v8628 = vlaneseq
    %v8629 = vshrl.u32 %v8628, 7
    %v8630 = vsub.s32 0, %v8629
    %v8631 = vrot.slane %v8624, %v8630
    %v8632 = vlaneseq
    %v8633 = vshrl.u32 %v8632, 7
    %v8634 = vsub.s32 1, %v8633
    %v8635 = vrot.slane %v8624, %v8634
    %v8636 = vlaneseq
    %v8637 = vshrl.u32 %v8636, 7
    %v8638 = vsub.s32 2, %v8637
    %v8639 = vrot.slane %v8624, %v8638
    %v8640 = vlaneseq
    %v8641 = vshrl.u32 %v8640, 7
    %v8642 = vsub.s32 3, %v8641
    %v8643 = vrot.slane %v8624, %v8642
    %v8644 = vlaneseq
    %v8645 = vshrl.u32 %v8644, 7
    %v8646 = vsub.s32 4, %v8645
    %v8647 = vrot.slane %v8624, %v8646
    %v8648 = vlaneseq
    %v8649 = vshrl.u32 %v8648, 7
    %v8650 = vsub.s32 5, %v8649
    %v8651 = vrot.slane %v8624, %v8650
    %v8652 = vlaneseq
    %v8653 = vshrl.u32 %v8652, 7
    %v8654 = vsub.s32 6, %v8653
    %v8655 = vrot.slane %v8624, %v8654
    %v8656 = vlaneseq
    %v8657 = vshrl.u32 %v8656, 7
    %v8658 = vsub.s32 7, %v8657
    %v8659 = vrot.slane %v8624, %v8658
    %v8796 = vunpack.c.l.b16 %v8493
    %v8797 = vunpack.c.h.b16 %v8493
    %v8798 = vunpack.c.l.b16 %v8494
    %v8799 = vunpack.c.h.b16 %v8494
    %v8800 = vunpack.c.l.b16 %v8495
    %v8801 = vunpack.c.h.b16 %v8495
    %v8802 = vunpack.c.l.b16 %v8496
    %v8803 = vunpack.c.h.b16 %v8496
    %v8804 = vunpack.c.l.b16 %v8497
    %v8805 = vunpack.c.h.b16 %v8497
    %v8806 = vunpack.c.l.b16 %v8498
    %v8807 = vunpack.c.h.b16 %v8498
    %v8808 = vunpack.c.l.b16 %v8499
    %v8809 = vunpack.c.h.b16 %v8499
    %v8810 = vunpack.c.l.b16 %v8500
    %v8811 = vunpack.c.h.b16 %v8500
    %v8812 = vunpack.c.l.b16 %v8501
    %v8813 = vunpack.c.h.b16 %v8501
    %v8814 = vunpack.c.l.b16 %v8502
    %v8815 = vunpack.c.h.b16 %v8502
    %v8816 = vunpack.c.l.b16 %v8503
    %v8817 = vunpack.c.h.b16 %v8503
    %v8818 = vunpack.c.l.b16 %v8504
    %v8819 = vunpack.c.h.b16 %v8504
    %v8820 = vunpack.c.l.b16 %v8505
    %v8821 = vunpack.c.h.b16 %v8505
    %v8822 = vunpack.c.l.b16 %v8506
    %v8823 = vunpack.c.h.b16 %v8506
    %v8824 = vunpack.c.l.b16 %v8507
    %v8825 = vunpack.c.h.b16 %v8507
    %v8826 = vunpack.c.l.b16 %v8508
    %v8827 = vunpack.c.h.b16 %v8508
    %v8828 = vunpack.c.l.b16 %v8509
    %v8829 = vunpack.c.h.b16 %v8509
    %v8830 = vunpack.c.l.b16 %v8510
    %v8831 = vunpack.c.h.b16 %v8510
    %v8832 = vunpack.c.l.b16 %v8511
    %v8833 = vunpack.c.h.b16 %v8511
    %v8834 = vunpack.c.l.b16 %v8512
    %v8835 = vunpack.c.h.b16 %v8512
    %v8836 = vunpack.c.l.b16 %v8513
    %v8837 = vunpack.c.h.b16 %v8513
    %v8838 = vunpack.c.l.b16 %v8514
    %v8839 = vunpack.c.h.b16 %v8514
    %v8840 = vunpack.c.l.b16 %v8515
    %v8841 = vunpack.c.h.b16 %v8515
    %v8842 = vunpack.c.l.b16 %v8516
    %v8843 = vunpack.c.h.b16 %v8516
    %v8844 = vunpack.c.l.b16 %v8517
    %v8845 = vunpack.c.h.b16 %v8517
    %v8846 = vunpack.c.l.b16 %v8518
    %v8847 = vunpack.c.h.b16 %v8518
    %v8848 = vunpack.c.l.b16 %v8519
    %v8849 = vunpack.c.h.b16 %v8519
    %v8850 = vunpack.c.l.b16 %v8520
    %v8851 = vunpack.c.h.b16 %v8520
    %v8852 = vunpack.c.l.b16 %v8521
    %v8853 = vunpack.c.h.b16 %v8521
    %v8854 = vunpack.c.l.b16 %v8522
    %v8855 = vunpack.c.h.b16 %v8522
    %v8856 = vunpack.c.l.b16 %v8523
    %v8857 = vunpack.c.h.b16 %v8523
    %v8858 = vunpack.c.l.b16 %v8524
    %v8859 = vunpack.c.h.b16 %v8524
    %v8860 = vunpack.c.l.b16 %v8525
    %v8861 = vunpack.c.h.b16 %v8525
    %v8862 = vunpack.c.l.b16 %v8526
    %v8863 = vunpack.c.h.b16 %v8526
    %v8864 = vunpack.c.l.b16 %v8527
    %v8865 = vunpack.c.h.b16 %v8527
    %v8866 = vunpack.c.l.b16 %v8528
    %v8867 = vunpack.c.h.b16 %v8528
    %v8868 = vunpack.c.l.b16 %v8529
    %v8869 = vunpack.c.h.b16 %v8529
    %v8870 = vunpack.c.l.b16 %v8530
    %v8871 = vunpack.c.h.b16 %v8530
    %v8872 = vunpack.c.l.b16 %v8531
    %v8873 = vunpack.c.h.b16 %v8531
    %v8874 = vunpack.c.l.b16 %v8532
    %v8875 = vunpack.c.h.b16 %v8532
    %v8876 = vunpack.c.l.b16 %v8533
    %v8877 = vunpack.c.h.b16 %v8533
    %v8878 = vunpack.c.l.b16 %v8534
    %v8879 = vunpack.c.h.b16 %v8534
    %v8880 = vunpack.c.l.b16 %v8535
    %v8881 = vunpack.c.h.b16 %v8535
    %v8882 = vunpack.c.l.b16 %v8536
    %v8883 = vunpack.c.h.b16 %v8536
    %v8884 = vunpack.c.l.b16 %v8537
    %v8885 = vunpack.c.h.b16 %v8537
    %v8886 = vunpack.c.l.b16 %v8538
    %v8887 = vunpack.c.h.b16 %v8538
    %v8888 = vunpack.c.l.b16 %v8539
    %v8889 = vunpack.c.h.b16 %v8539
    %v8890 = vunpack.c.l.b16 %v8540
    %v8891 = vunpack.c.h.b16 %v8540
    %v8892 = vunpack.c.l.b16 %v8541
    %v8893 = vunpack.c.h.b16 %v8541
    %v8894 = vunpack.c.l.b16 %v8542
    %v8895 = vunpack.c.h.b16 %v8542
    %v8896 = vunpack.c.l.b16 %v8543
    %v8897 = vunpack.c.h.b16 %v8543
    %v8898 = vunpack.c.l.b16 %v8544
    %v8899 = vunpack.c.h.b16 %v8544
    %v8900 = vunpack.c.l.b16 %v8545
    %v8901 = vunpack.c.h.b16 %v8545
    %v8902 = vunpack.c.l.b16 %v8546
    %v8903 = vunpack.c.h.b16 %v8546
    %v8904 = vunpack.c.l.b16 %v8547
    %v8905 = vunpack.c.h.b16 %v8547
    %v8906 = vunpack.c.l.b16 %v8548
    %v8907 = vunpack.c.h.b16 %v8548
    %v8908 = vunpack.c.l.b16 %v8549
    %v8909 = vunpack.c.h.b16 %v8549
    %v8910 = vunpack.c.l.b16 %v8550
    %v8911 = vunpack.c.h.b16 %v8550
    %v8912 = vunpack.c.l.b16 %v8551
    %v8913 = vunpack.c.h.b16 %v8551
    %v8914 = vunpack.c.l.b16 %v8552
    %v8915 = vunpack.c.h.b16 %v8552
    %v8916 = vunpack.c.l.b16 %v8553
    %v8917 = vunpack.c.h.b16 %v8553
    %v8918 = vunpack.c.l.b16 %v8554
    %v8919 = vunpack.c.h.b16 %v8554
    %v8920 = vunpack.c.l.b16 %v8555
    %v8921 = vunpack.c.h.b16 %v8555
    %v8922 = vunpack.c.l.b16 %v8556
    %v8923 = vunpack.c.h.b16 %v8556
    %v8924 = vunpack.c.l.b16 %v8557
    %v8925 = vunpack.c.h.b16 %v8557
    %v8926 = vunpack.c.l.b16 %v8558
    %v8927 = vunpack.c.h.b16 %v8558
    %v8928 = vunpack.c.l.b16 %v8559
    %v8929 = vunpack.c.h.b16 %v8559
    %v8930 = vunpack.c.l.b16 %v8560
    %v8931 = vunpack.c.h.b16 %v8560
    %v8932 = vunpack.c.l.b16 %v8561
    %v8933 = vunpack.c.h.b16 %v8561
    %v8934 = vunpack.c.l.b16 %v8562
    %v8935 = vunpack.c.h.b16 %v8562
    %v8936 = vunpack.c.l.b16 %v8563
    %v8937 = vunpack.c.h.b16 %v8563
    %v8938 = vunpack.c.l.b16 %v8564
    %v8939 = vunpack.c.h.b16 %v8564
    %v8940 = vunpack.c.l.b16 %v8565
    %v8941 = vunpack.c.h.b16 %v8565
    %v8942 = vunpack.c.l.b16 %v8566
    %v8943 = vunpack.c.h.b16 %v8566
    %v8944 = vunpack.c.l.b16 %v8567
    %v8945 = vunpack.c.h.b16 %v8567
    %v8946 = vunpack.c.l.b16 %v8568
    %v8947 = vunpack.c.h.b16 %v8568
    %v8948 = vunpack.c.l.b16 %v8569
    %v8949 = vunpack.c.h.b16 %v8569
    %v8950 = vunpack.c.l.b16 %v8570
    %v8951 = vunpack.c.h.b16 %v8570
    %v8952 = vunpack.c.l.b16 %v8571
    %v8953 = vunpack.c.h.b16 %v8571
    %v8954 = vunpack.c.l.b16 %v8572
    %v8955 = vunpack.c.h.b16 %v8572
    %v8956 = vunpack.c.l.b16 %v8573
    %v8957 = vunpack.c.h.b16 %v8573
    %v8958 = vunpack.c.l.b16 %v8574
    %v8959 = vunpack.c.h.b16 %v8574
    %v8960 = vunpack.c.l.b16 %v8575
    %v8961 = vunpack.c.h.b16 %v8575
    %v8962 = vunpack.c.l.b16 %v8576
    %v8963 = vunpack.c.h.b16 %v8576
    %v8964 = vunpack.c.l.b16 %v8577
    %v8965 = vunpack.c.h.b16 %v8577
    %v8966 = vunpack.c.l.b16 %v8578
    %v8967 = vunpack.c.h.b16 %v8578
    %v8968 = vunpack.c.l.b16 %v8579
    %v8969 = vunpack.c.h.b16 %v8579
    %v8970 = vunpack.c.l.b16 %v8580
    %v8971 = vunpack.c.h.b16 %v8580
    %v8972 = vunpack.c.l.b16 %v8581
    %v8973 = vunpack.c.h.b16 %v8581
    %v8974 = vunpack.c.l.b16 %v8582
    %v8975 = vunpack.c.h.b16 %v8582
    %v8976 = vunpack.c.l.b16 %v8583
    %v8977 = vunpack.c.h.b16 %v8583
    %v8978 = vunpack.c.l.b16 %v8584
    %v8979 = vunpack.c.h.b16 %v8584
    %v8980 = vunpack.c.l.b16 %v8585
    %v8981 = vunpack.c.h.b16 %v8585
    %v8982 = vunpack.c.l.b16 %v8586
    %v8983 = vunpack.c.h.b16 %v8586
    %v8984 = vunpack.c.l.b16 %v8587
    %v8985 = vunpack.c.h.b16 %v8587
    %v8986 = vunpack.c.l.b16 %v8588
    %v8987 = vunpack.c.h.b16 %v8588
    %v8988 = vunpack.c.l.b16 %v8589
    %v8989 = vunpack.c.h.b16 %v8589
    %v8990 = vunpack.c.l.b16 %v8590
    %v8991 = vunpack.c.h.b16 %v8590
    %v8992 = vunpack.c.l.b16 %v8591
    %v8993 = vunpack.c.h.b16 %v8591
    %v8994 = vunpack.c.l.b16 %v8592
    %v8995 = vunpack.c.h.b16 %v8592
    %v8996 = vunpack.c.l.b16 %v8593
    %v8997 = vunpack.c.h.b16 %v8593
    %v8998 = vunpack.c.l.b16 %v8594
    %v8999 = vunpack.c.h.b16 %v8594
    %v9000 = vunpack.c.l.b16 %v8595
    %v9001 = vunpack.c.h.b16 %v8595
    %v9002 = vunpack.c.l.b16 %v8596
    %v9003 = vunpack.c.h.b16 %v8596
    %v9004 = vunpack.c.l.b16 %v8597
    %v9005 = vunpack.c.h.b16 %v8597
    %v9006 = vunpack.c.l.b16 %v8598
    %v9007 = vunpack.c.h.b16 %v8598
    %v9008 = vunpack.c.l.b16 %v8599
    %v9009 = vunpack.c.h.b16 %v8599
    %v9010 = vunpack.c.l.b16 %v8600
    %v9011 = vunpack.c.h.b16 %v8600
    %v9012 = vunpack.c.l.b16 %v8601
    %v9013 = vunpack.c.h.b16 %v8601
    %v9014 = vunpack.c.l.b16 %v8602
    %v9015 = vunpack.c.h.b16 %v8602
    %v9016 = vunpack.c.l.b16 %v8603
    %v9017 = vunpack.c.h.b16 %v8603
    %v9018 = vunpack.c.l.b16 %v8604
    %v9019 = vunpack.c.h.b16 %v8604
    %v9020 = vunpack.c.l.b16 %v8605
    %v9021 = vunpack.c.h.b16 %v8605
    %v9022 = vunpack.c.l.b16 %v8606
    %v9023 = vunpack.c.h.b16 %v8606
    %v9024 = vunpack.c.l.b16 %v8607
    %v9025 = vunpack.c.h.b16 %v8607
    %v9026 = vunpack.c.l.b16 %v8608
    %v9027 = vunpack.c.h.b16 %v8608
    %v9028 = vunpack.c.l.b16 %v8609
    %v9029 = vunpack.c.h.b16 %v8609
    %v9030 = vunpack.c.l.b16 %v8610
    %v9031 = vunpack.c.h.b16 %v8610
    %v9032 = vunpack.c.l.b16 %v8611
    %v9033 = vunpack.c.h.b16 %v8611
    %v9034 = vunpack.c.l.b16 %v8612
    %v9035 = vunpack.c.h.b16 %v8612
    %v9036 = vunpack.c.l.b16 %v8613
    %v9037 = vunpack.c.h.b16 %v8613
    %v9038 = vunpack.c.l.b16 %v8614
    %v9039 = vunpack.c.h.b16 %v8614
    %v9040 = vunpack.c.l.b16 %v8615
    %v9041 = vunpack.c.h.b16 %v8615
    %v9042 = vunpack.c.l.b16 %v8616
    %v9043 = vunpack.c.h.b16 %v8616
    %v9044 = vunpack.c.l.b16 %v8617
    %v9045 = vunpack.c.h.b16 %v8617
    %v9046 = vunpack.c.l.b16 %v8618
    %v9047 = vunpack.c.h.b16 %v8618
    %v9048 = vunpack.c.l.b16 %v8619
    %v9049 = vunpack.c.h.b16 %v8619
    %v9050 = vunpack.c.l.b16 %v8620
    %v9051 = vunpack.c.h.b16 %v8620
    %v9052 = vpack.c.b16 %v8804, %v8796
    %v9053 = vpack.c.b16 %v8805, %v8797
    %v9054 = vpack.c.b16 %v8806, %v8798
    %v9055 = vpack.c.b16 %v8807, %v8799
    %v9056 = vpack.c.b16 %v8808, %v8800
    %v9057 = vpack.c.b16 %v8809, %v8801
    %v9058 = vpack.c.b16 %v8810, %v8802
    %v9059 = vpack.c.b16 %v8811, %v8803
    %v9060 = vpack.c.b16 %v8820, %v8812
    %v9061 = vpack.c.b16 %v8821, %v8813
    %v9062 = vpack.c.b16 %v8822, %v8814
    %v9063 = vpack.c.b16 %v8823, %v8815
    %v9064 = vpack.c.b16 %v8824, %v8816
    %v9065 = vpack.c.b16 %v8825, %v8817
    %v9066 = vpack.c.b16 %v8826, %v8818
    %v9067 = vpack.c.b16 %v8827, %v8819
    %v9068 = vpack.c.b16 %v8836, %v8828
    %v9069 = vpack.c.b16 %v8837, %v8829
    %v9070 = vpack.c.b16 %v8838, %v8830
    %v9071 = vpack.c.b16 %v8839, %v8831
    %v9072 = vpack.c.b16 %v8840, %v8832
    %v9073 = vpack.c.b16 %v8841, %v8833
    %v9074 = vpack.c.b16 %v8842, %v8834
    %v9075 = vpack.c.b16 %v8843, %v8835
    %v9076 = vpack.c.b16 %v8852, %v8844
    %v9077 = vpack.c.b16 %v8853, %v8845
    %v9078 = vpack.c.b16 %v8854, %v8846
    %v9079 = vpack.c.b16 %v8855, %v8847
    %v9080 = vpack.c.b16 %v8856, %v8848
    %v9081 = vpack.c.b16 %v8857, %v8849
    %v9082 = vpack.c.b16 %v8858, %v8850
    %v9083 = vpack.c.b16 %v8859, %v8851
    %v9084 = vpack.c.b16 %v8868, %v8860
    %v9085 = vpack.c.b16 %v8869, %v8861
    %v9086 = vpack.c.b16 %v8870, %v8862
    %v9087 = vpack.c.b16 %v8871, %v8863
    %v9088 = vpack.c.b16 %v8872, %v8864
    %v9089 = vpack.c.b16 %v8873, %v8865
    %v9090 = vpack.c.b16 %v8874, %v8866
    %v9091 = vpack.c.b16 %v8875, %v8867
    %v9092 = vpack.c.b16 %v8884, %v8876
    %v9093 = vpack.c.b16 %v8885, %v8877
    %v9094 = vpack.c.b16 %v8886, %v8878
    %v9095 = vpack.c.b16 %v8887, %v8879
    %v9096 = vpack.c.b16 %v8888, %v8880
    %v9097 = vpack.c.b16 %v8889, %v8881
    %v9098 = vpack.c.b16 %v8890, %v8882
    %v9099 = vpack.c.b16 %v8891, %v8883
    %v9100 = vpack.c.b16 %v8900, %v8892
    %v9101 = vpack.c.b16 %v8901, %v8893
    %v9102 = vpack.c.b16 %v8902, %v8894
    %v9103 = vpack.c.b16 %v8903, %v8895
    %v9104 = vpack.c.b16 %v8904, %v8896
    %v9105 = vpack.c.b16 %v8905, %v8897
    %v9106 = vpack.c.b16 %v8906, %v8898
    %v9107 = vpack.c.b16 %v8907, %v8899
    %v9108 = vpack.c.b16 %v8916, %v8908
    %v9109 = vpack.c.b16 %v8917, %v8909
    %v9110 = vpack.c.b16 %v8918, %v8910
    %v9111 = vpack.c.b16 %v8919, %v8911
    %v9112 = vpack.c.b16 %v8920, %v8912
    %v9113 = vpack.c.b16 %v8921, %v8913
    %v9114 = vpack.c.b16 %v8922, %v8914
    %v9115 = vpack.c.b16 %v8923, %v8915
    %v9116 = vpack.c.b16 %v8932, %v8924
    %v9117 = vpack.c.b16 %v8933, %v8925
    %v9118 = vpack.c.b16 %v8934, %v8926
    %v9119 = vpack.c.b16 %v8935, %v8927
    %v9120 = vpack.c.b16 %v8936, %v8928
    %v9121 = vpack.c.b16 %v8937, %v8929
    %v9122 = vpack.c.b16 %v8938, %v8930
    %v9123 = vpack.c.b16 %v8939, %v8931
    %v9124 = vpack.c.b16 %v8948, %v8940
    %v9125 = vpack.c.b16 %v8949, %v8941
    %v9126 = vpack.c.b16 %v8950, %v8942
    %v9127 = vpack.c.b16 %v8951, %v8943
    %v9128 = vpack.c.b16 %v8952, %v8944
    %v9129 = vpack.c.b16 %v8953, %v8945
    %v9130 = vpack.c.b16 %v8954, %v8946
    %v9131 = vpack.c.b16 %v8955, %v8947
    %v9132 = vpack.c.b16 %v8964, %v8956
    %v9133 = vpack.c.b16 %v8965, %v8957
    %v9134 = vpack.c.b16 %v8966, %v8958
    %v9135 = vpack.c.b16 %v8967, %v8959
    %v9136 = vpack.c.b16 %v8968, %v8960
    %v9137 = vpack.c.b16 %v8969, %v8961
    %v9138 = vpack.c.b16 %v8970, %v8962
    %v9139 = vpack.c.b16 %v8971, %v8963
    %v9140 = vpack.c.b16 %v8980, %v8972
    %v9141 = vpack.c.b16 %v8981, %v8973
    %v9142 = vpack.c.b16 %v8982, %v8974
    %v9143 = vpack.c.b16 %v8983, %v8975
    %v9144 = vpack.c.b16 %v8984, %v8976
    %v9145 = vpack.c.b16 %v8985, %v8977
    %v9146 = vpack.c.b16 %v8986, %v8978
    %v9147 = vpack.c.b16 %v8987, %v8979
    %v9148 = vpack.c.b16 %v8996, %v8988
    %v9149 = vpack.c.b16 %v8997, %v8989
    %v9150 = vpack.c.b16 %v8998, %v8990
    %v9151 = vpack.c.b16 %v8999, %v8991
    %v9152 = vpack.c.b16 %v9000, %v8992
    %v9153 = vpack.c.b16 %v9001, %v8993
    %v9154 = vpack.c.b16 %v9002, %v8994
    %v9155 = vpack.c.b16 %v9003, %v8995
    %v9156 = vpack.c.b16 %v9012, %v9004
    %v9157 = vpack.c.b16 %v9013, %v9005
    %v9158 = vpack.c.b16 %v9014, %v9006
    %v9159 = vpack.c.b16 %v9015, %v9007
    %v9160 = vpack.c.b16 %v9016, %v9008
    %v9161 = vpack.c.b16 %v9017, %v9009
    %v9162 = vpack.c.b16 %v9018, %v9010
    %v9163 = vpack.c.b16 %v9019, %v9011
    %v9164 = vpack.c.b16 %v9028, %v9020
    %v9165 = vpack.c.b16 %v9029, %v9021
    %v9166 = vpack.c.b16 %v9030, %v9022
    %v9167 = vpack.c.b16 %v9031, %v9023
    %v9168 = vpack.c.b16 %v9032, %v9024
    %v9169 = vpack.c.b16 %v9033, %v9025
    %v9170 = vpack.c.b16 %v9034, %v9026
    %v9171 = vpack.c.b16 %v9035, %v9027
    %v9172 = vpack.c.b16 %v9044, %v9036
    %v9173 = vpack.c.b16 %v9045, %v9037
    %v9174 = vpack.c.b16 %v9046, %v9038
    %v9175 = vpack.c.b16 %v9047, %v9039
    %v9176 = vpack.c.b16 %v9048, %v9040
    %v9177 = vpack.c.b16 %v9049, %v9041
    %v9178 = vpack.c.b16 %v9050, %v9042
    %v9179 = vpack.c.b16 %v9051, %v9043
    %9308 = vmatprep.subr.bf16.mxu0 %v9109
    %9309 = vmatpush1.bf16.msra.mxu0 %v9108
    %9310 = vmatprep.subr.bf16.mxu0 %v9101
    %9311 = vmatpush1.bf16.msra.mxu0 %v9100
    %9312 = vmatprep.subr.bf16.mxu0 %v9093
    %9313 = vmatpush1.bf16.msra.mxu0 %v9092
    %9314 = vmatprep.subr.bf16.mxu0 %v9085
    %9315 = vmatpush1.bf16.msra.mxu0 %v9084
    %9316 = vmatprep.subr.bf16.mxu0 %v9077
    %9317 = vmatpush1.bf16.msra.mxu0 %v9076
    %9318 = vmatprep.subr.bf16.mxu0 %v9069
    %9319 = vmatpush1.bf16.msra.mxu0 %v9068
    %9320 = vmatprep.subr.bf16.mxu0 %v9061
    %9321 = vmatpush1.bf16.msra.mxu0 %v9060
    %9322 = vmatprep.subr.bf16.mxu0 %v9053
    %9323 = vmatpush1.bf16.msra.mxu0 %v9052
    %9324 = vmatprep.subr.bf16.mxu0 %v9173
    %9325 = vmatpush2.bf16.msra.mxu0 %v9172
    %9326 = vmatprep.subr.bf16.mxu0 %v9165
    %9327 = vmatpush2.bf16.msra.mxu0 %v9164
    %9328 = vmatprep.subr.bf16.mxu0 %v9157
    %9329 = vmatpush2.bf16.msra.mxu0 %v9156
    %9330 = vmatprep.subr.bf16.mxu0 %v9149
    %9331 = vmatpush2.bf16.msra.mxu0 %v9148
    %9332 = vmatprep.subr.bf16.mxu0 %v9141
    %9333 = vmatpush2.bf16.msra.mxu0 %v9140
    %9334 = vmatprep.subr.bf16.mxu0 %v9133
    %9335 = vmatpush2.bf16.msra.mxu0 %v9132
    %9336 = vmatprep.subr.bf16.mxu0 %v9125
    %9337 = vmatpush2.bf16.msra.mxu0 %v9124
    %9338 = vmatprep.subr.bf16.mxu0 %v9117
    %9339 = vmatpush2.bf16.msra.mxu0 %v9116
    %9340 = vmatprep.mubr.bf16.mxu0 %v8626
    %9341 = vmatmul.mubr.bf16.gmra.mxu0 %v8625
    %v9342 = vpop.f32.mrf.mxu0
    %v9343 = vadd.f32 %v8631, %v9342
    %v9344 = vpop.f32.mrf.mxu0
    %v9345 = vadd.f32 %v8635, %v9344
    %v9346 = vpop.f32.mrf.mxu0
    %v9347 = vpop.f32.mrf.mxu0
    %9348 = vdwg.mxu0
    %9349 = vmatprep.subr.bf16.mxu0 %v9111
    %9350 = vmatpush1.bf16.msra.mxu0 %v9110
    %9351 = vmatprep.subr.bf16.mxu0 %v9103
    %9352 = vmatpush1.bf16.msra.mxu0 %v9102
    %9353 = vmatprep.subr.bf16.mxu0 %v9095
    %9354 = vmatpush1.bf16.msra.mxu0 %v9094
    %9355 = vmatprep.subr.bf16.mxu0 %v9087
    %9356 = vmatpush1.bf16.msra.mxu0 %v9086
    %9357 = vmatprep.subr.bf16.mxu0 %v9079
    %9358 = vmatpush1.bf16.msra.mxu0 %v9078
    %9359 = vmatprep.subr.bf16.mxu0 %v9071
    %9360 = vmatpush1.bf16.msra.mxu0 %v9070
    %9361 = vmatprep.subr.bf16.mxu0 %v9063
    %9362 = vmatpush1.bf16.msra.mxu0 %v9062
    %9363 = vmatprep.subr.bf16.mxu0 %v9055
    %9364 = vmatpush1.bf16.msra.mxu0 %v9054
    %9365 = vmatprep.subr.bf16.mxu0 %v9175
    %9366 = vmatpush2.bf16.msra.mxu0 %v9174
    %9367 = vmatprep.subr.bf16.mxu0 %v9167
    %9368 = vmatpush2.bf16.msra.mxu0 %v9166
    %9369 = vmatprep.subr.bf16.mxu0 %v9159
    %9370 = vmatpush2.bf16.msra.mxu0 %v9158
    %9371 = vmatprep.subr.bf16.mxu0 %v9151
    %9372 = vmatpush2.bf16.msra.mxu0 %v9150
    %9373 = vmatprep.subr.bf16.mxu0 %v9143
    %9374 = vmatpush2.bf16.msra.mxu0 %v9142
    %9375 = vmatprep.subr.bf16.mxu0 %v9135
    %9376 = vmatpush2.bf16.msra.mxu0 %v9134
    %9377 = vmatprep.subr.bf16.mxu0 %v9127
    %9378 = vmatpush2.bf16.msra.mxu0 %v9126
    %9379 = vmatprep.subr.bf16.mxu0 %v9119
    %9380 = vmatpush2.bf16.msra.mxu0 %v9118
    %9381 = vmatprep.mubr.bf16.mxu0 %v8626
    %9382 = vmatmul.mubr.bf16.gmra.mxu0 %v8625
    %v9383 = vpop.f32.mrf.mxu0
    %v9384 = vadd.f32 %v8639, %v9383
    %v9385 = vpop.f32.mrf.mxu0
    %v9386 = vadd.f32 %v8643, %v9385
    %v9387 = vpop.f32.mrf.mxu0
    %v9388 = vpop.f32.mrf.mxu0
    %9389 = vdwg.mxu0
    %9390 = vmatprep.subr.bf16.mxu0 %v9113
    %9391 = vmatpush1.bf16.msra.mxu0 %v9112
    %9392 = vmatprep.subr.bf16.mxu0 %v9105
    %9393 = vmatpush1.bf16.msra.mxu0 %v9104
    %9394 = vmatprep.subr.bf16.mxu0 %v9097
    %9395 = vmatpush1.bf16.msra.mxu0 %v9096
    %9396 = vmatprep.subr.bf16.mxu0 %v9089
    %9397 = vmatpush1.bf16.msra.mxu0 %v9088
    %9398 = vmatprep.subr.bf16.mxu0 %v9081
    %9399 = vmatpush1.bf16.msra.mxu0 %v9080
    %9400 = vmatprep.subr.bf16.mxu0 %v9073
    %9401 = vmatpush1.bf16.msra.mxu0 %v9072
    %9402 = vmatprep.subr.bf16.mxu0 %v9065
    %9403 = vmatpush1.bf16.msra.mxu0 %v9064
    %9404 = vmatprep.subr.bf16.mxu0 %v9057
    %9405 = vmatpush1.bf16.msra.mxu0 %v9056
    %9406 = vmatprep.subr.bf16.mxu0 %v9177
    %9407 = vmatpush2.bf16.msra.mxu0 %v9176
    %9408 = vmatprep.subr.bf16.mxu0 %v9169
    %9409 = vmatpush2.bf16.msra.mxu0 %v9168
    %9410 = vmatprep.subr.bf16.mxu0 %v9161
    %9411 = vmatpush2.bf16.msra.mxu0 %v9160
    %9412 = vmatprep.subr.bf16.mxu0 %v9153
    %9413 = vmatpush2.bf16.msra.mxu0 %v9152
    %9414 = vmatprep.subr.bf16.mxu0 %v9145
    %9415 = vmatpush2.bf16.msra.mxu0 %v9144
    %9416 = vmatprep.subr.bf16.mxu0 %v9137
    %9417 = vmatpush2.bf16.msra.mxu0 %v9136
    %9418 = vmatprep.subr.bf16.mxu0 %v9129
    %9419 = vmatpush2.bf16.msra.mxu0 %v9128
    %9420 = vmatprep.subr.bf16.mxu0 %v9121
    %9421 = vmatpush2.bf16.msra.mxu0 %v9120
    %9422 = vmatprep.mubr.bf16.mxu0 %v8626
    %9423 = vmatmul.mubr.bf16.gmra.mxu0 %v8625
    %v9424 = vpop.f32.mrf.mxu0
    %v9425 = vadd.f32 %v8647, %v9424
    %v9426 = vpop.f32.mrf.mxu0
    %v9427 = vadd.f32 %v8651, %v9426
    %v9428 = vpop.f32.mrf.mxu0
    %v9429 = vpop.f32.mrf.mxu0
    %9430 = vdwg.mxu0
    %9431 = vmatprep.subr.bf16.mxu0 %v9115
    %9432 = vmatpush1.bf16.msra.mxu0 %v9114
    %9433 = vmatprep.subr.bf16.mxu0 %v9107
    %9434 = vmatpush1.bf16.msra.mxu0 %v9106
    %9435 = vmatprep.subr.bf16.mxu0 %v9099
    %9436 = vmatpush1.bf16.msra.mxu0 %v9098
    %9437 = vmatprep.subr.bf16.mxu0 %v9091
    %9438 = vmatpush1.bf16.msra.mxu0 %v9090
    %9439 = vmatprep.subr.bf16.mxu0 %v9083
    %9440 = vmatpush1.bf16.msra.mxu0 %v9082
    %9441 = vmatprep.subr.bf16.mxu0 %v9075
    %9442 = vmatpush1.bf16.msra.mxu0 %v9074
    %9443 = vmatprep.subr.bf16.mxu0 %v9067
    %9444 = vmatpush1.bf16.msra.mxu0 %v9066
    %9445 = vmatprep.subr.bf16.mxu0 %v9059
    %9446 = vmatpush1.bf16.msra.mxu0 %v9058
    %9447 = vmatprep.subr.bf16.mxu0 %v9179
    %9448 = vmatpush2.bf16.msra.mxu0 %v9178
    %9449 = vmatprep.subr.bf16.mxu0 %v9171
    %9450 = vmatpush2.bf16.msra.mxu0 %v9170
    %9451 = vmatprep.subr.bf16.mxu0 %v9163
    %9452 = vmatpush2.bf16.msra.mxu0 %v9162
    %9453 = vmatprep.subr.bf16.mxu0 %v9155
    %9454 = vmatpush2.bf16.msra.mxu0 %v9154
    %9455 = vmatprep.subr.bf16.mxu0 %v9147
    %9456 = vmatpush2.bf16.msra.mxu0 %v9146
    %9457 = vmatprep.subr.bf16.mxu0 %v9139
    %9458 = vmatpush2.bf16.msra.mxu0 %v9138
    %9459 = vmatprep.subr.bf16.mxu0 %v9131
    %9460 = vmatpush2.bf16.msra.mxu0 %v9130
    %9461 = vmatprep.subr.bf16.mxu0 %v9123
    %9462 = vmatpush2.bf16.msra.mxu0 %v9122
    %9463 = vmatprep.mubr.bf16.mxu0 %v8626
    %9464 = vmatmul.mubr.bf16.gmra.mxu0 %v8625
    %v9465 = vpop.f32.mrf.mxu0
    %v9466 = vadd.f32 %v8655, %v9465
    %v9467 = vpop.f32.mrf.mxu0
    %v9468 = vadd.f32 %v8659, %v9467
    %v9469 = vpop.f32.mrf.mxu0
    %v9470 = vpop.f32.mrf.mxu0
    %9471 = vdwg.mxu0
    %v9472 = vmax.f32 %v9343, 0.0
    %v9473 = vmax.f32 %v9345, 0.0
    %v9474 = vmax.f32 %v9384, 0.0
    %v9475 = vmax.f32 %v9386, 0.0
    %v9476 = vmax.f32 %v9425, 0.0
    %v9477 = vmax.f32 %v9427, 0.0
    %v9478 = vmax.f32 %v9466, 0.0
    %v9479 = vmax.f32 %v9468, 0.0
    %v9480 = vld [vmem:[#allocation3] sm:$0xff]
    %v9481 = vld [vmem:[#allocation3 + $0x8] sm:$0xff]
    %v9482 = vld [vmem:[#allocation3 + $0x10] sm:$0xff]
    %v9483 = vld [vmem:[#allocation3 + $0x18] sm:$0xff]
    %v9484 = vld [vmem:[#allocation3 + $0x20] sm:$0xff]
    %v9485 = vld [vmem:[#allocation3 + $0x28] sm:$0xff]
    %v9486 = vld [vmem:[#allocation3 + $0x30] sm:$0xff]
    %v9487 = vld [vmem:[#allocation3 + $0x38] sm:$0xff]
    %v9488 = vld [vmem:[#allocation3 + $0x40] sm:$0xff]
    %v9489 = vld [vmem:[#allocation3 + $0x48] sm:$0xff]
    %v9490 = vld [vmem:[#allocation3 + $0x50] sm:$0xff]
    %v9491 = vld [vmem:[#allocation3 + $0x58] sm:$0xff]
    %v9492 = vld [vmem:[#allocation3 + $0x60] sm:$0xff]
    %v9493 = vld [vmem:[#allocation3 + $0x68] sm:$0xff]
    %v9494 = vld [vmem:[#allocation3 + $0x70] sm:$0xff]
    %v9495 = vld [vmem:[#allocation3 + $0x78] sm:$0xff]
    %v9496 = vld [vmem:[#allocation3 + $0x80] sm:$0xff]
    %v9497 = vld [vmem:[#allocation3 + $0x88] sm:$0xff]
    %v9498 = vld [vmem:[#allocation3 + $0x90] sm:$0xff]
    %v9499 = vld [vmem:[#allocation3 + $0x98] sm:$0xff]
    %v9500 = vld [vmem:[#allocation3 + $0xa0] sm:$0xff]
    %v9501 = vld [vmem:[#allocation3 + $0xa8] sm:$0xff]
    %v9502 = vld [vmem:[#allocation3 + $0xb0] sm:$0xff]
    %v9503 = vld [vmem:[#allocation3 + $0xb8] sm:$0xff]
    %v9504 = vld [vmem:[#allocation3 + $0xc0] sm:$0xff]
    %v9505 = vld [vmem:[#allocation3 + $0xc8] sm:$0xff]
    %v9506 = vld [vmem:[#allocation3 + $0xd0] sm:$0xff]
    %v9507 = vld [vmem:[#allocation3 + $0xd8] sm:$0xff]
    %v9508 = vld [vmem:[#allocation3 + $0xe0] sm:$0xff]
    %v9509 = vld [vmem:[#allocation3 + $0xe8] sm:$0xff]
    %v9510 = vld [vmem:[#allocation3 + $0xf0] sm:$0xff]
    %v9511 = vld [vmem:[#allocation3 + $0xf8] sm:$0xff]
    %v9512 = vld [vmem:[#allocation3 + $0x100] sm:$0xff]
    %v9513 = vld [vmem:[#allocation3 + $0x108] sm:$0xff]
    %v9514 = vld [vmem:[#allocation3 + $0x110] sm:$0xff]
    %v9515 = vld [vmem:[#allocation3 + $0x118] sm:$0xff]
    %v9516 = vld [vmem:[#allocation3 + $0x120] sm:$0xff]
    %v9517 = vld [vmem:[#allocation3 + $0x128] sm:$0xff]
    %v9518 = vld [vmem:[#allocation3 + $0x130] sm:$0xff]
    %v9519 = vld [vmem:[#allocation3 + $0x138] sm:$0xff]
    %v9520 = vld [vmem:[#allocation3 + $0x140] sm:$0xff]
    %v9521 = vld [vmem:[#allocation3 + $0x148] sm:$0xff]
    %v9522 = vld [vmem:[#allocation3 + $0x150] sm:$0xff]
    %v9523 = vld [vmem:[#allocation3 + $0x158] sm:$0xff]
    %v9524 = vld [vmem:[#allocation3 + $0x160] sm:$0xff]
    %v9525 = vld [vmem:[#allocation3 + $0x168] sm:$0xff]
    %v9526 = vld [vmem:[#allocation3 + $0x170] sm:$0xff]
    %v9527 = vld [vmem:[#allocation3 + $0x178] sm:$0xff]
    %v9528 = vld [vmem:[#allocation3 + $0x180] sm:$0xff]
    %v9529 = vld [vmem:[#allocation3 + $0x188] sm:$0xff]
    %v9530 = vld [vmem:[#allocation3 + $0x190] sm:$0xff]
    %v9531 = vld [vmem:[#allocation3 + $0x198] sm:$0xff]
    %v9532 = vld [vmem:[#allocation3 + $0x1a0] sm:$0xff]
    %v9533 = vld [vmem:[#allocation3 + $0x1a8] sm:$0xff]
    %v9534 = vld [vmem:[#allocation3 + $0x1b0] sm:$0xff]
    %v9535 = vld [vmem:[#allocation3 + $0x1b8] sm:$0xff]
    %v9536 = vld [vmem:[#allocation3 + $0x1c0] sm:$0xff]
    %v9537 = vld [vmem:[#allocation3 + $0x1c8] sm:$0xff]
    %v9538 = vld [vmem:[#allocation3 + $0x1d0] sm:$0xff]
    %v9539 = vld [vmem:[#allocation3 + $0x1d8] sm:$0xff]
    %v9540 = vld [vmem:[#allocation3 + $0x1e0] sm:$0xff]
    %v9541 = vld [vmem:[#allocation3 + $0x1e8] sm:$0xff]
    %v9542 = vld [vmem:[#allocation3 + $0x1f0] sm:$0xff]
    %v9543 = vld [vmem:[#allocation3 + $0x1f8] sm:$0xff]
    %v9544 = vld [vmem:[#allocation3 + $0x200] sm:$0xff]
    %v9545 = vld [vmem:[#allocation3 + $0x208] sm:$0xff]
    %v9546 = vld [vmem:[#allocation3 + $0x210] sm:$0xff]
    %v9547 = vld [vmem:[#allocation3 + $0x218] sm:$0xff]
    %v9548 = vld [vmem:[#allocation3 + $0x220] sm:$0xff]
    %v9549 = vld [vmem:[#allocation3 + $0x228] sm:$0xff]
    %v9550 = vld [vmem:[#allocation3 + $0x230] sm:$0xff]
    %v9551 = vld [vmem:[#allocation3 + $0x238] sm:$0xff]
    %v9552 = vld [vmem:[#allocation3 + $0x240] sm:$0xff]
    %v9553 = vld [vmem:[#allocation3 + $0x248] sm:$0xff]
    %v9554 = vld [vmem:[#allocation3 + $0x250] sm:$0xff]
    %v9555 = vld [vmem:[#allocation3 + $0x258] sm:$0xff]
    %v9556 = vld [vmem:[#allocation3 + $0x260] sm:$0xff]
    %v9557 = vld [vmem:[#allocation3 + $0x268] sm:$0xff]
    %v9558 = vld [vmem:[#allocation3 + $0x270] sm:$0xff]
    %v9559 = vld [vmem:[#allocation3 + $0x278] sm:$0xff]
    %v9560 = vld [vmem:[#allocation3 + $0x280] sm:$0xff]
    %v9561 = vld [vmem:[#allocation3 + $0x288] sm:$0xff]
    %v9562 = vld [vmem:[#allocation3 + $0x290] sm:$0xff]
    %v9563 = vld [vmem:[#allocation3 + $0x298] sm:$0xff]
    %v9564 = vld [vmem:[#allocation3 + $0x2a0] sm:$0xff]
    %v9565 = vld [vmem:[#allocation3 + $0x2a8] sm:$0xff]
    %v9566 = vld [vmem:[#allocation3 + $0x2b0] sm:$0xff]
    %v9567 = vld [vmem:[#allocation3 + $0x2b8] sm:$0xff]
    %v9568 = vld [vmem:[#allocation3 + $0x2c0] sm:$0xff]
    %v9569 = vld [vmem:[#allocation3 + $0x2c8] sm:$0xff]
    %v9570 = vld [vmem:[#allocation3 + $0x2d0] sm:$0xff]
    %v9571 = vld [vmem:[#allocation3 + $0x2d8] sm:$0xff]
    %v9572 = vld [vmem:[#allocation3 + $0x2e0] sm:$0xff]
    %v9573 = vld [vmem:[#allocation3 + $0x2e8] sm:$0xff]
    %v9574 = vld [vmem:[#allocation3 + $0x2f0] sm:$0xff]
    %v9575 = vld [vmem:[#allocation3 + $0x2f8] sm:$0xff]
    %v9576 = vld [vmem:[#allocation3 + $0x300] sm:$0xff]
    %v9577 = vld [vmem:[#allocation3 + $0x308] sm:$0xff]
    %v9578 = vld [vmem:[#allocation3 + $0x310] sm:$0xff]
    %v9579 = vld [vmem:[#allocation3 + $0x318] sm:$0xff]
    %v9580 = vld [vmem:[#allocation3 + $0x320] sm:$0xff]
    %v9581 = vld [vmem:[#allocation3 + $0x328] sm:$0xff]
    %v9582 = vld [vmem:[#allocation3 + $0x330] sm:$0xff]
    %v9583 = vld [vmem:[#allocation3 + $0x338] sm:$0xff]
    %v9584 = vld [vmem:[#allocation3 + $0x340] sm:$0xff]
    %v9585 = vld [vmem:[#allocation3 + $0x348] sm:$0xff]
    %v9586 = vld [vmem:[#allocation3 + $0x350] sm:$0xff]
    %v9587 = vld [vmem:[#allocation3 + $0x358] sm:$0xff]
    %v9588 = vld [vmem:[#allocation3 + $0x360] sm:$0xff]
    %v9589 = vld [vmem:[#allocation3 + $0x368] sm:$0xff]
    %v9590 = vld [vmem:[#allocation3 + $0x370] sm:$0xff]
    %v9591 = vld [vmem:[#allocation3 + $0x378] sm:$0xff]
    %v9592 = vld [vmem:[#allocation3 + $0x380] sm:$0xff]
    %v9593 = vld [vmem:[#allocation3 + $0x388] sm:$0xff]
    %v9594 = vld [vmem:[#allocation3 + $0x390] sm:$0xff]
    %v9595 = vld [vmem:[#allocation3 + $0x398] sm:$0xff]
    %v9596 = vld [vmem:[#allocation3 + $0x3a0] sm:$0xff]
    %v9597 = vld [vmem:[#allocation3 + $0x3a8] sm:$0xff]
    %v9598 = vld [vmem:[#allocation3 + $0x3b0] sm:$0xff]
    %v9599 = vld [vmem:[#allocation3 + $0x3b8] sm:$0xff]
    %v9600 = vld [vmem:[#allocation3 + $0x3c0] sm:$0xff]
    %v9601 = vld [vmem:[#allocation3 + $0x3c8] sm:$0xff]
    %v9602 = vld [vmem:[#allocation3 + $0x3d0] sm:$0xff]
    %v9603 = vld [vmem:[#allocation3 + $0x3d8] sm:$0xff]
    %v9604 = vld [vmem:[#allocation3 + $0x3e0] sm:$0xff]
    %v9605 = vld [vmem:[#allocation3 + $0x3e8] sm:$0xff]
    %v9606 = vld [vmem:[#allocation3 + $0x3f0] sm:$0xff]
    %v9607 = vld [vmem:[#allocation3 + $0x3f8] sm:$0xff]
    %v9608 = vld [vmem:[#allocation3 + $0x400] sm:$0xff]
    %v9609 = vld [vmem:[#allocation3 + $0x408] sm:$0xff]
    %v9610 = vld [vmem:[#allocation3 + $0x410] sm:$0xff]
    %v9611 = vld [vmem:[#allocation3 + $0x418] sm:$0xff]
    %v9612 = vld [vmem:[#allocation3 + $0x420] sm:$0xff]
    %v9613 = vld [vmem:[#allocation3 + $0x428] sm:$0xff]
    %v9614 = vld [vmem:[#allocation3 + $0x430] sm:$0xff]
    %v9615 = vld [vmem:[#allocation3 + $0x438] sm:$0xff]
    %v9616 = vld [vmem:[#allocation3 + $0x440] sm:$0xff]
    %v9617 = vld [vmem:[#allocation3 + $0x448] sm:$0xff]
    %v9618 = vld [vmem:[#allocation3 + $0x450] sm:$0xff]
    %v9619 = vld [vmem:[#allocation3 + $0x458] sm:$0xff]
    %v9620 = vld [vmem:[#allocation3 + $0x460] sm:$0xff]
    %v9621 = vld [vmem:[#allocation3 + $0x468] sm:$0xff]
    %v9622 = vld [vmem:[#allocation3 + $0x470] sm:$0xff]
    %v9623 = vld [vmem:[#allocation3 + $0x478] sm:$0xff]
    %v9624 = vld [vmem:[#allocation3 + $0x480] sm:$0xff]
    %v9625 = vld [vmem:[#allocation3 + $0x488] sm:$0xff]
    %v9626 = vld [vmem:[#allocation3 + $0x490] sm:$0xff]
    %v9627 = vld [vmem:[#allocation3 + $0x498] sm:$0xff]
    %v9628 = vld [vmem:[#allocation3 + $0x4a0] sm:$0xff]
    %v9629 = vld [vmem:[#allocation3 + $0x4a8] sm:$0xff]
    %v9630 = vld [vmem:[#allocation3 + $0x4b0] sm:$0xff]
    %v9631 = vld [vmem:[#allocation3 + $0x4b8] sm:$0xff]
    %v9632 = vld [vmem:[#allocation3 + $0x4c0] sm:$0xff]
    %v9633 = vld [vmem:[#allocation3 + $0x4c8] sm:$0xff]
    %v9634 = vld [vmem:[#allocation3 + $0x4d0] sm:$0xff]
    %v9635 = vld [vmem:[#allocation3 + $0x4d8] sm:$0xff]
    %v9636 = vld [vmem:[#allocation3 + $0x4e0] sm:$0xff]
    %v9637 = vld [vmem:[#allocation3 + $0x4e8] sm:$0xff]
    %v9638 = vld [vmem:[#allocation3 + $0x4f0] sm:$0xff]
    %v9639 = vld [vmem:[#allocation3 + $0x4f8] sm:$0xff]
    %v9640 = vld [vmem:[#allocation3 + $0x500] sm:$0xff]
    %v9641 = vld [vmem:[#allocation3 + $0x508] sm:$0xff]
    %v9642 = vld [vmem:[#allocation3 + $0x510] sm:$0xff]
    %v9643 = vld [vmem:[#allocation3 + $0x518] sm:$0xff]
    %v9644 = vld [vmem:[#allocation3 + $0x520] sm:$0xff]
    %v9645 = vld [vmem:[#allocation3 + $0x528] sm:$0xff]
    %v9646 = vld [vmem:[#allocation3 + $0x530] sm:$0xff]
    %v9647 = vld [vmem:[#allocation3 + $0x538] sm:$0xff]
    %v9648 = vld [vmem:[#allocation3 + $0x540] sm:$0xff]
    %v9649 = vld [vmem:[#allocation3 + $0x548] sm:$0xff]
    %v9650 = vld [vmem:[#allocation3 + $0x550] sm:$0xff]
    %v9651 = vld [vmem:[#allocation3 + $0x558] sm:$0xff]
    %v9652 = vld [vmem:[#allocation3 + $0x560] sm:$0xff]
    %v9653 = vld [vmem:[#allocation3 + $0x568] sm:$0xff]
    %v9654 = vld [vmem:[#allocation3 + $0x570] sm:$0xff]
    %v9655 = vld [vmem:[#allocation3 + $0x578] sm:$0xff]
    %v9656 = vld [vmem:[#allocation3 + $0x580] sm:$0xff]
    %v9657 = vld [vmem:[#allocation3 + $0x588] sm:$0xff]
    %v9658 = vld [vmem:[#allocation3 + $0x590] sm:$0xff]
    %v9659 = vld [vmem:[#allocation3 + $0x598] sm:$0xff]
    %v9660 = vld [vmem:[#allocation3 + $0x5a0] sm:$0xff]
    %v9661 = vld [vmem:[#allocation3 + $0x5a8] sm:$0xff]
    %v9662 = vld [vmem:[#allocation3 + $0x5b0] sm:$0xff]
    %v9663 = vld [vmem:[#allocation3 + $0x5b8] sm:$0xff]
    %v9664 = vld [vmem:[#allocation3 + $0x5c0] sm:$0xff]
    %v9665 = vld [vmem:[#allocation3 + $0x5c8] sm:$0xff]
    %v9666 = vld [vmem:[#allocation3 + $0x5d0] sm:$0xff]
    %v9667 = vld [vmem:[#allocation3 + $0x5d8] sm:$0xff]
    %v9668 = vld [vmem:[#allocation3 + $0x5e0] sm:$0xff]
    %v9669 = vld [vmem:[#allocation3 + $0x5e8] sm:$0xff]
    %v9670 = vld [vmem:[#allocation3 + $0x5f0] sm:$0xff]
    %v9671 = vld [vmem:[#allocation3 + $0x5f8] sm:$0xff]
    %v9672 = vld [vmem:[#allocation3 + $0x600] sm:$0xff]
    %v9673 = vld [vmem:[#allocation3 + $0x608] sm:$0xff]
    %v9674 = vld [vmem:[#allocation3 + $0x610] sm:$0xff]
    %v9675 = vld [vmem:[#allocation3 + $0x618] sm:$0xff]
    %v9676 = vld [vmem:[#allocation3 + $0x620] sm:$0xff]
    %v9677 = vld [vmem:[#allocation3 + $0x628] sm:$0xff]
    %v9678 = vld [vmem:[#allocation3 + $0x630] sm:$0xff]
    %v9679 = vld [vmem:[#allocation3 + $0x638] sm:$0xff]
    %v9680 = vld [vmem:[#allocation3 + $0x640] sm:$0xff]
    %v9681 = vld [vmem:[#allocation3 + $0x648] sm:$0xff]
    %v9682 = vld [vmem:[#allocation3 + $0x650] sm:$0xff]
    %v9683 = vld [vmem:[#allocation3 + $0x658] sm:$0xff]
    %v9684 = vld [vmem:[#allocation3 + $0x660] sm:$0xff]
    %v9685 = vld [vmem:[#allocation3 + $0x668] sm:$0xff]
    %v9686 = vld [vmem:[#allocation3 + $0x670] sm:$0xff]
    %v9687 = vld [vmem:[#allocation3 + $0x678] sm:$0xff]
    %v9688 = vld [vmem:[#allocation3 + $0x680] sm:$0xff]
    %v9689 = vld [vmem:[#allocation3 + $0x688] sm:$0xff]
    %v9690 = vld [vmem:[#allocation3 + $0x690] sm:$0xff]
    %v9691 = vld [vmem:[#allocation3 + $0x698] sm:$0xff]
    %v9692 = vld [vmem:[#allocation3 + $0x6a0] sm:$0xff]
    %v9693 = vld [vmem:[#allocation3 + $0x6a8] sm:$0xff]
    %v9694 = vld [vmem:[#allocation3 + $0x6b0] sm:$0xff]
    %v9695 = vld [vmem:[#allocation3 + $0x6b8] sm:$0xff]
    %v9696 = vld [vmem:[#allocation3 + $0x6c0] sm:$0xff]
    %v9697 = vld [vmem:[#allocation3 + $0x6c8] sm:$0xff]
    %v9698 = vld [vmem:[#allocation3 + $0x6d0] sm:$0xff]
    %v9699 = vld [vmem:[#allocation3 + $0x6d8] sm:$0xff]
    %v9700 = vld [vmem:[#allocation3 + $0x6e0] sm:$0xff]
    %v9701 = vld [vmem:[#allocation3 + $0x6e8] sm:$0xff]
    %v9702 = vld [vmem:[#allocation3 + $0x6f0] sm:$0xff]
    %v9703 = vld [vmem:[#allocation3 + $0x6f8] sm:$0xff]
    %v9704 = vld [vmem:[#allocation3 + $0x700] sm:$0xff]
    %v9705 = vld [vmem:[#allocation3 + $0x708] sm:$0xff]
    %v9706 = vld [vmem:[#allocation3 + $0x710] sm:$0xff]
    %v9707 = vld [vmem:[#allocation3 + $0x718] sm:$0xff]
    %v9708 = vld [vmem:[#allocation3 + $0x720] sm:$0xff]
    %v9709 = vld [vmem:[#allocation3 + $0x728] sm:$0xff]
    %v9710 = vld [vmem:[#allocation3 + $0x730] sm:$0xff]
    %v9711 = vld [vmem:[#allocation3 + $0x738] sm:$0xff]
    %v9712 = vld [vmem:[#allocation3 + $0x740] sm:$0xff]
    %v9713 = vld [vmem:[#allocation3 + $0x748] sm:$0xff]
    %v9714 = vld [vmem:[#allocation3 + $0x750] sm:$0xff]
    %v9715 = vld [vmem:[#allocation3 + $0x758] sm:$0xff]
    %v9716 = vld [vmem:[#allocation3 + $0x760] sm:$0xff]
    %v9717 = vld [vmem:[#allocation3 + $0x768] sm:$0xff]
    %v9718 = vld [vmem:[#allocation3 + $0x770] sm:$0xff]
    %v9719 = vld [vmem:[#allocation3 + $0x778] sm:$0xff]
    %v9720 = vld [vmem:[#allocation3 + $0x780] sm:$0xff]
    %v9721 = vld [vmem:[#allocation3 + $0x788] sm:$0xff]
    %v9722 = vld [vmem:[#allocation3 + $0x790] sm:$0xff]
    %v9723 = vld [vmem:[#allocation3 + $0x798] sm:$0xff]
    %v9724 = vld [vmem:[#allocation3 + $0x7a0] sm:$0xff]
    %v9725 = vld [vmem:[#allocation3 + $0x7a8] sm:$0xff]
    %v9726 = vld [vmem:[#allocation3 + $0x7b0] sm:$0xff]
    %v9727 = vld [vmem:[#allocation3 + $0x7b8] sm:$0xff]
    %v9728 = vld [vmem:[#allocation3 + $0x7c0] sm:$0xff]
    %v9729 = vld [vmem:[#allocation3 + $0x7c8] sm:$0xff]
    %v9730 = vld [vmem:[#allocation3 + $0x7d0] sm:$0xff]
    %v9731 = vld [vmem:[#allocation3 + $0x7d8] sm:$0xff]
    %v9732 = vld [vmem:[#allocation3 + $0x7e0] sm:$0xff]
    %v9733 = vld [vmem:[#allocation3 + $0x7e8] sm:$0xff]
    %v9734 = vld [vmem:[#allocation3 + $0x7f0] sm:$0xff]
    %v9735 = vld [vmem:[#allocation3 + $0x7f8] sm:$0xff]
    %v9736 = vld [vmem:[#allocation3 + $0x800] sm:$0xff]
    %v9737 = vld [vmem:[#allocation3 + $0x808] sm:$0xff]
    %v9738 = vld [vmem:[#allocation3 + $0x810] sm:$0xff]
    %v9739 = vld [vmem:[#allocation3 + $0x818] sm:$0xff]
    %v9740 = vld [vmem:[#allocation3 + $0x820] sm:$0xff]
    %v9741 = vld [vmem:[#allocation3 + $0x828] sm:$0xff]
    %v9742 = vld [vmem:[#allocation3 + $0x830] sm:$0xff]
    %v9743 = vld [vmem:[#allocation3 + $0x838] sm:$0xff]
    %v9744 = vld [vmem:[#allocation3 + $0x840] sm:$0xff]
    %v9745 = vld [vmem:[#allocation3 + $0x848] sm:$0xff]
    %v9746 = vld [vmem:[#allocation3 + $0x850] sm:$0xff]
    %v9747 = vld [vmem:[#allocation3 + $0x858] sm:$0xff]
    %v9748 = vld [vmem:[#allocation3 + $0x860] sm:$0xff]
    %v9749 = vld [vmem:[#allocation3 + $0x868] sm:$0xff]
    %v9750 = vld [vmem:[#allocation3 + $0x870] sm:$0xff]
    %v9751 = vld [vmem:[#allocation3 + $0x878] sm:$0xff]
    %v9752 = vld [vmem:[#allocation3 + $0x880] sm:$0xff]
    %v9753 = vld [vmem:[#allocation3 + $0x888] sm:$0xff]
    %v9754 = vld [vmem:[#allocation3 + $0x890] sm:$0xff]
    %v9755 = vld [vmem:[#allocation3 + $0x898] sm:$0xff]
    %v9756 = vld [vmem:[#allocation3 + $0x8a0] sm:$0xff]
    %v9757 = vld [vmem:[#allocation3 + $0x8a8] sm:$0xff]
    %v9758 = vld [vmem:[#allocation3 + $0x8b0] sm:$0xff]
    %v9759 = vld [vmem:[#allocation3 + $0x8b8] sm:$0xff]
    %v9760 = vld [vmem:[#allocation3 + $0x8c0] sm:$0xff]
    %v9761 = vld [vmem:[#allocation3 + $0x8c8] sm:$0xff]
    %v9762 = vld [vmem:[#allocation3 + $0x8d0] sm:$0xff]
    %v9763 = vld [vmem:[#allocation3 + $0x8d8] sm:$0xff]
    %v9764 = vld [vmem:[#allocation3 + $0x8e0] sm:$0xff]
    %v9765 = vld [vmem:[#allocation3 + $0x8e8] sm:$0xff]
    %v9766 = vld [vmem:[#allocation3 + $0x8f0] sm:$0xff]
    %v9767 = vld [vmem:[#allocation3 + $0x8f8] sm:$0xff]
    %v9768 = vld [vmem:[#allocation3 + $0x900] sm:$0xff]
    %v9769 = vld [vmem:[#allocation3 + $0x908] sm:$0xff]
    %v9770 = vld [vmem:[#allocation3 + $0x910] sm:$0xff]
    %v9771 = vld [vmem:[#allocation3 + $0x918] sm:$0xff]
    %v9772 = vld [vmem:[#allocation3 + $0x920] sm:$0xff]
    %v9773 = vld [vmem:[#allocation3 + $0x928] sm:$0xff]
    %v9774 = vld [vmem:[#allocation3 + $0x930] sm:$0xff]
    %v9775 = vld [vmem:[#allocation3 + $0x938] sm:$0xff]
    %v9776 = vld [vmem:[#allocation3 + $0x940] sm:$0xff]
    %v9777 = vld [vmem:[#allocation3 + $0x948] sm:$0xff]
    %v9778 = vld [vmem:[#allocation3 + $0x950] sm:$0xff]
    %v9779 = vld [vmem:[#allocation3 + $0x958] sm:$0xff]
    %v9780 = vld [vmem:[#allocation3 + $0x960] sm:$0xff]
    %v9781 = vld [vmem:[#allocation3 + $0x968] sm:$0xff]
    %v9782 = vld [vmem:[#allocation3 + $0x970] sm:$0xff]
    %v9783 = vld [vmem:[#allocation3 + $0x978] sm:$0xff]
    %v9784 = vld [vmem:[#allocation3 + $0x980] sm:$0xff]
    %v9785 = vld [vmem:[#allocation3 + $0x988] sm:$0xff]
    %v9786 = vld [vmem:[#allocation3 + $0x990] sm:$0xff]
    %v9787 = vld [vmem:[#allocation3 + $0x998] sm:$0xff]
    %v9788 = vld [vmem:[#allocation3 + $0x9a0] sm:$0xff]
    %v9789 = vld [vmem:[#allocation3 + $0x9a8] sm:$0xff]
    %v9790 = vld [vmem:[#allocation3 + $0x9b0] sm:$0xff]
    %v9791 = vld [vmem:[#allocation3 + $0x9b8] sm:$0xff]
    %v9792 = vld [vmem:[#allocation3 + $0x9c0] sm:$0xff]
    %v9793 = vld [vmem:[#allocation3 + $0x9c8] sm:$0xff]
    %v9794 = vld [vmem:[#allocation3 + $0x9d0] sm:$0xff]
    %v9795 = vld [vmem:[#allocation3 + $0x9d8] sm:$0xff]
    %v9796 = vld [vmem:[#allocation3 + $0x9e0] sm:$0xff]
    %v9797 = vld [vmem:[#allocation3 + $0x9e8] sm:$0xff]
    %v9798 = vld [vmem:[#allocation3 + $0x9f0] sm:$0xff]
    %v9799 = vld [vmem:[#allocation3 + $0x9f8] sm:$0xff]
    %v9800 = vld [vmem:[#allocation3 + $0xa00] sm:$0xff]
    %v9801 = vld [vmem:[#allocation3 + $0xa08] sm:$0xff]
    %v9802 = vld [vmem:[#allocation3 + $0xa10] sm:$0xff]
    %v9803 = vld [vmem:[#allocation3 + $0xa18] sm:$0xff]
    %v9804 = vld [vmem:[#allocation3 + $0xa20] sm:$0xff]
    %v9805 = vld [vmem:[#allocation3 + $0xa28] sm:$0xff]
    %v9806 = vld [vmem:[#allocation3 + $0xa30] sm:$0xff]
    %v9807 = vld [vmem:[#allocation3 + $0xa38] sm:$0xff]
    %v9808 = vld [vmem:[#allocation3 + $0xa40] sm:$0xff]
    %v9809 = vld [vmem:[#allocation3 + $0xa48] sm:$0xff]
    %v9810 = vld [vmem:[#allocation3 + $0xa50] sm:$0xff]
    %v9811 = vld [vmem:[#allocation3 + $0xa58] sm:$0xff]
    %v9812 = vld [vmem:[#allocation3 + $0xa60] sm:$0xff]
    %v9813 = vld [vmem:[#allocation3 + $0xa68] sm:$0xff]
    %v9814 = vld [vmem:[#allocation3 + $0xa70] sm:$0xff]
    %v9815 = vld [vmem:[#allocation3 + $0xa78] sm:$0xff]
    %v9816 = vld [vmem:[#allocation3 + $0xa80] sm:$0xff]
    %v9817 = vld [vmem:[#allocation3 + $0xa88] sm:$0xff]
    %v9818 = vld [vmem:[#allocation3 + $0xa90] sm:$0xff]
    %v9819 = vld [vmem:[#allocation3 + $0xa98] sm:$0xff]
    %v9820 = vld [vmem:[#allocation3 + $0xaa0] sm:$0xff]
    %v9821 = vld [vmem:[#allocation3 + $0xaa8] sm:$0xff]
    %v9822 = vld [vmem:[#allocation3 + $0xab0] sm:$0xff]
    %v9823 = vld [vmem:[#allocation3 + $0xab8] sm:$0xff]
    %v9824 = vld [vmem:[#allocation3 + $0xac0] sm:$0xff]
    %v9825 = vld [vmem:[#allocation3 + $0xac8] sm:$0xff]
    %v9826 = vld [vmem:[#allocation3 + $0xad0] sm:$0xff]
    %v9827 = vld [vmem:[#allocation3 + $0xad8] sm:$0xff]
    %v9828 = vld [vmem:[#allocation3 + $0xae0] sm:$0xff]
    %v9829 = vld [vmem:[#allocation3 + $0xae8] sm:$0xff]
    %v9830 = vld [vmem:[#allocation3 + $0xaf0] sm:$0xff]
    %v9831 = vld [vmem:[#allocation3 + $0xaf8] sm:$0xff]
    %v9832 = vld [vmem:[#allocation3 + $0xb00] sm:$0xff]
    %v9833 = vld [vmem:[#allocation3 + $0xb08] sm:$0xff]
    %v9834 = vld [vmem:[#allocation3 + $0xb10] sm:$0xff]
    %v9835 = vld [vmem:[#allocation3 + $0xb18] sm:$0xff]
    %v9836 = vld [vmem:[#allocation3 + $0xb20] sm:$0xff]
    %v9837 = vld [vmem:[#allocation3 + $0xb28] sm:$0xff]
    %v9838 = vld [vmem:[#allocation3 + $0xb30] sm:$0xff]
    %v9839 = vld [vmem:[#allocation3 + $0xb38] sm:$0xff]
    %v9840 = vld [vmem:[#allocation3 + $0xb40] sm:$0xff]
    %v9841 = vld [vmem:[#allocation3 + $0xb48] sm:$0xff]
    %v9842 = vld [vmem:[#allocation3 + $0xb50] sm:$0xff]
    %v9843 = vld [vmem:[#allocation3 + $0xb58] sm:$0xff]
    %v9844 = vld [vmem:[#allocation3 + $0xb60] sm:$0xff]
    %v9845 = vld [vmem:[#allocation3 + $0xb68] sm:$0xff]
    %v9846 = vld [vmem:[#allocation3 + $0xb70] sm:$0xff]
    %v9847 = vld [vmem:[#allocation3 + $0xb78] sm:$0xff]
    %v9848 = vld [vmem:[#allocation3 + $0xb80] sm:$0xff]
    %v9849 = vld [vmem:[#allocation3 + $0xb88] sm:$0xff]
    %v9850 = vld [vmem:[#allocation3 + $0xb90] sm:$0xff]
    %v9851 = vld [vmem:[#allocation3 + $0xb98] sm:$0xff]
    %v9852 = vld [vmem:[#allocation3 + $0xba0] sm:$0xff]
    %v9853 = vld [vmem:[#allocation3 + $0xba8] sm:$0xff]
    %v9854 = vld [vmem:[#allocation3 + $0xbb0] sm:$0xff]
    %v9855 = vld [vmem:[#allocation3 + $0xbb8] sm:$0xff]
    %v9856 = vld [vmem:[#allocation3 + $0xbc0] sm:$0xff]
    %v9857 = vld [vmem:[#allocation3 + $0xbc8] sm:$0xff]
    %v9858 = vld [vmem:[#allocation3 + $0xbd0] sm:$0xff]
    %v9859 = vld [vmem:[#allocation3 + $0xbd8] sm:$0xff]
    %v9860 = vld [vmem:[#allocation3 + $0xbe0] sm:$0xff]
    %v9861 = vld [vmem:[#allocation3 + $0xbe8] sm:$0xff]
    %v9862 = vld [vmem:[#allocation3 + $0xbf0] sm:$0xff]
    %v9863 = vld [vmem:[#allocation3 + $0xbf8] sm:$0xff]
    %s9864 = scalar_lea.vmem [#allocation9], 65
    %v9865 = vld [vmem:[%s9864] ss:$8 sm:$0xf]
    %v9866 = vld [vmem:[%s9864] ss:$8 sm:$0x30]
    %v9867 = vor.u32 %v9865, %v9866
    %v9868 = vpack.c.bf16 %v9472, %v9472
    %v9869 = vpack.c.bf16 %v9473, %v9473
    %v9870 = vpack.c.bf16 %v9474, %v9474
    %v9871 = vpack.c.bf16 %v9475, %v9475
    %v9872 = vpack.c.bf16 %v9476, %v9476
    %v9873 = vpack.c.bf16 %v9477, %v9477
    %v9874 = vpack.c.bf16 %v9478, %v9478
    %v9875 = vpack.c.bf16 %v9479, %v9479
    %v9877 = vlaneseq
    %v9878 = vshrl.u32 %v9877, 7
    %v9879 = vsub.s32 0, %v9878
    %v9880 = vrot.slane %v9867, %v9879
    %v9881 = vlaneseq
    %v9882 = vshrl.u32 %v9881, 7
    %v9883 = vsub.s32 1, %v9882
    %v9884 = vrot.slane %v9867, %v9883
    %v9885 = vlaneseq
    %v9886 = vshrl.u32 %v9885, 7
    %v9887 = vsub.s32 2, %v9886
    %v9888 = vrot.slane %v9867, %v9887
    %v9889 = vlaneseq
    %v9890 = vshrl.u32 %v9889, 7
    %v9891 = vsub.s32 3, %v9890
    %v9892 = vrot.slane %v9867, %v9891
    %v9893 = vlaneseq
    %v9894 = vshrl.u32 %v9893, 7
    %v9895 = vsub.s32 4, %v9894
    %v9896 = vrot.slane %v9867, %v9895
    %v9897 = vlaneseq
    %v9898 = vshrl.u32 %v9897, 7
    %v9899 = vsub.s32 5, %v9898
    %v9900 = vrot.slane %v9867, %v9899
    %v10291 = vunpack.c.l.b16 %v9480
    %v10292 = vunpack.c.h.b16 %v9480
    %v10293 = vunpack.c.l.b16 %v9481
    %v10294 = vunpack.c.h.b16 %v9481
    %v10295 = vunpack.c.l.b16 %v9482
    %v10296 = vunpack.c.h.b16 %v9482
    %v10297 = vunpack.c.l.b16 %v9483
    %v10298 = vunpack.c.h.b16 %v9483
    %v10299 = vunpack.c.l.b16 %v9484
    %v10300 = vunpack.c.h.b16 %v9484
    %v10301 = vunpack.c.l.b16 %v9485
    %v10302 = vunpack.c.h.b16 %v9485
    %v10303 = vunpack.c.l.b16 %v9486
    %v10304 = vunpack.c.h.b16 %v9486
    %v10305 = vunpack.c.l.b16 %v9487
    %v10306 = vunpack.c.h.b16 %v9487
    %v10307 = vunpack.c.l.b16 %v9488
    %v10308 = vunpack.c.h.b16 %v9488
    %v10309 = vunpack.c.l.b16 %v9489
    %v10310 = vunpack.c.h.b16 %v9489
    %v10311 = vunpack.c.l.b16 %v9490
    %v10312 = vunpack.c.h.b16 %v9490
    %v10313 = vunpack.c.l.b16 %v9491
    %v10314 = vunpack.c.h.b16 %v9491
    %v10315 = vunpack.c.l.b16 %v9492
    %v10316 = vunpack.c.h.b16 %v9492
    %v10317 = vunpack.c.l.b16 %v9493
    %v10318 = vunpack.c.h.b16 %v9493
    %v10319 = vunpack.c.l.b16 %v9494
    %v10320 = vunpack.c.h.b16 %v9494
    %v10321 = vunpack.c.l.b16 %v9495
    %v10322 = vunpack.c.h.b16 %v9495
    %v10323 = vunpack.c.l.b16 %v9496
    %v10324 = vunpack.c.h.b16 %v9496
    %v10325 = vunpack.c.l.b16 %v9497
    %v10326 = vunpack.c.h.b16 %v9497
    %v10327 = vunpack.c.l.b16 %v9498
    %v10328 = vunpack.c.h.b16 %v9498
    %v10329 = vunpack.c.l.b16 %v9499
    %v10330 = vunpack.c.h.b16 %v9499
    %v10331 = vunpack.c.l.b16 %v9500
    %v10332 = vunpack.c.h.b16 %v9500
    %v10333 = vunpack.c.l.b16 %v9501
    %v10334 = vunpack.c.h.b16 %v9501
    %v10335 = vunpack.c.l.b16 %v9502
    %v10336 = vunpack.c.h.b16 %v9502
    %v10337 = vunpack.c.l.b16 %v9503
    %v10338 = vunpack.c.h.b16 %v9503
    %v10339 = vunpack.c.l.b16 %v9504
    %v10340 = vunpack.c.h.b16 %v9504
    %v10341 = vunpack.c.l.b16 %v9505
    %v10342 = vunpack.c.h.b16 %v9505
    %v10343 = vunpack.c.l.b16 %v9506
    %v10344 = vunpack.c.h.b16 %v9506
    %v10345 = vunpack.c.l.b16 %v9507
    %v10346 = vunpack.c.h.b16 %v9507
    %v10347 = vunpack.c.l.b16 %v9508
    %v10348 = vunpack.c.h.b16 %v9508
    %v10349 = vunpack.c.l.b16 %v9509
    %v10350 = vunpack.c.h.b16 %v9509
    %v10351 = vunpack.c.l.b16 %v9510
    %v10352 = vunpack.c.h.b16 %v9510
    %v10353 = vunpack.c.l.b16 %v9511
    %v10354 = vunpack.c.h.b16 %v9511
    %v10355 = vunpack.c.l.b16 %v9512
    %v10356 = vunpack.c.h.b16 %v9512
    %v10357 = vunpack.c.l.b16 %v9513
    %v10358 = vunpack.c.h.b16 %v9513
    %v10359 = vunpack.c.l.b16 %v9514
    %v10360 = vunpack.c.h.b16 %v9514
    %v10361 = vunpack.c.l.b16 %v9515
    %v10362 = vunpack.c.h.b16 %v9515
    %v10363 = vunpack.c.l.b16 %v9516
    %v10364 = vunpack.c.h.b16 %v9516
    %v10365 = vunpack.c.l.b16 %v9517
    %v10366 = vunpack.c.h.b16 %v9517
    %v10367 = vunpack.c.l.b16 %v9518
    %v10368 = vunpack.c.h.b16 %v9518
    %v10369 = vunpack.c.l.b16 %v9519
    %v10370 = vunpack.c.h.b16 %v9519
    %v10371 = vunpack.c.l.b16 %v9520
    %v10372 = vunpack.c.h.b16 %v9520
    %v10373 = vunpack.c.l.b16 %v9521
    %v10374 = vunpack.c.h.b16 %v9521
    %v10375 = vunpack.c.l.b16 %v9522
    %v10376 = vunpack.c.h.b16 %v9522
    %v10377 = vunpack.c.l.b16 %v9523
    %v10378 = vunpack.c.h.b16 %v9523
    %v10379 = vunpack.c.l.b16 %v9524
    %v10380 = vunpack.c.h.b16 %v9524
    %v10381 = vunpack.c.l.b16 %v9525
    %v10382 = vunpack.c.h.b16 %v9525
    %v10383 = vunpack.c.l.b16 %v9526
    %v10384 = vunpack.c.h.b16 %v9526
    %v10385 = vunpack.c.l.b16 %v9527
    %v10386 = vunpack.c.h.b16 %v9527
    %v10387 = vunpack.c.l.b16 %v9528
    %v10388 = vunpack.c.h.b16 %v9528
    %v10389 = vunpack.c.l.b16 %v9529
    %v10390 = vunpack.c.h.b16 %v9529
    %v10391 = vunpack.c.l.b16 %v9530
    %v10392 = vunpack.c.h.b16 %v9530
    %v10393 = vunpack.c.l.b16 %v9531
    %v10394 = vunpack.c.h.b16 %v9531
    %v10395 = vunpack.c.l.b16 %v9532
    %v10396 = vunpack.c.h.b16 %v9532
    %v10397 = vunpack.c.l.b16 %v9533
    %v10398 = vunpack.c.h.b16 %v9533
    %v10399 = vunpack.c.l.b16 %v9534
    %v10400 = vunpack.c.h.b16 %v9534
    %v10401 = vunpack.c.l.b16 %v9535
    %v10402 = vunpack.c.h.b16 %v9535
    %v10403 = vunpack.c.l.b16 %v9536
    %v10404 = vunpack.c.h.b16 %v9536
    %v10405 = vunpack.c.l.b16 %v9537
    %v10406 = vunpack.c.h.b16 %v9537
    %v10407 = vunpack.c.l.b16 %v9538
    %v10408 = vunpack.c.h.b16 %v9538
    %v10409 = vunpack.c.l.b16 %v9539
    %v10410 = vunpack.c.h.b16 %v9539
    %v10411 = vunpack.c.l.b16 %v9540
    %v10412 = vunpack.c.h.b16 %v9540
    %v10413 = vunpack.c.l.b16 %v9541
    %v10414 = vunpack.c.h.b16 %v9541
    %v10415 = vunpack.c.l.b16 %v9542
    %v10416 = vunpack.c.h.b16 %v9542
    %v10417 = vunpack.c.l.b16 %v9543
    %v10418 = vunpack.c.h.b16 %v9543
    %v10419 = vunpack.c.l.b16 %v9544
    %v10420 = vunpack.c.h.b16 %v9544
    %v10421 = vunpack.c.l.b16 %v9545
    %v10422 = vunpack.c.h.b16 %v9545
    %v10423 = vunpack.c.l.b16 %v9546
    %v10424 = vunpack.c.h.b16 %v9546
    %v10425 = vunpack.c.l.b16 %v9547
    %v10426 = vunpack.c.h.b16 %v9547
    %v10427 = vunpack.c.l.b16 %v9548
    %v10428 = vunpack.c.h.b16 %v9548
    %v10429 = vunpack.c.l.b16 %v9549
    %v10430 = vunpack.c.h.b16 %v9549
    %v10431 = vunpack.c.l.b16 %v9550
    %v10432 = vunpack.c.h.b16 %v9550
    %v10433 = vunpack.c.l.b16 %v9551
    %v10434 = vunpack.c.h.b16 %v9551
    %v10435 = vunpack.c.l.b16 %v9552
    %v10436 = vunpack.c.h.b16 %v9552
    %v10437 = vunpack.c.l.b16 %v9553
    %v10438 = vunpack.c.h.b16 %v9553
    %v10439 = vunpack.c.l.b16 %v9554
    %v10440 = vunpack.c.h.b16 %v9554
    %v10441 = vunpack.c.l.b16 %v9555
    %v10442 = vunpack.c.h.b16 %v9555
    %v10443 = vunpack.c.l.b16 %v9556
    %v10444 = vunpack.c.h.b16 %v9556
    %v10445 = vunpack.c.l.b16 %v9557
    %v10446 = vunpack.c.h.b16 %v9557
    %v10447 = vunpack.c.l.b16 %v9558
    %v10448 = vunpack.c.h.b16 %v9558
    %v10449 = vunpack.c.l.b16 %v9559
    %v10450 = vunpack.c.h.b16 %v9559
    %v10451 = vunpack.c.l.b16 %v9560
    %v10452 = vunpack.c.h.b16 %v9560
    %v10453 = vunpack.c.l.b16 %v9561
    %v10454 = vunpack.c.h.b16 %v9561
    %v10455 = vunpack.c.l.b16 %v9562
    %v10456 = vunpack.c.h.b16 %v9562
    %v10457 = vunpack.c.l.b16 %v9563
    %v10458 = vunpack.c.h.b16 %v9563
    %v10459 = vunpack.c.l.b16 %v9564
    %v10460 = vunpack.c.h.b16 %v9564
    %v10461 = vunpack.c.l.b16 %v9565
    %v10462 = vunpack.c.h.b16 %v9565
    %v10463 = vunpack.c.l.b16 %v9566
    %v10464 = vunpack.c.h.b16 %v9566
    %v10465 = vunpack.c.l.b16 %v9567
    %v10466 = vunpack.c.h.b16 %v9567
    %v10467 = vunpack.c.l.b16 %v9568
    %v10468 = vunpack.c.h.b16 %v9568
    %v10469 = vunpack.c.l.b16 %v9569
    %v10470 = vunpack.c.h.b16 %v9569
    %v10471 = vunpack.c.l.b16 %v9570
    %v10472 = vunpack.c.h.b16 %v9570
    %v10473 = vunpack.c.l.b16 %v9571
    %v10474 = vunpack.c.h.b16 %v9571
    %v10475 = vunpack.c.l.b16 %v9572
    %v10476 = vunpack.c.h.b16 %v9572
    %v10477 = vunpack.c.l.b16 %v9573
    %v10478 = vunpack.c.h.b16 %v9573
    %v10479 = vunpack.c.l.b16 %v9574
    %v10480 = vunpack.c.h.b16 %v9574
    %v10481 = vunpack.c.l.b16 %v9575
    %v10482 = vunpack.c.h.b16 %v9575
    %v10483 = vunpack.c.l.b16 %v9576
    %v10484 = vunpack.c.h.b16 %v9576
    %v10485 = vunpack.c.l.b16 %v9577
    %v10486 = vunpack.c.h.b16 %v9577
    %v10487 = vunpack.c.l.b16 %v9578
    %v10488 = vunpack.c.h.b16 %v9578
    %v10489 = vunpack.c.l.b16 %v9579
    %v10490 = vunpack.c.h.b16 %v9579
    %v10491 = vunpack.c.l.b16 %v9580
    %v10492 = vunpack.c.h.b16 %v9580
    %v10493 = vunpack.c.l.b16 %v9581
    %v10494 = vunpack.c.h.b16 %v9581
    %v10495 = vunpack.c.l.b16 %v9582
    %v10496 = vunpack.c.h.b16 %v9582
    %v10497 = vunpack.c.l.b16 %v9583
    %v10498 = vunpack.c.h.b16 %v9583
    %v10499 = vunpack.c.l.b16 %v9584
    %v10500 = vunpack.c.h.b16 %v9584
    %v10501 = vunpack.c.l.b16 %v9585
    %v10502 = vunpack.c.h.b16 %v9585
    %v10503 = vunpack.c.l.b16 %v9586
    %v10504 = vunpack.c.h.b16 %v9586
    %v10505 = vunpack.c.l.b16 %v9587
    %v10506 = vunpack.c.h.b16 %v9587
    %v10507 = vunpack.c.l.b16 %v9588
    %v10508 = vunpack.c.h.b16 %v9588
    %v10509 = vunpack.c.l.b16 %v9589
    %v10510 = vunpack.c.h.b16 %v9589
    %v10511 = vunpack.c.l.b16 %v9590
    %v10512 = vunpack.c.h.b16 %v9590
    %v10513 = vunpack.c.l.b16 %v9591
    %v10514 = vunpack.c.h.b16 %v9591
    %v10515 = vunpack.c.l.b16 %v9592
    %v10516 = vunpack.c.h.b16 %v9592
    %v10517 = vunpack.c.l.b16 %v9593
    %v10518 = vunpack.c.h.b16 %v9593
    %v10519 = vunpack.c.l.b16 %v9594
    %v10520 = vunpack.c.h.b16 %v9594
    %v10521 = vunpack.c.l.b16 %v9595
    %v10522 = vunpack.c.h.b16 %v9595
    %v10523 = vunpack.c.l.b16 %v9596
    %v10524 = vunpack.c.h.b16 %v9596
    %v10525 = vunpack.c.l.b16 %v9597
    %v10526 = vunpack.c.h.b16 %v9597
    %v10527 = vunpack.c.l.b16 %v9598
    %v10528 = vunpack.c.h.b16 %v9598
    %v10529 = vunpack.c.l.b16 %v9599
    %v10530 = vunpack.c.h.b16 %v9599
    %v10531 = vunpack.c.l.b16 %v9600
    %v10532 = vunpack.c.h.b16 %v9600
    %v10533 = vunpack.c.l.b16 %v9601
    %v10534 = vunpack.c.h.b16 %v9601
    %v10535 = vunpack.c.l.b16 %v9602
    %v10536 = vunpack.c.h.b16 %v9602
    %v10537 = vunpack.c.l.b16 %v9603
    %v10538 = vunpack.c.h.b16 %v9603
    %v10539 = vunpack.c.l.b16 %v9604
    %v10540 = vunpack.c.h.b16 %v9604
    %v10541 = vunpack.c.l.b16 %v9605
    %v10542 = vunpack.c.h.b16 %v9605
    %v10543 = vunpack.c.l.b16 %v9606
    %v10544 = vunpack.c.h.b16 %v9606
    %v10545 = vunpack.c.l.b16 %v9607
    %v10546 = vunpack.c.h.b16 %v9607
    %v10547 = vunpack.c.l.b16 %v9608
    %v10548 = vunpack.c.h.b16 %v9608
    %v10549 = vunpack.c.l.b16 %v9609
    %v10550 = vunpack.c.h.b16 %v9609
    %v10551 = vunpack.c.l.b16 %v9610
    %v10552 = vunpack.c.h.b16 %v9610
    %v10553 = vunpack.c.l.b16 %v9611
    %v10554 = vunpack.c.h.b16 %v9611
    %v10555 = vunpack.c.l.b16 %v9612
    %v10556 = vunpack.c.h.b16 %v9612
    %v10557 = vunpack.c.l.b16 %v9613
    %v10558 = vunpack.c.h.b16 %v9613
    %v10559 = vunpack.c.l.b16 %v9614
    %v10560 = vunpack.c.h.b16 %v9614
    %v10561 = vunpack.c.l.b16 %v9615
    %v10562 = vunpack.c.h.b16 %v9615
    %v10563 = vunpack.c.l.b16 %v9616
    %v10564 = vunpack.c.h.b16 %v9616
    %v10565 = vunpack.c.l.b16 %v9617
    %v10566 = vunpack.c.h.b16 %v9617
    %v10567 = vunpack.c.l.b16 %v9618
    %v10568 = vunpack.c.h.b16 %v9618
    %v10569 = vunpack.c.l.b16 %v9619
    %v10570 = vunpack.c.h.b16 %v9619
    %v10571 = vunpack.c.l.b16 %v9620
    %v10572 = vunpack.c.h.b16 %v9620
    %v10573 = vunpack.c.l.b16 %v9621
    %v10574 = vunpack.c.h.b16 %v9621
    %v10575 = vunpack.c.l.b16 %v9622
    %v10576 = vunpack.c.h.b16 %v9622
    %v10577 = vunpack.c.l.b16 %v9623
    %v10578 = vunpack.c.h.b16 %v9623
    %v10579 = vunpack.c.l.b16 %v9624
    %v10580 = vunpack.c.h.b16 %v9624
    %v10581 = vunpack.c.l.b16 %v9625
    %v10582 = vunpack.c.h.b16 %v9625
    %v10583 = vunpack.c.l.b16 %v9626
    %v10584 = vunpack.c.h.b16 %v9626
    %v10585 = vunpack.c.l.b16 %v9627
    %v10586 = vunpack.c.h.b16 %v9627
    %v10587 = vunpack.c.l.b16 %v9628
    %v10588 = vunpack.c.h.b16 %v9628
    %v10589 = vunpack.c.l.b16 %v9629
    %v10590 = vunpack.c.h.b16 %v9629
    %v10591 = vunpack.c.l.b16 %v9630
    %v10592 = vunpack.c.h.b16 %v9630
    %v10593 = vunpack.c.l.b16 %v9631
    %v10594 = vunpack.c.h.b16 %v9631
    %v10595 = vunpack.c.l.b16 %v9632
    %v10596 = vunpack.c.h.b16 %v9632
    %v10597 = vunpack.c.l.b16 %v9633
    %v10598 = vunpack.c.h.b16 %v9633
    %v10599 = vunpack.c.l.b16 %v9634
    %v10600 = vunpack.c.h.b16 %v9634
    %v10601 = vunpack.c.l.b16 %v9635
    %v10602 = vunpack.c.h.b16 %v9635
    %v10603 = vunpack.c.l.b16 %v9636
    %v10604 = vunpack.c.h.b16 %v9636
    %v10605 = vunpack.c.l.b16 %v9637
    %v10606 = vunpack.c.h.b16 %v9637
    %v10607 = vunpack.c.l.b16 %v9638
    %v10608 = vunpack.c.h.b16 %v9638
    %v10609 = vunpack.c.l.b16 %v9639
    %v10610 = vunpack.c.h.b16 %v9639
    %v10611 = vunpack.c.l.b16 %v9640
    %v10612 = vunpack.c.h.b16 %v9640
    %v10613 = vunpack.c.l.b16 %v9641
    %v10614 = vunpack.c.h.b16 %v9641
    %v10615 = vunpack.c.l.b16 %v9642
    %v10616 = vunpack.c.h.b16 %v9642
    %v10617 = vunpack.c.l.b16 %v9643
    %v10618 = vunpack.c.h.b16 %v9643
    %v10619 = vunpack.c.l.b16 %v9644
    %v10620 = vunpack.c.h.b16 %v9644
    %v10621 = vunpack.c.l.b16 %v9645
    %v10622 = vunpack.c.h.b16 %v9645
    %v10623 = vunpack.c.l.b16 %v9646
    %v10624 = vunpack.c.h.b16 %v9646
    %v10625 = vunpack.c.l.b16 %v9647
    %v10626 = vunpack.c.h.b16 %v9647
    %v10627 = vunpack.c.l.b16 %v9648
    %v10628 = vunpack.c.h.b16 %v9648
    %v10629 = vunpack.c.l.b16 %v9649
    %v10630 = vunpack.c.h.b16 %v9649
    %v10631 = vunpack.c.l.b16 %v9650
    %v10632 = vunpack.c.h.b16 %v9650
    %v10633 = vunpack.c.l.b16 %v9651
    %v10634 = vunpack.c.h.b16 %v9651
    %v10635 = vunpack.c.l.b16 %v9652
    %v10636 = vunpack.c.h.b16 %v9652
    %v10637 = vunpack.c.l.b16 %v9653
    %v10638 = vunpack.c.h.b16 %v9653
    %v10639 = vunpack.c.l.b16 %v9654
    %v10640 = vunpack.c.h.b16 %v9654
    %v10641 = vunpack.c.l.b16 %v9655
    %v10642 = vunpack.c.h.b16 %v9655
    %v10643 = vunpack.c.l.b16 %v9656
    %v10644 = vunpack.c.h.b16 %v9656
    %v10645 = vunpack.c.l.b16 %v9657
    %v10646 = vunpack.c.h.b16 %v9657
    %v10647 = vunpack.c.l.b16 %v9658
    %v10648 = vunpack.c.h.b16 %v9658
    %v10649 = vunpack.c.l.b16 %v9659
    %v10650 = vunpack.c.h.b16 %v9659
    %v10651 = vunpack.c.l.b16 %v9660
    %v10652 = vunpack.c.h.b16 %v9660
    %v10653 = vunpack.c.l.b16 %v9661
    %v10654 = vunpack.c.h.b16 %v9661
    %v10655 = vunpack.c.l.b16 %v9662
    %v10656 = vunpack.c.h.b16 %v9662
    %v10657 = vunpack.c.l.b16 %v9663
    %v10658 = vunpack.c.h.b16 %v9663
    %v10659 = vunpack.c.l.b16 %v9664
    %v10660 = vunpack.c.h.b16 %v9664
    %v10661 = vunpack.c.l.b16 %v9665
    %v10662 = vunpack.c.h.b16 %v9665
    %v10663 = vunpack.c.l.b16 %v9666
    %v10664 = vunpack.c.h.b16 %v9666
    %v10665 = vunpack.c.l.b16 %v9667
    %v10666 = vunpack.c.h.b16 %v9667
    %v10667 = vunpack.c.l.b16 %v9668
    %v10668 = vunpack.c.h.b16 %v9668
    %v10669 = vunpack.c.l.b16 %v9669
    %v10670 = vunpack.c.h.b16 %v9669
    %v10671 = vunpack.c.l.b16 %v9670
    %v10672 = vunpack.c.h.b16 %v9670
    %v10673 = vunpack.c.l.b16 %v9671
    %v10674 = vunpack.c.h.b16 %v9671
    %v10675 = vunpack.c.l.b16 %v9672
    %v10676 = vunpack.c.h.b16 %v9672
    %v10677 = vunpack.c.l.b16 %v9673
    %v10678 = vunpack.c.h.b16 %v9673
    %v10679 = vunpack.c.l.b16 %v9674
    %v10680 = vunpack.c.h.b16 %v9674
    %v10681 = vunpack.c.l.b16 %v9675
    %v10682 = vunpack.c.h.b16 %v9675
    %v10683 = vunpack.c.l.b16 %v9676
    %v10684 = vunpack.c.h.b16 %v9676
    %v10685 = vunpack.c.l.b16 %v9677
    %v10686 = vunpack.c.h.b16 %v9677
    %v10687 = vunpack.c.l.b16 %v9678
    %v10688 = vunpack.c.h.b16 %v9678
    %v10689 = vunpack.c.l.b16 %v9679
    %v10690 = vunpack.c.h.b16 %v9679
    %v10691 = vunpack.c.l.b16 %v9680
    %v10692 = vunpack.c.h.b16 %v9680
    %v10693 = vunpack.c.l.b16 %v9681
    %v10694 = vunpack.c.h.b16 %v9681
    %v10695 = vunpack.c.l.b16 %v9682
    %v10696 = vunpack.c.h.b16 %v9682
    %v10697 = vunpack.c.l.b16 %v9683
    %v10698 = vunpack.c.h.b16 %v9683
    %v10699 = vunpack.c.l.b16 %v9684
    %v10700 = vunpack.c.h.b16 %v9684
    %v10701 = vunpack.c.l.b16 %v9685
    %v10702 = vunpack.c.h.b16 %v9685
    %v10703 = vunpack.c.l.b16 %v9686
    %v10704 = vunpack.c.h.b16 %v9686
    %v10705 = vunpack.c.l.b16 %v9687
    %v10706 = vunpack.c.h.b16 %v9687
    %v10707 = vunpack.c.l.b16 %v9688
    %v10708 = vunpack.c.h.b16 %v9688
    %v10709 = vunpack.c.l.b16 %v9689
    %v10710 = vunpack.c.h.b16 %v9689
    %v10711 = vunpack.c.l.b16 %v9690
    %v10712 = vunpack.c.h.b16 %v9690
    %v10713 = vunpack.c.l.b16 %v9691
    %v10714 = vunpack.c.h.b16 %v9691
    %v10715 = vunpack.c.l.b16 %v9692
    %v10716 = vunpack.c.h.b16 %v9692
    %v10717 = vunpack.c.l.b16 %v9693
    %v10718 = vunpack.c.h.b16 %v9693
    %v10719 = vunpack.c.l.b16 %v9694
    %v10720 = vunpack.c.h.b16 %v9694
    %v10721 = vunpack.c.l.b16 %v9695
    %v10722 = vunpack.c.h.b16 %v9695
    %v10723 = vunpack.c.l.b16 %v9696
    %v10724 = vunpack.c.h.b16 %v9696
    %v10725 = vunpack.c.l.b16 %v9697
    %v10726 = vunpack.c.h.b16 %v9697
    %v10727 = vunpack.c.l.b16 %v9698
    %v10728 = vunpack.c.h.b16 %v9698
    %v10729 = vunpack.c.l.b16 %v9699
    %v10730 = vunpack.c.h.b16 %v9699
    %v10731 = vunpack.c.l.b16 %v9700
    %v10732 = vunpack.c.h.b16 %v9700
    %v10733 = vunpack.c.l.b16 %v9701
    %v10734 = vunpack.c.h.b16 %v9701
    %v10735 = vunpack.c.l.b16 %v9702
    %v10736 = vunpack.c.h.b16 %v9702
    %v10737 = vunpack.c.l.b16 %v9703
    %v10738 = vunpack.c.h.b16 %v9703
    %v10739 = vunpack.c.l.b16 %v9704
    %v10740 = vunpack.c.h.b16 %v9704
    %v10741 = vunpack.c.l.b16 %v9705
    %v10742 = vunpack.c.h.b16 %v9705
    %v10743 = vunpack.c.l.b16 %v9706
    %v10744 = vunpack.c.h.b16 %v9706
    %v10745 = vunpack.c.l.b16 %v9707
    %v10746 = vunpack.c.h.b16 %v9707
    %v10747 = vunpack.c.l.b16 %v9708
    %v10748 = vunpack.c.h.b16 %v9708
    %v10749 = vunpack.c.l.b16 %v9709
    %v10750 = vunpack.c.h.b16 %v9709
    %v10751 = vunpack.c.l.b16 %v9710
    %v10752 = vunpack.c.h.b16 %v9710
    %v10753 = vunpack.c.l.b16 %v9711
    %v10754 = vunpack.c.h.b16 %v9711
    %v10755 = vunpack.c.l.b16 %v9712
    %v10756 = vunpack.c.h.b16 %v9712
    %v10757 = vunpack.c.l.b16 %v9713
    %v10758 = vunpack.c.h.b16 %v9713
    %v10759 = vunpack.c.l.b16 %v9714
    %v10760 = vunpack.c.h.b16 %v9714
    %v10761 = vunpack.c.l.b16 %v9715
    %v10762 = vunpack.c.h.b16 %v9715
    %v10763 = vunpack.c.l.b16 %v9716
    %v10764 = vunpack.c.h.b16 %v9716
    %v10765 = vunpack.c.l.b16 %v9717
    %v10766 = vunpack.c.h.b16 %v9717
    %v10767 = vunpack.c.l.b16 %v9718
    %v10768 = vunpack.c.h.b16 %v9718
    %v10769 = vunpack.c.l.b16 %v9719
    %v10770 = vunpack.c.h.b16 %v9719
    %v10771 = vunpack.c.l.b16 %v9720
    %v10772 = vunpack.c.h.b16 %v9720
    %v10773 = vunpack.c.l.b16 %v9721
    %v10774 = vunpack.c.h.b16 %v9721
    %v10775 = vunpack.c.l.b16 %v9722
    %v10776 = vunpack.c.h.b16 %v9722
    %v10777 = vunpack.c.l.b16 %v9723
    %v10778 = vunpack.c.h.b16 %v9723
    %v10779 = vunpack.c.l.b16 %v9724
    %v10780 = vunpack.c.h.b16 %v9724
    %v10781 = vunpack.c.l.b16 %v9725
    %v10782 = vunpack.c.h.b16 %v9725
    %v10783 = vunpack.c.l.b16 %v9726
    %v10784 = vunpack.c.h.b16 %v9726
    %v10785 = vunpack.c.l.b16 %v9727
    %v10786 = vunpack.c.h.b16 %v9727
    %v10787 = vunpack.c.l.b16 %v9728
    %v10788 = vunpack.c.h.b16 %v9728
    %v10789 = vunpack.c.l.b16 %v9729
    %v10790 = vunpack.c.h.b16 %v9729
    %v10791 = vunpack.c.l.b16 %v9730
    %v10792 = vunpack.c.h.b16 %v9730
    %v10793 = vunpack.c.l.b16 %v9731
    %v10794 = vunpack.c.h.b16 %v9731
    %v10795 = vunpack.c.l.b16 %v9732
    %v10796 = vunpack.c.h.b16 %v9732
    %v10797 = vunpack.c.l.b16 %v9733
    %v10798 = vunpack.c.h.b16 %v9733
    %v10799 = vunpack.c.l.b16 %v9734
    %v10800 = vunpack.c.h.b16 %v9734
    %v10801 = vunpack.c.l.b16 %v9735
    %v10802 = vunpack.c.h.b16 %v9735
    %v10803 = vunpack.c.l.b16 %v9736
    %v10804 = vunpack.c.h.b16 %v9736
    %v10805 = vunpack.c.l.b16 %v9737
    %v10806 = vunpack.c.h.b16 %v9737
    %v10807 = vunpack.c.l.b16 %v9738
    %v10808 = vunpack.c.h.b16 %v9738
    %v10809 = vunpack.c.l.b16 %v9739
    %v10810 = vunpack.c.h.b16 %v9739
    %v10811 = vunpack.c.l.b16 %v9740
    %v10812 = vunpack.c.h.b16 %v9740
    %v10813 = vunpack.c.l.b16 %v9741
    %v10814 = vunpack.c.h.b16 %v9741
    %v10815 = vunpack.c.l.b16 %v9742
    %v10816 = vunpack.c.h.b16 %v9742
    %v10817 = vunpack.c.l.b16 %v9743
    %v10818 = vunpack.c.h.b16 %v9743
    %v10819 = vunpack.c.l.b16 %v9744
    %v10820 = vunpack.c.h.b16 %v9744
    %v10821 = vunpack.c.l.b16 %v9745
    %v10822 = vunpack.c.h.b16 %v9745
    %v10823 = vunpack.c.l.b16 %v9746
    %v10824 = vunpack.c.h.b16 %v9746
    %v10825 = vunpack.c.l.b16 %v9747
    %v10826 = vunpack.c.h.b16 %v9747
    %v10827 = vunpack.c.l.b16 %v9748
    %v10828 = vunpack.c.h.b16 %v9748
    %v10829 = vunpack.c.l.b16 %v9749
    %v10830 = vunpack.c.h.b16 %v9749
    %v10831 = vunpack.c.l.b16 %v9750
    %v10832 = vunpack.c.h.b16 %v9750
    %v10833 = vunpack.c.l.b16 %v9751
    %v10834 = vunpack.c.h.b16 %v9751
    %v10835 = vunpack.c.l.b16 %v9752
    %v10836 = vunpack.c.h.b16 %v9752
    %v10837 = vunpack.c.l.b16 %v9753
    %v10838 = vunpack.c.h.b16 %v9753
    %v10839 = vunpack.c.l.b16 %v9754
    %v10840 = vunpack.c.h.b16 %v9754
    %v10841 = vunpack.c.l.b16 %v9755
    %v10842 = vunpack.c.h.b16 %v9755
    %v10843 = vunpack.c.l.b16 %v9756
    %v10844 = vunpack.c.h.b16 %v9756
    %v10845 = vunpack.c.l.b16 %v9757
    %v10846 = vunpack.c.h.b16 %v9757
    %v10847 = vunpack.c.l.b16 %v9758
    %v10848 = vunpack.c.h.b16 %v9758
    %v10849 = vunpack.c.l.b16 %v9759
    %v10850 = vunpack.c.h.b16 %v9759
    %v10851 = vunpack.c.l.b16 %v9760
    %v10852 = vunpack.c.h.b16 %v9760
    %v10853 = vunpack.c.l.b16 %v9761
    %v10854 = vunpack.c.h.b16 %v9761
    %v10855 = vunpack.c.l.b16 %v9762
    %v10856 = vunpack.c.h.b16 %v9762
    %v10857 = vunpack.c.l.b16 %v9763
    %v10858 = vunpack.c.h.b16 %v9763
    %v10859 = vunpack.c.l.b16 %v9764
    %v10860 = vunpack.c.h.b16 %v9764
    %v10861 = vunpack.c.l.b16 %v9765
    %v10862 = vunpack.c.h.b16 %v9765
    %v10863 = vunpack.c.l.b16 %v9766
    %v10864 = vunpack.c.h.b16 %v9766
    %v10865 = vunpack.c.l.b16 %v9767
    %v10866 = vunpack.c.h.b16 %v9767
    %v10867 = vunpack.c.l.b16 %v9768
    %v10868 = vunpack.c.h.b16 %v9768
    %v10869 = vunpack.c.l.b16 %v9769
    %v10870 = vunpack.c.h.b16 %v9769
    %v10871 = vunpack.c.l.b16 %v9770
    %v10872 = vunpack.c.h.b16 %v9770
    %v10873 = vunpack.c.l.b16 %v9771
    %v10874 = vunpack.c.h.b16 %v9771
    %v10875 = vunpack.c.l.b16 %v9772
    %v10876 = vunpack.c.h.b16 %v9772
    %v10877 = vunpack.c.l.b16 %v9773
    %v10878 = vunpack.c.h.b16 %v9773
    %v10879 = vunpack.c.l.b16 %v9774
    %v10880 = vunpack.c.h.b16 %v9774
    %v10881 = vunpack.c.l.b16 %v9775
    %v10882 = vunpack.c.h.b16 %v9775
    %v10883 = vunpack.c.l.b16 %v9776
    %v10884 = vunpack.c.h.b16 %v9776
    %v10885 = vunpack.c.l.b16 %v9777
    %v10886 = vunpack.c.h.b16 %v9777
    %v10887 = vunpack.c.l.b16 %v9778
    %v10888 = vunpack.c.h.b16 %v9778
    %v10889 = vunpack.c.l.b16 %v9779
    %v10890 = vunpack.c.h.b16 %v9779
    %v10891 = vunpack.c.l.b16 %v9780
    %v10892 = vunpack.c.h.b16 %v9780
    %v10893 = vunpack.c.l.b16 %v9781
    %v10894 = vunpack.c.h.b16 %v9781
    %v10895 = vunpack.c.l.b16 %v9782
    %v10896 = vunpack.c.h.b16 %v9782
    %v10897 = vunpack.c.l.b16 %v9783
    %v10898 = vunpack.c.h.b16 %v9783
    %v10899 = vunpack.c.l.b16 %v9784
    %v10900 = vunpack.c.h.b16 %v9784
    %v10901 = vunpack.c.l.b16 %v9785
    %v10902 = vunpack.c.h.b16 %v9785
    %v10903 = vunpack.c.l.b16 %v9786
    %v10904 = vunpack.c.h.b16 %v9786
    %v10905 = vunpack.c.l.b16 %v9787
    %v10906 = vunpack.c.h.b16 %v9787
    %v10907 = vunpack.c.l.b16 %v9788
    %v10908 = vunpack.c.h.b16 %v9788
    %v10909 = vunpack.c.l.b16 %v9789
    %v10910 = vunpack.c.h.b16 %v9789
    %v10911 = vunpack.c.l.b16 %v9790
    %v10912 = vunpack.c.h.b16 %v9790
    %v10913 = vunpack.c.l.b16 %v9791
    %v10914 = vunpack.c.h.b16 %v9791
    %v10915 = vunpack.c.l.b16 %v9792
    %v10916 = vunpack.c.h.b16 %v9792
    %v10917 = vunpack.c.l.b16 %v9793
    %v10918 = vunpack.c.h.b16 %v9793
    %v10919 = vunpack.c.l.b16 %v9794
    %v10920 = vunpack.c.h.b16 %v9794
    %v10921 = vunpack.c.l.b16 %v9795
    %v10922 = vunpack.c.h.b16 %v9795
    %v10923 = vunpack.c.l.b16 %v9796
    %v10924 = vunpack.c.h.b16 %v9796
    %v10925 = vunpack.c.l.b16 %v9797
    %v10926 = vunpack.c.h.b16 %v9797
    %v10927 = vunpack.c.l.b16 %v9798
    %v10928 = vunpack.c.h.b16 %v9798
    %v10929 = vunpack.c.l.b16 %v9799
    %v10930 = vunpack.c.h.b16 %v9799
    %v10931 = vunpack.c.l.b16 %v9800
    %v10932 = vunpack.c.h.b16 %v9800
    %v10933 = vunpack.c.l.b16 %v9801
    %v10934 = vunpack.c.h.b16 %v9801
    %v10935 = vunpack.c.l.b16 %v9802
    %v10936 = vunpack.c.h.b16 %v9802
    %v10937 = vunpack.c.l.b16 %v9803
    %v10938 = vunpack.c.h.b16 %v9803
    %v10939 = vunpack.c.l.b16 %v9804
    %v10940 = vunpack.c.h.b16 %v9804
    %v10941 = vunpack.c.l.b16 %v9805
    %v10942 = vunpack.c.h.b16 %v9805
    %v10943 = vunpack.c.l.b16 %v9806
    %v10944 = vunpack.c.h.b16 %v9806
    %v10945 = vunpack.c.l.b16 %v9807
    %v10946 = vunpack.c.h.b16 %v9807
    %v10947 = vunpack.c.l.b16 %v9808
    %v10948 = vunpack.c.h.b16 %v9808
    %v10949 = vunpack.c.l.b16 %v9809
    %v10950 = vunpack.c.h.b16 %v9809
    %v10951 = vunpack.c.l.b16 %v9810
    %v10952 = vunpack.c.h.b16 %v9810
    %v10953 = vunpack.c.l.b16 %v9811
    %v10954 = vunpack.c.h.b16 %v9811
    %v10955 = vunpack.c.l.b16 %v9812
    %v10956 = vunpack.c.h.b16 %v9812
    %v10957 = vunpack.c.l.b16 %v9813
    %v10958 = vunpack.c.h.b16 %v9813
    %v10959 = vunpack.c.l.b16 %v9814
    %v10960 = vunpack.c.h.b16 %v9814
    %v10961 = vunpack.c.l.b16 %v9815
    %v10962 = vunpack.c.h.b16 %v9815
    %v10963 = vunpack.c.l.b16 %v9816
    %v10964 = vunpack.c.h.b16 %v9816
    %v10965 = vunpack.c.l.b16 %v9817
    %v10966 = vunpack.c.h.b16 %v9817
    %v10967 = vunpack.c.l.b16 %v9818
    %v10968 = vunpack.c.h.b16 %v9818
    %v10969 = vunpack.c.l.b16 %v9819
    %v10970 = vunpack.c.h.b16 %v9819
    %v10971 = vunpack.c.l.b16 %v9820
    %v10972 = vunpack.c.h.b16 %v9820
    %v10973 = vunpack.c.l.b16 %v9821
    %v10974 = vunpack.c.h.b16 %v9821
    %v10975 = vunpack.c.l.b16 %v9822
    %v10976 = vunpack.c.h.b16 %v9822
    %v10977 = vunpack.c.l.b16 %v9823
    %v10978 = vunpack.c.h.b16 %v9823
    %v10979 = vunpack.c.l.b16 %v9824
    %v10980 = vunpack.c.h.b16 %v9824
    %v10981 = vunpack.c.l.b16 %v9825
    %v10982 = vunpack.c.h.b16 %v9825
    %v10983 = vunpack.c.l.b16 %v9826
    %v10984 = vunpack.c.h.b16 %v9826
    %v10985 = vunpack.c.l.b16 %v9827
    %v10986 = vunpack.c.h.b16 %v9827
    %v10987 = vunpack.c.l.b16 %v9828
    %v10988 = vunpack.c.h.b16 %v9828
    %v10989 = vunpack.c.l.b16 %v9829
    %v10990 = vunpack.c.h.b16 %v9829
    %v10991 = vunpack.c.l.b16 %v9830
    %v10992 = vunpack.c.h.b16 %v9830
    %v10993 = vunpack.c.l.b16 %v9831
    %v10994 = vunpack.c.h.b16 %v9831
    %v10995 = vunpack.c.l.b16 %v9832
    %v10996 = vunpack.c.h.b16 %v9832
    %v10997 = vunpack.c.l.b16 %v9833
    %v10998 = vunpack.c.h.b16 %v9833
    %v10999 = vunpack.c.l.b16 %v9834
    %v11000 = vunpack.c.h.b16 %v9834
    %v11001 = vunpack.c.l.b16 %v9835
    %v11002 = vunpack.c.h.b16 %v9835
    %v11003 = vunpack.c.l.b16 %v9836
    %v11004 = vunpack.c.h.b16 %v9836
    %v11005 = vunpack.c.l.b16 %v9837
    %v11006 = vunpack.c.h.b16 %v9837
    %v11007 = vunpack.c.l.b16 %v9838
    %v11008 = vunpack.c.h.b16 %v9838
    %v11009 = vunpack.c.l.b16 %v9839
    %v11010 = vunpack.c.h.b16 %v9839
    %v11011 = vunpack.c.l.b16 %v9840
    %v11012 = vunpack.c.h.b16 %v9840
    %v11013 = vunpack.c.l.b16 %v9841
    %v11014 = vunpack.c.h.b16 %v9841
    %v11015 = vunpack.c.l.b16 %v9842
    %v11016 = vunpack.c.h.b16 %v9842
    %v11017 = vunpack.c.l.b16 %v9843
    %v11018 = vunpack.c.h.b16 %v9843
    %v11019 = vunpack.c.l.b16 %v9844
    %v11020 = vunpack.c.h.b16 %v9844
    %v11021 = vunpack.c.l.b16 %v9845
    %v11022 = vunpack.c.h.b16 %v9845
    %v11023 = vunpack.c.l.b16 %v9846
    %v11024 = vunpack.c.h.b16 %v9846
    %v11025 = vunpack.c.l.b16 %v9847
    %v11026 = vunpack.c.h.b16 %v9847
    %v11027 = vunpack.c.l.b16 %v9848
    %v11028 = vunpack.c.h.b16 %v9848
    %v11029 = vunpack.c.l.b16 %v9849
    %v11030 = vunpack.c.h.b16 %v9849
    %v11031 = vunpack.c.l.b16 %v9850
    %v11032 = vunpack.c.h.b16 %v9850
    %v11033 = vunpack.c.l.b16 %v9851
    %v11034 = vunpack.c.h.b16 %v9851
    %v11035 = vunpack.c.l.b16 %v9852
    %v11036 = vunpack.c.h.b16 %v9852
    %v11037 = vunpack.c.l.b16 %v9853
    %v11038 = vunpack.c.h.b16 %v9853
    %v11039 = vunpack.c.l.b16 %v9854
    %v11040 = vunpack.c.h.b16 %v9854
    %v11041 = vunpack.c.l.b16 %v9855
    %v11042 = vunpack.c.h.b16 %v9855
    %v11043 = vunpack.c.l.b16 %v9856
    %v11044 = vunpack.c.h.b16 %v9856
    %v11045 = vunpack.c.l.b16 %v9857
    %v11046 = vunpack.c.h.b16 %v9857
    %v11047 = vunpack.c.l.b16 %v9858
    %v11048 = vunpack.c.h.b16 %v9858
    %v11049 = vunpack.c.l.b16 %v9859
    %v11050 = vunpack.c.h.b16 %v9859
    %v11051 = vunpack.c.l.b16 %v9860
    %v11052 = vunpack.c.h.b16 %v9860
    %v11053 = vunpack.c.l.b16 %v9861
    %v11054 = vunpack.c.h.b16 %v9861
    %v11055 = vunpack.c.l.b16 %v9862
    %v11056 = vunpack.c.h.b16 %v9862
    %v11057 = vunpack.c.l.b16 %v9863
    %v11058 = vunpack.c.h.b16 %v9863
    %v11059 = vpack.c.b16 %v10297, %v10291
    %v11060 = vpack.c.b16 %v10298, %v10292
    %v11061 = vpack.c.b16 %v10299, %v10293
    %v11062 = vpack.c.b16 %v10300, %v10294
    %v11063 = vpack.c.b16 %v10301, %v10295
    %v11064 = vpack.c.b16 %v10302, %v10296
    %v11065 = vpack.c.b16 %v10309, %v10303
    %v11066 = vpack.c.b16 %v10310, %v10304
    %v11067 = vpack.c.b16 %v10311, %v10305
    %v11068 = vpack.c.b16 %v10312, %v10306
    %v11069 = vpack.c.b16 %v10313, %v10307
    %v11070 = vpack.c.b16 %v10314, %v10308
    %v11071 = vpack.c.b16 %v10321, %v10315
    %v11072 = vpack.c.b16 %v10322, %v10316
    %v11073 = vpack.c.b16 %v10323, %v10317
    %v11074 = vpack.c.b16 %v10324, %v10318
    %v11075 = vpack.c.b16 %v10325, %v10319
    %v11076 = vpack.c.b16 %v10326, %v10320
    %v11077 = vpack.c.b16 %v10333, %v10327
    %v11078 = vpack.c.b16 %v10334, %v10328
    %v11079 = vpack.c.b16 %v10335, %v10329
    %v11080 = vpack.c.b16 %v10336, %v10330
    %v11081 = vpack.c.b16 %v10337, %v10331
    %v11082 = vpack.c.b16 %v10338, %v10332
    %v11083 = vpack.c.b16 %v10345, %v10339
    %v11084 = vpack.c.b16 %v10346, %v10340
    %v11085 = vpack.c.b16 %v10347, %v10341
    %v11086 = vpack.c.b16 %v10348, %v10342
    %v11087 = vpack.c.b16 %v10349, %v10343
    %v11088 = vpack.c.b16 %v10350, %v10344
    %v11089 = vpack.c.b16 %v10357, %v10351
    %v11090 = vpack.c.b16 %v10358, %v10352
    %v11091 = vpack.c.b16 %v10359, %v10353
    %v11092 = vpack.c.b16 %v10360, %v10354
    %v11093 = vpack.c.b16 %v10361, %v10355
    %v11094 = vpack.c.b16 %v10362, %v10356
    %v11095 = vpack.c.b16 %v10369, %v10363
    %v11096 = vpack.c.b16 %v10370, %v10364
    %v11097 = vpack.c.b16 %v10371, %v10365
    %v11098 = vpack.c.b16 %v10372, %v10366
    %v11099 = vpack.c.b16 %v10373, %v10367
    %v11100 = vpack.c.b16 %v10374, %v10368
    %v11101 = vpack.c.b16 %v10381, %v10375
    %v11102 = vpack.c.b16 %v10382, %v10376
    %v11103 = vpack.c.b16 %v10383, %v10377
    %v11104 = vpack.c.b16 %v10384, %v10378
    %v11105 = vpack.c.b16 %v10385, %v10379
    %v11106 = vpack.c.b16 %v10386, %v10380
    %v11107 = vpack.c.b16 %v10393, %v10387
    %v11108 = vpack.c.b16 %v10394, %v10388
    %v11109 = vpack.c.b16 %v10395, %v10389
    %v11110 = vpack.c.b16 %v10396, %v10390
    %v11111 = vpack.c.b16 %v10397, %v10391
    %v11112 = vpack.c.b16 %v10398, %v10392
    %v11113 = vpack.c.b16 %v10405, %v10399
    %v11114 = vpack.c.b16 %v10406, %v10400
    %v11115 = vpack.c.b16 %v10407, %v10401
    %v11116 = vpack.c.b16 %v10408, %v10402
    %v11117 = vpack.c.b16 %v10409, %v10403
    %v11118 = vpack.c.b16 %v10410, %v10404
    %v11119 = vpack.c.b16 %v10417, %v10411
    %v11120 = vpack.c.b16 %v10418, %v10412
    %v11121 = vpack.c.b16 %v10419, %v10413
    %v11122 = vpack.c.b16 %v10420, %v10414
    %v11123 = vpack.c.b16 %v10421, %v10415
    %v11124 = vpack.c.b16 %v10422, %v10416
    %v11125 = vpack.c.b16 %v10429, %v10423
    %v11126 = vpack.c.b16 %v10430, %v10424
    %v11127 = vpack.c.b16 %v10431, %v10425
    %v11128 = vpack.c.b16 %v10432, %v10426
    %v11129 = vpack.c.b16 %v10433, %v10427
    %v11130 = vpack.c.b16 %v10434, %v10428
    %v11131 = vpack.c.b16 %v10441, %v10435
    %v11132 = vpack.c.b16 %v10442, %v10436
    %v11133 = vpack.c.b16 %v10443, %v10437
    %v11134 = vpack.c.b16 %v10444, %v10438
    %v11135 = vpack.c.b16 %v10445, %v10439
    %v11136 = vpack.c.b16 %v10446, %v10440
    %v11137 = vpack.c.b16 %v10453, %v10447
    %v11138 = vpack.c.b16 %v10454, %v10448
    %v11139 = vpack.c.b16 %v10455, %v10449
    %v11140 = vpack.c.b16 %v10456, %v10450
    %v11141 = vpack.c.b16 %v10457, %v10451
    %v11142 = vpack.c.b16 %v10458, %v10452
    %v11143 = vpack.c.b16 %v10465, %v10459
    %v11144 = vpack.c.b16 %v10466, %v10460
    %v11145 = vpack.c.b16 %v10467, %v10461
    %v11146 = vpack.c.b16 %v10468, %v10462
    %v11147 = vpack.c.b16 %v10469, %v10463
    %v11148 = vpack.c.b16 %v10470, %v10464
    %v11149 = vpack.c.b16 %v10477, %v10471
    %v11150 = vpack.c.b16 %v10478, %v10472
    %v11151 = vpack.c.b16 %v10479, %v10473
    %v11152 = vpack.c.b16 %v10480, %v10474
    %v11153 = vpack.c.b16 %v10481, %v10475
    %v11154 = vpack.c.b16 %v10482, %v10476
    %v11155 = vpack.c.b16 %v10489, %v10483
    %v11156 = vpack.c.b16 %v10490, %v10484
    %v11157 = vpack.c.b16 %v10491, %v10485
    %v11158 = vpack.c.b16 %v10492, %v10486
    %v11159 = vpack.c.b16 %v10493, %v10487
    %v11160 = vpack.c.b16 %v10494, %v10488
    %v11161 = vpack.c.b16 %v10501, %v10495
    %v11162 = vpack.c.b16 %v10502, %v10496
    %v11163 = vpack.c.b16 %v10503, %v10497
    %v11164 = vpack.c.b16 %v10504, %v10498
    %v11165 = vpack.c.b16 %v10505, %v10499
    %v11166 = vpack.c.b16 %v10506, %v10500
    %v11167 = vpack.c.b16 %v10513, %v10507
    %v11168 = vpack.c.b16 %v10514, %v10508
    %v11169 = vpack.c.b16 %v10515, %v10509
    %v11170 = vpack.c.b16 %v10516, %v10510
    %v11171 = vpack.c.b16 %v10517, %v10511
    %v11172 = vpack.c.b16 %v10518, %v10512
    %v11173 = vpack.c.b16 %v10525, %v10519
    %v11174 = vpack.c.b16 %v10526, %v10520
    %v11175 = vpack.c.b16 %v10527, %v10521
    %v11176 = vpack.c.b16 %v10528, %v10522
    %v11177 = vpack.c.b16 %v10529, %v10523
    %v11178 = vpack.c.b16 %v10530, %v10524
    %v11179 = vpack.c.b16 %v10537, %v10531
    %v11180 = vpack.c.b16 %v10538, %v10532
    %v11181 = vpack.c.b16 %v10539, %v10533
    %v11182 = vpack.c.b16 %v10540, %v10534
    %v11183 = vpack.c.b16 %v10541, %v10535
    %v11184 = vpack.c.b16 %v10542, %v10536
    %v11185 = vpack.c.b16 %v10549, %v10543
    %v11186 = vpack.c.b16 %v10550, %v10544
    %v11187 = vpack.c.b16 %v10551, %v10545
    %v11188 = vpack.c.b16 %v10552, %v10546
    %v11189 = vpack.c.b16 %v10553, %v10547
    %v11190 = vpack.c.b16 %v10554, %v10548
    %v11191 = vpack.c.b16 %v10561, %v10555
    %v11192 = vpack.c.b16 %v10562, %v10556
    %v11193 = vpack.c.b16 %v10563, %v10557
    %v11194 = vpack.c.b16 %v10564, %v10558
    %v11195 = vpack.c.b16 %v10565, %v10559
    %v11196 = vpack.c.b16 %v10566, %v10560
    %v11197 = vpack.c.b16 %v10573, %v10567
    %v11198 = vpack.c.b16 %v10574, %v10568
    %v11199 = vpack.c.b16 %v10575, %v10569
    %v11200 = vpack.c.b16 %v10576, %v10570
    %v11201 = vpack.c.b16 %v10577, %v10571
    %v11202 = vpack.c.b16 %v10578, %v10572
    %v11203 = vpack.c.b16 %v10585, %v10579
    %v11204 = vpack.c.b16 %v10586, %v10580
    %v11205 = vpack.c.b16 %v10587, %v10581
    %v11206 = vpack.c.b16 %v10588, %v10582
    %v11207 = vpack.c.b16 %v10589, %v10583
    %v11208 = vpack.c.b16 %v10590, %v10584
    %v11209 = vpack.c.b16 %v10597, %v10591
    %v11210 = vpack.c.b16 %v10598, %v10592
    %v11211 = vpack.c.b16 %v10599, %v10593
    %v11212 = vpack.c.b16 %v10600, %v10594
    %v11213 = vpack.c.b16 %v10601, %v10595
    %v11214 = vpack.c.b16 %v10602, %v10596
    %v11215 = vpack.c.b16 %v10609, %v10603
    %v11216 = vpack.c.b16 %v10610, %v10604
    %v11217 = vpack.c.b16 %v10611, %v10605
    %v11218 = vpack.c.b16 %v10612, %v10606
    %v11219 = vpack.c.b16 %v10613, %v10607
    %v11220 = vpack.c.b16 %v10614, %v10608
    %v11221 = vpack.c.b16 %v10621, %v10615
    %v11222 = vpack.c.b16 %v10622, %v10616
    %v11223 = vpack.c.b16 %v10623, %v10617
    %v11224 = vpack.c.b16 %v10624, %v10618
    %v11225 = vpack.c.b16 %v10625, %v10619
    %v11226 = vpack.c.b16 %v10626, %v10620
    %v11227 = vpack.c.b16 %v10633, %v10627
    %v11228 = vpack.c.b16 %v10634, %v10628
    %v11229 = vpack.c.b16 %v10635, %v10629
    %v11230 = vpack.c.b16 %v10636, %v10630
    %v11231 = vpack.c.b16 %v10637, %v10631
    %v11232 = vpack.c.b16 %v10638, %v10632
    %v11233 = vpack.c.b16 %v10645, %v10639
    %v11234 = vpack.c.b16 %v10646, %v10640
    %v11235 = vpack.c.b16 %v10647, %v10641
    %v11236 = vpack.c.b16 %v10648, %v10642
    %v11237 = vpack.c.b16 %v10649, %v10643
    %v11238 = vpack.c.b16 %v10650, %v10644
    %v11239 = vpack.c.b16 %v10657, %v10651
    %v11240 = vpack.c.b16 %v10658, %v10652
    %v11241 = vpack.c.b16 %v10659, %v10653
    %v11242 = vpack.c.b16 %v10660, %v10654
    %v11243 = vpack.c.b16 %v10661, %v10655
    %v11244 = vpack.c.b16 %v10662, %v10656
    %v11245 = vpack.c.b16 %v10669, %v10663
    %v11246 = vpack.c.b16 %v10670, %v10664
    %v11247 = vpack.c.b16 %v10671, %v10665
    %v11248 = vpack.c.b16 %v10672, %v10666
    %v11249 = vpack.c.b16 %v10673, %v10667
    %v11250 = vpack.c.b16 %v10674, %v10668
    %v11251 = vpack.c.b16 %v10681, %v10675
    %v11252 = vpack.c.b16 %v10682, %v10676
    %v11253 = vpack.c.b16 %v10683, %v10677
    %v11254 = vpack.c.b16 %v10684, %v10678
    %v11255 = vpack.c.b16 %v10685, %v10679
    %v11256 = vpack.c.b16 %v10686, %v10680
    %v11257 = vpack.c.b16 %v10693, %v10687
    %v11258 = vpack.c.b16 %v10694, %v10688
    %v11259 = vpack.c.b16 %v10695, %v10689
    %v11260 = vpack.c.b16 %v10696, %v10690
    %v11261 = vpack.c.b16 %v10697, %v10691
    %v11262 = vpack.c.b16 %v10698, %v10692
    %v11263 = vpack.c.b16 %v10705, %v10699
    %v11264 = vpack.c.b16 %v10706, %v10700
    %v11265 = vpack.c.b16 %v10707, %v10701
    %v11266 = vpack.c.b16 %v10708, %v10702
    %v11267 = vpack.c.b16 %v10709, %v10703
    %v11268 = vpack.c.b16 %v10710, %v10704
    %v11269 = vpack.c.b16 %v10717, %v10711
    %v11270 = vpack.c.b16 %v10718, %v10712
    %v11271 = vpack.c.b16 %v10719, %v10713
    %v11272 = vpack.c.b16 %v10720, %v10714
    %v11273 = vpack.c.b16 %v10721, %v10715
    %v11274 = vpack.c.b16 %v10722, %v10716
    %v11275 = vpack.c.b16 %v10729, %v10723
    %v11276 = vpack.c.b16 %v10730, %v10724
    %v11277 = vpack.c.b16 %v10731, %v10725
    %v11278 = vpack.c.b16 %v10732, %v10726
    %v11279 = vpack.c.b16 %v10733, %v10727
    %v11280 = vpack.c.b16 %v10734, %v10728
    %v11281 = vpack.c.b16 %v10741, %v10735
    %v11282 = vpack.c.b16 %v10742, %v10736
    %v11283 = vpack.c.b16 %v10743, %v10737
    %v11284 = vpack.c.b16 %v10744, %v10738
    %v11285 = vpack.c.b16 %v10745, %v10739
    %v11286 = vpack.c.b16 %v10746, %v10740
    %v11287 = vpack.c.b16 %v10753, %v10747
    %v11288 = vpack.c.b16 %v10754, %v10748
    %v11289 = vpack.c.b16 %v10755, %v10749
    %v11290 = vpack.c.b16 %v10756, %v10750
    %v11291 = vpack.c.b16 %v10757, %v10751
    %v11292 = vpack.c.b16 %v10758, %v10752
    %v11293 = vpack.c.b16 %v10765, %v10759
    %v11294 = vpack.c.b16 %v10766, %v10760
    %v11295 = vpack.c.b16 %v10767, %v10761
    %v11296 = vpack.c.b16 %v10768, %v10762
    %v11297 = vpack.c.b16 %v10769, %v10763
    %v11298 = vpack.c.b16 %v10770, %v10764
    %v11299 = vpack.c.b16 %v10777, %v10771
    %v11300 = vpack.c.b16 %v10778, %v10772
    %v11301 = vpack.c.b16 %v10779, %v10773
    %v11302 = vpack.c.b16 %v10780, %v10774
    %v11303 = vpack.c.b16 %v10781, %v10775
    %v11304 = vpack.c.b16 %v10782, %v10776
    %v11305 = vpack.c.b16 %v10789, %v10783
    %v11306 = vpack.c.b16 %v10790, %v10784
    %v11307 = vpack.c.b16 %v10791, %v10785
    %v11308 = vpack.c.b16 %v10792, %v10786
    %v11309 = vpack.c.b16 %v10793, %v10787
    %v11310 = vpack.c.b16 %v10794, %v10788
    %v11311 = vpack.c.b16 %v10801, %v10795
    %v11312 = vpack.c.b16 %v10802, %v10796
    %v11313 = vpack.c.b16 %v10803, %v10797
    %v11314 = vpack.c.b16 %v10804, %v10798
    %v11315 = vpack.c.b16 %v10805, %v10799
    %v11316 = vpack.c.b16 %v10806, %v10800
    %v11317 = vpack.c.b16 %v10813, %v10807
    %v11318 = vpack.c.b16 %v10814, %v10808
    %v11319 = vpack.c.b16 %v10815, %v10809
    %v11320 = vpack.c.b16 %v10816, %v10810
    %v11321 = vpack.c.b16 %v10817, %v10811
    %v11322 = vpack.c.b16 %v10818, %v10812
    %v11323 = vpack.c.b16 %v10825, %v10819
    %v11324 = vpack.c.b16 %v10826, %v10820
    %v11325 = vpack.c.b16 %v10827, %v10821
    %v11326 = vpack.c.b16 %v10828, %v10822
    %v11327 = vpack.c.b16 %v10829, %v10823
    %v11328 = vpack.c.b16 %v10830, %v10824
    %v11329 = vpack.c.b16 %v10837, %v10831
    %v11330 = vpack.c.b16 %v10838, %v10832
    %v11331 = vpack.c.b16 %v10839, %v10833
    %v11332 = vpack.c.b16 %v10840, %v10834
    %v11333 = vpack.c.b16 %v10841, %v10835
    %v11334 = vpack.c.b16 %v10842, %v10836
    %v11335 = vpack.c.b16 %v10849, %v10843
    %v11336 = vpack.c.b16 %v10850, %v10844
    %v11337 = vpack.c.b16 %v10851, %v10845
    %v11338 = vpack.c.b16 %v10852, %v10846
    %v11339 = vpack.c.b16 %v10853, %v10847
    %v11340 = vpack.c.b16 %v10854, %v10848
    %v11341 = vpack.c.b16 %v10861, %v10855
    %v11342 = vpack.c.b16 %v10862, %v10856
    %v11343 = vpack.c.b16 %v10863, %v10857
    %v11344 = vpack.c.b16 %v10864, %v10858
    %v11345 = vpack.c.b16 %v10865, %v10859
    %v11346 = vpack.c.b16 %v10866, %v10860
    %v11347 = vpack.c.b16 %v10873, %v10867
    %v11348 = vpack.c.b16 %v10874, %v10868
    %v11349 = vpack.c.b16 %v10875, %v10869
    %v11350 = vpack.c.b16 %v10876, %v10870
    %v11351 = vpack.c.b16 %v10877, %v10871
    %v11352 = vpack.c.b16 %v10878, %v10872
    %v11353 = vpack.c.b16 %v10885, %v10879
    %v11354 = vpack.c.b16 %v10886, %v10880
    %v11355 = vpack.c.b16 %v10887, %v10881
    %v11356 = vpack.c.b16 %v10888, %v10882
    %v11357 = vpack.c.b16 %v10889, %v10883
    %v11358 = vpack.c.b16 %v10890, %v10884
    %v11359 = vpack.c.b16 %v10897, %v10891
    %v11360 = vpack.c.b16 %v10898, %v10892
    %v11361 = vpack.c.b16 %v10899, %v10893
    %v11362 = vpack.c.b16 %v10900, %v10894
    %v11363 = vpack.c.b16 %v10901, %v10895
    %v11364 = vpack.c.b16 %v10902, %v10896
    %v11365 = vpack.c.b16 %v10909, %v10903
    %v11366 = vpack.c.b16 %v10910, %v10904
    %v11367 = vpack.c.b16 %v10911, %v10905
    %v11368 = vpack.c.b16 %v10912, %v10906
    %v11369 = vpack.c.b16 %v10913, %v10907
    %v11370 = vpack.c.b16 %v10914, %v10908
    %v11371 = vpack.c.b16 %v10921, %v10915
    %v11372 = vpack.c.b16 %v10922, %v10916
    %v11373 = vpack.c.b16 %v10923, %v10917
    %v11374 = vpack.c.b16 %v10924, %v10918
    %v11375 = vpack.c.b16 %v10925, %v10919
    %v11376 = vpack.c.b16 %v10926, %v10920
    %v11377 = vpack.c.b16 %v10933, %v10927
    %v11378 = vpack.c.b16 %v10934, %v10928
    %v11379 = vpack.c.b16 %v10935, %v10929
    %v11380 = vpack.c.b16 %v10936, %v10930
    %v11381 = vpack.c.b16 %v10937, %v10931
    %v11382 = vpack.c.b16 %v10938, %v10932
    %v11383 = vpack.c.b16 %v10945, %v10939
    %v11384 = vpack.c.b16 %v10946, %v10940
    %v11385 = vpack.c.b16 %v10947, %v10941
    %v11386 = vpack.c.b16 %v10948, %v10942
    %v11387 = vpack.c.b16 %v10949, %v10943
    %v11388 = vpack.c.b16 %v10950, %v10944
    %v11389 = vpack.c.b16 %v10957, %v10951
    %v11390 = vpack.c.b16 %v10958, %v10952
    %v11391 = vpack.c.b16 %v10959, %v10953
    %v11392 = vpack.c.b16 %v10960, %v10954
    %v11393 = vpack.c.b16 %v10961, %v10955
    %v11394 = vpack.c.b16 %v10962, %v10956
    %v11395 = vpack.c.b16 %v10969, %v10963
    %v11396 = vpack.c.b16 %v10970, %v10964
    %v11397 = vpack.c.b16 %v10971, %v10965
    %v11398 = vpack.c.b16 %v10972, %v10966
    %v11399 = vpack.c.b16 %v10973, %v10967
    %v11400 = vpack.c.b16 %v10974, %v10968
    %v11401 = vpack.c.b16 %v10981, %v10975
    %v11402 = vpack.c.b16 %v10982, %v10976
    %v11403 = vpack.c.b16 %v10983, %v10977
    %v11404 = vpack.c.b16 %v10984, %v10978
    %v11405 = vpack.c.b16 %v10985, %v10979
    %v11406 = vpack.c.b16 %v10986, %v10980
    %v11407 = vpack.c.b16 %v10993, %v10987
    %v11408 = vpack.c.b16 %v10994, %v10988
    %v11409 = vpack.c.b16 %v10995, %v10989
    %v11410 = vpack.c.b16 %v10996, %v10990
    %v11411 = vpack.c.b16 %v10997, %v10991
    %v11412 = vpack.c.b16 %v10998, %v10992
    %v11413 = vpack.c.b16 %v11005, %v10999
    %v11414 = vpack.c.b16 %v11006, %v11000
    %v11415 = vpack.c.b16 %v11007, %v11001
    %v11416 = vpack.c.b16 %v11008, %v11002
    %v11417 = vpack.c.b16 %v11009, %v11003
    %v11418 = vpack.c.b16 %v11010, %v11004
    %v11419 = vpack.c.b16 %v11017, %v11011
    %v11420 = vpack.c.b16 %v11018, %v11012
    %v11421 = vpack.c.b16 %v11019, %v11013
    %v11422 = vpack.c.b16 %v11020, %v11014
    %v11423 = vpack.c.b16 %v11021, %v11015
    %v11424 = vpack.c.b16 %v11022, %v11016
    %v11425 = vpack.c.b16 %v11029, %v11023
    %v11426 = vpack.c.b16 %v11030, %v11024
    %v11427 = vpack.c.b16 %v11031, %v11025
    %v11428 = vpack.c.b16 %v11032, %v11026
    %v11429 = vpack.c.b16 %v11033, %v11027
    %v11430 = vpack.c.b16 %v11034, %v11028
    %v11431 = vpack.c.b16 %v11041, %v11035
    %v11432 = vpack.c.b16 %v11042, %v11036
    %v11433 = vpack.c.b16 %v11043, %v11037
    %v11434 = vpack.c.b16 %v11044, %v11038
    %v11435 = vpack.c.b16 %v11045, %v11039
    %v11436 = vpack.c.b16 %v11046, %v11040
    %v11437 = vpack.c.b16 %v11053, %v11047
    %v11438 = vpack.c.b16 %v11054, %v11048
    %v11439 = vpack.c.b16 %v11055, %v11049
    %v11440 = vpack.c.b16 %v11056, %v11050
    %v11441 = vpack.c.b16 %v11057, %v11051
    %v11442 = vpack.c.b16 %v11058, %v11052
    %11827 = vmatprep.subr.bf16.mxu0 %v11102
    %11828 = vmatpush1.bf16.msra.mxu0 %v11101
    %11829 = vmatprep.subr.bf16.mxu0 %v11096
    %11830 = vmatpush1.bf16.msra.mxu0 %v11095
    %11831 = vmatprep.subr.bf16.mxu0 %v11090
    %11832 = vmatpush1.bf16.msra.mxu0 %v11089
    %11833 = vmatprep.subr.bf16.mxu0 %v11084
    %11834 = vmatpush1.bf16.msra.mxu0 %v11083
    %11835 = vmatprep.subr.bf16.mxu0 %v11078
    %11836 = vmatpush1.bf16.msra.mxu0 %v11077
    %11837 = vmatprep.subr.bf16.mxu0 %v11072
    %11838 = vmatpush1.bf16.msra.mxu0 %v11071
    %11839 = vmatprep.subr.bf16.mxu0 %v11066
    %11840 = vmatpush1.bf16.msra.mxu0 %v11065
    %11841 = vmatprep.subr.bf16.mxu0 %v11060
    %11842 = vmatpush1.bf16.msra.mxu0 %v11059
    %11843 = vmatprep.subr.bf16.mxu0 %v11150
    %11844 = vmatpush2.bf16.msra.mxu0 %v11149
    %11845 = vmatprep.subr.bf16.mxu0 %v11144
    %11846 = vmatpush2.bf16.msra.mxu0 %v11143
    %11847 = vmatprep.subr.bf16.mxu0 %v11138
    %11848 = vmatpush2.bf16.msra.mxu0 %v11137
    %11849 = vmatprep.subr.bf16.mxu0 %v11132
    %11850 = vmatpush2.bf16.msra.mxu0 %v11131
    %11851 = vmatprep.subr.bf16.mxu0 %v11126
    %11852 = vmatpush2.bf16.msra.mxu0 %v11125
    %11853 = vmatprep.subr.bf16.mxu0 %v11120
    %11854 = vmatpush2.bf16.msra.mxu0 %v11119
    %11855 = vmatprep.subr.bf16.mxu0 %v11114
    %11856 = vmatpush2.bf16.msra.mxu0 %v11113
    %11857 = vmatprep.subr.bf16.mxu0 %v11108
    %11858 = vmatpush2.bf16.msra.mxu0 %v11107
    %11859 = vmatprep.mubr.bf16.mxu0 %v9869
    %11860 = vmatmul.mubr.bf16.gmra.mxu0 %v9868
    %v11861 = vpop.f32.mrf.mxu0
    %v11862 = vadd.f32 %v9880, %v11861
    %v11863 = vpop.f32.mrf.mxu0
    %v11864 = vadd.f32 %v9884, %v11863
    %v11865 = vpop.f32.mrf.mxu0
    %v11866 = vpop.f32.mrf.mxu0
    %11867 = vdwg.mxu0
    %11868 = vmatprep.subr.bf16.mxu0 %v11198
    %11869 = vmatpush1.bf16.msra.mxu0 %v11197
    %11870 = vmatprep.subr.bf16.mxu0 %v11192
    %11871 = vmatpush1.bf16.msra.mxu0 %v11191
    %11872 = vmatprep.subr.bf16.mxu0 %v11186
    %11873 = vmatpush1.bf16.msra.mxu0 %v11185
    %11874 = vmatprep.subr.bf16.mxu0 %v11180
    %11875 = vmatpush1.bf16.msra.mxu0 %v11179
    %11876 = vmatprep.subr.bf16.mxu0 %v11174
    %11877 = vmatpush1.bf16.msra.mxu0 %v11173
    %11878 = vmatprep.subr.bf16.mxu0 %v11168
    %11879 = vmatpush1.bf16.msra.mxu0 %v11167
    %11880 = vmatprep.subr.bf16.mxu0 %v11162
    %11881 = vmatpush1.bf16.msra.mxu0 %v11161
    %11882 = vmatprep.subr.bf16.mxu0 %v11156
    %11883 = vmatpush1.bf16.msra.mxu0 %v11155
    %11884 = vmatprep.subr.bf16.mxu0 %v11246
    %11885 = vmatpush2.bf16.msra.mxu0 %v11245
    %11886 = vmatprep.subr.bf16.mxu0 %v11240
    %11887 = vmatpush2.bf16.msra.mxu0 %v11239
    %11888 = vmatprep.subr.bf16.mxu0 %v11234
    %11889 = vmatpush2.bf16.msra.mxu0 %v11233
    %11890 = vmatprep.subr.bf16.mxu0 %v11228
    %11891 = vmatpush2.bf16.msra.mxu0 %v11227
    %11892 = vmatprep.subr.bf16.mxu0 %v11222
    %11893 = vmatpush2.bf16.msra.mxu0 %v11221
    %11894 = vmatprep.subr.bf16.mxu0 %v11216
    %11895 = vmatpush2.bf16.msra.mxu0 %v11215
    %11896 = vmatprep.subr.bf16.mxu0 %v11210
    %11897 = vmatpush2.bf16.msra.mxu0 %v11209
    %11898 = vmatprep.subr.bf16.mxu0 %v11204
    %11899 = vmatpush2.bf16.msra.mxu0 %v11203
    %11900 = vmatprep.mubr.bf16.mxu0 %v9871
    %11901 = vmatmul.mubr.bf16.gmra.mxu0 %v9870
    %v11902 = vpop.f32.mrf.mxu0
    %v11903 = vadd.f32 %v11862, %v11902
    %v11904 = vpop.f32.mrf.mxu0
    %v11905 = vadd.f32 %v11864, %v11904
    %v11906 = vpop.f32.mrf.mxu0
    %v11907 = vpop.f32.mrf.mxu0
    %11908 = vdwg.mxu0
    %11909 = vmatprep.subr.bf16.mxu0 %v11294
    %11910 = vmatpush1.bf16.msra.mxu0 %v11293
    %11911 = vmatprep.subr.bf16.mxu0 %v11288
    %11912 = vmatpush1.bf16.msra.mxu0 %v11287
    %11913 = vmatprep.subr.bf16.mxu0 %v11282
    %11914 = vmatpush1.bf16.msra.mxu0 %v11281
    %11915 = vmatprep.subr.bf16.mxu0 %v11276
    %11916 = vmatpush1.bf16.msra.mxu0 %v11275
    %11917 = vmatprep.subr.bf16.mxu0 %v11270
    %11918 = vmatpush1.bf16.msra.mxu0 %v11269
    %11919 = vmatprep.subr.bf16.mxu0 %v11264
    %11920 = vmatpush1.bf16.msra.mxu0 %v11263
    %11921 = vmatprep.subr.bf16.mxu0 %v11258
    %11922 = vmatpush1.bf16.msra.mxu0 %v11257
    %11923 = vmatprep.subr.bf16.mxu0 %v11252
    %11924 = vmatpush1.bf16.msra.mxu0 %v11251
    %11925 = vmatprep.subr.bf16.mxu0 %v11342
    %11926 = vmatpush2.bf16.msra.mxu0 %v11341
    %11927 = vmatprep.subr.bf16.mxu0 %v11336
    %11928 = vmatpush2.bf16.msra.mxu0 %v11335
    %11929 = vmatprep.subr.bf16.mxu0 %v11330
    %11930 = vmatpush2.bf16.msra.mxu0 %v11329
    %11931 = vmatprep.subr.bf16.mxu0 %v11324
    %11932 = vmatpush2.bf16.msra.mxu0 %v11323
    %11933 = vmatprep.subr.bf16.mxu0 %v11318
    %11934 = vmatpush2.bf16.msra.mxu0 %v11317
    %11935 = vmatprep.subr.bf16.mxu0 %v11312
    %11936 = vmatpush2.bf16.msra.mxu0 %v11311
    %11937 = vmatprep.subr.bf16.mxu0 %v11306
    %11938 = vmatpush2.bf16.msra.mxu0 %v11305
    %11939 = vmatprep.subr.bf16.mxu0 %v11300
    %11940 = vmatpush2.bf16.msra.mxu0 %v11299
    %11941 = vmatprep.mubr.bf16.mxu0 %v9873
    %11942 = vmatmul.mubr.bf16.gmra.mxu0 %v9872
    %v11943 = vpop.f32.mrf.mxu0
    %v11944 = vadd.f32 %v11903, %v11943
    %v11945 = vpop.f32.mrf.mxu0
    %v11946 = vadd.f32 %v11905, %v11945
    %v11947 = vpop.f32.mrf.mxu0
    %v11948 = vpop.f32.mrf.mxu0
    %11949 = vdwg.mxu0
    %11950 = vmatprep.subr.bf16.mxu0 %v11390
    %11951 = vmatpush1.bf16.msra.mxu0 %v11389
    %11952 = vmatprep.subr.bf16.mxu0 %v11384
    %11953 = vmatpush1.bf16.msra.mxu0 %v11383
    %11954 = vmatprep.subr.bf16.mxu0 %v11378
    %11955 = vmatpush1.bf16.msra.mxu0 %v11377
    %11956 = vmatprep.subr.bf16.mxu0 %v11372
    %11957 = vmatpush1.bf16.msra.mxu0 %v11371
    %11958 = vmatprep.subr.bf16.mxu0 %v11366
    %11959 = vmatpush1.bf16.msra.mxu0 %v11365
    %11960 = vmatprep.subr.bf16.mxu0 %v11360
    %11961 = vmatpush1.bf16.msra.mxu0 %v11359
    %11962 = vmatprep.subr.bf16.mxu0 %v11354
    %11963 = vmatpush1.bf16.msra.mxu0 %v11353
    %11964 = vmatprep.subr.bf16.mxu0 %v11348
    %11965 = vmatpush1.bf16.msra.mxu0 %v11347
    %11966 = vmatprep.subr.bf16.mxu0 %v11438
    %11967 = vmatpush2.bf16.msra.mxu0 %v11437
    %11968 = vmatprep.subr.bf16.mxu0 %v11432
    %11969 = vmatpush2.bf16.msra.mxu0 %v11431
    %11970 = vmatprep.subr.bf16.mxu0 %v11426
    %11971 = vmatpush2.bf16.msra.mxu0 %v11425
    %11972 = vmatprep.subr.bf16.mxu0 %v11420
    %11973 = vmatpush2.bf16.msra.mxu0 %v11419
    %11974 = vmatprep.subr.bf16.mxu0 %v11414
    %11975 = vmatpush2.bf16.msra.mxu0 %v11413
    %11976 = vmatprep.subr.bf16.mxu0 %v11408
    %11977 = vmatpush2.bf16.msra.mxu0 %v11407
    %11978 = vmatprep.subr.bf16.mxu0 %v11402
    %11979 = vmatpush2.bf16.msra.mxu0 %v11401
    %11980 = vmatprep.subr.bf16.mxu0 %v11396
    %11981 = vmatpush2.bf16.msra.mxu0 %v11395
    %11982 = vmatprep.mubr.bf16.mxu0 %v9875
    %11983 = vmatmul.mubr.bf16.gmra.mxu0 %v9874
    %v11984 = vpop.f32.mrf.mxu0
    %v11985 = vadd.f32 %v11944, %v11984
    %v11986 = vpop.f32.mrf.mxu0
    %v11987 = vadd.f32 %v11946, %v11986
    %v11988 = vpop.f32.mrf.mxu0
    %v11989 = vpop.f32.mrf.mxu0
    %11990 = vdwg.mxu0
    %11991 = vmatprep.subr.bf16.mxu0 %v11104
    %11992 = vmatpush1.bf16.msra.mxu0 %v11103
    %11993 = vmatprep.subr.bf16.mxu0 %v11098
    %11994 = vmatpush1.bf16.msra.mxu0 %v11097
    %11995 = vmatprep.subr.bf16.mxu0 %v11092
    %11996 = vmatpush1.bf16.msra.mxu0 %v11091
    %11997 = vmatprep.subr.bf16.mxu0 %v11086
    %11998 = vmatpush1.bf16.msra.mxu0 %v11085
    %11999 = vmatprep.subr.bf16.mxu0 %v11080
    %12000 = vmatpush1.bf16.msra.mxu0 %v11079
    %12001 = vmatprep.subr.bf16.mxu0 %v11074
    %12002 = vmatpush1.bf16.msra.mxu0 %v11073
    %12003 = vmatprep.subr.bf16.mxu0 %v11068
    %12004 = vmatpush1.bf16.msra.mxu0 %v11067
    %12005 = vmatprep.subr.bf16.mxu0 %v11062
    %12006 = vmatpush1.bf16.msra.mxu0 %v11061
    %12007 = vmatprep.subr.bf16.mxu0 %v11152
    %12008 = vmatpush2.bf16.msra.mxu0 %v11151
    %12009 = vmatprep.subr.bf16.mxu0 %v11146
    %12010 = vmatpush2.bf16.msra.mxu0 %v11145
    %12011 = vmatprep.subr.bf16.mxu0 %v11140
    %12012 = vmatpush2.bf16.msra.mxu0 %v11139
    %12013 = vmatprep.subr.bf16.mxu0 %v11134
    %12014 = vmatpush2.bf16.msra.mxu0 %v11133
    %12015 = vmatprep.subr.bf16.mxu0 %v11128
    %12016 = vmatpush2.bf16.msra.mxu0 %v11127
    %12017 = vmatprep.subr.bf16.mxu0 %v11122
    %12018 = vmatpush2.bf16.msra.mxu0 %v11121
    %12019 = vmatprep.subr.bf16.mxu0 %v11116
    %12020 = vmatpush2.bf16.msra.mxu0 %v11115
    %12021 = vmatprep.subr.bf16.mxu0 %v11110
    %12022 = vmatpush2.bf16.msra.mxu0 %v11109
    %12023 = vmatprep.mubr.bf16.mxu0 %v9869
    %12024 = vmatmul.mubr.bf16.gmra.mxu0 %v9868
    %v12025 = vpop.f32.mrf.mxu0
    %v12026 = vadd.f32 %v9888, %v12025
    %v12027 = vpop.f32.mrf.mxu0
    %v12028 = vadd.f32 %v9892, %v12027
    %v12029 = vpop.f32.mrf.mxu0
    %v12030 = vpop.f32.mrf.mxu0
    %12031 = vdwg.mxu0
    %12032 = vmatprep.subr.bf16.mxu0 %v11200
    %12033 = vmatpush1.bf16.msra.mxu0 %v11199
    %12034 = vmatprep.subr.bf16.mxu0 %v11194
    %12035 = vmatpush1.bf16.msra.mxu0 %v11193
    %12036 = vmatprep.subr.bf16.mxu0 %v11188
    %12037 = vmatpush1.bf16.msra.mxu0 %v11187
    %12038 = vmatprep.subr.bf16.mxu0 %v11182
    %12039 = vmatpush1.bf16.msra.mxu0 %v11181
    %12040 = vmatprep.subr.bf16.mxu0 %v11176
    %12041 = vmatpush1.bf16.msra.mxu0 %v11175
    %12042 = vmatprep.subr.bf16.mxu0 %v11170
    %12043 = vmatpush1.bf16.msra.mxu0 %v11169
    %12044 = vmatprep.subr.bf16.mxu0 %v11164
    %12045 = vmatpush1.bf16.msra.mxu0 %v11163
    %12046 = vmatprep.subr.bf16.mxu0 %v11158
    %12047 = vmatpush1.bf16.msra.mxu0 %v11157
    %12048 = vmatprep.subr.bf16.mxu0 %v11248
    %12049 = vmatpush2.bf16.msra.mxu0 %v11247
    %12050 = vmatprep.subr.bf16.mxu0 %v11242
    %12051 = vmatpush2.bf16.msra.mxu0 %v11241
    %12052 = vmatprep.subr.bf16.mxu0 %v11236
    %12053 = vmatpush2.bf16.msra.mxu0 %v11235
    %12054 = vmatprep.subr.bf16.mxu0 %v11230
    %12055 = vmatpush2.bf16.msra.mxu0 %v11229
    %12056 = vmatprep.subr.bf16.mxu0 %v11224
    %12057 = vmatpush2.bf16.msra.mxu0 %v11223
    %12058 = vmatprep.subr.bf16.mxu0 %v11218
    %12059 = vmatpush2.bf16.msra.mxu0 %v11217
    %12060 = vmatprep.subr.bf16.mxu0 %v11212
    %12061 = vmatpush2.bf16.msra.mxu0 %v11211
    %12062 = vmatprep.subr.bf16.mxu0 %v11206
    %12063 = vmatpush2.bf16.msra.mxu0 %v11205
    %12064 = vmatprep.mubr.bf16.mxu0 %v9871
    %12065 = vmatmul.mubr.bf16.gmra.mxu0 %v9870
    %v12066 = vpop.f32.mrf.mxu0
    %v12067 = vadd.f32 %v12026, %v12066
    %v12068 = vpop.f32.mrf.mxu0
    %v12069 = vadd.f32 %v12028, %v12068
    %v12070 = vpop.f32.mrf.mxu0
    %v12071 = vpop.f32.mrf.mxu0
    %12072 = vdwg.mxu0
    %12073 = vmatprep.subr.bf16.mxu0 %v11296
    %12074 = vmatpush1.bf16.msra.mxu0 %v11295
    %12075 = vmatprep.subr.bf16.mxu0 %v11290
    %12076 = vmatpush1.bf16.msra.mxu0 %v11289
    %12077 = vmatprep.subr.bf16.mxu0 %v11284
    %12078 = vmatpush1.bf16.msra.mxu0 %v11283
    %12079 = vmatprep.subr.bf16.mxu0 %v11278
    %12080 = vmatpush1.bf16.msra.mxu0 %v11277
    %12081 = vmatprep.subr.bf16.mxu0 %v11272
    %12082 = vmatpush1.bf16.msra.mxu0 %v11271
    %12083 = vmatprep.subr.bf16.mxu0 %v11266
    %12084 = vmatpush1.bf16.msra.mxu0 %v11265
    %12085 = vmatprep.subr.bf16.mxu0 %v11260
    %12086 = vmatpush1.bf16.msra.mxu0 %v11259
    %12087 = vmatprep.subr.bf16.mxu0 %v11254
    %12088 = vmatpush1.bf16.msra.mxu0 %v11253
    %12089 = vmatprep.subr.bf16.mxu0 %v11344
    %12090 = vmatpush2.bf16.msra.mxu0 %v11343
    %12091 = vmatprep.subr.bf16.mxu0 %v11338
    %12092 = vmatpush2.bf16.msra.mxu0 %v11337
    %12093 = vmatprep.subr.bf16.mxu0 %v11332
    %12094 = vmatpush2.bf16.msra.mxu0 %v11331
    %12095 = vmatprep.subr.bf16.mxu0 %v11326
    %12096 = vmatpush2.bf16.msra.mxu0 %v11325
    %12097 = vmatprep.subr.bf16.mxu0 %v11320
    %12098 = vmatpush2.bf16.msra.mxu0 %v11319
    %12099 = vmatprep.subr.bf16.mxu0 %v11314
    %12100 = vmatpush2.bf16.msra.mxu0 %v11313
    %12101 = vmatprep.subr.bf16.mxu0 %v11308
    %12102 = vmatpush2.bf16.msra.mxu0 %v11307
    %12103 = vmatprep.subr.bf16.mxu0 %v11302
    %12104 = vmatpush2.bf16.msra.mxu0 %v11301
    %12105 = vmatprep.mubr.bf16.mxu0 %v9873
    %12106 = vmatmul.mubr.bf16.gmra.mxu0 %v9872
    %v12107 = vpop.f32.mrf.mxu0
    %v12108 = vadd.f32 %v12067, %v12107
    %v12109 = vpop.f32.mrf.mxu0
    %v12110 = vadd.f32 %v12069, %v12109
    %v12111 = vpop.f32.mrf.mxu0
    %v12112 = vpop.f32.mrf.mxu0
    %12113 = vdwg.mxu0
    %12114 = vmatprep.subr.bf16.mxu0 %v11392
    %12115 = vmatpush1.bf16.msra.mxu0 %v11391
    %12116 = vmatprep.subr.bf16.mxu0 %v11386
    %12117 = vmatpush1.bf16.msra.mxu0 %v11385
    %12118 = vmatprep.subr.bf16.mxu0 %v11380
    %12119 = vmatpush1.bf16.msra.mxu0 %v11379
    %12120 = vmatprep.subr.bf16.mxu0 %v11374
    %12121 = vmatpush1.bf16.msra.mxu0 %v11373
    %12122 = vmatprep.subr.bf16.mxu0 %v11368
    %12123 = vmatpush1.bf16.msra.mxu0 %v11367
    %12124 = vmatprep.subr.bf16.mxu0 %v11362
    %12125 = vmatpush1.bf16.msra.mxu0 %v11361
    %12126 = vmatprep.subr.bf16.mxu0 %v11356
    %12127 = vmatpush1.bf16.msra.mxu0 %v11355
    %12128 = vmatprep.subr.bf16.mxu0 %v11350
    %12129 = vmatpush1.bf16.msra.mxu0 %v11349
    %12130 = vmatprep.subr.bf16.mxu0 %v11440
    %12131 = vmatpush2.bf16.msra.mxu0 %v11439
    %12132 = vmatprep.subr.bf16.mxu0 %v11434
    %12133 = vmatpush2.bf16.msra.mxu0 %v11433
    %12134 = vmatprep.subr.bf16.mxu0 %v11428
    %12135 = vmatpush2.bf16.msra.mxu0 %v11427
    %12136 = vmatprep.subr.bf16.mxu0 %v11422
    %12137 = vmatpush2.bf16.msra.mxu0 %v11421
    %12138 = vmatprep.subr.bf16.mxu0 %v11416
    %12139 = vmatpush2.bf16.msra.mxu0 %v11415
    %12140 = vmatprep.subr.bf16.mxu0 %v11410
    %12141 = vmatpush2.bf16.msra.mxu0 %v11409
    %12142 = vmatprep.subr.bf16.mxu0 %v11404
    %12143 = vmatpush2.bf16.msra.mxu0 %v11403
    %12144 = vmatprep.subr.bf16.mxu0 %v11398
    %12145 = vmatpush2.bf16.msra.mxu0 %v11397
    %12146 = vmatprep.mubr.bf16.mxu0 %v9875
    %12147 = vmatmul.mubr.bf16.gmra.mxu0 %v9874
    %v12148 = vpop.f32.mrf.mxu0
    %v12149 = vadd.f32 %v12108, %v12148
    %v12150 = vpop.f32.mrf.mxu0
    %v12151 = vadd.f32 %v12110, %v12150
    %v12152 = vpop.f32.mrf.mxu0
    %v12153 = vpop.f32.mrf.mxu0
    %12154 = vdwg.mxu0
    %12155 = vmatprep.subr.bf16.mxu0 %v11106
    %12156 = vmatpush1.bf16.msra.mxu0 %v11105
    %12157 = vmatprep.subr.bf16.mxu0 %v11100
    %12158 = vmatpush1.bf16.msra.mxu0 %v11099
    %12159 = vmatprep.subr.bf16.mxu0 %v11094
    %12160 = vmatpush1.bf16.msra.mxu0 %v11093
    %12161 = vmatprep.subr.bf16.mxu0 %v11088
    %12162 = vmatpush1.bf16.msra.mxu0 %v11087
    %12163 = vmatprep.subr.bf16.mxu0 %v11082
    %12164 = vmatpush1.bf16.msra.mxu0 %v11081
    %12165 = vmatprep.subr.bf16.mxu0 %v11076
    %12166 = vmatpush1.bf16.msra.mxu0 %v11075
    %12167 = vmatprep.subr.bf16.mxu0 %v11070
    %12168 = vmatpush1.bf16.msra.mxu0 %v11069
    %12169 = vmatprep.subr.bf16.mxu0 %v11064
    %12170 = vmatpush1.bf16.msra.mxu0 %v11063
    %12171 = vmatprep.subr.bf16.mxu0 %v11154
    %12172 = vmatpush2.bf16.msra.mxu0 %v11153
    %12173 = vmatprep.subr.bf16.mxu0 %v11148
    %12174 = vmatpush2.bf16.msra.mxu0 %v11147
    %12175 = vmatprep.subr.bf16.mxu0 %v11142
    %12176 = vmatpush2.bf16.msra.mxu0 %v11141
    %12177 = vmatprep.subr.bf16.mxu0 %v11136
    %12178 = vmatpush2.bf16.msra.mxu0 %v11135
    %12179 = vmatprep.subr.bf16.mxu0 %v11130
    %12180 = vmatpush2.bf16.msra.mxu0 %v11129
    %12181 = vmatprep.subr.bf16.mxu0 %v11124
    %12182 = vmatpush2.bf16.msra.mxu0 %v11123
    %12183 = vmatprep.subr.bf16.mxu0 %v11118
    %12184 = vmatpush2.bf16.msra.mxu0 %v11117
    %12185 = vmatprep.subr.bf16.mxu0 %v11112
    %12186 = vmatpush2.bf16.msra.mxu0 %v11111
    %12187 = vmatprep.mubr.bf16.mxu0 %v9869
    %12188 = vmatmul.mubr.bf16.gmra.mxu0 %v9868
    %v12189 = vpop.f32.mrf.mxu0
    %v12190 = vadd.f32 %v9896, %v12189
    %v12191 = vpop.f32.mrf.mxu0
    %v12192 = vadd.f32 %v9900, %v12191
    %v12193 = vpop.f32.mrf.mxu0
    %v12194 = vpop.f32.mrf.mxu0
    %12195 = vdwg.mxu0
    %12196 = vmatprep.subr.bf16.mxu0 %v11202
    %12197 = vmatpush1.bf16.msra.mxu0 %v11201
    %12198 = vmatprep.subr.bf16.mxu0 %v11196
    %12199 = vmatpush1.bf16.msra.mxu0 %v11195
    %12200 = vmatprep.subr.bf16.mxu0 %v11190
    %12201 = vmatpush1.bf16.msra.mxu0 %v11189
    %12202 = vmatprep.subr.bf16.mxu0 %v11184
    %12203 = vmatpush1.bf16.msra.mxu0 %v11183
    %12204 = vmatprep.subr.bf16.mxu0 %v11178
    %12205 = vmatpush1.bf16.msra.mxu0 %v11177
    %12206 = vmatprep.subr.bf16.mxu0 %v11172
    %12207 = vmatpush1.bf16.msra.mxu0 %v11171
    %12208 = vmatprep.subr.bf16.mxu0 %v11166
    %12209 = vmatpush1.bf16.msra.mxu0 %v11165
    %12210 = vmatprep.subr.bf16.mxu0 %v11160
    %12211 = vmatpush1.bf16.msra.mxu0 %v11159
    %12212 = vmatprep.subr.bf16.mxu0 %v11250
    %12213 = vmatpush2.bf16.msra.mxu0 %v11249
    %12214 = vmatprep.subr.bf16.mxu0 %v11244
    %12215 = vmatpush2.bf16.msra.mxu0 %v11243
    %12216 = vmatprep.subr.bf16.mxu0 %v11238
    %12217 = vmatpush2.bf16.msra.mxu0 %v11237
    %12218 = vmatprep.subr.bf16.mxu0 %v11232
    %12219 = vmatpush2.bf16.msra.mxu0 %v11231
    %12220 = vmatprep.subr.bf16.mxu0 %v11226
    %12221 = vmatpush2.bf16.msra.mxu0 %v11225
    %12222 = vmatprep.subr.bf16.mxu0 %v11220
    %12223 = vmatpush2.bf16.msra.mxu0 %v11219
    %12224 = vmatprep.subr.bf16.mxu0 %v11214
    %12225 = vmatpush2.bf16.msra.mxu0 %v11213
    %12226 = vmatprep.subr.bf16.mxu0 %v11208
    %12227 = vmatpush2.bf16.msra.mxu0 %v11207
    %12228 = vmatprep.mubr.bf16.mxu0 %v9871
    %12229 = vmatmul.mubr.bf16.gmra.mxu0 %v9870
    %v12230 = vpop.f32.mrf.mxu0
    %v12231 = vadd.f32 %v12190, %v12230
    %v12232 = vpop.f32.mrf.mxu0
    %v12233 = vadd.f32 %v12192, %v12232
    %v12234 = vpop.f32.mrf.mxu0
    %v12235 = vpop.f32.mrf.mxu0
    %12236 = vdwg.mxu0
    %12237 = vmatprep.subr.bf16.mxu0 %v11298
    %12238 = vmatpush1.bf16.msra.mxu0 %v11297
    %12239 = vmatprep.subr.bf16.mxu0 %v11292
    %12240 = vmatpush1.bf16.msra.mxu0 %v11291
    %12241 = vmatprep.subr.bf16.mxu0 %v11286
    %12242 = vmatpush1.bf16.msra.mxu0 %v11285
    %12243 = vmatprep.subr.bf16.mxu0 %v11280
    %12244 = vmatpush1.bf16.msra.mxu0 %v11279
    %12245 = vmatprep.subr.bf16.mxu0 %v11274
    %12246 = vmatpush1.bf16.msra.mxu0 %v11273
    %12247 = vmatprep.subr.bf16.mxu0 %v11268
    %12248 = vmatpush1.bf16.msra.mxu0 %v11267
    %12249 = vmatprep.subr.bf16.mxu0 %v11262
    %12250 = vmatpush1.bf16.msra.mxu0 %v11261
    %12251 = vmatprep.subr.bf16.mxu0 %v11256
    %12252 = vmatpush1.bf16.msra.mxu0 %v11255
    %12253 = vmatprep.subr.bf16.mxu0 %v11346
    %12254 = vmatpush2.bf16.msra.mxu0 %v11345
    %12255 = vmatprep.subr.bf16.mxu0 %v11340
    %12256 = vmatpush2.bf16.msra.mxu0 %v11339
    %12257 = vmatprep.subr.bf16.mxu0 %v11334
    %12258 = vmatpush2.bf16.msra.mxu0 %v11333
    %12259 = vmatprep.subr.bf16.mxu0 %v11328
    %12260 = vmatpush2.bf16.msra.mxu0 %v11327
    %12261 = vmatprep.subr.bf16.mxu0 %v11322
    %12262 = vmatpush2.bf16.msra.mxu0 %v11321
    %12263 = vmatprep.subr.bf16.mxu0 %v11316
    %12264 = vmatpush2.bf16.msra.mxu0 %v11315
    %12265 = vmatprep.subr.bf16.mxu0 %v11310
    %12266 = vmatpush2.bf16.msra.mxu0 %v11309
    %12267 = vmatprep.subr.bf16.mxu0 %v11304
    %12268 = vmatpush2.bf16.msra.mxu0 %v11303
    %12269 = vmatprep.mubr.bf16.mxu0 %v9873
    %12270 = vmatmul.mubr.bf16.gmra.mxu0 %v9872
    %v12271 = vpop.f32.mrf.mxu0
    %v12272 = vadd.f32 %v12231, %v12271
    %v12273 = vpop.f32.mrf.mxu0
    %v12274 = vadd.f32 %v12233, %v12273
    %v12275 = vpop.f32.mrf.mxu0
    %v12276 = vpop.f32.mrf.mxu0
    %12277 = vdwg.mxu0
    %12278 = vmatprep.subr.bf16.mxu0 %v11394
    %12279 = vmatpush1.bf16.msra.mxu0 %v11393
    %12280 = vmatprep.subr.bf16.mxu0 %v11388
    %12281 = vmatpush1.bf16.msra.mxu0 %v11387
    %12282 = vmatprep.subr.bf16.mxu0 %v11382
    %12283 = vmatpush1.bf16.msra.mxu0 %v11381
    %12284 = vmatprep.subr.bf16.mxu0 %v11376
    %12285 = vmatpush1.bf16.msra.mxu0 %v11375
    %12286 = vmatprep.subr.bf16.mxu0 %v11370
    %12287 = vmatpush1.bf16.msra.mxu0 %v11369
    %12288 = vmatprep.subr.bf16.mxu0 %v11364
    %12289 = vmatpush1.bf16.msra.mxu0 %v11363
    %12290 = vmatprep.subr.bf16.mxu0 %v11358
    %12291 = vmatpush1.bf16.msra.mxu0 %v11357
    %12292 = vmatprep.subr.bf16.mxu0 %v11352
    %12293 = vmatpush1.bf16.msra.mxu0 %v11351
    %12294 = vmatprep.subr.bf16.mxu0 %v11442
    %12295 = vmatpush2.bf16.msra.mxu0 %v11441
    %12296 = vmatprep.subr.bf16.mxu0 %v11436
    %12297 = vmatpush2.bf16.msra.mxu0 %v11435
    %12298 = vmatprep.subr.bf16.mxu0 %v11430
    %12299 = vmatpush2.bf16.msra.mxu0 %v11429
    %12300 = vmatprep.subr.bf16.mxu0 %v11424
    %12301 = vmatpush2.bf16.msra.mxu0 %v11423
    %12302 = vmatprep.subr.bf16.mxu0 %v11418
    %12303 = vmatpush2.bf16.msra.mxu0 %v11417
    %12304 = vmatprep.subr.bf16.mxu0 %v11412
    %12305 = vmatpush2.bf16.msra.mxu0 %v11411
    %12306 = vmatprep.subr.bf16.mxu0 %v11406
    %12307 = vmatpush2.bf16.msra.mxu0 %v11405
    %12308 = vmatprep.subr.bf16.mxu0 %v11400
    %12309 = vmatpush2.bf16.msra.mxu0 %v11399
    %12310 = vmatprep.mubr.bf16.mxu0 %v9875
    %12311 = vmatmul.mubr.bf16.gmra.mxu0 %v9874
    %v12312 = vpop.f32.mrf.mxu0
    %v12313 = vadd.f32 %v12272, %v12312
    %v12314 = vpop.f32.mrf.mxu0
    %v12315 = vadd.f32 %v12274, %v12314
    %v12316 = vpop.f32.mrf.mxu0
    %v12317 = vpop.f32.mrf.mxu0
    %12318 = vdwg.mxu0
    %12319 = vst [vmem:[%s15] sm:$0xff] %v11985
    %12320 = vst [vmem:[%s15 + $0x8] sm:$0xff] %v11987
    %12321 = vst [vmem:[%s15 + $0x10] sm:$0xff] %v12149
    %12322 = vst [vmem:[%s15 + $0x18] sm:$0xff] %v12151
    %12323 = vst [vmem:[%s15 + $0x20] sm:$0xff] %v12313
    %12324 = vst [vmem:[%s15 + $0x28] sm:$0xff] %v12315
    // Predicated region
    $region82: #{dae_forward.1} parent=1 // pred_check
      _
    $region83: #{dae_forward.1} parent=1 // pred_check_branch
      %12326 = sbr.rel (0) target = $region85
    $region84: #{dae_forward.1} parent=1 // pred_region
      _
    $region85: #{dae_forward.1} parent=1 // pred_fallthru
      _
    // Predicated region
    $region86: #{dae_forward.1} parent=1 // pred_check
      _
    $region87: #{dae_forward.1} parent=1 // pred_check_branch
      %12328 = sbr.rel (0) target = $region89
    $region88: #{dae_forward.1} parent=1 // pred_region
      _
    $region89: #{dae_forward.1} parent=1 // pred_fallthru
      _
    // Predicated region
    $region90: #{dae_forward.1} parent=1 // pred_check
      _
    $region91: #{dae_forward.1} parent=1 // pred_check_branch
      %12330 = sbr.rel (0) target = $region93
    $region92: #{dae_forward.1} parent=1 // pred_region
      _
    $region93: #{dae_forward.1} parent=1 // pred_fallthru
      _
    // Predicated region
    $region94: #{dae_forward.1} parent=1 // pred_check
      _
    $region95: #{dae_forward.1} parent=1 // pred_check_branch
      %12332 = sbr.rel (0) target = $region97
    $region96: #{dae_forward.1} parent=1 // pred_region
      _
    $region97: #{dae_forward.1} parent=1 // pred_fallthru
      _
    %12333 = vsyncpa [#allocation5], 1
    %12334 = vsyncpa [#allocation7], 1
    %12335 = vsyncpa [#allocation10], 1

</llo_original>
